<compile_context>
chip_gen: v7x
topology: tpu7x:2x2x1
jax: 0.10.0
libtpu: 0.0.40
codegen_flags: <defaults>
</compile_context>

<pallas_src>
import jax
import jax.numpy as jnp
import numpy as np
from jax.experimental import pallas as pl
from jax.experimental.pallas import tpu as pltpu

EPS = 1e-5

D_IN = 3000          # logical feature width of input / output (PyTorch spec)
D_PAD = 3072         # padded to a multiple of 128 -> lane-dense loads/stores
H1, H2, H3 = 512, 256, 512


def net_kernel(x_ref,
               w1_ref, b1_ref, g1_ref, be1_ref,
               w2_hbm, b2_ref, g2_ref, be2_ref,
               w3_hbm, b3_ref, g3_ref, be3_ref,
               w4_hbm, b4_ref,
               o_ref,
               w2_vmem, w3_vmem, w4_vmem, dma_sem):
    """Whole forward pass in one invocation; later weights streamed from HBM."""

    # Start the fc2/fc3/fc4 weight DMAs immediately so their HBM traffic
    # overlaps the fc1..fc3 matmuls + BN below.
    cp2 = pltpu.make_async_copy(w2_hbm, w2_vmem, dma_sem.at[0])
    cp3 = pltpu.make_async_copy(w3_hbm, w3_vmem, dma_sem.at[1])
    cp4 = pltpu.make_async_copy(w4_hbm, w4_vmem, dma_sem.at[2])
    cp2.start()
    cp3.start()
    cp4.start()

    def linear(h, w, b_ref):
        # bf16 x bf16 on the MXU with f32 accumulation, then f32 bias add.
        return jnp.dot(h.astype(jnp.bfloat16), w,
                       preferred_element_type=jnp.float32) + b_ref[...]

    def bn_relu(h, g_ref, be_ref):
        # BatchNorm1d (training mode): batch mean / biased variance, folded
        # into one scale/shift and fused with ReLU. rsqrt goes to the EUP.
        mu = jnp.mean(h, axis=0, keepdims=True)
        var = jnp.mean((h - mu) * (h - mu), axis=0, keepdims=True)
        scale = g_ref[...] * jax.lax.rsqrt(var + EPS)
        shift = be_ref[...] - mu * scale
        return jnp.maximum(h * scale + shift, 0.0)

    h1 = bn_relu(linear(x_ref[...], w1_ref[...], b1_ref), g1_ref, be1_ref)
    cp2.wait()
    h2 = bn_relu(linear(h1, w2_vmem[...], b2_ref), g2_ref, be2_ref)
    cp3.wait()
    h3 = bn_relu(linear(h2, w3_vmem[...], b3_ref), g3_ref, be3_ref)
    cp4.wait()
    o_ref[...] = jnp.maximum(linear(h3, w4_vmem[...], b4_ref), 0.0)


@jax.jit
def net_forward(x, kparams):
    (w1, b1, g1, be1, w2, b2, g2, be2, w3, b3, g3, be3, w4, b4) = kparams
    B = x.shape[0]

    # Pad the 3000-wide input to 3072 so every load/store is lane-dense.
    x_pad = jnp.pad(x, ((0, 0), (0, D_PAD - D_IN)))

    vmem = pl.BlockSpec(memory_space=pltpu.VMEM)
    hbm = pl.BlockSpec(memory_space=pl.ANY)

    mm_terms = D_PAD * H1 + H1 * H2 + H2 * H3 + H3 * D_PAD
    cost = pl.CostEstimate(
        flops=2 * B * mm_terms,
        bytes_accessed=2 * mm_terms + 4 * B * D_PAD * 2 + 4 * 4 * (H1 + H2 + H3),
        transcendentals=H1 + H2 + H3,
    )

    out_pad = pl.pallas_call(
        net_kernel,
        out_shape=jax.ShapeDtypeStruct((B, D_PAD), jnp.float32),
        in_specs=[vmem,                     # x (padded)
                  vmem, vmem, vmem, vmem,   # w1 (bf16), b1, gamma1, beta1
                  hbm, vmem, vmem, vmem,    # w2 (bf16, HBM), b2, gamma2, beta2
                  hbm, vmem, vmem, vmem,    # w3 (bf16, HBM), b3, gamma3, beta3
                  hbm, vmem],               # w4 (bf16, HBM), b4
        out_specs=vmem,
        scratch_shapes=[
            pltpu.VMEM((H1, H2), jnp.bfloat16),      # w2 landing buffer
            pltpu.VMEM((H2, H3), jnp.bfloat16),      # w3 landing buffer
            pltpu.VMEM((H3, D_PAD), jnp.bfloat16),   # w4 landing buffer
            pltpu.SemaphoreType.DMA((3,)),
        ],
        compiler_params=pltpu.CompilerParams(vmem_limit_bytes=32 << 20),
        cost_estimate=cost,
    )(x_pad, w1, b1, g1, be1, w2, b2, g2, be2, w3, b3, g3, be3, w4, b4)

    return out_pad[:, :D_IN]


def init_params(key):
    """PyTorch Linear default init (U[-1/sqrt(fan_in), 1/sqrt(fan_in)]), f32."""
    dims = [(D_IN, H1), (H1, H2), (H2, H3), (H3, D_IN)]
    params = []
    for i, (fan_in, fan_out) in enumerate(dims):
        key, kw, kb = jax.random.split(key, 3)
        bound = 1.0 / np.sqrt(fan_in)
        # weight stored already transposed: (in, out)
        w = jax.random.uniform(kw, (fan_in, fan_out), jnp.float32, -bound, bound)
        b = jax.random.uniform(kb, (1, fan_out), jnp.float32, -bound, bound)
        params.append(w)
        params.append(b)
        if i < 3:  # BN gamma/beta for fc1..fc3 outputs
            params.append(jnp.ones((1, fan_out), jnp.float32))   # gamma
            params.append(jnp.zeros((1, fan_out), jnp.float32))  # beta
    return tuple(params)


def prepare_kernel_params(params):
    """Cast weights to bf16 (halves HBM bytes) and zero-pad 3000-wide dims."""
    (w1, b1, g1, be1, w2, b2, g2, be2, w3, b3, g3, be3, w4, b4) = params
    w1k = jnp.pad(w1, ((0, D_PAD - D_IN), (0, 0))).astype(jnp.bfloat16)
    w2k = w2.astype(jnp.bfloat16)
    w3k = w3.astype(jnp.bfloat16)
    w4k = jnp.pad(w4, ((0, 0), (0, D_PAD - D_IN))).astype(jnp.bfloat16)
    b4k = jnp.pad(b4, ((0, 0), (0, D_PAD - D_IN)))
    return (w1k, b1, g1, be1, w2k, b2, g2, be2, w3k, b3, g3, be3, w4k, b4k)


def net_reference(x, kparams):
    """Pure-JAX reference with identical numerics (bf16 weights, f32 accum/BN)."""
    (w1, b1, g1, be1, w2, b2, g2, be2, w3, b3, g3, be3, w4, b4) = kparams

    def linear(h, w, b):
        return jnp.dot(h.astype(jnp.bfloat16), w,
                       preferred_element_type=jnp.float32) + b

    def bn_relu(h, g, be):
        mu = jnp.mean(h, axis=0, keepdims=True)
        var = jnp.mean((h - mu) ** 2, axis=0, keepdims=True)
        return jnp.maximum((h - mu) * jax.lax.rsqrt(var + EPS) * g + be, 0.0)

    x_pad = jnp.pad(x, ((0, 0), (0, D_PAD - D_IN)))
    h = bn_relu(linear(x_pad, w1, b1), g1, be1)
    h = bn_relu(linear(h, w2, b2), g2, be2)
    h = bn_relu(linear(h, w3, b3), g3, be3)
    return jnp.maximum(linear(h, w4, b4), 0.0)[:, :D_IN]


if __name__ == "__main__":
    key = jax.random.PRNGKey(0)
    key, kx, kp = jax.random.split(key, 3)

    B = 8  # BatchNorm1d batch statistics require B > 1
    x = jax.random.normal(kx, (B, D_IN), jnp.float32)
    kparams = prepare_kernel_params(init_params(kp))

    out = jax.block_until_ready(net_forward(x, kparams))

    ref = net_reference(x, kparams)
    np.testing.assert_allclose(np.asarray(out), np.asarray(ref),
                               rtol=2e-3, atol=2e-3)
    assert out.shape == (B, D_IN) and out.dtype == jnp.float32

    print("KERNEL_OK")
</pallas_src>

<mosaic_0001>
module attributes {stable_mosaic.version = 11 : i64} {
  func.func @net_kernel(%arg0: memref<8x3072xf32, #tpu.memory_space<vmem>>, %arg1: memref<3072x512xbf16, #tpu.memory_space<vmem>>, %arg2: memref<1x512xf32, #tpu.memory_space<vmem>>, %arg3: memref<1x512xf32, #tpu.memory_space<vmem>>, %arg4: memref<1x512xf32, #tpu.memory_space<vmem>>, %arg5: memref<512x256xbf16, #tpu.memory_space<any>>, %arg6: memref<1x256xf32, #tpu.memory_space<vmem>>, %arg7: memref<1x256xf32, #tpu.memory_space<vmem>>, %arg8: memref<1x256xf32, #tpu.memory_space<vmem>>, %arg9: memref<256x512xbf16, #tpu.memory_space<any>>, %arg10: memref<1x512xf32, #tpu.memory_space<vmem>>, %arg11: memref<1x512xf32, #tpu.memory_space<vmem>>, %arg12: memref<1x512xf32, #tpu.memory_space<vmem>>, %arg13: memref<512x3072xbf16, #tpu.memory_space<any>>, %arg14: memref<1x3072xf32, #tpu.memory_space<vmem>>, %arg15: memref<8x3072xf32, #tpu.memory_space<vmem>>, %arg16: memref<512x256xbf16, #tpu.memory_space<vmem>>, %arg17: memref<256x512xbf16, #tpu.memory_space<vmem>>, %arg18: memref<512x3072xbf16, #tpu.memory_space<vmem>>, %arg19: memref<3x!tpu.dma_semaphore, #tpu.memory_space<semaphore_mem>>) attributes {dimension_semantics = [], scalar_prefetch = 0 : i64, scratch_operands = 4 : i64, tpu.core_type = #tpu.core_type<tc>} {
    %c0_i32 = arith.constant 0 : i32
    %0 = tpu.memref_slice %arg19[%c0_i32] : memref<3x!tpu.dma_semaphore, #tpu.memory_space<semaphore_mem>> -> memref<1x!tpu.dma_semaphore, #tpu.memory_space<semaphore_mem>>
    %1 = tpu.memref_squeeze %0 : memref<1x!tpu.dma_semaphore, #tpu.memory_space<semaphore_mem>> -> memref<!tpu.dma_semaphore, #tpu.memory_space<semaphore_mem>>
    tpu.enqueue_dma source(%arg5 : memref<512x256xbf16, #tpu.memory_space<any>>) target(%arg16 : memref<512x256xbf16, #tpu.memory_space<vmem>>) target_semaphore(%1 : memref<!tpu.dma_semaphore, #tpu.memory_space<semaphore_mem>>)
    %c1_i32 = arith.constant 1 : i32
    %2 = tpu.memref_slice %arg19[%c1_i32] : memref<3x!tpu.dma_semaphore, #tpu.memory_space<semaphore_mem>> -> memref<1x!tpu.dma_semaphore, #tpu.memory_space<semaphore_mem>>
    %3 = tpu.memref_squeeze %2 : memref<1x!tpu.dma_semaphore, #tpu.memory_space<semaphore_mem>> -> memref<!tpu.dma_semaphore, #tpu.memory_space<semaphore_mem>>
    tpu.enqueue_dma source(%arg9 : memref<256x512xbf16, #tpu.memory_space<any>>) target(%arg17 : memref<256x512xbf16, #tpu.memory_space<vmem>>) target_semaphore(%3 : memref<!tpu.dma_semaphore, #tpu.memory_space<semaphore_mem>>)
    %c2_i32 = arith.constant 2 : i32
    %4 = tpu.memref_slice %arg19[%c2_i32] : memref<3x!tpu.dma_semaphore, #tpu.memory_space<semaphore_mem>> -> memref<1x!tpu.dma_semaphore, #tpu.memory_space<semaphore_mem>>
    %5 = tpu.memref_squeeze %4 : memref<1x!tpu.dma_semaphore, #tpu.memory_space<semaphore_mem>> -> memref<!tpu.dma_semaphore, #tpu.memory_space<semaphore_mem>>
    tpu.enqueue_dma source(%arg13 : memref<512x3072xbf16, #tpu.memory_space<any>>) target(%arg18 : memref<512x3072xbf16, #tpu.memory_space<vmem>>) target_semaphore(%5 : memref<!tpu.dma_semaphore, #tpu.memory_space<semaphore_mem>>)
    %c0 = arith.constant 0 : index
    %c0_0 = arith.constant 0 : index
    %6 = vector.load %arg0[%c0, %c0_0] : memref<8x3072xf32, #tpu.memory_space<vmem>>, vector<8x3072xf32>
    %c0_1 = arith.constant 0 : index
    %c0_2 = arith.constant 0 : index
    %7 = vector.load %arg1[%c0_1, %c0_2] : memref<3072x512xbf16, #tpu.memory_space<vmem>>, vector<3072x512xbf16>
    %8 = arith.truncf %6 : vector<8x3072xf32> to vector<8x3072xbf16>
    %cst = arith.constant dense<0.000000e+00> : vector<8x512xf32>
    %9 = tpu.matmul %8, %7, %cst {dimension_numbers = #tpu.dot_dimension_numbers<[1], [0], [0], [1], [0, 0, 1, 1], [], []>} : vector<8x3072xbf16>, vector<3072x512xbf16>, vector<8x512xf32> -> vector<8x512xf32>
    %c0_3 = arith.constant 0 : index
    %c0_4 = arith.constant 0 : index
    %10 = vector.load %arg2[%c0_3, %c0_4] : memref<1x512xf32, #tpu.memory_space<vmem>>, vector<1x512xf32>
    %11 = vector.broadcast %10 : vector<1x512xf32> to vector<8x512xf32>
    %12 = arith.addf %9, %11 : vector<8x512xf32>
    %cst_5 = arith.constant dense<0.000000e+00> : vector<512xf32>
    %13 = vector.multi_reduction <add>, %12, %cst_5 [0] : vector<8x512xf32> to vector<512xf32>
    %14 = vector.shape_cast %13 : vector<512xf32> to vector<1x512xf32>
    %cst_6 = arith.constant 8.000000e+00 : f32
    %15 = vector.broadcast %cst_6 : f32 to vector<1x512xf32>
    %16 = arith.divf %14, %15 : vector<1x512xf32>
    %17 = vector.broadcast %16 : vector<1x512xf32> to vector<8x512xf32>
    %18 = arith.subf %12, %17 : vector<8x512xf32>
    %19 = vector.broadcast %16 : vector<1x512xf32> to vector<8x512xf32>
    %20 = arith.subf %12, %19 : vector<8x512xf32>
    %21 = arith.mulf %18, %20 : vector<8x512xf32>
    %cst_7 = arith.constant dense<0.000000e+00> : vector<512xf32>
    %22 = vector.multi_reduction <add>, %21, %cst_7 [0] : vector<8x512xf32> to vector<512xf32>
    %23 = vector.shape_cast %22 : vector<512xf32> to vector<1x512xf32>
    %cst_8 = arith.constant 8.000000e+00 : f32
    %24 = vector.broadcast %cst_8 : f32 to vector<1x512xf32>
    %25 = arith.divf %23, %24 : vector<1x512xf32>
    %c0_9 = arith.constant 0 : index
    %c0_10 = arith.constant 0 : index
    %26 = vector.load %arg3[%c0_9, %c0_10] : memref<1x512xf32, #tpu.memory_space<vmem>>, vector<1x512xf32>
    %cst_11 = arith.constant 9.99999974E-6 : f32
    %27 = vector.broadcast %cst_11 : f32 to vector<1x512xf32>
    %28 = arith.addf %25, %27 : vector<1x512xf32>
    %29 = math.rsqrt %28 : vector<1x512xf32>
    %30 = arith.mulf %26, %29 : vector<1x512xf32>
    %c0_12 = arith.constant 0 : index
    %c0_13 = arith.constant 0 : index
    %31 = vector.load %arg4[%c0_12, %c0_13] : memref<1x512xf32, #tpu.memory_space<vmem>>, vector<1x512xf32>
    %32 = arith.mulf %16, %30 : vector<1x512xf32>
    %33 = arith.subf %31, %32 : vector<1x512xf32>
    %34 = vector.broadcast %30 : vector<1x512xf32> to vector<8x512xf32>
    %35 = arith.mulf %12, %34 : vector<8x512xf32>
    %36 = vector.broadcast %33 : vector<1x512xf32> to vector<8x512xf32>
    %37 = arith.addf %35, %36 : vector<8x512xf32>
    %cst_14 = arith.constant 0.000000e+00 : f32
    %38 = vector.broadcast %cst_14 : f32 to vector<8x512xf32>
    %39 = arith.maximumf %37, %38 : vector<8x512xf32>
    %c0_i32_15 = arith.constant 0 : i32
    %40 = tpu.memref_slice %arg19[%c0_i32_15] : memref<3x!tpu.dma_semaphore, #tpu.memory_space<semaphore_mem>> -> memref<1x!tpu.dma_semaphore, #tpu.memory_space<semaphore_mem>>
    %41 = tpu.memref_squeeze %40 : memref<1x!tpu.dma_semaphore, #tpu.memory_space<semaphore_mem>> -> memref<!tpu.dma_semaphore, #tpu.memory_space<semaphore_mem>>
    tpu.wait_dma2 semaphore(%41 : memref<!tpu.dma_semaphore, #tpu.memory_space<semaphore_mem>>) src(%arg5 : memref<512x256xbf16, #tpu.memory_space<any>>) dst(%arg16 : memref<512x256xbf16, #tpu.memory_space<vmem>>)
    %c0_16 = arith.constant 0 : index
    %c0_17 = arith.constant 0 : index
    %42 = vector.load %arg16[%c0_16, %c0_17] : memref<512x256xbf16, #tpu.memory_space<vmem>>, vector<512x256xbf16>
    %43 = arith.truncf %39 : vector<8x512xf32> to vector<8x512xbf16>
    %cst_18 = arith.constant dense<0.000000e+00> : vector<8x256xf32>
    %44 = tpu.matmul %43, %42, %cst_18 {dimension_numbers = #tpu.dot_dimension_numbers<[1], [0], [0], [1], [0, 0, 1, 1], [], []>} : vector<8x512xbf16>, vector<512x256xbf16>, vector<8x256xf32> -> vector<8x256xf32>
    %c0_19 = arith.constant 0 : index
    %c0_20 = arith.constant 0 : index
    %45 = vector.load %arg6[%c0_19, %c0_20] : memref<1x256xf32, #tpu.memory_space<vmem>>, vector<1x256xf32>
    %46 = vector.broadcast %45 : vector<1x256xf32> to vector<8x256xf32>
    %47 = arith.addf %44, %46 : vector<8x256xf32>
    %cst_21 = arith.constant dense<0.000000e+00> : vector<256xf32>
    %48 = vector.multi_reduction <add>, %47, %cst_21 [0] : vector<8x256xf32> to vector<256xf32>
    %49 = vector.shape_cast %48 : vector<256xf32> to vector<1x256xf32>
    %cst_22 = arith.constant 8.000000e+00 : f32
    %50 = vector.broadcast %cst_22 : f32 to vector<1x256xf32>
    %51 = arith.divf %49, %50 : vector<1x256xf32>
    %52 = vector.broadcast %51 : vector<1x256xf32> to vector<8x256xf32>
    %53 = arith.subf %47, %52 : vector<8x256xf32>
    %54 = vector.broadcast %51 : vector<1x256xf32> to vector<8x256xf32>
    %55 = arith.subf %47, %54 : vector<8x256xf32>
    %56 = arith.mulf %53, %55 : vector<8x256xf32>
    %cst_23 = arith.constant dense<0.000000e+00> : vector<256xf32>
    %57 = vector.multi_reduction <add>, %56, %cst_23 [0] : vector<8x256xf32> to vector<256xf32>
    %58 = vector.shape_cast %57 : vector<256xf32> to vector<1x256xf32>
    %cst_24 = arith.constant 8.000000e+00 : f32
    %59 = vector.broadcast %cst_24 : f32 to vector<1x256xf32>
    %60 = arith.divf %58, %59 : vector<1x256xf32>
    %c0_25 = arith.constant 0 : index
    %c0_26 = arith.constant 0 : index
    %61 = vector.load %arg7[%c0_25, %c0_26] : memref<1x256xf32, #tpu.memory_space<vmem>>, vector<1x256xf32>
    %cst_27 = arith.constant 9.99999974E-6 : f32
    %62 = vector.broadcast %cst_27 : f32 to vector<1x256xf32>
    %63 = arith.addf %60, %62 : vector<1x256xf32>
    %64 = math.rsqrt %63 : vector<1x256xf32>
    %65 = arith.mulf %61, %64 : vector<1x256xf32>
    %c0_28 = arith.constant 0 : index
    %c0_29 = arith.constant 0 : index
    %66 = vector.load %arg8[%c0_28, %c0_29] : memref<1x256xf32, #tpu.memory_space<vmem>>, vector<1x256xf32>
    %67 = arith.mulf %51, %65 : vector<1x256xf32>
    %68 = arith.subf %66, %67 : vector<1x256xf32>
    %69 = vector.broadcast %65 : vector<1x256xf32> to vector<8x256xf32>
    %70 = arith.mulf %47, %69 : vector<8x256xf32>
    %71 = vector.broadcast %68 : vector<1x256xf32> to vector<8x256xf32>
    %72 = arith.addf %70, %71 : vector<8x256xf32>
    %cst_30 = arith.constant 0.000000e+00 : f32
    %73 = vector.broadcast %cst_30 : f32 to vector<8x256xf32>
    %74 = arith.maximumf %72, %73 : vector<8x256xf32>
    %c1_i32_31 = arith.constant 1 : i32
    %75 = tpu.memref_slice %arg19[%c1_i32_31] : memref<3x!tpu.dma_semaphore, #tpu.memory_space<semaphore_mem>> -> memref<1x!tpu.dma_semaphore, #tpu.memory_space<semaphore_mem>>
    %76 = tpu.memref_squeeze %75 : memref<1x!tpu.dma_semaphore, #tpu.memory_space<semaphore_mem>> -> memref<!tpu.dma_semaphore, #tpu.memory_space<semaphore_mem>>
    tpu.wait_dma2 semaphore(%76 : memref<!tpu.dma_semaphore, #tpu.memory_space<semaphore_mem>>) src(%arg9 : memref<256x512xbf16, #tpu.memory_space<any>>) dst(%arg17 : memref<256x512xbf16, #tpu.memory_space<vmem>>)
    %c0_32 = arith.constant 0 : index
    %c0_33 = arith.constant 0 : index
    %77 = vector.load %arg17[%c0_32, %c0_33] : memref<256x512xbf16, #tpu.memory_space<vmem>>, vector<256x512xbf16>
    %78 = arith.truncf %74 : vector<8x256xf32> to vector<8x256xbf16>
    %cst_34 = arith.constant dense<0.000000e+00> : vector<8x512xf32>
    %79 = tpu.matmul %78, %77, %cst_34 {dimension_numbers = #tpu.dot_dimension_numbers<[1], [0], [0], [1], [0, 0, 1, 1], [], []>} : vector<8x256xbf16>, vector<256x512xbf16>, vector<8x512xf32> -> vector<8x512xf32>
    %c0_35 = arith.constant 0 : index
    %c0_36 = arith.constant 0 : index
    %80 = vector.load %arg10[%c0_35, %c0_36] : memref<1x512xf32, #tpu.memory_space<vmem>>, vector<1x512xf32>
    %81 = vector.broadcast %80 : vector<1x512xf32> to vector<8x512xf32>
    %82 = arith.addf %79, %81 : vector<8x512xf32>
    %cst_37 = arith.constant dense<0.000000e+00> : vector<512xf32>
    %83 = vector.multi_reduction <add>, %82, %cst_37 [0] : vector<8x512xf32> to vector<512xf32>
    %84 = vector.shape_cast %83 : vector<512xf32> to vector<1x512xf32>
    %cst_38 = arith.constant 8.000000e+00 : f32
    %85 = vector.broadcast %cst_38 : f32 to vector<1x512xf32>
    %86 = arith.divf %84, %85 : vector<1x512xf32>
    %87 = vector.broadcast %86 : vector<1x512xf32> to vector<8x512xf32>
    %88 = arith.subf %82, %87 : vector<8x512xf32>
    %89 = vector.broadcast %86 : vector<1x512xf32> to vector<8x512xf32>
    %90 = arith.subf %82, %89 : vector<8x512xf32>
    %91 = arith.mulf %88, %90 : vector<8x512xf32>
    %cst_39 = arith.constant dense<0.000000e+00> : vector<512xf32>
    %92 = vector.multi_reduction <add>, %91, %cst_39 [0] : vector<8x512xf32> to vector<512xf32>
    %93 = vector.shape_cast %92 : vector<512xf32> to vector<1x512xf32>
    %cst_40 = arith.constant 8.000000e+00 : f32
    %94 = vector.broadcast %cst_40 : f32 to vector<1x512xf32>
    %95 = arith.divf %93, %94 : vector<1x512xf32>
    %c0_41 = arith.constant 0 : index
    %c0_42 = arith.constant 0 : index
    %96 = vector.load %arg11[%c0_41, %c0_42] : memref<1x512xf32, #tpu.memory_space<vmem>>, vector<1x512xf32>
    %cst_43 = arith.constant 9.99999974E-6 : f32
    %97 = vector.broadcast %cst_43 : f32 to vector<1x512xf32>
    %98 = arith.addf %95, %97 : vector<1x512xf32>
    %99 = math.rsqrt %98 : vector<1x512xf32>
    %100 = arith.mulf %96, %99 : vector<1x512xf32>
    %c0_44 = arith.constant 0 : index
    %c0_45 = arith.constant 0 : index
    %101 = vector.load %arg12[%c0_44, %c0_45] : memref<1x512xf32, #tpu.memory_space<vmem>>, vector<1x512xf32>
    %102 = arith.mulf %86, %100 : vector<1x512xf32>
    %103 = arith.subf %101, %102 : vector<1x512xf32>
    %104 = vector.broadcast %100 : vector<1x512xf32> to vector<8x512xf32>
    %105 = arith.mulf %82, %104 : vector<8x512xf32>
    %106 = vector.broadcast %103 : vector<1x512xf32> to vector<8x512xf32>
    %107 = arith.addf %105, %106 : vector<8x512xf32>
    %cst_46 = arith.constant 0.000000e+00 : f32
    %108 = vector.broadcast %cst_46 : f32 to vector<8x512xf32>
    %109 = arith.maximumf %107, %108 : vector<8x512xf32>
    %c2_i32_47 = arith.constant 2 : i32
    %110 = tpu.memref_slice %arg19[%c2_i32_47] : memref<3x!tpu.dma_semaphore, #tpu.memory_space<semaphore_mem>> -> memref<1x!tpu.dma_semaphore, #tpu.memory_space<semaphore_mem>>
    %111 = tpu.memref_squeeze %110 : memref<1x!tpu.dma_semaphore, #tpu.memory_space<semaphore_mem>> -> memref<!tpu.dma_semaphore, #tpu.memory_space<semaphore_mem>>
    tpu.wait_dma2 semaphore(%111 : memref<!tpu.dma_semaphore, #tpu.memory_space<semaphore_mem>>) src(%arg13 : memref<512x3072xbf16, #tpu.memory_space<any>>) dst(%arg18 : memref<512x3072xbf16, #tpu.memory_space<vmem>>)
    %c0_48 = arith.constant 0 : index
    %c0_49 = arith.constant 0 : index
    %112 = vector.load %arg18[%c0_48, %c0_49] : memref<512x3072xbf16, #tpu.memory_space<vmem>>, vector<512x3072xbf16>
    %113 = arith.truncf %109 : vector<8x512xf32> to vector<8x512xbf16>
    %cst_50 = arith.constant dense<0.000000e+00> : vector<8x3072xf32>
    %114 = tpu.matmul %113, %112, %cst_50 {dimension_numbers = #tpu.dot_dimension_numbers<[1], [0], [0], [1], [0, 0, 1, 1], [], []>} : vector<8x512xbf16>, vector<512x3072xbf16>, vector<8x3072xf32> -> vector<8x3072xf32>
    %c0_51 = arith.constant 0 : index
    %c0_52 = arith.constant 0 : index
    %115 = vector.load %arg14[%c0_51, %c0_52] : memref<1x3072xf32, #tpu.memory_space<vmem>>, vector<1x3072xf32>
    %116 = vector.broadcast %115 : vector<1x3072xf32> to vector<8x3072xf32>
    %117 = arith.addf %114, %116 : vector<8x3072xf32>
    %cst_53 = arith.constant 0.000000e+00 : f32
    %118 = vector.broadcast %cst_53 : f32 to vector<8x3072xf32>
    %119 = arith.maximumf %117, %118 : vector<8x3072xf32>
    %c0_54 = arith.constant 0 : index
    %c0_55 = arith.constant 0 : index
    %120 = vector.load %arg15[%c0_54, %c0_55] : memref<8x3072xf32, #tpu.memory_space<vmem>>, vector<8x3072xf32>
    tpu.vector_store %arg15[%c0_54, %c0_55], %119 {strides = array<i32>} : memref<8x3072xf32, #tpu.memory_space<vmem>>, vector<8x3072xf32>,
    return
  }
}

</mosaic_0001>

<llo_original>
// kernel: net_forward.1
$region0: #{net_forward.1}
  #allocation0 [shape = 'u32[]', space=smem, size = 0x4, offset = 0x4, fixed_abs, tag = 'smem constant byte address 0x4 - core index']
  #allocation1 [shape = 'u32[144,128]{1,0:T(1,128)}', space=vmem, size = 0x12000, scoped, tag = 'internal scratch']
  #allocation2 [shape = 'bf16[512,256]{1,0:T(16,128)(2,1)}', space=vmem, size = 0x40000, scoped, tag = 'scratch operand']
  #allocation3 [shape = 'bf16[256,512]{1,0:T(16,128)(2,1)}', space=vmem, size = 0x40000, scoped, tag = 'scratch operand']
  #allocation4 [shape = 'bf16[512,3072]{1,0:T(16,128)(2,1)}', space=vmem, size = 0x300000, scoped, tag = 'scratch operand']
  #allocation5 [shape = 's32[3]{0}', space=sflag, size = 0xc, scoped, tag = 'scratch operand']
  #allocation25 [shape = 's32[]', space=sflag, size = 0x4, offset = 0, fixed_abs, tag = 'sflag constant byte address 0x0 - dummy sync flag']
  #allocation27 [shape = 's32[]', space=sflag, size = 0x4, offset = 0, fixed_abs, tag = 'sflag constant byte address 0x0 - dummy sync flag']
  #allocation29 [shape = 's32[]', space=sflag, size = 0x4, offset = 0, fixed_abs, tag = 'sflag constant byte address 0x0 - dummy sync flag']
  %s0 = inlined_call_operand.vmem [shape: f32[8,3072], index: 0, kind: input, shape index: {}]
  %s1 = inlined_call_operand.hbm [shape: bf16[3072,512], index: 1, kind: input, shape index: {}]
  %s2 = inlined_call_operand.hbm [shape: f32[1,512], index: 2, kind: input, shape index: {}]
  %s3 = inlined_call_operand.hbm [shape: f32[1,512], index: 3, kind: input, shape index: {}]
  %s4 = inlined_call_operand.hbm [shape: f32[1,512], index: 4, kind: input, shape index: {}]
  %s5 = inlined_call_operand.hbm [shape: bf16[512,256], index: 5, kind: input, shape index: {}]
  %s6 = inlined_call_operand.hbm [shape: f32[1,256], index: 6, kind: input, shape index: {}]
  %s7 = inlined_call_operand.hbm [shape: f32[1,256], index: 7, kind: input, shape index: {}]
  %s8 = inlined_call_operand.hbm [shape: f32[1,256], index: 8, kind: input, shape index: {}]
  %s9 = inlined_call_operand.hbm [shape: bf16[256,512], index: 9, kind: input, shape index: {}]
  %s10 = inlined_call_operand.hbm [shape: f32[1,512], index: 10, kind: input, shape index: {}]
  %s11 = inlined_call_operand.hbm [shape: f32[1,512], index: 11, kind: input, shape index: {}]
  %s12 = inlined_call_operand.hbm [shape: f32[1,512], index: 12, kind: input, shape index: {}]
  %s13 = inlined_call_operand.hbm [shape: bf16[512,3072], index: 13, kind: input, shape index: {}]
  %s14 = inlined_call_operand.hbm [shape: f32[1,3072], index: 14, kind: input, shape index: {}]
  %s15 = inlined_call_operand.hbm [shape: f32[8,3072], index: 15, kind: output, shape index: {}]
  %s16 = sld [smem:[#allocation0]]
  $region102: #{net_forward.1} parent=0
    _
  %s18 = ssub.s32 1, %s16
  %s19 = scalar_select 0, %s18, %s16
  $region1: #{net_forward.1} parent=0
    #allocation6 [shape = 'u8[3145728]{0}', space=vmem, size = 0x300000, scoped, tag = 'input window, operand 1, single buffered']
    #allocation7 [shape = 's32[1]{0}', space=sflag, size = 0x4, scoped, tag = 'scoped memory for net_forward.1']
    #allocation8 [shape = 's32[1]{0}', space=sflag, size = 0x4, scoped, tag = 'scoped memory for net_forward.1']
    #allocation9 [shape = 'u8[2048]{0}', space=vmem, size = 0x800, scoped, tag = 'input window, operand 2, single buffered']
    #allocation10 [shape = 's32[1]{0}', space=sflag, size = 0x4, scoped, tag = 'scoped memory for net_forward.1']
    #allocation11 [shape = 'u8[2048]{0}', space=vmem, size = 0x800, scoped, tag = 'input window, operand 3, single buffered']
    #allocation12 [shape = 'u8[2048]{0}', space=vmem, size = 0x800, scoped, tag = 'input window, operand 4, single buffered']
    #allocation13 [shape = 's32[1]{0}', space=sflag, size = 0x4, scoped, tag = 'scoped memory for net_forward.1']
    #allocation14 [shape = 'u8[1024]{0}', space=vmem, size = 0x400, scoped, tag = 'input window, operand 6, single buffered']
    #allocation15 [shape = 'u8[1024]{0}', space=vmem, size = 0x400, scoped, tag = 'input window, operand 7, single buffered']
    #allocation16 [shape = 's32[1]{0}', space=sflag, size = 0x4, scoped, tag = 'scoped memory for net_forward.1']
    #allocation17 [shape = 'u8[1024]{0}', space=vmem, size = 0x400, scoped, tag = 'input window, operand 8, single buffered']
    #allocation18 [shape = 'u8[2048]{0}', space=vmem, size = 0x800, scoped, tag = 'input window, operand 10, single buffered']
    #allocation19 [shape = 's32[1]{0}', space=sflag, size = 0x4, scoped, tag = 'scoped memory for net_forward.1']
    #allocation20 [shape = 'u8[2048]{0}', space=vmem, size = 0x800, scoped, tag = 'input window, operand 11, single buffered']
    #allocation21 [shape = 'u8[2048]{0}', space=vmem, size = 0x800, scoped, tag = 'input window, operand 12, single buffered']
    #allocation22 [shape = 's32[1]{0}', space=sflag, size = 0x4, scoped, tag = 'scoped memory for net_forward.1']
    #allocation23 [shape = 'u8[12288]{0}', space=vmem, size = 0x3000, scoped, tag = 'input window, operand 14, single buffered']
    #allocation24 [shape = 'u8[98304]{0}', space=vmem, size = 0x18000, scoped, tag = 'output window, operand 0, single buffered']
    #allocation26 [shape = 'u32[9]{0}', space=smem, size = 0x24, scoped, tag = 'DMA stride descriptor']
    #allocation28 [shape = 'u32[9]{0}', space=smem, size = 0x24, scoped, tag = 'DMA stride descriptor']
    #allocation30 [shape = 'u32[9]{0}', space=smem, size = 0x24, scoped, tag = 'DMA stride descriptor']
    %20 = vsyncpa [#allocation7], 0
    %21 = vsyncpa [#allocation10], 0
    %22 = vsyncpa [#allocation13], 0
    %23 = vsyncpa [#allocation16], 0
    %24 = vsyncpa [#allocation19], 0
    %25 = vsyncpa [#allocation22], 0
    %26 = vsyncpa [#allocation8], 0
    // Predicated region
    $region2: #{net_forward.1} parent=1 // pred_check
      _
    $region3: #{net_forward.1} parent=1 // pred_check_branch
      %28 = sbr.rel (0) target = $region5
    $region4: #{net_forward.1} parent=1 // pred_region
      _
    $region5: #{net_forward.1} parent=1 // pred_fallthru
      _
    // Predicated region
    $region6: #{net_forward.1} parent=1 // pred_check
      _
    $region7: #{net_forward.1} parent=1 // pred_check_branch
      %30 = sbr.rel (0) target = $region9
    $region8: #{net_forward.1} parent=1 // pred_region
      %s32 = ssub.s32 98304, 98304
      %33 = vsyncadd [#allocation7], %s32
      %s34 = sshll.u32 [#allocation6], 4
      %s35 = int_to_ptr.vmem [resolvable:$true] %s34
      %40 = dma.hbm_to_vmem [thread:$0]  %s1, 98304, %s35, [#allocation7], 256, 256, 16
    $region9: #{net_forward.1} parent=1 // pred_fallthru
      _
    // Predicated region
    $region10: #{net_forward.1} parent=1 // pred_check
      _
    $region11: #{net_forward.1} parent=1 // pred_check_branch
      %42 = sbr.rel (0) target = $region13
    $region12: #{net_forward.1} parent=1 // pred_region
      %s44 = ssub.s32 64, 64
      %45 = vsyncadd [#allocation10], %s44
      %s47 = sshll.u32 [#allocation9], 4
      %s48 = int_to_ptr.vmem [resolvable:$true] %s47
      %50 = dma.hbm_to_vmem [thread:$0]  %s2, 64, %s48, [#allocation10]
    $region13: #{net_forward.1} parent=1 // pred_fallthru
      _
    // Predicated region
    $region14: #{net_forward.1} parent=1 // pred_check
      _
    $region15: #{net_forward.1} parent=1 // pred_check_branch
      %52 = sbr.rel (0) target = $region17
    $region16: #{net_forward.1} parent=1 // pred_region
      %s54 = ssub.s32 64, 64
      %55 = vsyncadd [#allocation10], %s54
      %s57 = sshll.u32 [#allocation11], 4
      %s58 = int_to_ptr.vmem [resolvable:$true] %s57
      %60 = dma.hbm_to_vmem [thread:$0]  %s3, 64, %s58, [#allocation10]
    $region17: #{net_forward.1} parent=1 // pred_fallthru
      _
    // Predicated region
    $region18: #{net_forward.1} parent=1 // pred_check
      _
    $region19: #{net_forward.1} parent=1 // pred_check_branch
      %62 = sbr.rel (0) target = $region21
    $region20: #{net_forward.1} parent=1 // pred_region
      %s64 = ssub.s32 64, 64
      %65 = vsyncadd [#allocation13], %s64
      %s67 = sshll.u32 [#allocation12], 4
      %s68 = int_to_ptr.vmem [resolvable:$true] %s67
      %70 = dma.hbm_to_vmem [thread:$0]  %s4, 64, %s68, [#allocation13]
    $region21: #{net_forward.1} parent=1 // pred_fallthru
      _
    // Predicated region
    $region22: #{net_forward.1} parent=1 // pred_check
      _
    $region23: #{net_forward.1} parent=1 // pred_check_branch
      %72 = sbr.rel (0) target = $region25
    $region24: #{net_forward.1} parent=1 // pred_region
      %s74 = ssub.s32 32, 32
      %75 = vsyncadd [#allocation13], %s74
      %s77 = sshll.u32 [#allocation14], 4
      %s78 = int_to_ptr.vmem [resolvable:$true] %s77
      %80 = dma.hbm_to_vmem [thread:$0]  %s6, 32, %s78, [#allocation13]
    $region25: #{net_forward.1} parent=1 // pred_fallthru
      _
    // Predicated region
    $region26: #{net_forward.1} parent=1 // pred_check
      _
    $region27: #{net_forward.1} parent=1 // pred_check_branch
      %82 = sbr.rel (0) target = $region29
    $region28: #{net_forward.1} parent=1 // pred_region
      %s84 = ssub.s32 32, 32
      %85 = vsyncadd [#allocation16], %s84
      %s87 = sshll.u32 [#allocation15], 4
      %s88 = int_to_ptr.vmem [resolvable:$true] %s87
      %90 = dma.hbm_to_vmem [thread:$0]  %s7, 32, %s88, [#allocation16]
    $region29: #{net_forward.1} parent=1 // pred_fallthru
      _
    // Predicated region
    $region30: #{net_forward.1} parent=1 // pred_check
      _
    $region31: #{net_forward.1} parent=1 // pred_check_branch
      %92 = sbr.rel (0) target = $region33
    $region32: #{net_forward.1} parent=1 // pred_region
      %s94 = ssub.s32 32, 32
      %95 = vsyncadd [#allocation16], %s94
      %s97 = sshll.u32 [#allocation17], 4
      %s98 = int_to_ptr.vmem [resolvable:$true] %s97
      %100 = dma.hbm_to_vmem [thread:$0]  %s8, 32, %s98, [#allocation16]
    $region33: #{net_forward.1} parent=1 // pred_fallthru
      _
    // Predicated region
    $region34: #{net_forward.1} parent=1 // pred_check
      _
    $region35: #{net_forward.1} parent=1 // pred_check_branch
      %102 = sbr.rel (0) target = $region37
    $region36: #{net_forward.1} parent=1 // pred_region
      %s104 = ssub.s32 64, 64
      %105 = vsyncadd [#allocation19], %s104
      %s107 = sshll.u32 [#allocation18], 4
      %s108 = int_to_ptr.vmem [resolvable:$true] %s107
      %110 = dma.hbm_to_vmem [thread:$0]  %s10, 64, %s108, [#allocation19]
    $region37: #{net_forward.1} parent=1 // pred_fallthru
      _
    // Predicated region
    $region38: #{net_forward.1} parent=1 // pred_check
      _
    $region39: #{net_forward.1} parent=1 // pred_check_branch
      %112 = sbr.rel (0) target = $region41
    $region40: #{net_forward.1} parent=1 // pred_region
      %s114 = ssub.s32 64, 64
      %115 = vsyncadd [#allocation19], %s114
      %s117 = sshll.u32 [#allocation20], 4
      %s118 = int_to_ptr.vmem [resolvable:$true] %s117
      %120 = dma.hbm_to_vmem [thread:$0]  %s11, 64, %s118, [#allocation19]
    $region41: #{net_forward.1} parent=1 // pred_fallthru
      _
    // Predicated region
    $region42: #{net_forward.1} parent=1 // pred_check
      _
    $region43: #{net_forward.1} parent=1 // pred_check_branch
      %122 = sbr.rel (0) target = $region45
    $region44: #{net_forward.1} parent=1 // pred_region
      %s124 = ssub.s32 64, 64
      %125 = vsyncadd [#allocation22], %s124
      %s127 = sshll.u32 [#allocation21], 4
      %s128 = int_to_ptr.vmem [resolvable:$true] %s127
      %130 = dma.hbm_to_vmem [thread:$0]  %s12, 64, %s128, [#allocation22]
    $region45: #{net_forward.1} parent=1 // pred_fallthru
      _
    // Predicated region
    $region46: #{net_forward.1} parent=1 // pred_check
      _
    $region47: #{net_forward.1} parent=1 // pred_check_branch
      %132 = sbr.rel (0) target = $region49
    $region48: #{net_forward.1} parent=1 // pred_region
      %s134 = ssub.s32 384, 384
      %135 = vsyncadd [#allocation22], %s134
      %s137 = sshll.u32 [#allocation23], 4
      %s138 = int_to_ptr.vmem [resolvable:$true] %s137
      %140 = dma.hbm_to_vmem [thread:$0]  %s14, 384, %s138, [#allocation22]
    $region49: #{net_forward.1} parent=1 // pred_fallthru
      _
    // Predicated region
    $region50: #{net_forward.1} parent=1 // pred_check
      _
    $region51: #{net_forward.1} parent=1 // pred_check_branch
      %142 = sbr.rel (0) target = $region53
    $region52: #{net_forward.1} parent=1 // pred_region
      %143 = dma.done [#allocation7], 98304
    $region53: #{net_forward.1} parent=1 // pred_fallthru
      _
    // Predicated region
    $region54: #{net_forward.1} parent=1 // pred_check
      _
    $region55: #{net_forward.1} parent=1 // pred_check_branch
      %145 = sbr.rel (0) target = $region57
    $region56: #{net_forward.1} parent=1 // pred_region
      %146 = dma.done [#allocation10], 64
    $region57: #{net_forward.1} parent=1 // pred_fallthru
      _
    // Predicated region
    $region58: #{net_forward.1} parent=1 // pred_check
      _
    $region59: #{net_forward.1} parent=1 // pred_check_branch
      %148 = sbr.rel (0) target = $region61
    $region60: #{net_forward.1} parent=1 // pred_region
      %149 = dma.done [#allocation10], 64
    $region61: #{net_forward.1} parent=1 // pred_fallthru
      _
    // Predicated region
    $region62: #{net_forward.1} parent=1 // pred_check
      _
    $region63: #{net_forward.1} parent=1 // pred_check_branch
      %151 = sbr.rel (0) target = $region65
    $region64: #{net_forward.1} parent=1 // pred_region
      %152 = dma.done [#allocation13], 64
    $region65: #{net_forward.1} parent=1 // pred_fallthru
      _
    // Predicated region
    $region66: #{net_forward.1} parent=1 // pred_check
      _
    $region67: #{net_forward.1} parent=1 // pred_check_branch
      %154 = sbr.rel (0) target = $region69
    $region68: #{net_forward.1} parent=1 // pred_region
      %155 = dma.done [#allocation13], 32
    $region69: #{net_forward.1} parent=1 // pred_fallthru
      _
    // Predicated region
    $region70: #{net_forward.1} parent=1 // pred_check
      _
    $region71: #{net_forward.1} parent=1 // pred_check_branch
      %157 = sbr.rel (0) target = $region73
    $region72: #{net_forward.1} parent=1 // pred_region
      %158 = dma.done [#allocation16], 32
    $region73: #{net_forward.1} parent=1 // pred_fallthru
      _
    // Predicated region
    $region74: #{net_forward.1} parent=1 // pred_check
      _
    $region75: #{net_forward.1} parent=1 // pred_check_branch
      %160 = sbr.rel (0) target = $region77
    $region76: #{net_forward.1} parent=1 // pred_region
      %161 = dma.done [#allocation16], 32
    $region77: #{net_forward.1} parent=1 // pred_fallthru
      _
    // Predicated region
    $region78: #{net_forward.1} parent=1 // pred_check
      _
    $region79: #{net_forward.1} parent=1 // pred_check_branch
      %163 = sbr.rel (0) target = $region81
    $region80: #{net_forward.1} parent=1 // pred_region
      %164 = dma.done [#allocation19], 64
    $region81: #{net_forward.1} parent=1 // pred_fallthru
      _
    // Predicated region
    $region82: #{net_forward.1} parent=1 // pred_check
      _
    $region83: #{net_forward.1} parent=1 // pred_check_branch
      %166 = sbr.rel (0) target = $region85
    $region84: #{net_forward.1} parent=1 // pred_region
      %167 = dma.done [#allocation19], 64
    $region85: #{net_forward.1} parent=1 // pred_fallthru
      _
    // Predicated region
    $region86: #{net_forward.1} parent=1 // pred_check
      _
    $region87: #{net_forward.1} parent=1 // pred_check_branch
      %169 = sbr.rel (0) target = $region89
    $region88: #{net_forward.1} parent=1 // pred_region
      %170 = dma.done [#allocation22], 64
    $region89: #{net_forward.1} parent=1 // pred_fallthru
      _
    // Predicated region
    $region90: #{net_forward.1} parent=1 // pred_check
      _
    $region91: #{net_forward.1} parent=1 // pred_check_branch
      %172 = sbr.rel (0) target = $region93
    $region92: #{net_forward.1} parent=1 // pred_region
      %173 = dma.done [#allocation22], 384
    $region93: #{net_forward.1} parent=1 // pred_fallthru
      _
    %s175 = sshll.u32 1, 14
    %s176 = sxor.u32 4294967295, %s175
    %s178 = sld [smem:[#allocation0]]
    %s179 = sadd.s32 2, %s178
    %s181 = sshll.u32 7, 26
    %s182 = sxor.u32 4294967295, %s181
    %s183 = sand.u32 0, %s182
    %s184 = sshll.u32 %s179, 26
    %s185 = sor.u32 %s183, %s184
    %s186 = sshll.u32 [#allocation2], 4
    %s187 = int_to_ptr.vmem [resolvable:$true] %s186
    %190 = sst [smem:[#allocation26]] 256
    %s191 = scalar_lea.smem [#allocation26], 1
    %192 = sst [smem:[%s191]] 256
    %s193 = scalar_lea.smem [#allocation26], 2
    %194 = sst [smem:[%s193]] 2
    %s195 = scalar_lea.smem [#allocation26], 3
    %196 = sst [smem:[%s195]] 64
    %s197 = scalar_lea.smem [#allocation26], 4
    %198 = sst [smem:[%s197]] 128
    %s199 = scalar_lea.smem [#allocation26], 5
    %200 = sst [smem:[%s199]] 2
    %s201 = scalar_lea.smem [#allocation26], 6
    %202 = sst [smem:[%s201]] 128
    %s203 = scalar_lea.smem [#allocation26], 7
    %204 = sst [smem:[%s203]] 64
    %s205 = scalar_lea.smem [#allocation26], 8
    %206 = sst [smem:[%s205]] 4
    %208 = dma.general %s5, 8192, %s187, [#allocation5], [#allocation25], [#allocation26], %s185, 0
    %s209 = scalar_lea.sflag [#allocation5], 1
    %s211 = sshll.u32 1, 14
    %s212 = sxor.u32 4294967295, %s211
    %s214 = sadd.s32 2, %s178
    %s216 = sshll.u32 7, 26
    %s217 = sxor.u32 4294967295, %s216
    %s218 = sand.u32 0, %s217
    %s219 = sshll.u32 %s214, 26
    %s220 = sor.u32 %s218, %s219
    %s221 = sshll.u32 [#allocation3], 4
    %s222 = int_to_ptr.vmem [resolvable:$true] %s221
    %225 = sst [smem:[#allocation28]] 512
    %s226 = scalar_lea.smem [#allocation28], 1
    %227 = sst [smem:[%s226]] 512
    %s228 = scalar_lea.smem [#allocation28], 2
    %229 = sst [smem:[%s228]] 4
    %s230 = scalar_lea.smem [#allocation28], 3
    %231 = sst [smem:[%s230]] 64
    %s232 = scalar_lea.smem [#allocation28], 4
    %233 = sst [smem:[%s232]] 128
    %s234 = scalar_lea.smem [#allocation28], 5
    %235 = sst [smem:[%s234]] 2
    %s236 = scalar_lea.smem [#allocation28], 6
    %237 = sst [smem:[%s236]] 256
    %s238 = scalar_lea.smem [#allocation28], 7
    %239 = sst [smem:[%s238]] 64
    %s240 = scalar_lea.smem [#allocation28], 8
    %241 = sst [smem:[%s240]] 4
    %243 = dma.general %s9, 8192, %s222, %s209, [#allocation27], [#allocation28], %s220, 0
    %s244 = scalar_lea.sflag [#allocation5], 2
    %s246 = sshll.u32 1, 14
    %s247 = sxor.u32 4294967295, %s246
    %s249 = sadd.s32 2, %s178
    %s251 = sshll.u32 7, 26
    %s252 = sxor.u32 4294967295, %s251
    %s253 = sand.u32 0, %s252
    %s254 = sshll.u32 %s249, 26
    %s255 = sor.u32 %s253, %s254
    %s256 = sshll.u32 [#allocation4], 4
    %s257 = int_to_ptr.vmem [resolvable:$true] %s256
    %260 = sst [smem:[#allocation30]] 3072
    %s261 = scalar_lea.smem [#allocation30], 1
    %262 = sst [smem:[%s261]] 3072
    %s263 = scalar_lea.smem [#allocation30], 2
    %264 = sst [smem:[%s263]] 24
    %s265 = scalar_lea.smem [#allocation30], 3
    %266 = sst [smem:[%s265]] 64
    %s267 = scalar_lea.smem [#allocation30], 4
    %268 = sst [smem:[%s267]] 128
    %s269 = scalar_lea.smem [#allocation30], 5
    %270 = sst [smem:[%s269]] 2
    %s271 = scalar_lea.smem [#allocation30], 6
    %272 = sst [smem:[%s271]] 1536
    %s273 = scalar_lea.smem [#allocation30], 7
    %274 = sst [smem:[%s273]] 64
    %s275 = scalar_lea.smem [#allocation30], 8
    %276 = sst [smem:[%s275]] 4
    %278 = dma.general %s13, 98304, %s257, %s244, [#allocation29], [#allocation30], %s255, 0
    %v279 = vld [vmem:[%s0] sm:$0xff]
    %v280 = vld [vmem:[%s0 + $0x8] sm:$0xff]
    %v281 = vld [vmem:[%s0 + $0x10] sm:$0xff]
    %v282 = vld [vmem:[%s0 + $0x18] sm:$0xff]
    %v283 = vld [vmem:[%s0 + $0x20] sm:$0xff]
    %v284 = vld [vmem:[%s0 + $0x28] sm:$0xff]
    %v285 = vld [vmem:[%s0 + $0x30] sm:$0xff]
    %v286 = vld [vmem:[%s0 + $0x38] sm:$0xff]
    %v287 = vld [vmem:[%s0 + $0x40] sm:$0xff]
    %v288 = vld [vmem:[%s0 + $0x48] sm:$0xff]
    %v289 = vld [vmem:[%s0 + $0x50] sm:$0xff]
    %v290 = vld [vmem:[%s0 + $0x58] sm:$0xff]
    %v291 = vld [vmem:[%s0 + $0x60] sm:$0xff]
    %v292 = vld [vmem:[%s0 + $0x68] sm:$0xff]
    %v293 = vld [vmem:[%s0 + $0x70] sm:$0xff]
    %v294 = vld [vmem:[%s0 + $0x78] sm:$0xff]
    %v295 = vld [vmem:[%s0 + $0x80] sm:$0xff]
    %v296 = vld [vmem:[%s0 + $0x88] sm:$0xff]
    %v297 = vld [vmem:[%s0 + $0x90] sm:$0xff]
    %v298 = vld [vmem:[%s0 + $0x98] sm:$0xff]
    %v299 = vld [vmem:[%s0 + $0xa0] sm:$0xff]
    %v300 = vld [vmem:[%s0 + $0xa8] sm:$0xff]
    %v301 = vld [vmem:[%s0 + $0xb0] sm:$0xff]
    %v302 = vld [vmem:[%s0 + $0xb8] sm:$0xff]
    %v303 = vld [vmem:[#allocation6] sm:$0xff]
    %v304 = vld [vmem:[#allocation6 + $0x8] sm:$0xff]
    %v305 = vld [vmem:[#allocation6 + $0x10] sm:$0xff]
    %v306 = vld [vmem:[#allocation6 + $0x18] sm:$0xff]
    %v307 = vld [vmem:[#allocation6 + $0x20] sm:$0xff]
    %v308 = vld [vmem:[#allocation6 + $0x28] sm:$0xff]
    %v309 = vld [vmem:[#allocation6 + $0x30] sm:$0xff]
    %v310 = vld [vmem:[#allocation6 + $0x38] sm:$0xff]
    %v311 = vld [vmem:[#allocation6 + $0x40] sm:$0xff]
    %v312 = vld [vmem:[#allocation6 + $0x48] sm:$0xff]
    %v313 = vld [vmem:[#allocation6 + $0x50] sm:$0xff]
    %v314 = vld [vmem:[#allocation6 + $0x58] sm:$0xff]
    %v315 = vld [vmem:[#allocation6 + $0x60] sm:$0xff]
    %v316 = vld [vmem:[#allocation6 + $0x68] sm:$0xff]
    %v317 = vld [vmem:[#allocation6 + $0x70] sm:$0xff]
    %v318 = vld [vmem:[#allocation6 + $0x78] sm:$0xff]
    %v319 = vld [vmem:[#allocation6 + $0x80] sm:$0xff]
    %v320 = vld [vmem:[#allocation6 + $0x88] sm:$0xff]
    %v321 = vld [vmem:[#allocation6 + $0x90] sm:$0xff]
    %v322 = vld [vmem:[#allocation6 + $0x98] sm:$0xff]
    %v323 = vld [vmem:[#allocation6 + $0xa0] sm:$0xff]
    %v324 = vld [vmem:[#allocation6 + $0xa8] sm:$0xff]
    %v325 = vld [vmem:[#allocation6 + $0xb0] sm:$0xff]
    %v326 = vld [vmem:[#allocation6 + $0xb8] sm:$0xff]
    %v327 = vld [vmem:[#allocation6 + $0xc0] sm:$0xff]
    %v328 = vld [vmem:[#allocation6 + $0xc8] sm:$0xff]
    %v329 = vld [vmem:[#allocation6 + $0xd0] sm:$0xff]
    %v330 = vld [vmem:[#allocation6 + $0xd8] sm:$0xff]
    %v331 = vld [vmem:[#allocation6 + $0xe0] sm:$0xff]
    %v332 = vld [vmem:[#allocation6 + $0xe8] sm:$0xff]
    %v333 = vld [vmem:[#allocation6 + $0xf0] sm:$0xff]
    %v334 = vld [vmem:[#allocation6 + $0xf8] sm:$0xff]
    %v335 = vld [vmem:[#allocation6 + $0x100] sm:$0xff]
    %v336 = vld [vmem:[#allocation6 + $0x108] sm:$0xff]
    %v337 = vld [vmem:[#allocation6 + $0x110] sm:$0xff]
    %v338 = vld [vmem:[#allocation6 + $0x118] sm:$0xff]
    %v339 = vld [vmem:[#allocation6 + $0x120] sm:$0xff]
    %v340 = vld [vmem:[#allocation6 + $0x128] sm:$0xff]
    %v341 = vld [vmem:[#allocation6 + $0x130] sm:$0xff]
    %v342 = vld [vmem:[#allocation6 + $0x138] sm:$0xff]
    %v343 = vld [vmem:[#allocation6 + $0x140] sm:$0xff]
    %v344 = vld [vmem:[#allocation6 + $0x148] sm:$0xff]
    %v345 = vld [vmem:[#allocation6 + $0x150] sm:$0xff]
    %v346 = vld [vmem:[#allocation6 + $0x158] sm:$0xff]
    %v347 = vld [vmem:[#allocation6 + $0x160] sm:$0xff]
    %v348 = vld [vmem:[#allocation6 + $0x168] sm:$0xff]
    %v349 = vld [vmem:[#allocation6 + $0x170] sm:$0xff]
    %v350 = vld [vmem:[#allocation6 + $0x178] sm:$0xff]
    %v351 = vld [vmem:[#allocation6 + $0x180] sm:$0xff]
    %v352 = vld [vmem:[#allocation6 + $0x188] sm:$0xff]
    %v353 = vld [vmem:[#allocation6 + $0x190] sm:$0xff]
    %v354 = vld [vmem:[#allocation6 + $0x198] sm:$0xff]
    %v355 = vld [vmem:[#allocation6 + $0x1a0] sm:$0xff]
    %v356 = vld [vmem:[#allocation6 + $0x1a8] sm:$0xff]
    %v357 = vld [vmem:[#allocation6 + $0x1b0] sm:$0xff]
    %v358 = vld [vmem:[#allocation6 + $0x1b8] sm:$0xff]
    %v359 = vld [vmem:[#allocation6 + $0x1c0] sm:$0xff]
    %v360 = vld [vmem:[#allocation6 + $0x1c8] sm:$0xff]
    %v361 = vld [vmem:[#allocation6 + $0x1d0] sm:$0xff]
    %v362 = vld [vmem:[#allocation6 + $0x1d8] sm:$0xff]
    %v363 = vld [vmem:[#allocation6 + $0x1e0] sm:$0xff]
    %v364 = vld [vmem:[#allocation6 + $0x1e8] sm:$0xff]
    %v365 = vld [vmem:[#allocation6 + $0x1f0] sm:$0xff]
    %v366 = vld [vmem:[#allocation6 + $0x1f8] sm:$0xff]
    %v367 = vld [vmem:[#allocation6 + $0x200] sm:$0xff]
    %v368 = vld [vmem:[#allocation6 + $0x208] sm:$0xff]
    %v369 = vld [vmem:[#allocation6 + $0x210] sm:$0xff]
    %v370 = vld [vmem:[#allocation6 + $0x218] sm:$0xff]
    %v371 = vld [vmem:[#allocation6 + $0x220] sm:$0xff]
    %v372 = vld [vmem:[#allocation6 + $0x228] sm:$0xff]
    %v373 = vld [vmem:[#allocation6 + $0x230] sm:$0xff]
    %v374 = vld [vmem:[#allocation6 + $0x238] sm:$0xff]
    %v375 = vld [vmem:[#allocation6 + $0x240] sm:$0xff]
    %v376 = vld [vmem:[#allocation6 + $0x248] sm:$0xff]
    %v377 = vld [vmem:[#allocation6 + $0x250] sm:$0xff]
    %v378 = vld [vmem:[#allocation6 + $0x258] sm:$0xff]
    %v379 = vld [vmem:[#allocation6 + $0x260] sm:$0xff]
    %v380 = vld [vmem:[#allocation6 + $0x268] sm:$0xff]
    %v381 = vld [vmem:[#allocation6 + $0x270] sm:$0xff]
    %v382 = vld [vmem:[#allocation6 + $0x278] sm:$0xff]
    %v383 = vld [vmem:[#allocation6 + $0x280] sm:$0xff]
    %v384 = vld [vmem:[#allocation6 + $0x288] sm:$0xff]
    %v385 = vld [vmem:[#allocation6 + $0x290] sm:$0xff]
    %v386 = vld [vmem:[#allocation6 + $0x298] sm:$0xff]
    %v387 = vld [vmem:[#allocation6 + $0x2a0] sm:$0xff]
    %v388 = vld [vmem:[#allocation6 + $0x2a8] sm:$0xff]
    %v389 = vld [vmem:[#allocation6 + $0x2b0] sm:$0xff]
    %v390 = vld [vmem:[#allocation6 + $0x2b8] sm:$0xff]
    %v391 = vld [vmem:[#allocation6 + $0x2c0] sm:$0xff]
    %v392 = vld [vmem:[#allocation6 + $0x2c8] sm:$0xff]
    %v393 = vld [vmem:[#allocation6 + $0x2d0] sm:$0xff]
    %v394 = vld [vmem:[#allocation6 + $0x2d8] sm:$0xff]
    %v395 = vld [vmem:[#allocation6 + $0x2e0] sm:$0xff]
    %v396 = vld [vmem:[#allocation6 + $0x2e8] sm:$0xff]
    %v397 = vld [vmem:[#allocation6 + $0x2f0] sm:$0xff]
    %v398 = vld [vmem:[#allocation6 + $0x2f8] sm:$0xff]
    %v399 = vld [vmem:[#allocation6 + $0x300] sm:$0xff]
    %v400 = vld [vmem:[#allocation6 + $0x308] sm:$0xff]
    %v401 = vld [vmem:[#allocation6 + $0x310] sm:$0xff]
    %v402 = vld [vmem:[#allocation6 + $0x318] sm:$0xff]
    %v403 = vld [vmem:[#allocation6 + $0x320] sm:$0xff]
    %v404 = vld [vmem:[#allocation6 + $0x328] sm:$0xff]
    %v405 = vld [vmem:[#allocation6 + $0x330] sm:$0xff]
    %v406 = vld [vmem:[#allocation6 + $0x338] sm:$0xff]
    %v407 = vld [vmem:[#allocation6 + $0x340] sm:$0xff]
    %v408 = vld [vmem:[#allocation6 + $0x348] sm:$0xff]
    %v409 = vld [vmem:[#allocation6 + $0x350] sm:$0xff]
    %v410 = vld [vmem:[#allocation6 + $0x358] sm:$0xff]
    %v411 = vld [vmem:[#allocation6 + $0x360] sm:$0xff]
    %v412 = vld [vmem:[#allocation6 + $0x368] sm:$0xff]
    %v413 = vld [vmem:[#allocation6 + $0x370] sm:$0xff]
    %v414 = vld [vmem:[#allocation6 + $0x378] sm:$0xff]
    %v415 = vld [vmem:[#allocation6 + $0x380] sm:$0xff]
    %v416 = vld [vmem:[#allocation6 + $0x388] sm:$0xff]
    %v417 = vld [vmem:[#allocation6 + $0x390] sm:$0xff]
    %v418 = vld [vmem:[#allocation6 + $0x398] sm:$0xff]
    %v419 = vld [vmem:[#allocation6 + $0x3a0] sm:$0xff]
    %v420 = vld [vmem:[#allocation6 + $0x3a8] sm:$0xff]
    %v421 = vld [vmem:[#allocation6 + $0x3b0] sm:$0xff]
    %v422 = vld [vmem:[#allocation6 + $0x3b8] sm:$0xff]
    %v423 = vld [vmem:[#allocation6 + $0x3c0] sm:$0xff]
    %v424 = vld [vmem:[#allocation6 + $0x3c8] sm:$0xff]
    %v425 = vld [vmem:[#allocation6 + $0x3d0] sm:$0xff]
    %v426 = vld [vmem:[#allocation6 + $0x3d8] sm:$0xff]
    %v427 = vld [vmem:[#allocation6 + $0x3e0] sm:$0xff]
    %v428 = vld [vmem:[#allocation6 + $0x3e8] sm:$0xff]
    %v429 = vld [vmem:[#allocation6 + $0x3f0] sm:$0xff]
    %v430 = vld [vmem:[#allocation6 + $0x3f8] sm:$0xff]
    %v431 = vld [vmem:[#allocation6 + $0x400] sm:$0xff]
    %v432 = vld [vmem:[#allocation6 + $0x408] sm:$0xff]
    %v433 = vld [vmem:[#allocation6 + $0x410] sm:$0xff]
    %v434 = vld [vmem:[#allocation6 + $0x418] sm:$0xff]
    %v435 = vld [vmem:[#allocation6 + $0x420] sm:$0xff]
    %v436 = vld [vmem:[#allocation6 + $0x428] sm:$0xff]
    %v437 = vld [vmem:[#allocation6 + $0x430] sm:$0xff]
    %v438 = vld [vmem:[#allocation6 + $0x438] sm:$0xff]
    %v439 = vld [vmem:[#allocation6 + $0x440] sm:$0xff]
    %v440 = vld [vmem:[#allocation6 + $0x448] sm:$0xff]
    %v441 = vld [vmem:[#allocation6 + $0x450] sm:$0xff]
    %v442 = vld [vmem:[#allocation6 + $0x458] sm:$0xff]
    %v443 = vld [vmem:[#allocation6 + $0x460] sm:$0xff]
    %v444 = vld [vmem:[#allocation6 + $0x468] sm:$0xff]
    %v445 = vld [vmem:[#allocation6 + $0x470] sm:$0xff]
    %v446 = vld [vmem:[#allocation6 + $0x478] sm:$0xff]
    %v447 = vld [vmem:[#allocation6 + $0x480] sm:$0xff]
    %v448 = vld [vmem:[#allocation6 + $0x488] sm:$0xff]
    %v449 = vld [vmem:[#allocation6 + $0x490] sm:$0xff]
    %v450 = vld [vmem:[#allocation6 + $0x498] sm:$0xff]
    %v451 = vld [vmem:[#allocation6 + $0x4a0] sm:$0xff]
    %v452 = vld [vmem:[#allocation6 + $0x4a8] sm:$0xff]
    %v453 = vld [vmem:[#allocation6 + $0x4b0] sm:$0xff]
    %v454 = vld [vmem:[#allocation6 + $0x4b8] sm:$0xff]
    %v455 = vld [vmem:[#allocation6 + $0x4c0] sm:$0xff]
    %v456 = vld [vmem:[#allocation6 + $0x4c8] sm:$0xff]
    %v457 = vld [vmem:[#allocation6 + $0x4d0] sm:$0xff]
    %v458 = vld [vmem:[#allocation6 + $0x4d8] sm:$0xff]
    %v459 = vld [vmem:[#allocation6 + $0x4e0] sm:$0xff]
    %v460 = vld [vmem:[#allocation6 + $0x4e8] sm:$0xff]
    %v461 = vld [vmem:[#allocation6 + $0x4f0] sm:$0xff]
    %v462 = vld [vmem:[#allocation6 + $0x4f8] sm:$0xff]
    %v463 = vld [vmem:[#allocation6 + $0x500] sm:$0xff]
    %v464 = vld [vmem:[#allocation6 + $0x508] sm:$0xff]
    %v465 = vld [vmem:[#allocation6 + $0x510] sm:$0xff]
    %v466 = vld [vmem:[#allocation6 + $0x518] sm:$0xff]
    %v467 = vld [vmem:[#allocation6 + $0x520] sm:$0xff]
    %v468 = vld [vmem:[#allocation6 + $0x528] sm:$0xff]
    %v469 = vld [vmem:[#allocation6 + $0x530] sm:$0xff]
    %v470 = vld [vmem:[#allocation6 + $0x538] sm:$0xff]
    %v471 = vld [vmem:[#allocation6 + $0x540] sm:$0xff]
    %v472 = vld [vmem:[#allocation6 + $0x548] sm:$0xff]
    %v473 = vld [vmem:[#allocation6 + $0x550] sm:$0xff]
    %v474 = vld [vmem:[#allocation6 + $0x558] sm:$0xff]
    %v475 = vld [vmem:[#allocation6 + $0x560] sm:$0xff]
    %v476 = vld [vmem:[#allocation6 + $0x568] sm:$0xff]
    %v477 = vld [vmem:[#allocation6 + $0x570] sm:$0xff]
    %v478 = vld [vmem:[#allocation6 + $0x578] sm:$0xff]
    %v479 = vld [vmem:[#allocation6 + $0x580] sm:$0xff]
    %v480 = vld [vmem:[#allocation6 + $0x588] sm:$0xff]
    %v481 = vld [vmem:[#allocation6 + $0x590] sm:$0xff]
    %v482 = vld [vmem:[#allocation6 + $0x598] sm:$0xff]
    %v483 = vld [vmem:[#allocation6 + $0x5a0] sm:$0xff]
    %v484 = vld [vmem:[#allocation6 + $0x5a8] sm:$0xff]
    %v485 = vld [vmem:[#allocation6 + $0x5b0] sm:$0xff]
    %v486 = vld [vmem:[#allocation6 + $0x5b8] sm:$0xff]
    %v487 = vld [vmem:[#allocation6 + $0x5c0] sm:$0xff]
    %v488 = vld [vmem:[#allocation6 + $0x5c8] sm:$0xff]
    %v489 = vld [vmem:[#allocation6 + $0x5d0] sm:$0xff]
    %v490 = vld [vmem:[#allocation6 + $0x5d8] sm:$0xff]
    %v491 = vld [vmem:[#allocation6 + $0x5e0] sm:$0xff]
    %v492 = vld [vmem:[#allocation6 + $0x5e8] sm:$0xff]
    %v493 = vld [vmem:[#allocation6 + $0x5f0] sm:$0xff]
    %v494 = vld [vmem:[#allocation6 + $0x5f8] sm:$0xff]
    %v495 = vld [vmem:[#allocation6 + $0x600] sm:$0xff]
    %v496 = vld [vmem:[#allocation6 + $0x608] sm:$0xff]
    %v497 = vld [vmem:[#allocation6 + $0x610] sm:$0xff]
    %v498 = vld [vmem:[#allocation6 + $0x618] sm:$0xff]
    %v499 = vld [vmem:[#allocation6 + $0x620] sm:$0xff]
    %v500 = vld [vmem:[#allocation6 + $0x628] sm:$0xff]
    %v501 = vld [vmem:[#allocation6 + $0x630] sm:$0xff]
    %v502 = vld [vmem:[#allocation6 + $0x638] sm:$0xff]
    %v503 = vld [vmem:[#allocation6 + $0x640] sm:$0xff]
    %v504 = vld [vmem:[#allocation6 + $0x648] sm:$0xff]
    %v505 = vld [vmem:[#allocation6 + $0x650] sm:$0xff]
    %v506 = vld [vmem:[#allocation6 + $0x658] sm:$0xff]
    %v507 = vld [vmem:[#allocation6 + $0x660] sm:$0xff]
    %v508 = vld [vmem:[#allocation6 + $0x668] sm:$0xff]
    %v509 = vld [vmem:[#allocation6 + $0x670] sm:$0xff]
    %v510 = vld [vmem:[#allocation6 + $0x678] sm:$0xff]
    %v511 = vld [vmem:[#allocation6 + $0x680] sm:$0xff]
    %v512 = vld [vmem:[#allocation6 + $0x688] sm:$0xff]
    %v513 = vld [vmem:[#allocation6 + $0x690] sm:$0xff]
    %v514 = vld [vmem:[#allocation6 + $0x698] sm:$0xff]
    %v515 = vld [vmem:[#allocation6 + $0x6a0] sm:$0xff]
    %v516 = vld [vmem:[#allocation6 + $0x6a8] sm:$0xff]
    %v517 = vld [vmem:[#allocation6 + $0x6b0] sm:$0xff]
    %v518 = vld [vmem:[#allocation6 + $0x6b8] sm:$0xff]
    %v519 = vld [vmem:[#allocation6 + $0x6c0] sm:$0xff]
    %v520 = vld [vmem:[#allocation6 + $0x6c8] sm:$0xff]
    %v521 = vld [vmem:[#allocation6 + $0x6d0] sm:$0xff]
    %v522 = vld [vmem:[#allocation6 + $0x6d8] sm:$0xff]
    %v523 = vld [vmem:[#allocation6 + $0x6e0] sm:$0xff]
    %v524 = vld [vmem:[#allocation6 + $0x6e8] sm:$0xff]
    %v525 = vld [vmem:[#allocation6 + $0x6f0] sm:$0xff]
    %v526 = vld [vmem:[#allocation6 + $0x6f8] sm:$0xff]
    %v527 = vld [vmem:[#allocation6 + $0x700] sm:$0xff]
    %v528 = vld [vmem:[#allocation6 + $0x708] sm:$0xff]
    %v529 = vld [vmem:[#allocation6 + $0x710] sm:$0xff]
    %v530 = vld [vmem:[#allocation6 + $0x718] sm:$0xff]
    %v531 = vld [vmem:[#allocation6 + $0x720] sm:$0xff]
    %v532 = vld [vmem:[#allocation6 + $0x728] sm:$0xff]
    %v533 = vld [vmem:[#allocation6 + $0x730] sm:$0xff]
    %v534 = vld [vmem:[#allocation6 + $0x738] sm:$0xff]
    %v535 = vld [vmem:[#allocation6 + $0x740] sm:$0xff]
    %v536 = vld [vmem:[#allocation6 + $0x748] sm:$0xff]
    %v537 = vld [vmem:[#allocation6 + $0x750] sm:$0xff]
    %v538 = vld [vmem:[#allocation6 + $0x758] sm:$0xff]
    %v539 = vld [vmem:[#allocation6 + $0x760] sm:$0xff]
    %v540 = vld [vmem:[#allocation6 + $0x768] sm:$0xff]
    %v541 = vld [vmem:[#allocation6 + $0x770] sm:$0xff]
    %v542 = vld [vmem:[#allocation6 + $0x778] sm:$0xff]
    %v543 = vld [vmem:[#allocation6 + $0x780] sm:$0xff]
    %v544 = vld [vmem:[#allocation6 + $0x788] sm:$0xff]
    %v545 = vld [vmem:[#allocation6 + $0x790] sm:$0xff]
    %v546 = vld [vmem:[#allocation6 + $0x798] sm:$0xff]
    %v547 = vld [vmem:[#allocation6 + $0x7a0] sm:$0xff]
    %v548 = vld [vmem:[#allocation6 + $0x7a8] sm:$0xff]
    %v549 = vld [vmem:[#allocation6 + $0x7b0] sm:$0xff]
    %v550 = vld [vmem:[#allocation6 + $0x7b8] sm:$0xff]
    %v551 = vld [vmem:[#allocation6 + $0x7c0] sm:$0xff]
    %v552 = vld [vmem:[#allocation6 + $0x7c8] sm:$0xff]
    %v553 = vld [vmem:[#allocation6 + $0x7d0] sm:$0xff]
    %v554 = vld [vmem:[#allocation6 + $0x7d8] sm:$0xff]
    %v555 = vld [vmem:[#allocation6 + $0x7e0] sm:$0xff]
    %v556 = vld [vmem:[#allocation6 + $0x7e8] sm:$0xff]
    %v557 = vld [vmem:[#allocation6 + $0x7f0] sm:$0xff]
    %v558 = vld [vmem:[#allocation6 + $0x7f8] sm:$0xff]
    %v559 = vld [vmem:[#allocation6 + $0x800] sm:$0xff]
    %v560 = vld [vmem:[#allocation6 + $0x808] sm:$0xff]
    %v561 = vld [vmem:[#allocation6 + $0x810] sm:$0xff]
    %v562 = vld [vmem:[#allocation6 + $0x818] sm:$0xff]
    %v563 = vld [vmem:[#allocation6 + $0x820] sm:$0xff]
    %v564 = vld [vmem:[#allocation6 + $0x828] sm:$0xff]
    %v565 = vld [vmem:[#allocation6 + $0x830] sm:$0xff]
    %v566 = vld [vmem:[#allocation6 + $0x838] sm:$0xff]
    %v567 = vld [vmem:[#allocation6 + $0x840] sm:$0xff]
    %v568 = vld [vmem:[#allocation6 + $0x848] sm:$0xff]
    %v569 = vld [vmem:[#allocation6 + $0x850] sm:$0xff]
    %v570 = vld [vmem:[#allocation6 + $0x858] sm:$0xff]
    %v571 = vld [vmem:[#allocation6 + $0x860] sm:$0xff]
    %v572 = vld [vmem:[#allocation6 + $0x868] sm:$0xff]
    %v573 = vld [vmem:[#allocation6 + $0x870] sm:$0xff]
    %v574 = vld [vmem:[#allocation6 + $0x878] sm:$0xff]
    %v575 = vld [vmem:[#allocation6 + $0x880] sm:$0xff]
    %v576 = vld [vmem:[#allocation6 + $0x888] sm:$0xff]
    %v577 = vld [vmem:[#allocation6 + $0x890] sm:$0xff]
    %v578 = vld [vmem:[#allocation6 + $0x898] sm:$0xff]
    %v579 = vld [vmem:[#allocation6 + $0x8a0] sm:$0xff]
    %v580 = vld [vmem:[#allocation6 + $0x8a8] sm:$0xff]
    %v581 = vld [vmem:[#allocation6 + $0x8b0] sm:$0xff]
    %v582 = vld [vmem:[#allocation6 + $0x8b8] sm:$0xff]
    %v583 = vld [vmem:[#allocation6 + $0x8c0] sm:$0xff]
    %v584 = vld [vmem:[#allocation6 + $0x8c8] sm:$0xff]
    %v585 = vld [vmem:[#allocation6 + $0x8d0] sm:$0xff]
    %v586 = vld [vmem:[#allocation6 + $0x8d8] sm:$0xff]
    %v587 = vld [vmem:[#allocation6 + $0x8e0] sm:$0xff]
    %v588 = vld [vmem:[#allocation6 + $0x8e8] sm:$0xff]
    %v589 = vld [vmem:[#allocation6 + $0x8f0] sm:$0xff]
    %v590 = vld [vmem:[#allocation6 + $0x8f8] sm:$0xff]
    %v591 = vld [vmem:[#allocation6 + $0x900] sm:$0xff]
    %v592 = vld [vmem:[#allocation6 + $0x908] sm:$0xff]
    %v593 = vld [vmem:[#allocation6 + $0x910] sm:$0xff]
    %v594 = vld [vmem:[#allocation6 + $0x918] sm:$0xff]
    %v595 = vld [vmem:[#allocation6 + $0x920] sm:$0xff]
    %v596 = vld [vmem:[#allocation6 + $0x928] sm:$0xff]
    %v597 = vld [vmem:[#allocation6 + $0x930] sm:$0xff]
    %v598 = vld [vmem:[#allocation6 + $0x938] sm:$0xff]
    %v599 = vld [vmem:[#allocation6 + $0x940] sm:$0xff]
    %v600 = vld [vmem:[#allocation6 + $0x948] sm:$0xff]
    %v601 = vld [vmem:[#allocation6 + $0x950] sm:$0xff]
    %v602 = vld [vmem:[#allocation6 + $0x958] sm:$0xff]
    %v603 = vld [vmem:[#allocation6 + $0x960] sm:$0xff]
    %v604 = vld [vmem:[#allocation6 + $0x968] sm:$0xff]
    %v605 = vld [vmem:[#allocation6 + $0x970] sm:$0xff]
    %v606 = vld [vmem:[#allocation6 + $0x978] sm:$0xff]
    %v607 = vld [vmem:[#allocation6 + $0x980] sm:$0xff]
    %v608 = vld [vmem:[#allocation6 + $0x988] sm:$0xff]
    %v609 = vld [vmem:[#allocation6 + $0x990] sm:$0xff]
    %v610 = vld [vmem:[#allocation6 + $0x998] sm:$0xff]
    %v611 = vld [vmem:[#allocation6 + $0x9a0] sm:$0xff]
    %v612 = vld [vmem:[#allocation6 + $0x9a8] sm:$0xff]
    %v613 = vld [vmem:[#allocation6 + $0x9b0] sm:$0xff]
    %v614 = vld [vmem:[#allocation6 + $0x9b8] sm:$0xff]
    %v615 = vld [vmem:[#allocation6 + $0x9c0] sm:$0xff]
    %v616 = vld [vmem:[#allocation6 + $0x9c8] sm:$0xff]
    %v617 = vld [vmem:[#allocation6 + $0x9d0] sm:$0xff]
    %v618 = vld [vmem:[#allocation6 + $0x9d8] sm:$0xff]
    %v619 = vld [vmem:[#allocation6 + $0x9e0] sm:$0xff]
    %v620 = vld [vmem:[#allocation6 + $0x9e8] sm:$0xff]
    %v621 = vld [vmem:[#allocation6 + $0x9f0] sm:$0xff]
    %v622 = vld [vmem:[#allocation6 + $0x9f8] sm:$0xff]
    %v623 = vld [vmem:[#allocation6 + $0xa00] sm:$0xff]
    %v624 = vld [vmem:[#allocation6 + $0xa08] sm:$0xff]
    %v625 = vld [vmem:[#allocation6 + $0xa10] sm:$0xff]
    %v626 = vld [vmem:[#allocation6 + $0xa18] sm:$0xff]
    %v627 = vld [vmem:[#allocation6 + $0xa20] sm:$0xff]
    %v628 = vld [vmem:[#allocation6 + $0xa28] sm:$0xff]
    %v629 = vld [vmem:[#allocation6 + $0xa30] sm:$0xff]
    %v630 = vld [vmem:[#allocation6 + $0xa38] sm:$0xff]
    %v631 = vld [vmem:[#allocation6 + $0xa40] sm:$0xff]
    %v632 = vld [vmem:[#allocation6 + $0xa48] sm:$0xff]
    %v633 = vld [vmem:[#allocation6 + $0xa50] sm:$0xff]
    %v634 = vld [vmem:[#allocation6 + $0xa58] sm:$0xff]
    %v635 = vld [vmem:[#allocation6 + $0xa60] sm:$0xff]
    %v636 = vld [vmem:[#allocation6 + $0xa68] sm:$0xff]
    %v637 = vld [vmem:[#allocation6 + $0xa70] sm:$0xff]
    %v638 = vld [vmem:[#allocation6 + $0xa78] sm:$0xff]
    %v639 = vld [vmem:[#allocation6 + $0xa80] sm:$0xff]
    %v640 = vld [vmem:[#allocation6 + $0xa88] sm:$0xff]
    %v641 = vld [vmem:[#allocation6 + $0xa90] sm:$0xff]
    %v642 = vld [vmem:[#allocation6 + $0xa98] sm:$0xff]
    %v643 = vld [vmem:[#allocation6 + $0xaa0] sm:$0xff]
    %v644 = vld [vmem:[#allocation6 + $0xaa8] sm:$0xff]
    %v645 = vld [vmem:[#allocation6 + $0xab0] sm:$0xff]
    %v646 = vld [vmem:[#allocation6 + $0xab8] sm:$0xff]
    %v647 = vld [vmem:[#allocation6 + $0xac0] sm:$0xff]
    %v648 = vld [vmem:[#allocation6 + $0xac8] sm:$0xff]
    %v649 = vld [vmem:[#allocation6 + $0xad0] sm:$0xff]
    %v650 = vld [vmem:[#allocation6 + $0xad8] sm:$0xff]
    %v651 = vld [vmem:[#allocation6 + $0xae0] sm:$0xff]
    %v652 = vld [vmem:[#allocation6 + $0xae8] sm:$0xff]
    %v653 = vld [vmem:[#allocation6 + $0xaf0] sm:$0xff]
    %v654 = vld [vmem:[#allocation6 + $0xaf8] sm:$0xff]
    %v655 = vld [vmem:[#allocation6 + $0xb00] sm:$0xff]
    %v656 = vld [vmem:[#allocation6 + $0xb08] sm:$0xff]
    %v657 = vld [vmem:[#allocation6 + $0xb10] sm:$0xff]
    %v658 = vld [vmem:[#allocation6 + $0xb18] sm:$0xff]
    %v659 = vld [vmem:[#allocation6 + $0xb20] sm:$0xff]
    %v660 = vld [vmem:[#allocation6 + $0xb28] sm:$0xff]
    %v661 = vld [vmem:[#allocation6 + $0xb30] sm:$0xff]
    %v662 = vld [vmem:[#allocation6 + $0xb38] sm:$0xff]
    %v663 = vld [vmem:[#allocation6 + $0xb40] sm:$0xff]
    %v664 = vld [vmem:[#allocation6 + $0xb48] sm:$0xff]
    %v665 = vld [vmem:[#allocation6 + $0xb50] sm:$0xff]
    %v666 = vld [vmem:[#allocation6 + $0xb58] sm:$0xff]
    %v667 = vld [vmem:[#allocation6 + $0xb60] sm:$0xff]
    %v668 = vld [vmem:[#allocation6 + $0xb68] sm:$0xff]
    %v669 = vld [vmem:[#allocation6 + $0xb70] sm:$0xff]
    %v670 = vld [vmem:[#allocation6 + $0xb78] sm:$0xff]
    %v671 = vld [vmem:[#allocation6 + $0xb80] sm:$0xff]
    %v672 = vld [vmem:[#allocation6 + $0xb88] sm:$0xff]
    %v673 = vld [vmem:[#allocation6 + $0xb90] sm:$0xff]
    %v674 = vld [vmem:[#allocation6 + $0xb98] sm:$0xff]
    %v675 = vld [vmem:[#allocation6 + $0xba0] sm:$0xff]
    %v676 = vld [vmem:[#allocation6 + $0xba8] sm:$0xff]
    %v677 = vld [vmem:[#allocation6 + $0xbb0] sm:$0xff]
    %v678 = vld [vmem:[#allocation6 + $0xbb8] sm:$0xff]
    %v679 = vld [vmem:[#allocation6 + $0xbc0] sm:$0xff]
    %v680 = vld [vmem:[#allocation6 + $0xbc8] sm:$0xff]
    %v681 = vld [vmem:[#allocation6 + $0xbd0] sm:$0xff]
    %v682 = vld [vmem:[#allocation6 + $0xbd8] sm:$0xff]
    %v683 = vld [vmem:[#allocation6 + $0xbe0] sm:$0xff]
    %v684 = vld [vmem:[#allocation6 + $0xbe8] sm:$0xff]
    %v685 = vld [vmem:[#allocation6 + $0xbf0] sm:$0xff]
    %v686 = vld [vmem:[#allocation6 + $0xbf8] sm:$0xff]
    %v687 = vld [vmem:[#allocation6 + $0xc00] sm:$0xff]
    %v688 = vld [vmem:[#allocation6 + $0xc08] sm:$0xff]
    %v689 = vld [vmem:[#allocation6 + $0xc10] sm:$0xff]
    %v690 = vld [vmem:[#allocation6 + $0xc18] sm:$0xff]
    %v691 = vld [vmem:[#allocation6 + $0xc20] sm:$0xff]
    %v692 = vld [vmem:[#allocation6 + $0xc28] sm:$0xff]
    %v693 = vld [vmem:[#allocation6 + $0xc30] sm:$0xff]
    %v694 = vld [vmem:[#allocation6 + $0xc38] sm:$0xff]
    %v695 = vld [vmem:[#allocation6 + $0xc40] sm:$0xff]
    %v696 = vld [vmem:[#allocation6 + $0xc48] sm:$0xff]
    %v697 = vld [vmem:[#allocation6 + $0xc50] sm:$0xff]
    %v698 = vld [vmem:[#allocation6 + $0xc58] sm:$0xff]
    %v699 = vld [vmem:[#allocation6 + $0xc60] sm:$0xff]
    %v700 = vld [vmem:[#allocation6 + $0xc68] sm:$0xff]
    %v701 = vld [vmem:[#allocation6 + $0xc70] sm:$0xff]
    %v702 = vld [vmem:[#allocation6 + $0xc78] sm:$0xff]
    %v703 = vld [vmem:[#allocation6 + $0xc80] sm:$0xff]
    %v704 = vld [vmem:[#allocation6 + $0xc88] sm:$0xff]
    %v705 = vld [vmem:[#allocation6 + $0xc90] sm:$0xff]
    %v706 = vld [vmem:[#allocation6 + $0xc98] sm:$0xff]
    %v707 = vld [vmem:[#allocation6 + $0xca0] sm:$0xff]
    %v708 = vld [vmem:[#allocation6 + $0xca8] sm:$0xff]
    %v709 = vld [vmem:[#allocation6 + $0xcb0] sm:$0xff]
    %v710 = vld [vmem:[#allocation6 + $0xcb8] sm:$0xff]
    %v711 = vld [vmem:[#allocation6 + $0xcc0] sm:$0xff]
    %v712 = vld [vmem:[#allocation6 + $0xcc8] sm:$0xff]
    %v713 = vld [vmem:[#allocation6 + $0xcd0] sm:$0xff]
    %v714 = vld [vmem:[#allocation6 + $0xcd8] sm:$0xff]
    %v715 = vld [vmem:[#allocation6 + $0xce0] sm:$0xff]
    %v716 = vld [vmem:[#allocation6 + $0xce8] sm:$0xff]
    %v717 = vld [vmem:[#allocation6 + $0xcf0] sm:$0xff]
    %v718 = vld [vmem:[#allocation6 + $0xcf8] sm:$0xff]
    %v719 = vld [vmem:[#allocation6 + $0xd00] sm:$0xff]
    %v720 = vld [vmem:[#allocation6 + $0xd08] sm:$0xff]
    %v721 = vld [vmem:[#allocation6 + $0xd10] sm:$0xff]
    %v722 = vld [vmem:[#allocation6 + $0xd18] sm:$0xff]
    %v723 = vld [vmem:[#allocation6 + $0xd20] sm:$0xff]
    %v724 = vld [vmem:[#allocation6 + $0xd28] sm:$0xff]
    %v725 = vld [vmem:[#allocation6 + $0xd30] sm:$0xff]
    %v726 = vld [vmem:[#allocation6 + $0xd38] sm:$0xff]
    %v727 = vld [vmem:[#allocation6 + $0xd40] sm:$0xff]
    %v728 = vld [vmem:[#allocation6 + $0xd48] sm:$0xff]
    %v729 = vld [vmem:[#allocation6 + $0xd50] sm:$0xff]
    %v730 = vld [vmem:[#allocation6 + $0xd58] sm:$0xff]
    %v731 = vld [vmem:[#allocation6 + $0xd60] sm:$0xff]
    %v732 = vld [vmem:[#allocation6 + $0xd68] sm:$0xff]
    %v733 = vld [vmem:[#allocation6 + $0xd70] sm:$0xff]
    %v734 = vld [vmem:[#allocation6 + $0xd78] sm:$0xff]
    %v735 = vld [vmem:[#allocation6 + $0xd80] sm:$0xff]
    %v736 = vld [vmem:[#allocation6 + $0xd88] sm:$0xff]
    %v737 = vld [vmem:[#allocation6 + $0xd90] sm:$0xff]
    %v738 = vld [vmem:[#allocation6 + $0xd98] sm:$0xff]
    %v739 = vld [vmem:[#allocation6 + $0xda0] sm:$0xff]
    %v740 = vld [vmem:[#allocation6 + $0xda8] sm:$0xff]
    %v741 = vld [vmem:[#allocation6 + $0xdb0] sm:$0xff]
    %v742 = vld [vmem:[#allocation6 + $0xdb8] sm:$0xff]
    %v743 = vld [vmem:[#allocation6 + $0xdc0] sm:$0xff]
    %v744 = vld [vmem:[#allocation6 + $0xdc8] sm:$0xff]
    %v745 = vld [vmem:[#allocation6 + $0xdd0] sm:$0xff]
    %v746 = vld [vmem:[#allocation6 + $0xdd8] sm:$0xff]
    %v747 = vld [vmem:[#allocation6 + $0xde0] sm:$0xff]
    %v748 = vld [vmem:[#allocation6 + $0xde8] sm:$0xff]
    %v749 = vld [vmem:[#allocation6 + $0xdf0] sm:$0xff]
    %v750 = vld [vmem:[#allocation6 + $0xdf8] sm:$0xff]
    %v751 = vld [vmem:[#allocation6 + $0xe00] sm:$0xff]
    %v752 = vld [vmem:[#allocation6 + $0xe08] sm:$0xff]
    %v753 = vld [vmem:[#allocation6 + $0xe10] sm:$0xff]
    %v754 = vld [vmem:[#allocation6 + $0xe18] sm:$0xff]
    %v755 = vld [vmem:[#allocation6 + $0xe20] sm:$0xff]
    %v756 = vld [vmem:[#allocation6 + $0xe28] sm:$0xff]
    %v757 = vld [vmem:[#allocation6 + $0xe30] sm:$0xff]
    %v758 = vld [vmem:[#allocation6 + $0xe38] sm:$0xff]
    %v759 = vld [vmem:[#allocation6 + $0xe40] sm:$0xff]
    %v760 = vld [vmem:[#allocation6 + $0xe48] sm:$0xff]
    %v761 = vld [vmem:[#allocation6 + $0xe50] sm:$0xff]
    %v762 = vld [vmem:[#allocation6 + $0xe58] sm:$0xff]
    %v763 = vld [vmem:[#allocation6 + $0xe60] sm:$0xff]
    %v764 = vld [vmem:[#allocation6 + $0xe68] sm:$0xff]
    %v765 = vld [vmem:[#allocation6 + $0xe70] sm:$0xff]
    %v766 = vld [vmem:[#allocation6 + $0xe78] sm:$0xff]
    %v767 = vld [vmem:[#allocation6 + $0xe80] sm:$0xff]
    %v768 = vld [vmem:[#allocation6 + $0xe88] sm:$0xff]
    %v769 = vld [vmem:[#allocation6 + $0xe90] sm:$0xff]
    %v770 = vld [vmem:[#allocation6 + $0xe98] sm:$0xff]
    %v771 = vld [vmem:[#allocation6 + $0xea0] sm:$0xff]
    %v772 = vld [vmem:[#allocation6 + $0xea8] sm:$0xff]
    %v773 = vld [vmem:[#allocation6 + $0xeb0] sm:$0xff]
    %v774 = vld [vmem:[#allocation6 + $0xeb8] sm:$0xff]
    %v775 = vld [vmem:[#allocation6 + $0xec0] sm:$0xff]
    %v776 = vld [vmem:[#allocation6 + $0xec8] sm:$0xff]
    %v777 = vld [vmem:[#allocation6 + $0xed0] sm:$0xff]
    %v778 = vld [vmem:[#allocation6 + $0xed8] sm:$0xff]
    %v779 = vld [vmem:[#allocation6 + $0xee0] sm:$0xff]
    %v780 = vld [vmem:[#allocation6 + $0xee8] sm:$0xff]
    %v781 = vld [vmem:[#allocation6 + $0xef0] sm:$0xff]
    %v782 = vld [vmem:[#allocation6 + $0xef8] sm:$0xff]
    %v783 = vld [vmem:[#allocation6 + $0xf00] sm:$0xff]
    %v784 = vld [vmem:[#allocation6 + $0xf08] sm:$0xff]
    %v785 = vld [vmem:[#allocation6 + $0xf10] sm:$0xff]
    %v786 = vld [vmem:[#allocation6 + $0xf18] sm:$0xff]
    %v787 = vld [vmem:[#allocation6 + $0xf20] sm:$0xff]
    %v788 = vld [vmem:[#allocation6 + $0xf28] sm:$0xff]
    %v789 = vld [vmem:[#allocation6 + $0xf30] sm:$0xff]
    %v790 = vld [vmem:[#allocation6 + $0xf38] sm:$0xff]
    %v791 = vld [vmem:[#allocation6 + $0xf40] sm:$0xff]
    %v792 = vld [vmem:[#allocation6 + $0xf48] sm:$0xff]
    %v793 = vld [vmem:[#allocation6 + $0xf50] sm:$0xff]
    %v794 = vld [vmem:[#allocation6 + $0xf58] sm:$0xff]
    %v795 = vld [vmem:[#allocation6 + $0xf60] sm:$0xff]
    %v796 = vld [vmem:[#allocation6 + $0xf68] sm:$0xff]
    %v797 = vld [vmem:[#allocation6 + $0xf70] sm:$0xff]
    %v798 = vld [vmem:[#allocation6 + $0xf78] sm:$0xff]
    %v799 = vld [vmem:[#allocation6 + $0xf80] sm:$0xff]
    %v800 = vld [vmem:[#allocation6 + $0xf88] sm:$0xff]
    %v801 = vld [vmem:[#allocation6 + $0xf90] sm:$0xff]
    %v802 = vld [vmem:[#allocation6 + $0xf98] sm:$0xff]
    %v803 = vld [vmem:[#allocation6 + $0xfa0] sm:$0xff]
    %v804 = vld [vmem:[#allocation6 + $0xfa8] sm:$0xff]
    %v805 = vld [vmem:[#allocation6 + $0xfb0] sm:$0xff]
    %v806 = vld [vmem:[#allocation6 + $0xfb8] sm:$0xff]
    %v807 = vld [vmem:[#allocation6 + $0xfc0] sm:$0xff]
    %v808 = vld [vmem:[#allocation6 + $0xfc8] sm:$0xff]
    %v809 = vld [vmem:[#allocation6 + $0xfd0] sm:$0xff]
    %v810 = vld [vmem:[#allocation6 + $0xfd8] sm:$0xff]
    %v811 = vld [vmem:[#allocation6 + $0xfe0] sm:$0xff]
    %v812 = vld [vmem:[#allocation6 + $0xfe8] sm:$0xff]
    %v813 = vld [vmem:[#allocation6 + $0xff0] sm:$0xff]
    %v814 = vld [vmem:[#allocation6 + $0xff8] sm:$0xff]
    %v815 = vld [vmem:[#allocation6 + $0x1000] sm:$0xff]
    %v816 = vld [vmem:[#allocation6 + $0x1008] sm:$0xff]
    %v817 = vld [vmem:[#allocation6 + $0x1010] sm:$0xff]
    %v818 = vld [vmem:[#allocation6 + $0x1018] sm:$0xff]
    %v819 = vld [vmem:[#allocation6 + $0x1020] sm:$0xff]
    %v820 = vld [vmem:[#allocation6 + $0x1028] sm:$0xff]
    %v821 = vld [vmem:[#allocation6 + $0x1030] sm:$0xff]
    %v822 = vld [vmem:[#allocation6 + $0x1038] sm:$0xff]
    %v823 = vld [vmem:[#allocation6 + $0x1040] sm:$0xff]
    %v824 = vld [vmem:[#allocation6 + $0x1048] sm:$0xff]
    %v825 = vld [vmem:[#allocation6 + $0x1050] sm:$0xff]
    %v826 = vld [vmem:[#allocation6 + $0x1058] sm:$0xff]
    %v827 = vld [vmem:[#allocation6 + $0x1060] sm:$0xff]
    %v828 = vld [vmem:[#allocation6 + $0x1068] sm:$0xff]
    %v829 = vld [vmem:[#allocation6 + $0x1070] sm:$0xff]
    %v830 = vld [vmem:[#allocation6 + $0x1078] sm:$0xff]
    %v831 = vld [vmem:[#allocation6 + $0x1080] sm:$0xff]
    %v832 = vld [vmem:[#allocation6 + $0x1088] sm:$0xff]
    %v833 = vld [vmem:[#allocation6 + $0x1090] sm:$0xff]
    %v834 = vld [vmem:[#allocation6 + $0x1098] sm:$0xff]
    %v835 = vld [vmem:[#allocation6 + $0x10a0] sm:$0xff]
    %v836 = vld [vmem:[#allocation6 + $0x10a8] sm:$0xff]
    %v837 = vld [vmem:[#allocation6 + $0x10b0] sm:$0xff]
    %v838 = vld [vmem:[#allocation6 + $0x10b8] sm:$0xff]
    %v839 = vld [vmem:[#allocation6 + $0x10c0] sm:$0xff]
    %v840 = vld [vmem:[#allocation6 + $0x10c8] sm:$0xff]
    %v841 = vld [vmem:[#allocation6 + $0x10d0] sm:$0xff]
    %v842 = vld [vmem:[#allocation6 + $0x10d8] sm:$0xff]
    %v843 = vld [vmem:[#allocation6 + $0x10e0] sm:$0xff]
    %v844 = vld [vmem:[#allocation6 + $0x10e8] sm:$0xff]
    %v845 = vld [vmem:[#allocation6 + $0x10f0] sm:$0xff]
    %v846 = vld [vmem:[#allocation6 + $0x10f8] sm:$0xff]
    %v847 = vld [vmem:[#allocation6 + $0x1100] sm:$0xff]
    %v848 = vld [vmem:[#allocation6 + $0x1108] sm:$0xff]
    %v849 = vld [vmem:[#allocation6 + $0x1110] sm:$0xff]
    %v850 = vld [vmem:[#allocation6 + $0x1118] sm:$0xff]
    %v851 = vld [vmem:[#allocation6 + $0x1120] sm:$0xff]
    %v852 = vld [vmem:[#allocation6 + $0x1128] sm:$0xff]
    %v853 = vld [vmem:[#allocation6 + $0x1130] sm:$0xff]
    %v854 = vld [vmem:[#allocation6 + $0x1138] sm:$0xff]
    %v855 = vld [vmem:[#allocation6 + $0x1140] sm:$0xff]
    %v856 = vld [vmem:[#allocation6 + $0x1148] sm:$0xff]
    %v857 = vld [vmem:[#allocation6 + $0x1150] sm:$0xff]
    %v858 = vld [vmem:[#allocation6 + $0x1158] sm:$0xff]
    %v859 = vld [vmem:[#allocation6 + $0x1160] sm:$0xff]
    %v860 = vld [vmem:[#allocation6 + $0x1168] sm:$0xff]
    %v861 = vld [vmem:[#allocation6 + $0x1170] sm:$0xff]
    %v862 = vld [vmem:[#allocation6 + $0x1178] sm:$0xff]
    %v863 = vld [vmem:[#allocation6 + $0x1180] sm:$0xff]
    %v864 = vld [vmem:[#allocation6 + $0x1188] sm:$0xff]
    %v865 = vld [vmem:[#allocation6 + $0x1190] sm:$0xff]
    %v866 = vld [vmem:[#allocation6 + $0x1198] sm:$0xff]
    %v867 = vld [vmem:[#allocation6 + $0x11a0] sm:$0xff]
    %v868 = vld [vmem:[#allocation6 + $0x11a8] sm:$0xff]
    %v869 = vld [vmem:[#allocation6 + $0x11b0] sm:$0xff]
    %v870 = vld [vmem:[#allocation6 + $0x11b8] sm:$0xff]
    %v871 = vld [vmem:[#allocation6 + $0x11c0] sm:$0xff]
    %v872 = vld [vmem:[#allocation6 + $0x11c8] sm:$0xff]
    %v873 = vld [vmem:[#allocation6 + $0x11d0] sm:$0xff]
    %v874 = vld [vmem:[#allocation6 + $0x11d8] sm:$0xff]
    %v875 = vld [vmem:[#allocation6 + $0x11e0] sm:$0xff]
    %v876 = vld [vmem:[#allocation6 + $0x11e8] sm:$0xff]
    %v877 = vld [vmem:[#allocation6 + $0x11f0] sm:$0xff]
    %v878 = vld [vmem:[#allocation6 + $0x11f8] sm:$0xff]
    %v879 = vld [vmem:[#allocation6 + $0x1200] sm:$0xff]
    %v880 = vld [vmem:[#allocation6 + $0x1208] sm:$0xff]
    %v881 = vld [vmem:[#allocation6 + $0x1210] sm:$0xff]
    %v882 = vld [vmem:[#allocation6 + $0x1218] sm:$0xff]
    %v883 = vld [vmem:[#allocation6 + $0x1220] sm:$0xff]
    %v884 = vld [vmem:[#allocation6 + $0x1228] sm:$0xff]
    %v885 = vld [vmem:[#allocation6 + $0x1230] sm:$0xff]
    %v886 = vld [vmem:[#allocation6 + $0x1238] sm:$0xff]
    %v887 = vld [vmem:[#allocation6 + $0x1240] sm:$0xff]
    %v888 = vld [vmem:[#allocation6 + $0x1248] sm:$0xff]
    %v889 = vld [vmem:[#allocation6 + $0x1250] sm:$0xff]
    %v890 = vld [vmem:[#allocation6 + $0x1258] sm:$0xff]
    %v891 = vld [vmem:[#allocation6 + $0x1260] sm:$0xff]
    %v892 = vld [vmem:[#allocation6 + $0x1268] sm:$0xff]
    %v893 = vld [vmem:[#allocation6 + $0x1270] sm:$0xff]
    %v894 = vld [vmem:[#allocation6 + $0x1278] sm:$0xff]
    %v895 = vld [vmem:[#allocation6 + $0x1280] sm:$0xff]
    %v896 = vld [vmem:[#allocation6 + $0x1288] sm:$0xff]
    %v897 = vld [vmem:[#allocation6 + $0x1290] sm:$0xff]
    %v898 = vld [vmem:[#allocation6 + $0x1298] sm:$0xff]
    %v899 = vld [vmem:[#allocation6 + $0x12a0] sm:$0xff]
    %v900 = vld [vmem:[#allocation6 + $0x12a8] sm:$0xff]
    %v901 = vld [vmem:[#allocation6 + $0x12b0] sm:$0xff]
    %v902 = vld [vmem:[#allocation6 + $0x12b8] sm:$0xff]
    %v903 = vld [vmem:[#allocation6 + $0x12c0] sm:$0xff]
    %v904 = vld [vmem:[#allocation6 + $0x12c8] sm:$0xff]
    %v905 = vld [vmem:[#allocation6 + $0x12d0] sm:$0xff]
    %v906 = vld [vmem:[#allocation6 + $0x12d8] sm:$0xff]
    %v907 = vld [vmem:[#allocation6 + $0x12e0] sm:$0xff]
    %v908 = vld [vmem:[#allocation6 + $0x12e8] sm:$0xff]
    %v909 = vld [vmem:[#allocation6 + $0x12f0] sm:$0xff]
    %v910 = vld [vmem:[#allocation6 + $0x12f8] sm:$0xff]
    %v911 = vld [vmem:[#allocation6 + $0x1300] sm:$0xff]
    %v912 = vld [vmem:[#allocation6 + $0x1308] sm:$0xff]
    %v913 = vld [vmem:[#allocation6 + $0x1310] sm:$0xff]
    %v914 = vld [vmem:[#allocation6 + $0x1318] sm:$0xff]
    %v915 = vld [vmem:[#allocation6 + $0x1320] sm:$0xff]
    %v916 = vld [vmem:[#allocation6 + $0x1328] sm:$0xff]
    %v917 = vld [vmem:[#allocation6 + $0x1330] sm:$0xff]
    %v918 = vld [vmem:[#allocation6 + $0x1338] sm:$0xff]
    %v919 = vld [vmem:[#allocation6 + $0x1340] sm:$0xff]
    %v920 = vld [vmem:[#allocation6 + $0x1348] sm:$0xff]
    %v921 = vld [vmem:[#allocation6 + $0x1350] sm:$0xff]
    %v922 = vld [vmem:[#allocation6 + $0x1358] sm:$0xff]
    %v923 = vld [vmem:[#allocation6 + $0x1360] sm:$0xff]
    %v924 = vld [vmem:[#allocation6 + $0x1368] sm:$0xff]
    %v925 = vld [vmem:[#allocation6 + $0x1370] sm:$0xff]
    %v926 = vld [vmem:[#allocation6 + $0x1378] sm:$0xff]
    %v927 = vld [vmem:[#allocation6 + $0x1380] sm:$0xff]
    %v928 = vld [vmem:[#allocation6 + $0x1388] sm:$0xff]
    %v929 = vld [vmem:[#allocation6 + $0x1390] sm:$0xff]
    %v930 = vld [vmem:[#allocation6 + $0x1398] sm:$0xff]
    %v931 = vld [vmem:[#allocation6 + $0x13a0] sm:$0xff]
    %v932 = vld [vmem:[#allocation6 + $0x13a8] sm:$0xff]
    %v933 = vld [vmem:[#allocation6 + $0x13b0] sm:$0xff]
    %v934 = vld [vmem:[#allocation6 + $0x13b8] sm:$0xff]
    %v935 = vld [vmem:[#allocation6 + $0x13c0] sm:$0xff]
    %v936 = vld [vmem:[#allocation6 + $0x13c8] sm:$0xff]
    %v937 = vld [vmem:[#allocation6 + $0x13d0] sm:$0xff]
    %v938 = vld [vmem:[#allocation6 + $0x13d8] sm:$0xff]
    %v939 = vld [vmem:[#allocation6 + $0x13e0] sm:$0xff]
    %v940 = vld [vmem:[#allocation6 + $0x13e8] sm:$0xff]
    %v941 = vld [vmem:[#allocation6 + $0x13f0] sm:$0xff]
    %v942 = vld [vmem:[#allocation6 + $0x13f8] sm:$0xff]
    %v943 = vld [vmem:[#allocation6 + $0x1400] sm:$0xff]
    %v944 = vld [vmem:[#allocation6 + $0x1408] sm:$0xff]
    %v945 = vld [vmem:[#allocation6 + $0x1410] sm:$0xff]
    %v946 = vld [vmem:[#allocation6 + $0x1418] sm:$0xff]
    %v947 = vld [vmem:[#allocation6 + $0x1420] sm:$0xff]
    %v948 = vld [vmem:[#allocation6 + $0x1428] sm:$0xff]
    %v949 = vld [vmem:[#allocation6 + $0x1430] sm:$0xff]
    %v950 = vld [vmem:[#allocation6 + $0x1438] sm:$0xff]
    %v951 = vld [vmem:[#allocation6 + $0x1440] sm:$0xff]
    %v952 = vld [vmem:[#allocation6 + $0x1448] sm:$0xff]
    %v953 = vld [vmem:[#allocation6 + $0x1450] sm:$0xff]
    %v954 = vld [vmem:[#allocation6 + $0x1458] sm:$0xff]
    %v955 = vld [vmem:[#allocation6 + $0x1460] sm:$0xff]
    %v956 = vld [vmem:[#allocation6 + $0x1468] sm:$0xff]
    %v957 = vld [vmem:[#allocation6 + $0x1470] sm:$0xff]
    %v958 = vld [vmem:[#allocation6 + $0x1478] sm:$0xff]
    %v959 = vld [vmem:[#allocation6 + $0x1480] sm:$0xff]
    %v960 = vld [vmem:[#allocation6 + $0x1488] sm:$0xff]
    %v961 = vld [vmem:[#allocation6 + $0x1490] sm:$0xff]
    %v962 = vld [vmem:[#allocation6 + $0x1498] sm:$0xff]
    %v963 = vld [vmem:[#allocation6 + $0x14a0] sm:$0xff]
    %v964 = vld [vmem:[#allocation6 + $0x14a8] sm:$0xff]
    %v965 = vld [vmem:[#allocation6 + $0x14b0] sm:$0xff]
    %v966 = vld [vmem:[#allocation6 + $0x14b8] sm:$0xff]
    %v967 = vld [vmem:[#allocation6 + $0x14c0] sm:$0xff]
    %v968 = vld [vmem:[#allocation6 + $0x14c8] sm:$0xff]
    %v969 = vld [vmem:[#allocation6 + $0x14d0] sm:$0xff]
    %v970 = vld [vmem:[#allocation6 + $0x14d8] sm:$0xff]
    %v971 = vld [vmem:[#allocation6 + $0x14e0] sm:$0xff]
    %v972 = vld [vmem:[#allocation6 + $0x14e8] sm:$0xff]
    %v973 = vld [vmem:[#allocation6 + $0x14f0] sm:$0xff]
    %v974 = vld [vmem:[#allocation6 + $0x14f8] sm:$0xff]
    %v975 = vld [vmem:[#allocation6 + $0x1500] sm:$0xff]
    %v976 = vld [vmem:[#allocation6 + $0x1508] sm:$0xff]
    %v977 = vld [vmem:[#allocation6 + $0x1510] sm:$0xff]
    %v978 = vld [vmem:[#allocation6 + $0x1518] sm:$0xff]
    %v979 = vld [vmem:[#allocation6 + $0x1520] sm:$0xff]
    %v980 = vld [vmem:[#allocation6 + $0x1528] sm:$0xff]
    %v981 = vld [vmem:[#allocation6 + $0x1530] sm:$0xff]
    %v982 = vld [vmem:[#allocation6 + $0x1538] sm:$0xff]
    %v983 = vld [vmem:[#allocation6 + $0x1540] sm:$0xff]
    %v984 = vld [vmem:[#allocation6 + $0x1548] sm:$0xff]
    %v985 = vld [vmem:[#allocation6 + $0x1550] sm:$0xff]
    %v986 = vld [vmem:[#allocation6 + $0x1558] sm:$0xff]
    %v987 = vld [vmem:[#allocation6 + $0x1560] sm:$0xff]
    %v988 = vld [vmem:[#allocation6 + $0x1568] sm:$0xff]
    %v989 = vld [vmem:[#allocation6 + $0x1570] sm:$0xff]
    %v990 = vld [vmem:[#allocation6 + $0x1578] sm:$0xff]
    %v991 = vld [vmem:[#allocation6 + $0x1580] sm:$0xff]
    %v992 = vld [vmem:[#allocation6 + $0x1588] sm:$0xff]
    %v993 = vld [vmem:[#allocation6 + $0x1590] sm:$0xff]
    %v994 = vld [vmem:[#allocation6 + $0x1598] sm:$0xff]
    %v995 = vld [vmem:[#allocation6 + $0x15a0] sm:$0xff]
    %v996 = vld [vmem:[#allocation6 + $0x15a8] sm:$0xff]
    %v997 = vld [vmem:[#allocation6 + $0x15b0] sm:$0xff]
    %v998 = vld [vmem:[#allocation6 + $0x15b8] sm:$0xff]
    %v999 = vld [vmem:[#allocation6 + $0x15c0] sm:$0xff]
    %v1000 = vld [vmem:[#allocation6 + $0x15c8] sm:$0xff]
    %v1001 = vld [vmem:[#allocation6 + $0x15d0] sm:$0xff]
    %v1002 = vld [vmem:[#allocation6 + $0x15d8] sm:$0xff]
    %v1003 = vld [vmem:[#allocation6 + $0x15e0] sm:$0xff]
    %v1004 = vld [vmem:[#allocation6 + $0x15e8] sm:$0xff]
    %v1005 = vld [vmem:[#allocation6 + $0x15f0] sm:$0xff]
    %v1006 = vld [vmem:[#allocation6 + $0x15f8] sm:$0xff]
    %v1007 = vld [vmem:[#allocation6 + $0x1600] sm:$0xff]
    %v1008 = vld [vmem:[#allocation6 + $0x1608] sm:$0xff]
    %v1009 = vld [vmem:[#allocation6 + $0x1610] sm:$0xff]
    %v1010 = vld [vmem:[#allocation6 + $0x1618] sm:$0xff]
    %v1011 = vld [vmem:[#allocation6 + $0x1620] sm:$0xff]
    %v1012 = vld [vmem:[#allocation6 + $0x1628] sm:$0xff]
    %v1013 = vld [vmem:[#allocation6 + $0x1630] sm:$0xff]
    %v1014 = vld [vmem:[#allocation6 + $0x1638] sm:$0xff]
    %v1015 = vld [vmem:[#allocation6 + $0x1640] sm:$0xff]
    %v1016 = vld [vmem:[#allocation6 + $0x1648] sm:$0xff]
    %v1017 = vld [vmem:[#allocation6 + $0x1650] sm:$0xff]
    %v1018 = vld [vmem:[#allocation6 + $0x1658] sm:$0xff]
    %v1019 = vld [vmem:[#allocation6 + $0x1660] sm:$0xff]
    %v1020 = vld [vmem:[#allocation6 + $0x1668] sm:$0xff]
    %v1021 = vld [vmem:[#allocation6 + $0x1670] sm:$0xff]
    %v1022 = vld [vmem:[#allocation6 + $0x1678] sm:$0xff]
    %v1023 = vld [vmem:[#allocation6 + $0x1680] sm:$0xff]
    %v1024 = vld [vmem:[#allocation6 + $0x1688] sm:$0xff]
    %v1025 = vld [vmem:[#allocation6 + $0x1690] sm:$0xff]
    %v1026 = vld [vmem:[#allocation6 + $0x1698] sm:$0xff]
    %v1027 = vld [vmem:[#allocation6 + $0x16a0] sm:$0xff]
    %v1028 = vld [vmem:[#allocation6 + $0x16a8] sm:$0xff]
    %v1029 = vld [vmem:[#allocation6 + $0x16b0] sm:$0xff]
    %v1030 = vld [vmem:[#allocation6 + $0x16b8] sm:$0xff]
    %v1031 = vld [vmem:[#allocation6 + $0x16c0] sm:$0xff]
    %v1032 = vld [vmem:[#allocation6 + $0x16c8] sm:$0xff]
    %v1033 = vld [vmem:[#allocation6 + $0x16d0] sm:$0xff]
    %v1034 = vld [vmem:[#allocation6 + $0x16d8] sm:$0xff]
    %v1035 = vld [vmem:[#allocation6 + $0x16e0] sm:$0xff]
    %v1036 = vld [vmem:[#allocation6 + $0x16e8] sm:$0xff]
    %v1037 = vld [vmem:[#allocation6 + $0x16f0] sm:$0xff]
    %v1038 = vld [vmem:[#allocation6 + $0x16f8] sm:$0xff]
    %v1039 = vld [vmem:[#allocation6 + $0x1700] sm:$0xff]
    %v1040 = vld [vmem:[#allocation6 + $0x1708] sm:$0xff]
    %v1041 = vld [vmem:[#allocation6 + $0x1710] sm:$0xff]
    %v1042 = vld [vmem:[#allocation6 + $0x1718] sm:$0xff]
    %v1043 = vld [vmem:[#allocation6 + $0x1720] sm:$0xff]
    %v1044 = vld [vmem:[#allocation6 + $0x1728] sm:$0xff]
    %v1045 = vld [vmem:[#allocation6 + $0x1730] sm:$0xff]
    %v1046 = vld [vmem:[#allocation6 + $0x1738] sm:$0xff]
    %v1047 = vld [vmem:[#allocation6 + $0x1740] sm:$0xff]
    %v1048 = vld [vmem:[#allocation6 + $0x1748] sm:$0xff]
    %v1049 = vld [vmem:[#allocation6 + $0x1750] sm:$0xff]
    %v1050 = vld [vmem:[#allocation6 + $0x1758] sm:$0xff]
    %v1051 = vld [vmem:[#allocation6 + $0x1760] sm:$0xff]
    %v1052 = vld [vmem:[#allocation6 + $0x1768] sm:$0xff]
    %v1053 = vld [vmem:[#allocation6 + $0x1770] sm:$0xff]
    %v1054 = vld [vmem:[#allocation6 + $0x1778] sm:$0xff]
    %v1055 = vld [vmem:[#allocation6 + $0x1780] sm:$0xff]
    %v1056 = vld [vmem:[#allocation6 + $0x1788] sm:$0xff]
    %v1057 = vld [vmem:[#allocation6 + $0x1790] sm:$0xff]
    %v1058 = vld [vmem:[#allocation6 + $0x1798] sm:$0xff]
    %v1059 = vld [vmem:[#allocation6 + $0x17a0] sm:$0xff]
    %v1060 = vld [vmem:[#allocation6 + $0x17a8] sm:$0xff]
    %v1061 = vld [vmem:[#allocation6 + $0x17b0] sm:$0xff]
    %v1062 = vld [vmem:[#allocation6 + $0x17b8] sm:$0xff]
    %v1063 = vld [vmem:[#allocation6 + $0x17c0] sm:$0xff]
    %v1064 = vld [vmem:[#allocation6 + $0x17c8] sm:$0xff]
    %v1065 = vld [vmem:[#allocation6 + $0x17d0] sm:$0xff]
    %v1066 = vld [vmem:[#allocation6 + $0x17d8] sm:$0xff]
    %v1067 = vld [vmem:[#allocation6 + $0x17e0] sm:$0xff]
    %v1068 = vld [vmem:[#allocation6 + $0x17e8] sm:$0xff]
    %v1069 = vld [vmem:[#allocation6 + $0x17f0] sm:$0xff]
    %v1070 = vld [vmem:[#allocation6 + $0x17f8] sm:$0xff]
    %v1071 = vpack.c.bf16 %v279, %v279
    %v1072 = vpack.c.bf16 %v280, %v280
    %v1073 = vpack.c.bf16 %v281, %v281
    %v1074 = vpack.c.bf16 %v282, %v282
    %v1075 = vpack.c.bf16 %v283, %v283
    %v1076 = vpack.c.bf16 %v284, %v284
    %v1077 = vpack.c.bf16 %v285, %v285
    %v1078 = vpack.c.bf16 %v286, %v286
    %v1079 = vpack.c.bf16 %v287, %v287
    %v1080 = vpack.c.bf16 %v288, %v288
    %v1081 = vpack.c.bf16 %v289, %v289
    %v1082 = vpack.c.bf16 %v290, %v290
    %v1083 = vpack.c.bf16 %v291, %v291
    %v1084 = vpack.c.bf16 %v292, %v292
    %v1085 = vpack.c.bf16 %v293, %v293
    %v1086 = vpack.c.bf16 %v294, %v294
    %v1087 = vpack.c.bf16 %v295, %v295
    %v1088 = vpack.c.bf16 %v296, %v296
    %v1089 = vpack.c.bf16 %v297, %v297
    %v1090 = vpack.c.bf16 %v298, %v298
    %v1091 = vpack.c.bf16 %v299, %v299
    %v1092 = vpack.c.bf16 %v300, %v300
    %v1093 = vpack.c.bf16 %v301, %v301
    %v1094 = vpack.c.bf16 %v302, %v302
    %v1095 = vld [vmem:[#allocation9] sm:$0xf]
    %v1097 = vlaneseq
    %v1098 = vshrl.u32 %v1097, 7
    %v1099 = vsub.s32 0, %v1098
    %v1100 = vrot.slane %v1095, %v1099
    %v1101 = vlaneseq
    %v1102 = vshrl.u32 %v1101, 7
    %v1103 = vsub.s32 1, %v1102
    %v1104 = vrot.slane %v1095, %v1103
    %v1105 = vlaneseq
    %v1106 = vshrl.u32 %v1105, 7
    %v1107 = vsub.s32 2, %v1106
    %v1108 = vrot.slane %v1095, %v1107
    %v1109 = vlaneseq
    %v1110 = vshrl.u32 %v1109, 7
    %v1111 = vsub.s32 3, %v1110
    %v1112 = vrot.slane %v1095, %v1111
    %v1885 = vunpack.c.l.b16 %v303
    %v1886 = vunpack.c.h.b16 %v303
    %v1887 = vunpack.c.l.b16 %v304
    %v1888 = vunpack.c.h.b16 %v304
    %v1889 = vunpack.c.l.b16 %v305
    %v1890 = vunpack.c.h.b16 %v305
    %v1891 = vunpack.c.l.b16 %v306
    %v1892 = vunpack.c.h.b16 %v306
    %v1893 = vunpack.c.l.b16 %v307
    %v1894 = vunpack.c.h.b16 %v307
    %v1895 = vunpack.c.l.b16 %v308
    %v1896 = vunpack.c.h.b16 %v308
    %v1897 = vunpack.c.l.b16 %v309
    %v1898 = vunpack.c.h.b16 %v309
    %v1899 = vunpack.c.l.b16 %v310
    %v1900 = vunpack.c.h.b16 %v310
    %v1901 = vunpack.c.l.b16 %v311
    %v1902 = vunpack.c.h.b16 %v311
    %v1903 = vunpack.c.l.b16 %v312
    %v1904 = vunpack.c.h.b16 %v312
    %v1905 = vunpack.c.l.b16 %v313
    %v1906 = vunpack.c.h.b16 %v313
    %v1907 = vunpack.c.l.b16 %v314
    %v1908 = vunpack.c.h.b16 %v314
    %v1909 = vunpack.c.l.b16 %v315
    %v1910 = vunpack.c.h.b16 %v315
    %v1911 = vunpack.c.l.b16 %v316
    %v1912 = vunpack.c.h.b16 %v316
    %v1913 = vunpack.c.l.b16 %v317
    %v1914 = vunpack.c.h.b16 %v317
    %v1915 = vunpack.c.l.b16 %v318
    %v1916 = vunpack.c.h.b16 %v318
    %v1917 = vunpack.c.l.b16 %v319
    %v1918 = vunpack.c.h.b16 %v319
    %v1919 = vunpack.c.l.b16 %v320
    %v1920 = vunpack.c.h.b16 %v320
    %v1921 = vunpack.c.l.b16 %v321
    %v1922 = vunpack.c.h.b16 %v321
    %v1923 = vunpack.c.l.b16 %v322
    %v1924 = vunpack.c.h.b16 %v322
    %v1925 = vunpack.c.l.b16 %v323
    %v1926 = vunpack.c.h.b16 %v323
    %v1927 = vunpack.c.l.b16 %v324
    %v1928 = vunpack.c.h.b16 %v324
    %v1929 = vunpack.c.l.b16 %v325
    %v1930 = vunpack.c.h.b16 %v325
    %v1931 = vunpack.c.l.b16 %v326
    %v1932 = vunpack.c.h.b16 %v326
    %v1933 = vunpack.c.l.b16 %v327
    %v1934 = vunpack.c.h.b16 %v327
    %v1935 = vunpack.c.l.b16 %v328
    %v1936 = vunpack.c.h.b16 %v328
    %v1937 = vunpack.c.l.b16 %v329
    %v1938 = vunpack.c.h.b16 %v329
    %v1939 = vunpack.c.l.b16 %v330
    %v1940 = vunpack.c.h.b16 %v330
    %v1941 = vunpack.c.l.b16 %v331
    %v1942 = vunpack.c.h.b16 %v331
    %v1943 = vunpack.c.l.b16 %v332
    %v1944 = vunpack.c.h.b16 %v332
    %v1945 = vunpack.c.l.b16 %v333
    %v1946 = vunpack.c.h.b16 %v333
    %v1947 = vunpack.c.l.b16 %v334
    %v1948 = vunpack.c.h.b16 %v334
    %v1949 = vunpack.c.l.b16 %v335
    %v1950 = vunpack.c.h.b16 %v335
    %v1951 = vunpack.c.l.b16 %v336
    %v1952 = vunpack.c.h.b16 %v336
    %v1953 = vunpack.c.l.b16 %v337
    %v1954 = vunpack.c.h.b16 %v337
    %v1955 = vunpack.c.l.b16 %v338
    %v1956 = vunpack.c.h.b16 %v338
    %v1957 = vunpack.c.l.b16 %v339
    %v1958 = vunpack.c.h.b16 %v339
    %v1959 = vunpack.c.l.b16 %v340
    %v1960 = vunpack.c.h.b16 %v340
    %v1961 = vunpack.c.l.b16 %v341
    %v1962 = vunpack.c.h.b16 %v341
    %v1963 = vunpack.c.l.b16 %v342
    %v1964 = vunpack.c.h.b16 %v342
    %v1965 = vunpack.c.l.b16 %v343
    %v1966 = vunpack.c.h.b16 %v343
    %v1967 = vunpack.c.l.b16 %v344
    %v1968 = vunpack.c.h.b16 %v344
    %v1969 = vunpack.c.l.b16 %v345
    %v1970 = vunpack.c.h.b16 %v345
    %v1971 = vunpack.c.l.b16 %v346
    %v1972 = vunpack.c.h.b16 %v346
    %v1973 = vunpack.c.l.b16 %v347
    %v1974 = vunpack.c.h.b16 %v347
    %v1975 = vunpack.c.l.b16 %v348
    %v1976 = vunpack.c.h.b16 %v348
    %v1977 = vunpack.c.l.b16 %v349
    %v1978 = vunpack.c.h.b16 %v349
    %v1979 = vunpack.c.l.b16 %v350
    %v1980 = vunpack.c.h.b16 %v350
    %v1981 = vunpack.c.l.b16 %v351
    %v1982 = vunpack.c.h.b16 %v351
    %v1983 = vunpack.c.l.b16 %v352
    %v1984 = vunpack.c.h.b16 %v352
    %v1985 = vunpack.c.l.b16 %v353
    %v1986 = vunpack.c.h.b16 %v353
    %v1987 = vunpack.c.l.b16 %v354
    %v1988 = vunpack.c.h.b16 %v354
    %v1989 = vunpack.c.l.b16 %v355
    %v1990 = vunpack.c.h.b16 %v355
    %v1991 = vunpack.c.l.b16 %v356
    %v1992 = vunpack.c.h.b16 %v356
    %v1993 = vunpack.c.l.b16 %v357
    %v1994 = vunpack.c.h.b16 %v357
    %v1995 = vunpack.c.l.b16 %v358
    %v1996 = vunpack.c.h.b16 %v358
    %v1997 = vunpack.c.l.b16 %v359
    %v1998 = vunpack.c.h.b16 %v359
    %v1999 = vunpack.c.l.b16 %v360
    %v2000 = vunpack.c.h.b16 %v360
    %v2001 = vunpack.c.l.b16 %v361
    %v2002 = vunpack.c.h.b16 %v361
    %v2003 = vunpack.c.l.b16 %v362
    %v2004 = vunpack.c.h.b16 %v362
    %v2005 = vunpack.c.l.b16 %v363
    %v2006 = vunpack.c.h.b16 %v363
    %v2007 = vunpack.c.l.b16 %v364
    %v2008 = vunpack.c.h.b16 %v364
    %v2009 = vunpack.c.l.b16 %v365
    %v2010 = vunpack.c.h.b16 %v365
    %v2011 = vunpack.c.l.b16 %v366
    %v2012 = vunpack.c.h.b16 %v366
    %v2013 = vunpack.c.l.b16 %v367
    %v2014 = vunpack.c.h.b16 %v367
    %v2015 = vunpack.c.l.b16 %v368
    %v2016 = vunpack.c.h.b16 %v368
    %v2017 = vunpack.c.l.b16 %v369
    %v2018 = vunpack.c.h.b16 %v369
    %v2019 = vunpack.c.l.b16 %v370
    %v2020 = vunpack.c.h.b16 %v370
    %v2021 = vunpack.c.l.b16 %v371
    %v2022 = vunpack.c.h.b16 %v371
    %v2023 = vunpack.c.l.b16 %v372
    %v2024 = vunpack.c.h.b16 %v372
    %v2025 = vunpack.c.l.b16 %v373
    %v2026 = vunpack.c.h.b16 %v373
    %v2027 = vunpack.c.l.b16 %v374
    %v2028 = vunpack.c.h.b16 %v374
    %v2029 = vunpack.c.l.b16 %v375
    %v2030 = vunpack.c.h.b16 %v375
    %v2031 = vunpack.c.l.b16 %v376
    %v2032 = vunpack.c.h.b16 %v376
    %v2033 = vunpack.c.l.b16 %v377
    %v2034 = vunpack.c.h.b16 %v377
    %v2035 = vunpack.c.l.b16 %v378
    %v2036 = vunpack.c.h.b16 %v378
    %v2037 = vunpack.c.l.b16 %v379
    %v2038 = vunpack.c.h.b16 %v379
    %v2039 = vunpack.c.l.b16 %v380
    %v2040 = vunpack.c.h.b16 %v380
    %v2041 = vunpack.c.l.b16 %v381
    %v2042 = vunpack.c.h.b16 %v381
    %v2043 = vunpack.c.l.b16 %v382
    %v2044 = vunpack.c.h.b16 %v382
    %v2045 = vunpack.c.l.b16 %v383
    %v2046 = vunpack.c.h.b16 %v383
    %v2047 = vunpack.c.l.b16 %v384
    %v2048 = vunpack.c.h.b16 %v384
    %v2049 = vunpack.c.l.b16 %v385
    %v2050 = vunpack.c.h.b16 %v385
    %v2051 = vunpack.c.l.b16 %v386
    %v2052 = vunpack.c.h.b16 %v386
    %v2053 = vunpack.c.l.b16 %v387
    %v2054 = vunpack.c.h.b16 %v387
    %v2055 = vunpack.c.l.b16 %v388
    %v2056 = vunpack.c.h.b16 %v388
    %v2057 = vunpack.c.l.b16 %v389
    %v2058 = vunpack.c.h.b16 %v389
    %v2059 = vunpack.c.l.b16 %v390
    %v2060 = vunpack.c.h.b16 %v390
    %v2061 = vunpack.c.l.b16 %v391
    %v2062 = vunpack.c.h.b16 %v391
    %v2063 = vunpack.c.l.b16 %v392
    %v2064 = vunpack.c.h.b16 %v392
    %v2065 = vunpack.c.l.b16 %v393
    %v2066 = vunpack.c.h.b16 %v393
    %v2067 = vunpack.c.l.b16 %v394
    %v2068 = vunpack.c.h.b16 %v394
    %v2069 = vunpack.c.l.b16 %v395
    %v2070 = vunpack.c.h.b16 %v395
    %v2071 = vunpack.c.l.b16 %v396
    %v2072 = vunpack.c.h.b16 %v396
    %v2073 = vunpack.c.l.b16 %v397
    %v2074 = vunpack.c.h.b16 %v397
    %v2075 = vunpack.c.l.b16 %v398
    %v2076 = vunpack.c.h.b16 %v398
    %v2077 = vunpack.c.l.b16 %v399
    %v2078 = vunpack.c.h.b16 %v399
    %v2079 = vunpack.c.l.b16 %v400
    %v2080 = vunpack.c.h.b16 %v400
    %v2081 = vunpack.c.l.b16 %v401
    %v2082 = vunpack.c.h.b16 %v401
    %v2083 = vunpack.c.l.b16 %v402
    %v2084 = vunpack.c.h.b16 %v402
    %v2085 = vunpack.c.l.b16 %v403
    %v2086 = vunpack.c.h.b16 %v403
    %v2087 = vunpack.c.l.b16 %v404
    %v2088 = vunpack.c.h.b16 %v404
    %v2089 = vunpack.c.l.b16 %v405
    %v2090 = vunpack.c.h.b16 %v405
    %v2091 = vunpack.c.l.b16 %v406
    %v2092 = vunpack.c.h.b16 %v406
    %v2093 = vunpack.c.l.b16 %v407
    %v2094 = vunpack.c.h.b16 %v407
    %v2095 = vunpack.c.l.b16 %v408
    %v2096 = vunpack.c.h.b16 %v408
    %v2097 = vunpack.c.l.b16 %v409
    %v2098 = vunpack.c.h.b16 %v409
    %v2099 = vunpack.c.l.b16 %v410
    %v2100 = vunpack.c.h.b16 %v410
    %v2101 = vunpack.c.l.b16 %v411
    %v2102 = vunpack.c.h.b16 %v411
    %v2103 = vunpack.c.l.b16 %v412
    %v2104 = vunpack.c.h.b16 %v412
    %v2105 = vunpack.c.l.b16 %v413
    %v2106 = vunpack.c.h.b16 %v413
    %v2107 = vunpack.c.l.b16 %v414
    %v2108 = vunpack.c.h.b16 %v414
    %v2109 = vunpack.c.l.b16 %v415
    %v2110 = vunpack.c.h.b16 %v415
    %v2111 = vunpack.c.l.b16 %v416
    %v2112 = vunpack.c.h.b16 %v416
    %v2113 = vunpack.c.l.b16 %v417
    %v2114 = vunpack.c.h.b16 %v417
    %v2115 = vunpack.c.l.b16 %v418
    %v2116 = vunpack.c.h.b16 %v418
    %v2117 = vunpack.c.l.b16 %v419
    %v2118 = vunpack.c.h.b16 %v419
    %v2119 = vunpack.c.l.b16 %v420
    %v2120 = vunpack.c.h.b16 %v420
    %v2121 = vunpack.c.l.b16 %v421
    %v2122 = vunpack.c.h.b16 %v421
    %v2123 = vunpack.c.l.b16 %v422
    %v2124 = vunpack.c.h.b16 %v422
    %v2125 = vunpack.c.l.b16 %v423
    %v2126 = vunpack.c.h.b16 %v423
    %v2127 = vunpack.c.l.b16 %v424
    %v2128 = vunpack.c.h.b16 %v424
    %v2129 = vunpack.c.l.b16 %v425
    %v2130 = vunpack.c.h.b16 %v425
    %v2131 = vunpack.c.l.b16 %v426
    %v2132 = vunpack.c.h.b16 %v426
    %v2133 = vunpack.c.l.b16 %v427
    %v2134 = vunpack.c.h.b16 %v427
    %v2135 = vunpack.c.l.b16 %v428
    %v2136 = vunpack.c.h.b16 %v428
    %v2137 = vunpack.c.l.b16 %v429
    %v2138 = vunpack.c.h.b16 %v429
    %v2139 = vunpack.c.l.b16 %v430
    %v2140 = vunpack.c.h.b16 %v430
    %v2141 = vunpack.c.l.b16 %v431
    %v2142 = vunpack.c.h.b16 %v431
    %v2143 = vunpack.c.l.b16 %v432
    %v2144 = vunpack.c.h.b16 %v432
    %v2145 = vunpack.c.l.b16 %v433
    %v2146 = vunpack.c.h.b16 %v433
    %v2147 = vunpack.c.l.b16 %v434
    %v2148 = vunpack.c.h.b16 %v434
    %v2149 = vunpack.c.l.b16 %v435
    %v2150 = vunpack.c.h.b16 %v435
    %v2151 = vunpack.c.l.b16 %v436
    %v2152 = vunpack.c.h.b16 %v436
    %v2153 = vunpack.c.l.b16 %v437
    %v2154 = vunpack.c.h.b16 %v437
    %v2155 = vunpack.c.l.b16 %v438
    %v2156 = vunpack.c.h.b16 %v438
    %v2157 = vunpack.c.l.b16 %v439
    %v2158 = vunpack.c.h.b16 %v439
    %v2159 = vunpack.c.l.b16 %v440
    %v2160 = vunpack.c.h.b16 %v440
    %v2161 = vunpack.c.l.b16 %v441
    %v2162 = vunpack.c.h.b16 %v441
    %v2163 = vunpack.c.l.b16 %v442
    %v2164 = vunpack.c.h.b16 %v442
    %v2165 = vunpack.c.l.b16 %v443
    %v2166 = vunpack.c.h.b16 %v443
    %v2167 = vunpack.c.l.b16 %v444
    %v2168 = vunpack.c.h.b16 %v444
    %v2169 = vunpack.c.l.b16 %v445
    %v2170 = vunpack.c.h.b16 %v445
    %v2171 = vunpack.c.l.b16 %v446
    %v2172 = vunpack.c.h.b16 %v446
    %v2173 = vunpack.c.l.b16 %v447
    %v2174 = vunpack.c.h.b16 %v447
    %v2175 = vunpack.c.l.b16 %v448
    %v2176 = vunpack.c.h.b16 %v448
    %v2177 = vunpack.c.l.b16 %v449
    %v2178 = vunpack.c.h.b16 %v449
    %v2179 = vunpack.c.l.b16 %v450
    %v2180 = vunpack.c.h.b16 %v450
    %v2181 = vunpack.c.l.b16 %v451
    %v2182 = vunpack.c.h.b16 %v451
    %v2183 = vunpack.c.l.b16 %v452
    %v2184 = vunpack.c.h.b16 %v452
    %v2185 = vunpack.c.l.b16 %v453
    %v2186 = vunpack.c.h.b16 %v453
    %v2187 = vunpack.c.l.b16 %v454
    %v2188 = vunpack.c.h.b16 %v454
    %v2189 = vunpack.c.l.b16 %v455
    %v2190 = vunpack.c.h.b16 %v455
    %v2191 = vunpack.c.l.b16 %v456
    %v2192 = vunpack.c.h.b16 %v456
    %v2193 = vunpack.c.l.b16 %v457
    %v2194 = vunpack.c.h.b16 %v457
    %v2195 = vunpack.c.l.b16 %v458
    %v2196 = vunpack.c.h.b16 %v458
    %v2197 = vunpack.c.l.b16 %v459
    %v2198 = vunpack.c.h.b16 %v459
    %v2199 = vunpack.c.l.b16 %v460
    %v2200 = vunpack.c.h.b16 %v460
    %v2201 = vunpack.c.l.b16 %v461
    %v2202 = vunpack.c.h.b16 %v461
    %v2203 = vunpack.c.l.b16 %v462
    %v2204 = vunpack.c.h.b16 %v462
    %v2205 = vunpack.c.l.b16 %v463
    %v2206 = vunpack.c.h.b16 %v463
    %v2207 = vunpack.c.l.b16 %v464
    %v2208 = vunpack.c.h.b16 %v464
    %v2209 = vunpack.c.l.b16 %v465
    %v2210 = vunpack.c.h.b16 %v465
    %v2211 = vunpack.c.l.b16 %v466
    %v2212 = vunpack.c.h.b16 %v466
    %v2213 = vunpack.c.l.b16 %v467
    %v2214 = vunpack.c.h.b16 %v467
    %v2215 = vunpack.c.l.b16 %v468
    %v2216 = vunpack.c.h.b16 %v468
    %v2217 = vunpack.c.l.b16 %v469
    %v2218 = vunpack.c.h.b16 %v469
    %v2219 = vunpack.c.l.b16 %v470
    %v2220 = vunpack.c.h.b16 %v470
    %v2221 = vunpack.c.l.b16 %v471
    %v2222 = vunpack.c.h.b16 %v471
    %v2223 = vunpack.c.l.b16 %v472
    %v2224 = vunpack.c.h.b16 %v472
    %v2225 = vunpack.c.l.b16 %v473
    %v2226 = vunpack.c.h.b16 %v473
    %v2227 = vunpack.c.l.b16 %v474
    %v2228 = vunpack.c.h.b16 %v474
    %v2229 = vunpack.c.l.b16 %v475
    %v2230 = vunpack.c.h.b16 %v475
    %v2231 = vunpack.c.l.b16 %v476
    %v2232 = vunpack.c.h.b16 %v476
    %v2233 = vunpack.c.l.b16 %v477
    %v2234 = vunpack.c.h.b16 %v477
    %v2235 = vunpack.c.l.b16 %v478
    %v2236 = vunpack.c.h.b16 %v478
    %v2237 = vunpack.c.l.b16 %v479
    %v2238 = vunpack.c.h.b16 %v479
    %v2239 = vunpack.c.l.b16 %v480
    %v2240 = vunpack.c.h.b16 %v480
    %v2241 = vunpack.c.l.b16 %v481
    %v2242 = vunpack.c.h.b16 %v481
    %v2243 = vunpack.c.l.b16 %v482
    %v2244 = vunpack.c.h.b16 %v482
    %v2245 = vunpack.c.l.b16 %v483
    %v2246 = vunpack.c.h.b16 %v483
    %v2247 = vunpack.c.l.b16 %v484
    %v2248 = vunpack.c.h.b16 %v484
    %v2249 = vunpack.c.l.b16 %v485
    %v2250 = vunpack.c.h.b16 %v485
    %v2251 = vunpack.c.l.b16 %v486
    %v2252 = vunpack.c.h.b16 %v486
    %v2253 = vunpack.c.l.b16 %v487
    %v2254 = vunpack.c.h.b16 %v487
    %v2255 = vunpack.c.l.b16 %v488
    %v2256 = vunpack.c.h.b16 %v488
    %v2257 = vunpack.c.l.b16 %v489
    %v2258 = vunpack.c.h.b16 %v489
    %v2259 = vunpack.c.l.b16 %v490
    %v2260 = vunpack.c.h.b16 %v490
    %v2261 = vunpack.c.l.b16 %v491
    %v2262 = vunpack.c.h.b16 %v491
    %v2263 = vunpack.c.l.b16 %v492
    %v2264 = vunpack.c.h.b16 %v492
    %v2265 = vunpack.c.l.b16 %v493
    %v2266 = vunpack.c.h.b16 %v493
    %v2267 = vunpack.c.l.b16 %v494
    %v2268 = vunpack.c.h.b16 %v494
    %v2269 = vunpack.c.l.b16 %v495
    %v2270 = vunpack.c.h.b16 %v495
    %v2271 = vunpack.c.l.b16 %v496
    %v2272 = vunpack.c.h.b16 %v496
    %v2273 = vunpack.c.l.b16 %v497
    %v2274 = vunpack.c.h.b16 %v497
    %v2275 = vunpack.c.l.b16 %v498
    %v2276 = vunpack.c.h.b16 %v498
    %v2277 = vunpack.c.l.b16 %v499
    %v2278 = vunpack.c.h.b16 %v499
    %v2279 = vunpack.c.l.b16 %v500
    %v2280 = vunpack.c.h.b16 %v500
    %v2281 = vunpack.c.l.b16 %v501
    %v2282 = vunpack.c.h.b16 %v501
    %v2283 = vunpack.c.l.b16 %v502
    %v2284 = vunpack.c.h.b16 %v502
    %v2285 = vunpack.c.l.b16 %v503
    %v2286 = vunpack.c.h.b16 %v503
    %v2287 = vunpack.c.l.b16 %v504
    %v2288 = vunpack.c.h.b16 %v504
    %v2289 = vunpack.c.l.b16 %v505
    %v2290 = vunpack.c.h.b16 %v505
    %v2291 = vunpack.c.l.b16 %v506
    %v2292 = vunpack.c.h.b16 %v506
    %v2293 = vunpack.c.l.b16 %v507
    %v2294 = vunpack.c.h.b16 %v507
    %v2295 = vunpack.c.l.b16 %v508
    %v2296 = vunpack.c.h.b16 %v508
    %v2297 = vunpack.c.l.b16 %v509
    %v2298 = vunpack.c.h.b16 %v509
    %v2299 = vunpack.c.l.b16 %v510
    %v2300 = vunpack.c.h.b16 %v510
    %v2301 = vunpack.c.l.b16 %v511
    %v2302 = vunpack.c.h.b16 %v511
    %v2303 = vunpack.c.l.b16 %v512
    %v2304 = vunpack.c.h.b16 %v512
    %v2305 = vunpack.c.l.b16 %v513
    %v2306 = vunpack.c.h.b16 %v513
    %v2307 = vunpack.c.l.b16 %v514
    %v2308 = vunpack.c.h.b16 %v514
    %v2309 = vunpack.c.l.b16 %v515
    %v2310 = vunpack.c.h.b16 %v515
    %v2311 = vunpack.c.l.b16 %v516
    %v2312 = vunpack.c.h.b16 %v516
    %v2313 = vunpack.c.l.b16 %v517
    %v2314 = vunpack.c.h.b16 %v517
    %v2315 = vunpack.c.l.b16 %v518
    %v2316 = vunpack.c.h.b16 %v518
    %v2317 = vunpack.c.l.b16 %v519
    %v2318 = vunpack.c.h.b16 %v519
    %v2319 = vunpack.c.l.b16 %v520
    %v2320 = vunpack.c.h.b16 %v520
    %v2321 = vunpack.c.l.b16 %v521
    %v2322 = vunpack.c.h.b16 %v521
    %v2323 = vunpack.c.l.b16 %v522
    %v2324 = vunpack.c.h.b16 %v522
    %v2325 = vunpack.c.l.b16 %v523
    %v2326 = vunpack.c.h.b16 %v523
    %v2327 = vunpack.c.l.b16 %v524
    %v2328 = vunpack.c.h.b16 %v524
    %v2329 = vunpack.c.l.b16 %v525
    %v2330 = vunpack.c.h.b16 %v525
    %v2331 = vunpack.c.l.b16 %v526
    %v2332 = vunpack.c.h.b16 %v526
    %v2333 = vunpack.c.l.b16 %v527
    %v2334 = vunpack.c.h.b16 %v527
    %v2335 = vunpack.c.l.b16 %v528
    %v2336 = vunpack.c.h.b16 %v528
    %v2337 = vunpack.c.l.b16 %v529
    %v2338 = vunpack.c.h.b16 %v529
    %v2339 = vunpack.c.l.b16 %v530
    %v2340 = vunpack.c.h.b16 %v530
    %v2341 = vunpack.c.l.b16 %v531
    %v2342 = vunpack.c.h.b16 %v531
    %v2343 = vunpack.c.l.b16 %v532
    %v2344 = vunpack.c.h.b16 %v532
    %v2345 = vunpack.c.l.b16 %v533
    %v2346 = vunpack.c.h.b16 %v533
    %v2347 = vunpack.c.l.b16 %v534
    %v2348 = vunpack.c.h.b16 %v534
    %v2349 = vunpack.c.l.b16 %v535
    %v2350 = vunpack.c.h.b16 %v535
    %v2351 = vunpack.c.l.b16 %v536
    %v2352 = vunpack.c.h.b16 %v536
    %v2353 = vunpack.c.l.b16 %v537
    %v2354 = vunpack.c.h.b16 %v537
    %v2355 = vunpack.c.l.b16 %v538
    %v2356 = vunpack.c.h.b16 %v538
    %v2357 = vunpack.c.l.b16 %v539
    %v2358 = vunpack.c.h.b16 %v539
    %v2359 = vunpack.c.l.b16 %v540
    %v2360 = vunpack.c.h.b16 %v540
    %v2361 = vunpack.c.l.b16 %v541
    %v2362 = vunpack.c.h.b16 %v541
    %v2363 = vunpack.c.l.b16 %v542
    %v2364 = vunpack.c.h.b16 %v542
    %v2365 = vunpack.c.l.b16 %v543
    %v2366 = vunpack.c.h.b16 %v543
    %v2367 = vunpack.c.l.b16 %v544
    %v2368 = vunpack.c.h.b16 %v544
    %v2369 = vunpack.c.l.b16 %v545
    %v2370 = vunpack.c.h.b16 %v545
    %v2371 = vunpack.c.l.b16 %v546
    %v2372 = vunpack.c.h.b16 %v546
    %v2373 = vunpack.c.l.b16 %v547
    %v2374 = vunpack.c.h.b16 %v547
    %v2375 = vunpack.c.l.b16 %v548
    %v2376 = vunpack.c.h.b16 %v548
    %v2377 = vunpack.c.l.b16 %v549
    %v2378 = vunpack.c.h.b16 %v549
    %v2379 = vunpack.c.l.b16 %v550
    %v2380 = vunpack.c.h.b16 %v550
    %v2381 = vunpack.c.l.b16 %v551
    %v2382 = vunpack.c.h.b16 %v551
    %v2383 = vunpack.c.l.b16 %v552
    %v2384 = vunpack.c.h.b16 %v552
    %v2385 = vunpack.c.l.b16 %v553
    %v2386 = vunpack.c.h.b16 %v553
    %v2387 = vunpack.c.l.b16 %v554
    %v2388 = vunpack.c.h.b16 %v554
    %v2389 = vunpack.c.l.b16 %v555
    %v2390 = vunpack.c.h.b16 %v555
    %v2391 = vunpack.c.l.b16 %v556
    %v2392 = vunpack.c.h.b16 %v556
    %v2393 = vunpack.c.l.b16 %v557
    %v2394 = vunpack.c.h.b16 %v557
    %v2395 = vunpack.c.l.b16 %v558
    %v2396 = vunpack.c.h.b16 %v558
    %v2397 = vunpack.c.l.b16 %v559
    %v2398 = vunpack.c.h.b16 %v559
    %v2399 = vunpack.c.l.b16 %v560
    %v2400 = vunpack.c.h.b16 %v560
    %v2401 = vunpack.c.l.b16 %v561
    %v2402 = vunpack.c.h.b16 %v561
    %v2403 = vunpack.c.l.b16 %v562
    %v2404 = vunpack.c.h.b16 %v562
    %v2405 = vunpack.c.l.b16 %v563
    %v2406 = vunpack.c.h.b16 %v563
    %v2407 = vunpack.c.l.b16 %v564
    %v2408 = vunpack.c.h.b16 %v564
    %v2409 = vunpack.c.l.b16 %v565
    %v2410 = vunpack.c.h.b16 %v565
    %v2411 = vunpack.c.l.b16 %v566
    %v2412 = vunpack.c.h.b16 %v566
    %v2413 = vunpack.c.l.b16 %v567
    %v2414 = vunpack.c.h.b16 %v567
    %v2415 = vunpack.c.l.b16 %v568
    %v2416 = vunpack.c.h.b16 %v568
    %v2417 = vunpack.c.l.b16 %v569
    %v2418 = vunpack.c.h.b16 %v569
    %v2419 = vunpack.c.l.b16 %v570
    %v2420 = vunpack.c.h.b16 %v570
    %v2421 = vunpack.c.l.b16 %v571
    %v2422 = vunpack.c.h.b16 %v571
    %v2423 = vunpack.c.l.b16 %v572
    %v2424 = vunpack.c.h.b16 %v572
    %v2425 = vunpack.c.l.b16 %v573
    %v2426 = vunpack.c.h.b16 %v573
    %v2427 = vunpack.c.l.b16 %v574
    %v2428 = vunpack.c.h.b16 %v574
    %v2429 = vunpack.c.l.b16 %v575
    %v2430 = vunpack.c.h.b16 %v575
    %v2431 = vunpack.c.l.b16 %v576
    %v2432 = vunpack.c.h.b16 %v576
    %v2433 = vunpack.c.l.b16 %v577
    %v2434 = vunpack.c.h.b16 %v577
    %v2435 = vunpack.c.l.b16 %v578
    %v2436 = vunpack.c.h.b16 %v578
    %v2437 = vunpack.c.l.b16 %v579
    %v2438 = vunpack.c.h.b16 %v579
    %v2439 = vunpack.c.l.b16 %v580
    %v2440 = vunpack.c.h.b16 %v580
    %v2441 = vunpack.c.l.b16 %v581
    %v2442 = vunpack.c.h.b16 %v581
    %v2443 = vunpack.c.l.b16 %v582
    %v2444 = vunpack.c.h.b16 %v582
    %v2445 = vunpack.c.l.b16 %v583
    %v2446 = vunpack.c.h.b16 %v583
    %v2447 = vunpack.c.l.b16 %v584
    %v2448 = vunpack.c.h.b16 %v584
    %v2449 = vunpack.c.l.b16 %v585
    %v2450 = vunpack.c.h.b16 %v585
    %v2451 = vunpack.c.l.b16 %v586
    %v2452 = vunpack.c.h.b16 %v586
    %v2453 = vunpack.c.l.b16 %v587
    %v2454 = vunpack.c.h.b16 %v587
    %v2455 = vunpack.c.l.b16 %v588
    %v2456 = vunpack.c.h.b16 %v588
    %v2457 = vunpack.c.l.b16 %v589
    %v2458 = vunpack.c.h.b16 %v589
    %v2459 = vunpack.c.l.b16 %v590
    %v2460 = vunpack.c.h.b16 %v590
    %v2461 = vunpack.c.l.b16 %v591
    %v2462 = vunpack.c.h.b16 %v591
    %v2463 = vunpack.c.l.b16 %v592
    %v2464 = vunpack.c.h.b16 %v592
    %v2465 = vunpack.c.l.b16 %v593
    %v2466 = vunpack.c.h.b16 %v593
    %v2467 = vunpack.c.l.b16 %v594
    %v2468 = vunpack.c.h.b16 %v594
    %v2469 = vunpack.c.l.b16 %v595
    %v2470 = vunpack.c.h.b16 %v595
    %v2471 = vunpack.c.l.b16 %v596
    %v2472 = vunpack.c.h.b16 %v596
    %v2473 = vunpack.c.l.b16 %v597
    %v2474 = vunpack.c.h.b16 %v597
    %v2475 = vunpack.c.l.b16 %v598
    %v2476 = vunpack.c.h.b16 %v598
    %v2477 = vunpack.c.l.b16 %v599
    %v2478 = vunpack.c.h.b16 %v599
    %v2479 = vunpack.c.l.b16 %v600
    %v2480 = vunpack.c.h.b16 %v600
    %v2481 = vunpack.c.l.b16 %v601
    %v2482 = vunpack.c.h.b16 %v601
    %v2483 = vunpack.c.l.b16 %v602
    %v2484 = vunpack.c.h.b16 %v602
    %v2485 = vunpack.c.l.b16 %v603
    %v2486 = vunpack.c.h.b16 %v603
    %v2487 = vunpack.c.l.b16 %v604
    %v2488 = vunpack.c.h.b16 %v604
    %v2489 = vunpack.c.l.b16 %v605
    %v2490 = vunpack.c.h.b16 %v605
    %v2491 = vunpack.c.l.b16 %v606
    %v2492 = vunpack.c.h.b16 %v606
    %v2493 = vunpack.c.l.b16 %v607
    %v2494 = vunpack.c.h.b16 %v607
    %v2495 = vunpack.c.l.b16 %v608
    %v2496 = vunpack.c.h.b16 %v608
    %v2497 = vunpack.c.l.b16 %v609
    %v2498 = vunpack.c.h.b16 %v609
    %v2499 = vunpack.c.l.b16 %v610
    %v2500 = vunpack.c.h.b16 %v610
    %v2501 = vunpack.c.l.b16 %v611
    %v2502 = vunpack.c.h.b16 %v611
    %v2503 = vunpack.c.l.b16 %v612
    %v2504 = vunpack.c.h.b16 %v612
    %v2505 = vunpack.c.l.b16 %v613
    %v2506 = vunpack.c.h.b16 %v613
    %v2507 = vunpack.c.l.b16 %v614
    %v2508 = vunpack.c.h.b16 %v614
    %v2509 = vunpack.c.l.b16 %v615
    %v2510 = vunpack.c.h.b16 %v615
    %v2511 = vunpack.c.l.b16 %v616
    %v2512 = vunpack.c.h.b16 %v616
    %v2513 = vunpack.c.l.b16 %v617
    %v2514 = vunpack.c.h.b16 %v617
    %v2515 = vunpack.c.l.b16 %v618
    %v2516 = vunpack.c.h.b16 %v618
    %v2517 = vunpack.c.l.b16 %v619
    %v2518 = vunpack.c.h.b16 %v619
    %v2519 = vunpack.c.l.b16 %v620
    %v2520 = vunpack.c.h.b16 %v620
    %v2521 = vunpack.c.l.b16 %v621
    %v2522 = vunpack.c.h.b16 %v621
    %v2523 = vunpack.c.l.b16 %v622
    %v2524 = vunpack.c.h.b16 %v622
    %v2525 = vunpack.c.l.b16 %v623
    %v2526 = vunpack.c.h.b16 %v623
    %v2527 = vunpack.c.l.b16 %v624
    %v2528 = vunpack.c.h.b16 %v624
    %v2529 = vunpack.c.l.b16 %v625
    %v2530 = vunpack.c.h.b16 %v625
    %v2531 = vunpack.c.l.b16 %v626
    %v2532 = vunpack.c.h.b16 %v626
    %v2533 = vunpack.c.l.b16 %v627
    %v2534 = vunpack.c.h.b16 %v627
    %v2535 = vunpack.c.l.b16 %v628
    %v2536 = vunpack.c.h.b16 %v628
    %v2537 = vunpack.c.l.b16 %v629
    %v2538 = vunpack.c.h.b16 %v629
    %v2539 = vunpack.c.l.b16 %v630
    %v2540 = vunpack.c.h.b16 %v630
    %v2541 = vunpack.c.l.b16 %v631
    %v2542 = vunpack.c.h.b16 %v631
    %v2543 = vunpack.c.l.b16 %v632
    %v2544 = vunpack.c.h.b16 %v632
    %v2545 = vunpack.c.l.b16 %v633
    %v2546 = vunpack.c.h.b16 %v633
    %v2547 = vunpack.c.l.b16 %v634
    %v2548 = vunpack.c.h.b16 %v634
    %v2549 = vunpack.c.l.b16 %v635
    %v2550 = vunpack.c.h.b16 %v635
    %v2551 = vunpack.c.l.b16 %v636
    %v2552 = vunpack.c.h.b16 %v636
    %v2553 = vunpack.c.l.b16 %v637
    %v2554 = vunpack.c.h.b16 %v637
    %v2555 = vunpack.c.l.b16 %v638
    %v2556 = vunpack.c.h.b16 %v638
    %v2557 = vunpack.c.l.b16 %v639
    %v2558 = vunpack.c.h.b16 %v639
    %v2559 = vunpack.c.l.b16 %v640
    %v2560 = vunpack.c.h.b16 %v640
    %v2561 = vunpack.c.l.b16 %v641
    %v2562 = vunpack.c.h.b16 %v641
    %v2563 = vunpack.c.l.b16 %v642
    %v2564 = vunpack.c.h.b16 %v642
    %v2565 = vunpack.c.l.b16 %v643
    %v2566 = vunpack.c.h.b16 %v643
    %v2567 = vunpack.c.l.b16 %v644
    %v2568 = vunpack.c.h.b16 %v644
    %v2569 = vunpack.c.l.b16 %v645
    %v2570 = vunpack.c.h.b16 %v645
    %v2571 = vunpack.c.l.b16 %v646
    %v2572 = vunpack.c.h.b16 %v646
    %v2573 = vunpack.c.l.b16 %v647
    %v2574 = vunpack.c.h.b16 %v647
    %v2575 = vunpack.c.l.b16 %v648
    %v2576 = vunpack.c.h.b16 %v648
    %v2577 = vunpack.c.l.b16 %v649
    %v2578 = vunpack.c.h.b16 %v649
    %v2579 = vunpack.c.l.b16 %v650
    %v2580 = vunpack.c.h.b16 %v650
    %v2581 = vunpack.c.l.b16 %v651
    %v2582 = vunpack.c.h.b16 %v651
    %v2583 = vunpack.c.l.b16 %v652
    %v2584 = vunpack.c.h.b16 %v652
    %v2585 = vunpack.c.l.b16 %v653
    %v2586 = vunpack.c.h.b16 %v653
    %v2587 = vunpack.c.l.b16 %v654
    %v2588 = vunpack.c.h.b16 %v654
    %v2589 = vunpack.c.l.b16 %v655
    %v2590 = vunpack.c.h.b16 %v655
    %v2591 = vunpack.c.l.b16 %v656
    %v2592 = vunpack.c.h.b16 %v656
    %v2593 = vunpack.c.l.b16 %v657
    %v2594 = vunpack.c.h.b16 %v657
    %v2595 = vunpack.c.l.b16 %v658
    %v2596 = vunpack.c.h.b16 %v658
    %v2597 = vunpack.c.l.b16 %v659
    %v2598 = vunpack.c.h.b16 %v659
    %v2599 = vunpack.c.l.b16 %v660
    %v2600 = vunpack.c.h.b16 %v660
    %v2601 = vunpack.c.l.b16 %v661
    %v2602 = vunpack.c.h.b16 %v661
    %v2603 = vunpack.c.l.b16 %v662
    %v2604 = vunpack.c.h.b16 %v662
    %v2605 = vunpack.c.l.b16 %v663
    %v2606 = vunpack.c.h.b16 %v663
    %v2607 = vunpack.c.l.b16 %v664
    %v2608 = vunpack.c.h.b16 %v664
    %v2609 = vunpack.c.l.b16 %v665
    %v2610 = vunpack.c.h.b16 %v665
    %v2611 = vunpack.c.l.b16 %v666
    %v2612 = vunpack.c.h.b16 %v666
    %v2613 = vunpack.c.l.b16 %v667
    %v2614 = vunpack.c.h.b16 %v667
    %v2615 = vunpack.c.l.b16 %v668
    %v2616 = vunpack.c.h.b16 %v668
    %v2617 = vunpack.c.l.b16 %v669
    %v2618 = vunpack.c.h.b16 %v669
    %v2619 = vunpack.c.l.b16 %v670
    %v2620 = vunpack.c.h.b16 %v670
    %v2621 = vunpack.c.l.b16 %v671
    %v2622 = vunpack.c.h.b16 %v671
    %v2623 = vunpack.c.l.b16 %v672
    %v2624 = vunpack.c.h.b16 %v672
    %v2625 = vunpack.c.l.b16 %v673
    %v2626 = vunpack.c.h.b16 %v673
    %v2627 = vunpack.c.l.b16 %v674
    %v2628 = vunpack.c.h.b16 %v674
    %v2629 = vunpack.c.l.b16 %v675
    %v2630 = vunpack.c.h.b16 %v675
    %v2631 = vunpack.c.l.b16 %v676
    %v2632 = vunpack.c.h.b16 %v676
    %v2633 = vunpack.c.l.b16 %v677
    %v2634 = vunpack.c.h.b16 %v677
    %v2635 = vunpack.c.l.b16 %v678
    %v2636 = vunpack.c.h.b16 %v678
    %v2637 = vunpack.c.l.b16 %v679
    %v2638 = vunpack.c.h.b16 %v679
    %v2639 = vunpack.c.l.b16 %v680
    %v2640 = vunpack.c.h.b16 %v680
    %v2641 = vunpack.c.l.b16 %v681
    %v2642 = vunpack.c.h.b16 %v681
    %v2643 = vunpack.c.l.b16 %v682
    %v2644 = vunpack.c.h.b16 %v682
    %v2645 = vunpack.c.l.b16 %v683
    %v2646 = vunpack.c.h.b16 %v683
    %v2647 = vunpack.c.l.b16 %v684
    %v2648 = vunpack.c.h.b16 %v684
    %v2649 = vunpack.c.l.b16 %v685
    %v2650 = vunpack.c.h.b16 %v685
    %v2651 = vunpack.c.l.b16 %v686
    %v2652 = vunpack.c.h.b16 %v686
    %v2653 = vunpack.c.l.b16 %v687
    %v2654 = vunpack.c.h.b16 %v687
    %v2655 = vunpack.c.l.b16 %v688
    %v2656 = vunpack.c.h.b16 %v688
    %v2657 = vunpack.c.l.b16 %v689
    %v2658 = vunpack.c.h.b16 %v689
    %v2659 = vunpack.c.l.b16 %v690
    %v2660 = vunpack.c.h.b16 %v690
    %v2661 = vunpack.c.l.b16 %v691
    %v2662 = vunpack.c.h.b16 %v691
    %v2663 = vunpack.c.l.b16 %v692
    %v2664 = vunpack.c.h.b16 %v692
    %v2665 = vunpack.c.l.b16 %v693
    %v2666 = vunpack.c.h.b16 %v693
    %v2667 = vunpack.c.l.b16 %v694
    %v2668 = vunpack.c.h.b16 %v694
    %v2669 = vunpack.c.l.b16 %v695
    %v2670 = vunpack.c.h.b16 %v695
    %v2671 = vunpack.c.l.b16 %v696
    %v2672 = vunpack.c.h.b16 %v696
    %v2673 = vunpack.c.l.b16 %v697
    %v2674 = vunpack.c.h.b16 %v697
    %v2675 = vunpack.c.l.b16 %v698
    %v2676 = vunpack.c.h.b16 %v698
    %v2677 = vunpack.c.l.b16 %v699
    %v2678 = vunpack.c.h.b16 %v699
    %v2679 = vunpack.c.l.b16 %v700
    %v2680 = vunpack.c.h.b16 %v700
    %v2681 = vunpack.c.l.b16 %v701
    %v2682 = vunpack.c.h.b16 %v701
    %v2683 = vunpack.c.l.b16 %v702
    %v2684 = vunpack.c.h.b16 %v702
    %v2685 = vunpack.c.l.b16 %v703
    %v2686 = vunpack.c.h.b16 %v703
    %v2687 = vunpack.c.l.b16 %v704
    %v2688 = vunpack.c.h.b16 %v704
    %v2689 = vunpack.c.l.b16 %v705
    %v2690 = vunpack.c.h.b16 %v705
    %v2691 = vunpack.c.l.b16 %v706
    %v2692 = vunpack.c.h.b16 %v706
    %v2693 = vunpack.c.l.b16 %v707
    %v2694 = vunpack.c.h.b16 %v707
    %v2695 = vunpack.c.l.b16 %v708
    %v2696 = vunpack.c.h.b16 %v708
    %v2697 = vunpack.c.l.b16 %v709
    %v2698 = vunpack.c.h.b16 %v709
    %v2699 = vunpack.c.l.b16 %v710
    %v2700 = vunpack.c.h.b16 %v710
    %v2701 = vunpack.c.l.b16 %v711
    %v2702 = vunpack.c.h.b16 %v711
    %v2703 = vunpack.c.l.b16 %v712
    %v2704 = vunpack.c.h.b16 %v712
    %v2705 = vunpack.c.l.b16 %v713
    %v2706 = vunpack.c.h.b16 %v713
    %v2707 = vunpack.c.l.b16 %v714
    %v2708 = vunpack.c.h.b16 %v714
    %v2709 = vunpack.c.l.b16 %v715
    %v2710 = vunpack.c.h.b16 %v715
    %v2711 = vunpack.c.l.b16 %v716
    %v2712 = vunpack.c.h.b16 %v716
    %v2713 = vunpack.c.l.b16 %v717
    %v2714 = vunpack.c.h.b16 %v717
    %v2715 = vunpack.c.l.b16 %v718
    %v2716 = vunpack.c.h.b16 %v718
    %v2717 = vunpack.c.l.b16 %v719
    %v2718 = vunpack.c.h.b16 %v719
    %v2719 = vunpack.c.l.b16 %v720
    %v2720 = vunpack.c.h.b16 %v720
    %v2721 = vunpack.c.l.b16 %v721
    %v2722 = vunpack.c.h.b16 %v721
    %v2723 = vunpack.c.l.b16 %v722
    %v2724 = vunpack.c.h.b16 %v722
    %v2725 = vunpack.c.l.b16 %v723
    %v2726 = vunpack.c.h.b16 %v723
    %v2727 = vunpack.c.l.b16 %v724
    %v2728 = vunpack.c.h.b16 %v724
    %v2729 = vunpack.c.l.b16 %v725
    %v2730 = vunpack.c.h.b16 %v725
    %v2731 = vunpack.c.l.b16 %v726
    %v2732 = vunpack.c.h.b16 %v726
    %v2733 = vunpack.c.l.b16 %v727
    %v2734 = vunpack.c.h.b16 %v727
    %v2735 = vunpack.c.l.b16 %v728
    %v2736 = vunpack.c.h.b16 %v728
    %v2737 = vunpack.c.l.b16 %v729
    %v2738 = vunpack.c.h.b16 %v729
    %v2739 = vunpack.c.l.b16 %v730
    %v2740 = vunpack.c.h.b16 %v730
    %v2741 = vunpack.c.l.b16 %v731
    %v2742 = vunpack.c.h.b16 %v731
    %v2743 = vunpack.c.l.b16 %v732
    %v2744 = vunpack.c.h.b16 %v732
    %v2745 = vunpack.c.l.b16 %v733
    %v2746 = vunpack.c.h.b16 %v733
    %v2747 = vunpack.c.l.b16 %v734
    %v2748 = vunpack.c.h.b16 %v734
    %v2749 = vunpack.c.l.b16 %v735
    %v2750 = vunpack.c.h.b16 %v735
    %v2751 = vunpack.c.l.b16 %v736
    %v2752 = vunpack.c.h.b16 %v736
    %v2753 = vunpack.c.l.b16 %v737
    %v2754 = vunpack.c.h.b16 %v737
    %v2755 = vunpack.c.l.b16 %v738
    %v2756 = vunpack.c.h.b16 %v738
    %v2757 = vunpack.c.l.b16 %v739
    %v2758 = vunpack.c.h.b16 %v739
    %v2759 = vunpack.c.l.b16 %v740
    %v2760 = vunpack.c.h.b16 %v740
    %v2761 = vunpack.c.l.b16 %v741
    %v2762 = vunpack.c.h.b16 %v741
    %v2763 = vunpack.c.l.b16 %v742
    %v2764 = vunpack.c.h.b16 %v742
    %v2765 = vunpack.c.l.b16 %v743
    %v2766 = vunpack.c.h.b16 %v743
    %v2767 = vunpack.c.l.b16 %v744
    %v2768 = vunpack.c.h.b16 %v744
    %v2769 = vunpack.c.l.b16 %v745
    %v2770 = vunpack.c.h.b16 %v745
    %v2771 = vunpack.c.l.b16 %v746
    %v2772 = vunpack.c.h.b16 %v746
    %v2773 = vunpack.c.l.b16 %v747
    %v2774 = vunpack.c.h.b16 %v747
    %v2775 = vunpack.c.l.b16 %v748
    %v2776 = vunpack.c.h.b16 %v748
    %v2777 = vunpack.c.l.b16 %v749
    %v2778 = vunpack.c.h.b16 %v749
    %v2779 = vunpack.c.l.b16 %v750
    %v2780 = vunpack.c.h.b16 %v750
    %v2781 = vunpack.c.l.b16 %v751
    %v2782 = vunpack.c.h.b16 %v751
    %v2783 = vunpack.c.l.b16 %v752
    %v2784 = vunpack.c.h.b16 %v752
    %v2785 = vunpack.c.l.b16 %v753
    %v2786 = vunpack.c.h.b16 %v753
    %v2787 = vunpack.c.l.b16 %v754
    %v2788 = vunpack.c.h.b16 %v754
    %v2789 = vunpack.c.l.b16 %v755
    %v2790 = vunpack.c.h.b16 %v755
    %v2791 = vunpack.c.l.b16 %v756
    %v2792 = vunpack.c.h.b16 %v756
    %v2793 = vunpack.c.l.b16 %v757
    %v2794 = vunpack.c.h.b16 %v757
    %v2795 = vunpack.c.l.b16 %v758
    %v2796 = vunpack.c.h.b16 %v758
    %v2797 = vunpack.c.l.b16 %v759
    %v2798 = vunpack.c.h.b16 %v759
    %v2799 = vunpack.c.l.b16 %v760
    %v2800 = vunpack.c.h.b16 %v760
    %v2801 = vunpack.c.l.b16 %v761
    %v2802 = vunpack.c.h.b16 %v761
    %v2803 = vunpack.c.l.b16 %v762
    %v2804 = vunpack.c.h.b16 %v762
    %v2805 = vunpack.c.l.b16 %v763
    %v2806 = vunpack.c.h.b16 %v763
    %v2807 = vunpack.c.l.b16 %v764
    %v2808 = vunpack.c.h.b16 %v764
    %v2809 = vunpack.c.l.b16 %v765
    %v2810 = vunpack.c.h.b16 %v765
    %v2811 = vunpack.c.l.b16 %v766
    %v2812 = vunpack.c.h.b16 %v766
    %v2813 = vunpack.c.l.b16 %v767
    %v2814 = vunpack.c.h.b16 %v767
    %v2815 = vunpack.c.l.b16 %v768
    %v2816 = vunpack.c.h.b16 %v768
    %v2817 = vunpack.c.l.b16 %v769
    %v2818 = vunpack.c.h.b16 %v769
    %v2819 = vunpack.c.l.b16 %v770
    %v2820 = vunpack.c.h.b16 %v770
    %v2821 = vunpack.c.l.b16 %v771
    %v2822 = vunpack.c.h.b16 %v771
    %v2823 = vunpack.c.l.b16 %v772
    %v2824 = vunpack.c.h.b16 %v772
    %v2825 = vunpack.c.l.b16 %v773
    %v2826 = vunpack.c.h.b16 %v773
    %v2827 = vunpack.c.l.b16 %v774
    %v2828 = vunpack.c.h.b16 %v774
    %v2829 = vunpack.c.l.b16 %v775
    %v2830 = vunpack.c.h.b16 %v775
    %v2831 = vunpack.c.l.b16 %v776
    %v2832 = vunpack.c.h.b16 %v776
    %v2833 = vunpack.c.l.b16 %v777
    %v2834 = vunpack.c.h.b16 %v777
    %v2835 = vunpack.c.l.b16 %v778
    %v2836 = vunpack.c.h.b16 %v778
    %v2837 = vunpack.c.l.b16 %v779
    %v2838 = vunpack.c.h.b16 %v779
    %v2839 = vunpack.c.l.b16 %v780
    %v2840 = vunpack.c.h.b16 %v780
    %v2841 = vunpack.c.l.b16 %v781
    %v2842 = vunpack.c.h.b16 %v781
    %v2843 = vunpack.c.l.b16 %v782
    %v2844 = vunpack.c.h.b16 %v782
    %v2845 = vunpack.c.l.b16 %v783
    %v2846 = vunpack.c.h.b16 %v783
    %v2847 = vunpack.c.l.b16 %v784
    %v2848 = vunpack.c.h.b16 %v784
    %v2849 = vunpack.c.l.b16 %v785
    %v2850 = vunpack.c.h.b16 %v785
    %v2851 = vunpack.c.l.b16 %v786
    %v2852 = vunpack.c.h.b16 %v786
    %v2853 = vunpack.c.l.b16 %v787
    %v2854 = vunpack.c.h.b16 %v787
    %v2855 = vunpack.c.l.b16 %v788
    %v2856 = vunpack.c.h.b16 %v788
    %v2857 = vunpack.c.l.b16 %v789
    %v2858 = vunpack.c.h.b16 %v789
    %v2859 = vunpack.c.l.b16 %v790
    %v2860 = vunpack.c.h.b16 %v790
    %v2861 = vunpack.c.l.b16 %v791
    %v2862 = vunpack.c.h.b16 %v791
    %v2863 = vunpack.c.l.b16 %v792
    %v2864 = vunpack.c.h.b16 %v792
    %v2865 = vunpack.c.l.b16 %v793
    %v2866 = vunpack.c.h.b16 %v793
    %v2867 = vunpack.c.l.b16 %v794
    %v2868 = vunpack.c.h.b16 %v794
    %v2869 = vunpack.c.l.b16 %v795
    %v2870 = vunpack.c.h.b16 %v795
    %v2871 = vunpack.c.l.b16 %v796
    %v2872 = vunpack.c.h.b16 %v796
    %v2873 = vunpack.c.l.b16 %v797
    %v2874 = vunpack.c.h.b16 %v797
    %v2875 = vunpack.c.l.b16 %v798
    %v2876 = vunpack.c.h.b16 %v798
    %v2877 = vunpack.c.l.b16 %v799
    %v2878 = vunpack.c.h.b16 %v799
    %v2879 = vunpack.c.l.b16 %v800
    %v2880 = vunpack.c.h.b16 %v800
    %v2881 = vunpack.c.l.b16 %v801
    %v2882 = vunpack.c.h.b16 %v801
    %v2883 = vunpack.c.l.b16 %v802
    %v2884 = vunpack.c.h.b16 %v802
    %v2885 = vunpack.c.l.b16 %v803
    %v2886 = vunpack.c.h.b16 %v803
    %v2887 = vunpack.c.l.b16 %v804
    %v2888 = vunpack.c.h.b16 %v804
    %v2889 = vunpack.c.l.b16 %v805
    %v2890 = vunpack.c.h.b16 %v805
    %v2891 = vunpack.c.l.b16 %v806
    %v2892 = vunpack.c.h.b16 %v806
    %v2893 = vunpack.c.l.b16 %v807
    %v2894 = vunpack.c.h.b16 %v807
    %v2895 = vunpack.c.l.b16 %v808
    %v2896 = vunpack.c.h.b16 %v808
    %v2897 = vunpack.c.l.b16 %v809
    %v2898 = vunpack.c.h.b16 %v809
    %v2899 = vunpack.c.l.b16 %v810
    %v2900 = vunpack.c.h.b16 %v810
    %v2901 = vunpack.c.l.b16 %v811
    %v2902 = vunpack.c.h.b16 %v811
    %v2903 = vunpack.c.l.b16 %v812
    %v2904 = vunpack.c.h.b16 %v812
    %v2905 = vunpack.c.l.b16 %v813
    %v2906 = vunpack.c.h.b16 %v813
    %v2907 = vunpack.c.l.b16 %v814
    %v2908 = vunpack.c.h.b16 %v814
    %v2909 = vunpack.c.l.b16 %v815
    %v2910 = vunpack.c.h.b16 %v815
    %v2911 = vunpack.c.l.b16 %v816
    %v2912 = vunpack.c.h.b16 %v816
    %v2913 = vunpack.c.l.b16 %v817
    %v2914 = vunpack.c.h.b16 %v817
    %v2915 = vunpack.c.l.b16 %v818
    %v2916 = vunpack.c.h.b16 %v818
    %v2917 = vunpack.c.l.b16 %v819
    %v2918 = vunpack.c.h.b16 %v819
    %v2919 = vunpack.c.l.b16 %v820
    %v2920 = vunpack.c.h.b16 %v820
    %v2921 = vunpack.c.l.b16 %v821
    %v2922 = vunpack.c.h.b16 %v821
    %v2923 = vunpack.c.l.b16 %v822
    %v2924 = vunpack.c.h.b16 %v822
    %v2925 = vunpack.c.l.b16 %v823
    %v2926 = vunpack.c.h.b16 %v823
    %v2927 = vunpack.c.l.b16 %v824
    %v2928 = vunpack.c.h.b16 %v824
    %v2929 = vunpack.c.l.b16 %v825
    %v2930 = vunpack.c.h.b16 %v825
    %v2931 = vunpack.c.l.b16 %v826
    %v2932 = vunpack.c.h.b16 %v826
    %v2933 = vunpack.c.l.b16 %v827
    %v2934 = vunpack.c.h.b16 %v827
    %v2935 = vunpack.c.l.b16 %v828
    %v2936 = vunpack.c.h.b16 %v828
    %v2937 = vunpack.c.l.b16 %v829
    %v2938 = vunpack.c.h.b16 %v829
    %v2939 = vunpack.c.l.b16 %v830
    %v2940 = vunpack.c.h.b16 %v830
    %v2941 = vunpack.c.l.b16 %v831
    %v2942 = vunpack.c.h.b16 %v831
    %v2943 = vunpack.c.l.b16 %v832
    %v2944 = vunpack.c.h.b16 %v832
    %v2945 = vunpack.c.l.b16 %v833
    %v2946 = vunpack.c.h.b16 %v833
    %v2947 = vunpack.c.l.b16 %v834
    %v2948 = vunpack.c.h.b16 %v834
    %v2949 = vunpack.c.l.b16 %v835
    %v2950 = vunpack.c.h.b16 %v835
    %v2951 = vunpack.c.l.b16 %v836
    %v2952 = vunpack.c.h.b16 %v836
    %v2953 = vunpack.c.l.b16 %v837
    %v2954 = vunpack.c.h.b16 %v837
    %v2955 = vunpack.c.l.b16 %v838
    %v2956 = vunpack.c.h.b16 %v838
    %v2957 = vunpack.c.l.b16 %v839
    %v2958 = vunpack.c.h.b16 %v839
    %v2959 = vunpack.c.l.b16 %v840
    %v2960 = vunpack.c.h.b16 %v840
    %v2961 = vunpack.c.l.b16 %v841
    %v2962 = vunpack.c.h.b16 %v841
    %v2963 = vunpack.c.l.b16 %v842
    %v2964 = vunpack.c.h.b16 %v842
    %v2965 = vunpack.c.l.b16 %v843
    %v2966 = vunpack.c.h.b16 %v843
    %v2967 = vunpack.c.l.b16 %v844
    %v2968 = vunpack.c.h.b16 %v844
    %v2969 = vunpack.c.l.b16 %v845
    %v2970 = vunpack.c.h.b16 %v845
    %v2971 = vunpack.c.l.b16 %v846
    %v2972 = vunpack.c.h.b16 %v846
    %v2973 = vunpack.c.l.b16 %v847
    %v2974 = vunpack.c.h.b16 %v847
    %v2975 = vunpack.c.l.b16 %v848
    %v2976 = vunpack.c.h.b16 %v848
    %v2977 = vunpack.c.l.b16 %v849
    %v2978 = vunpack.c.h.b16 %v849
    %v2979 = vunpack.c.l.b16 %v850
    %v2980 = vunpack.c.h.b16 %v850
    %v2981 = vunpack.c.l.b16 %v851
    %v2982 = vunpack.c.h.b16 %v851
    %v2983 = vunpack.c.l.b16 %v852
    %v2984 = vunpack.c.h.b16 %v852
    %v2985 = vunpack.c.l.b16 %v853
    %v2986 = vunpack.c.h.b16 %v853
    %v2987 = vunpack.c.l.b16 %v854
    %v2988 = vunpack.c.h.b16 %v854
    %v2989 = vunpack.c.l.b16 %v855
    %v2990 = vunpack.c.h.b16 %v855
    %v2991 = vunpack.c.l.b16 %v856
    %v2992 = vunpack.c.h.b16 %v856
    %v2993 = vunpack.c.l.b16 %v857
    %v2994 = vunpack.c.h.b16 %v857
    %v2995 = vunpack.c.l.b16 %v858
    %v2996 = vunpack.c.h.b16 %v858
    %v2997 = vunpack.c.l.b16 %v859
    %v2998 = vunpack.c.h.b16 %v859
    %v2999 = vunpack.c.l.b16 %v860
    %v3000 = vunpack.c.h.b16 %v860
    %v3001 = vunpack.c.l.b16 %v861
    %v3002 = vunpack.c.h.b16 %v861
    %v3003 = vunpack.c.l.b16 %v862
    %v3004 = vunpack.c.h.b16 %v862
    %v3005 = vunpack.c.l.b16 %v863
    %v3006 = vunpack.c.h.b16 %v863
    %v3007 = vunpack.c.l.b16 %v864
    %v3008 = vunpack.c.h.b16 %v864
    %v3009 = vunpack.c.l.b16 %v865
    %v3010 = vunpack.c.h.b16 %v865
    %v3011 = vunpack.c.l.b16 %v866
    %v3012 = vunpack.c.h.b16 %v866
    %v3013 = vunpack.c.l.b16 %v867
    %v3014 = vunpack.c.h.b16 %v867
    %v3015 = vunpack.c.l.b16 %v868
    %v3016 = vunpack.c.h.b16 %v868
    %v3017 = vunpack.c.l.b16 %v869
    %v3018 = vunpack.c.h.b16 %v869
    %v3019 = vunpack.c.l.b16 %v870
    %v3020 = vunpack.c.h.b16 %v870
    %v3021 = vunpack.c.l.b16 %v871
    %v3022 = vunpack.c.h.b16 %v871
    %v3023 = vunpack.c.l.b16 %v872
    %v3024 = vunpack.c.h.b16 %v872
    %v3025 = vunpack.c.l.b16 %v873
    %v3026 = vunpack.c.h.b16 %v873
    %v3027 = vunpack.c.l.b16 %v874
    %v3028 = vunpack.c.h.b16 %v874
    %v3029 = vunpack.c.l.b16 %v875
    %v3030 = vunpack.c.h.b16 %v875
    %v3031 = vunpack.c.l.b16 %v876
    %v3032 = vunpack.c.h.b16 %v876
    %v3033 = vunpack.c.l.b16 %v877
    %v3034 = vunpack.c.h.b16 %v877
    %v3035 = vunpack.c.l.b16 %v878
    %v3036 = vunpack.c.h.b16 %v878
    %v3037 = vunpack.c.l.b16 %v879
    %v3038 = vunpack.c.h.b16 %v879
    %v3039 = vunpack.c.l.b16 %v880
    %v3040 = vunpack.c.h.b16 %v880
    %v3041 = vunpack.c.l.b16 %v881
    %v3042 = vunpack.c.h.b16 %v881
    %v3043 = vunpack.c.l.b16 %v882
    %v3044 = vunpack.c.h.b16 %v882
    %v3045 = vunpack.c.l.b16 %v883
    %v3046 = vunpack.c.h.b16 %v883
    %v3047 = vunpack.c.l.b16 %v884
    %v3048 = vunpack.c.h.b16 %v884
    %v3049 = vunpack.c.l.b16 %v885
    %v3050 = vunpack.c.h.b16 %v885
    %v3051 = vunpack.c.l.b16 %v886
    %v3052 = vunpack.c.h.b16 %v886
    %v3053 = vunpack.c.l.b16 %v887
    %v3054 = vunpack.c.h.b16 %v887
    %v3055 = vunpack.c.l.b16 %v888
    %v3056 = vunpack.c.h.b16 %v888
    %v3057 = vunpack.c.l.b16 %v889
    %v3058 = vunpack.c.h.b16 %v889
    %v3059 = vunpack.c.l.b16 %v890
    %v3060 = vunpack.c.h.b16 %v890
    %v3061 = vunpack.c.l.b16 %v891
    %v3062 = vunpack.c.h.b16 %v891
    %v3063 = vunpack.c.l.b16 %v892
    %v3064 = vunpack.c.h.b16 %v892
    %v3065 = vunpack.c.l.b16 %v893
    %v3066 = vunpack.c.h.b16 %v893
    %v3067 = vunpack.c.l.b16 %v894
    %v3068 = vunpack.c.h.b16 %v894
    %v3069 = vunpack.c.l.b16 %v895
    %v3070 = vunpack.c.h.b16 %v895
    %v3071 = vunpack.c.l.b16 %v896
    %v3072 = vunpack.c.h.b16 %v896
    %v3073 = vunpack.c.l.b16 %v897
    %v3074 = vunpack.c.h.b16 %v897
    %v3075 = vunpack.c.l.b16 %v898
    %v3076 = vunpack.c.h.b16 %v898
    %v3077 = vunpack.c.l.b16 %v899
    %v3078 = vunpack.c.h.b16 %v899
    %v3079 = vunpack.c.l.b16 %v900
    %v3080 = vunpack.c.h.b16 %v900
    %v3081 = vunpack.c.l.b16 %v901
    %v3082 = vunpack.c.h.b16 %v901
    %v3083 = vunpack.c.l.b16 %v902
    %v3084 = vunpack.c.h.b16 %v902
    %v3085 = vunpack.c.l.b16 %v903
    %v3086 = vunpack.c.h.b16 %v903
    %v3087 = vunpack.c.l.b16 %v904
    %v3088 = vunpack.c.h.b16 %v904
    %v3089 = vunpack.c.l.b16 %v905
    %v3090 = vunpack.c.h.b16 %v905
    %v3091 = vunpack.c.l.b16 %v906
    %v3092 = vunpack.c.h.b16 %v906
    %v3093 = vunpack.c.l.b16 %v907
    %v3094 = vunpack.c.h.b16 %v907
    %v3095 = vunpack.c.l.b16 %v908
    %v3096 = vunpack.c.h.b16 %v908
    %v3097 = vunpack.c.l.b16 %v909
    %v3098 = vunpack.c.h.b16 %v909
    %v3099 = vunpack.c.l.b16 %v910
    %v3100 = vunpack.c.h.b16 %v910
    %v3101 = vunpack.c.l.b16 %v911
    %v3102 = vunpack.c.h.b16 %v911
    %v3103 = vunpack.c.l.b16 %v912
    %v3104 = vunpack.c.h.b16 %v912
    %v3105 = vunpack.c.l.b16 %v913
    %v3106 = vunpack.c.h.b16 %v913
    %v3107 = vunpack.c.l.b16 %v914
    %v3108 = vunpack.c.h.b16 %v914
    %v3109 = vunpack.c.l.b16 %v915
    %v3110 = vunpack.c.h.b16 %v915
    %v3111 = vunpack.c.l.b16 %v916
    %v3112 = vunpack.c.h.b16 %v916
    %v3113 = vunpack.c.l.b16 %v917
    %v3114 = vunpack.c.h.b16 %v917
    %v3115 = vunpack.c.l.b16 %v918
    %v3116 = vunpack.c.h.b16 %v918
    %v3117 = vunpack.c.l.b16 %v919
    %v3118 = vunpack.c.h.b16 %v919
    %v3119 = vunpack.c.l.b16 %v920
    %v3120 = vunpack.c.h.b16 %v920
    %v3121 = vunpack.c.l.b16 %v921
    %v3122 = vunpack.c.h.b16 %v921
    %v3123 = vunpack.c.l.b16 %v922
    %v3124 = vunpack.c.h.b16 %v922
    %v3125 = vunpack.c.l.b16 %v923
    %v3126 = vunpack.c.h.b16 %v923
    %v3127 = vunpack.c.l.b16 %v924
    %v3128 = vunpack.c.h.b16 %v924
    %v3129 = vunpack.c.l.b16 %v925
    %v3130 = vunpack.c.h.b16 %v925
    %v3131 = vunpack.c.l.b16 %v926
    %v3132 = vunpack.c.h.b16 %v926
    %v3133 = vunpack.c.l.b16 %v927
    %v3134 = vunpack.c.h.b16 %v927
    %v3135 = vunpack.c.l.b16 %v928
    %v3136 = vunpack.c.h.b16 %v928
    %v3137 = vunpack.c.l.b16 %v929
    %v3138 = vunpack.c.h.b16 %v929
    %v3139 = vunpack.c.l.b16 %v930
    %v3140 = vunpack.c.h.b16 %v930
    %v3141 = vunpack.c.l.b16 %v931
    %v3142 = vunpack.c.h.b16 %v931
    %v3143 = vunpack.c.l.b16 %v932
    %v3144 = vunpack.c.h.b16 %v932
    %v3145 = vunpack.c.l.b16 %v933
    %v3146 = vunpack.c.h.b16 %v933
    %v3147 = vunpack.c.l.b16 %v934
    %v3148 = vunpack.c.h.b16 %v934
    %v3149 = vunpack.c.l.b16 %v935
    %v3150 = vunpack.c.h.b16 %v935
    %v3151 = vunpack.c.l.b16 %v936
    %v3152 = vunpack.c.h.b16 %v936
    %v3153 = vunpack.c.l.b16 %v937
    %v3154 = vunpack.c.h.b16 %v937
    %v3155 = vunpack.c.l.b16 %v938
    %v3156 = vunpack.c.h.b16 %v938
    %v3157 = vunpack.c.l.b16 %v939
    %v3158 = vunpack.c.h.b16 %v939
    %v3159 = vunpack.c.l.b16 %v940
    %v3160 = vunpack.c.h.b16 %v940
    %v3161 = vunpack.c.l.b16 %v941
    %v3162 = vunpack.c.h.b16 %v941
    %v3163 = vunpack.c.l.b16 %v942
    %v3164 = vunpack.c.h.b16 %v942
    %v3165 = vunpack.c.l.b16 %v943
    %v3166 = vunpack.c.h.b16 %v943
    %v3167 = vunpack.c.l.b16 %v944
    %v3168 = vunpack.c.h.b16 %v944
    %v3169 = vunpack.c.l.b16 %v945
    %v3170 = vunpack.c.h.b16 %v945
    %v3171 = vunpack.c.l.b16 %v946
    %v3172 = vunpack.c.h.b16 %v946
    %v3173 = vunpack.c.l.b16 %v947
    %v3174 = vunpack.c.h.b16 %v947
    %v3175 = vunpack.c.l.b16 %v948
    %v3176 = vunpack.c.h.b16 %v948
    %v3177 = vunpack.c.l.b16 %v949
    %v3178 = vunpack.c.h.b16 %v949
    %v3179 = vunpack.c.l.b16 %v950
    %v3180 = vunpack.c.h.b16 %v950
    %v3181 = vunpack.c.l.b16 %v951
    %v3182 = vunpack.c.h.b16 %v951
    %v3183 = vunpack.c.l.b16 %v952
    %v3184 = vunpack.c.h.b16 %v952
    %v3185 = vunpack.c.l.b16 %v953
    %v3186 = vunpack.c.h.b16 %v953
    %v3187 = vunpack.c.l.b16 %v954
    %v3188 = vunpack.c.h.b16 %v954
    %v3189 = vunpack.c.l.b16 %v955
    %v3190 = vunpack.c.h.b16 %v955
    %v3191 = vunpack.c.l.b16 %v956
    %v3192 = vunpack.c.h.b16 %v956
    %v3193 = vunpack.c.l.b16 %v957
    %v3194 = vunpack.c.h.b16 %v957
    %v3195 = vunpack.c.l.b16 %v958
    %v3196 = vunpack.c.h.b16 %v958
    %v3197 = vunpack.c.l.b16 %v959
    %v3198 = vunpack.c.h.b16 %v959
    %v3199 = vunpack.c.l.b16 %v960
    %v3200 = vunpack.c.h.b16 %v960
    %v3201 = vunpack.c.l.b16 %v961
    %v3202 = vunpack.c.h.b16 %v961
    %v3203 = vunpack.c.l.b16 %v962
    %v3204 = vunpack.c.h.b16 %v962
    %v3205 = vunpack.c.l.b16 %v963
    %v3206 = vunpack.c.h.b16 %v963
    %v3207 = vunpack.c.l.b16 %v964
    %v3208 = vunpack.c.h.b16 %v964
    %v3209 = vunpack.c.l.b16 %v965
    %v3210 = vunpack.c.h.b16 %v965
    %v3211 = vunpack.c.l.b16 %v966
    %v3212 = vunpack.c.h.b16 %v966
    %v3213 = vunpack.c.l.b16 %v967
    %v3214 = vunpack.c.h.b16 %v967
    %v3215 = vunpack.c.l.b16 %v968
    %v3216 = vunpack.c.h.b16 %v968
    %v3217 = vunpack.c.l.b16 %v969
    %v3218 = vunpack.c.h.b16 %v969
    %v3219 = vunpack.c.l.b16 %v970
    %v3220 = vunpack.c.h.b16 %v970
    %v3221 = vunpack.c.l.b16 %v971
    %v3222 = vunpack.c.h.b16 %v971
    %v3223 = vunpack.c.l.b16 %v972
    %v3224 = vunpack.c.h.b16 %v972
    %v3225 = vunpack.c.l.b16 %v973
    %v3226 = vunpack.c.h.b16 %v973
    %v3227 = vunpack.c.l.b16 %v974
    %v3228 = vunpack.c.h.b16 %v974
    %v3229 = vunpack.c.l.b16 %v975
    %v3230 = vunpack.c.h.b16 %v975
    %v3231 = vunpack.c.l.b16 %v976
    %v3232 = vunpack.c.h.b16 %v976
    %v3233 = vunpack.c.l.b16 %v977
    %v3234 = vunpack.c.h.b16 %v977
    %v3235 = vunpack.c.l.b16 %v978
    %v3236 = vunpack.c.h.b16 %v978
    %v3237 = vunpack.c.l.b16 %v979
    %v3238 = vunpack.c.h.b16 %v979
    %v3239 = vunpack.c.l.b16 %v980
    %v3240 = vunpack.c.h.b16 %v980
    %v3241 = vunpack.c.l.b16 %v981
    %v3242 = vunpack.c.h.b16 %v981
    %v3243 = vunpack.c.l.b16 %v982
    %v3244 = vunpack.c.h.b16 %v982
    %v3245 = vunpack.c.l.b16 %v983
    %v3246 = vunpack.c.h.b16 %v983
    %v3247 = vunpack.c.l.b16 %v984
    %v3248 = vunpack.c.h.b16 %v984
    %v3249 = vunpack.c.l.b16 %v985
    %v3250 = vunpack.c.h.b16 %v985
    %v3251 = vunpack.c.l.b16 %v986
    %v3252 = vunpack.c.h.b16 %v986
    %v3253 = vunpack.c.l.b16 %v987
    %v3254 = vunpack.c.h.b16 %v987
    %v3255 = vunpack.c.l.b16 %v988
    %v3256 = vunpack.c.h.b16 %v988
    %v3257 = vunpack.c.l.b16 %v989
    %v3258 = vunpack.c.h.b16 %v989
    %v3259 = vunpack.c.l.b16 %v990
    %v3260 = vunpack.c.h.b16 %v990
    %v3261 = vunpack.c.l.b16 %v991
    %v3262 = vunpack.c.h.b16 %v991
    %v3263 = vunpack.c.l.b16 %v992
    %v3264 = vunpack.c.h.b16 %v992
    %v3265 = vunpack.c.l.b16 %v993
    %v3266 = vunpack.c.h.b16 %v993
    %v3267 = vunpack.c.l.b16 %v994
    %v3268 = vunpack.c.h.b16 %v994
    %v3269 = vunpack.c.l.b16 %v995
    %v3270 = vunpack.c.h.b16 %v995
    %v3271 = vunpack.c.l.b16 %v996
    %v3272 = vunpack.c.h.b16 %v996
    %v3273 = vunpack.c.l.b16 %v997
    %v3274 = vunpack.c.h.b16 %v997
    %v3275 = vunpack.c.l.b16 %v998
    %v3276 = vunpack.c.h.b16 %v998
    %v3277 = vunpack.c.l.b16 %v999
    %v3278 = vunpack.c.h.b16 %v999
    %v3279 = vunpack.c.l.b16 %v1000
    %v3280 = vunpack.c.h.b16 %v1000
    %v3281 = vunpack.c.l.b16 %v1001
    %v3282 = vunpack.c.h.b16 %v1001
    %v3283 = vunpack.c.l.b16 %v1002
    %v3284 = vunpack.c.h.b16 %v1002
    %v3285 = vunpack.c.l.b16 %v1003
    %v3286 = vunpack.c.h.b16 %v1003
    %v3287 = vunpack.c.l.b16 %v1004
    %v3288 = vunpack.c.h.b16 %v1004
    %v3289 = vunpack.c.l.b16 %v1005
    %v3290 = vunpack.c.h.b16 %v1005
    %v3291 = vunpack.c.l.b16 %v1006
    %v3292 = vunpack.c.h.b16 %v1006
    %v3293 = vunpack.c.l.b16 %v1007
    %v3294 = vunpack.c.h.b16 %v1007
    %v3295 = vunpack.c.l.b16 %v1008
    %v3296 = vunpack.c.h.b16 %v1008
    %v3297 = vunpack.c.l.b16 %v1009
    %v3298 = vunpack.c.h.b16 %v1009
    %v3299 = vunpack.c.l.b16 %v1010
    %v3300 = vunpack.c.h.b16 %v1010
    %v3301 = vunpack.c.l.b16 %v1011
    %v3302 = vunpack.c.h.b16 %v1011
    %v3303 = vunpack.c.l.b16 %v1012
    %v3304 = vunpack.c.h.b16 %v1012
    %v3305 = vunpack.c.l.b16 %v1013
    %v3306 = vunpack.c.h.b16 %v1013
    %v3307 = vunpack.c.l.b16 %v1014
    %v3308 = vunpack.c.h.b16 %v1014
    %v3309 = vunpack.c.l.b16 %v1015
    %v3310 = vunpack.c.h.b16 %v1015
    %v3311 = vunpack.c.l.b16 %v1016
    %v3312 = vunpack.c.h.b16 %v1016
    %v3313 = vunpack.c.l.b16 %v1017
    %v3314 = vunpack.c.h.b16 %v1017
    %v3315 = vunpack.c.l.b16 %v1018
    %v3316 = vunpack.c.h.b16 %v1018
    %v3317 = vunpack.c.l.b16 %v1019
    %v3318 = vunpack.c.h.b16 %v1019
    %v3319 = vunpack.c.l.b16 %v1020
    %v3320 = vunpack.c.h.b16 %v1020
    %v3321 = vunpack.c.l.b16 %v1021
    %v3322 = vunpack.c.h.b16 %v1021
    %v3323 = vunpack.c.l.b16 %v1022
    %v3324 = vunpack.c.h.b16 %v1022
    %v3325 = vunpack.c.l.b16 %v1023
    %v3326 = vunpack.c.h.b16 %v1023
    %v3327 = vunpack.c.l.b16 %v1024
    %v3328 = vunpack.c.h.b16 %v1024
    %v3329 = vunpack.c.l.b16 %v1025
    %v3330 = vunpack.c.h.b16 %v1025
    %v3331 = vunpack.c.l.b16 %v1026
    %v3332 = vunpack.c.h.b16 %v1026
    %v3333 = vunpack.c.l.b16 %v1027
    %v3334 = vunpack.c.h.b16 %v1027
    %v3335 = vunpack.c.l.b16 %v1028
    %v3336 = vunpack.c.h.b16 %v1028
    %v3337 = vunpack.c.l.b16 %v1029
    %v3338 = vunpack.c.h.b16 %v1029
    %v3339 = vunpack.c.l.b16 %v1030
    %v3340 = vunpack.c.h.b16 %v1030
    %v3341 = vunpack.c.l.b16 %v1031
    %v3342 = vunpack.c.h.b16 %v1031
    %v3343 = vunpack.c.l.b16 %v1032
    %v3344 = vunpack.c.h.b16 %v1032
    %v3345 = vunpack.c.l.b16 %v1033
    %v3346 = vunpack.c.h.b16 %v1033
    %v3347 = vunpack.c.l.b16 %v1034
    %v3348 = vunpack.c.h.b16 %v1034
    %v3349 = vunpack.c.l.b16 %v1035
    %v3350 = vunpack.c.h.b16 %v1035
    %v3351 = vunpack.c.l.b16 %v1036
    %v3352 = vunpack.c.h.b16 %v1036
    %v3353 = vunpack.c.l.b16 %v1037
    %v3354 = vunpack.c.h.b16 %v1037
    %v3355 = vunpack.c.l.b16 %v1038
    %v3356 = vunpack.c.h.b16 %v1038
    %v3357 = vunpack.c.l.b16 %v1039
    %v3358 = vunpack.c.h.b16 %v1039
    %v3359 = vunpack.c.l.b16 %v1040
    %v3360 = vunpack.c.h.b16 %v1040
    %v3361 = vunpack.c.l.b16 %v1041
    %v3362 = vunpack.c.h.b16 %v1041
    %v3363 = vunpack.c.l.b16 %v1042
    %v3364 = vunpack.c.h.b16 %v1042
    %v3365 = vunpack.c.l.b16 %v1043
    %v3366 = vunpack.c.h.b16 %v1043
    %v3367 = vunpack.c.l.b16 %v1044
    %v3368 = vunpack.c.h.b16 %v1044
    %v3369 = vunpack.c.l.b16 %v1045
    %v3370 = vunpack.c.h.b16 %v1045
    %v3371 = vunpack.c.l.b16 %v1046
    %v3372 = vunpack.c.h.b16 %v1046
    %v3373 = vunpack.c.l.b16 %v1047
    %v3374 = vunpack.c.h.b16 %v1047
    %v3375 = vunpack.c.l.b16 %v1048
    %v3376 = vunpack.c.h.b16 %v1048
    %v3377 = vunpack.c.l.b16 %v1049
    %v3378 = vunpack.c.h.b16 %v1049
    %v3379 = vunpack.c.l.b16 %v1050
    %v3380 = vunpack.c.h.b16 %v1050
    %v3381 = vunpack.c.l.b16 %v1051
    %v3382 = vunpack.c.h.b16 %v1051
    %v3383 = vunpack.c.l.b16 %v1052
    %v3384 = vunpack.c.h.b16 %v1052
    %v3385 = vunpack.c.l.b16 %v1053
    %v3386 = vunpack.c.h.b16 %v1053
    %v3387 = vunpack.c.l.b16 %v1054
    %v3388 = vunpack.c.h.b16 %v1054
    %v3389 = vunpack.c.l.b16 %v1055
    %v3390 = vunpack.c.h.b16 %v1055
    %v3391 = vunpack.c.l.b16 %v1056
    %v3392 = vunpack.c.h.b16 %v1056
    %v3393 = vunpack.c.l.b16 %v1057
    %v3394 = vunpack.c.h.b16 %v1057
    %v3395 = vunpack.c.l.b16 %v1058
    %v3396 = vunpack.c.h.b16 %v1058
    %v3397 = vunpack.c.l.b16 %v1059
    %v3398 = vunpack.c.h.b16 %v1059
    %v3399 = vunpack.c.l.b16 %v1060
    %v3400 = vunpack.c.h.b16 %v1060
    %v3401 = vunpack.c.l.b16 %v1061
    %v3402 = vunpack.c.h.b16 %v1061
    %v3403 = vunpack.c.l.b16 %v1062
    %v3404 = vunpack.c.h.b16 %v1062
    %v3405 = vunpack.c.l.b16 %v1063
    %v3406 = vunpack.c.h.b16 %v1063
    %v3407 = vunpack.c.l.b16 %v1064
    %v3408 = vunpack.c.h.b16 %v1064
    %v3409 = vunpack.c.l.b16 %v1065
    %v3410 = vunpack.c.h.b16 %v1065
    %v3411 = vunpack.c.l.b16 %v1066
    %v3412 = vunpack.c.h.b16 %v1066
    %v3413 = vunpack.c.l.b16 %v1067
    %v3414 = vunpack.c.h.b16 %v1067
    %v3415 = vunpack.c.l.b16 %v1068
    %v3416 = vunpack.c.h.b16 %v1068
    %v3417 = vunpack.c.l.b16 %v1069
    %v3418 = vunpack.c.h.b16 %v1069
    %v3419 = vunpack.c.l.b16 %v1070
    %v3420 = vunpack.c.h.b16 %v1070
    %v3421 = vpack.c.b16 %v1889, %v1885
    %v3422 = vpack.c.b16 %v1890, %v1886
    %v3423 = vpack.c.b16 %v1891, %v1887
    %v3424 = vpack.c.b16 %v1892, %v1888
    %v3425 = vpack.c.b16 %v1897, %v1893
    %v3426 = vpack.c.b16 %v1898, %v1894
    %v3427 = vpack.c.b16 %v1899, %v1895
    %v3428 = vpack.c.b16 %v1900, %v1896
    %v3429 = vpack.c.b16 %v1905, %v1901
    %v3430 = vpack.c.b16 %v1906, %v1902
    %v3431 = vpack.c.b16 %v1907, %v1903
    %v3432 = vpack.c.b16 %v1908, %v1904
    %v3433 = vpack.c.b16 %v1913, %v1909
    %v3434 = vpack.c.b16 %v1914, %v1910
    %v3435 = vpack.c.b16 %v1915, %v1911
    %v3436 = vpack.c.b16 %v1916, %v1912
    %v3437 = vpack.c.b16 %v1921, %v1917
    %v3438 = vpack.c.b16 %v1922, %v1918
    %v3439 = vpack.c.b16 %v1923, %v1919
    %v3440 = vpack.c.b16 %v1924, %v1920
    %v3441 = vpack.c.b16 %v1929, %v1925
    %v3442 = vpack.c.b16 %v1930, %v1926
    %v3443 = vpack.c.b16 %v1931, %v1927
    %v3444 = vpack.c.b16 %v1932, %v1928
    %v3445 = vpack.c.b16 %v1937, %v1933
    %v3446 = vpack.c.b16 %v1938, %v1934
    %v3447 = vpack.c.b16 %v1939, %v1935
    %v3448 = vpack.c.b16 %v1940, %v1936
    %v3449 = vpack.c.b16 %v1945, %v1941
    %v3450 = vpack.c.b16 %v1946, %v1942
    %v3451 = vpack.c.b16 %v1947, %v1943
    %v3452 = vpack.c.b16 %v1948, %v1944
    %v3453 = vpack.c.b16 %v1953, %v1949
    %v3454 = vpack.c.b16 %v1954, %v1950
    %v3455 = vpack.c.b16 %v1955, %v1951
    %v3456 = vpack.c.b16 %v1956, %v1952
    %v3457 = vpack.c.b16 %v1961, %v1957
    %v3458 = vpack.c.b16 %v1962, %v1958
    %v3459 = vpack.c.b16 %v1963, %v1959
    %v3460 = vpack.c.b16 %v1964, %v1960
    %v3461 = vpack.c.b16 %v1969, %v1965
    %v3462 = vpack.c.b16 %v1970, %v1966
    %v3463 = vpack.c.b16 %v1971, %v1967
    %v3464 = vpack.c.b16 %v1972, %v1968
    %v3465 = vpack.c.b16 %v1977, %v1973
    %v3466 = vpack.c.b16 %v1978, %v1974
    %v3467 = vpack.c.b16 %v1979, %v1975
    %v3468 = vpack.c.b16 %v1980, %v1976
    %v3469 = vpack.c.b16 %v1985, %v1981
    %v3470 = vpack.c.b16 %v1986, %v1982
    %v3471 = vpack.c.b16 %v1987, %v1983
    %v3472 = vpack.c.b16 %v1988, %v1984
    %v3473 = vpack.c.b16 %v1993, %v1989
    %v3474 = vpack.c.b16 %v1994, %v1990
    %v3475 = vpack.c.b16 %v1995, %v1991
    %v3476 = vpack.c.b16 %v1996, %v1992
    %v3477 = vpack.c.b16 %v2001, %v1997
    %v3478 = vpack.c.b16 %v2002, %v1998
    %v3479 = vpack.c.b16 %v2003, %v1999
    %v3480 = vpack.c.b16 %v2004, %v2000
    %v3481 = vpack.c.b16 %v2009, %v2005
    %v3482 = vpack.c.b16 %v2010, %v2006
    %v3483 = vpack.c.b16 %v2011, %v2007
    %v3484 = vpack.c.b16 %v2012, %v2008
    %v3485 = vpack.c.b16 %v2017, %v2013
    %v3486 = vpack.c.b16 %v2018, %v2014
    %v3487 = vpack.c.b16 %v2019, %v2015
    %v3488 = vpack.c.b16 %v2020, %v2016
    %v3489 = vpack.c.b16 %v2025, %v2021
    %v3490 = vpack.c.b16 %v2026, %v2022
    %v3491 = vpack.c.b16 %v2027, %v2023
    %v3492 = vpack.c.b16 %v2028, %v2024
    %v3493 = vpack.c.b16 %v2033, %v2029
    %v3494 = vpack.c.b16 %v2034, %v2030
    %v3495 = vpack.c.b16 %v2035, %v2031
    %v3496 = vpack.c.b16 %v2036, %v2032
    %v3497 = vpack.c.b16 %v2041, %v2037
    %v3498 = vpack.c.b16 %v2042, %v2038
    %v3499 = vpack.c.b16 %v2043, %v2039
    %v3500 = vpack.c.b16 %v2044, %v2040
    %v3501 = vpack.c.b16 %v2049, %v2045
    %v3502 = vpack.c.b16 %v2050, %v2046
    %v3503 = vpack.c.b16 %v2051, %v2047
    %v3504 = vpack.c.b16 %v2052, %v2048
    %v3505 = vpack.c.b16 %v2057, %v2053
    %v3506 = vpack.c.b16 %v2058, %v2054
    %v3507 = vpack.c.b16 %v2059, %v2055
    %v3508 = vpack.c.b16 %v2060, %v2056
    %v3509 = vpack.c.b16 %v2065, %v2061
    %v3510 = vpack.c.b16 %v2066, %v2062
    %v3511 = vpack.c.b16 %v2067, %v2063
    %v3512 = vpack.c.b16 %v2068, %v2064
    %v3513 = vpack.c.b16 %v2073, %v2069
    %v3514 = vpack.c.b16 %v2074, %v2070
    %v3515 = vpack.c.b16 %v2075, %v2071
    %v3516 = vpack.c.b16 %v2076, %v2072
    %v3517 = vpack.c.b16 %v2081, %v2077
    %v3518 = vpack.c.b16 %v2082, %v2078
    %v3519 = vpack.c.b16 %v2083, %v2079
    %v3520 = vpack.c.b16 %v2084, %v2080
    %v3521 = vpack.c.b16 %v2089, %v2085
    %v3522 = vpack.c.b16 %v2090, %v2086
    %v3523 = vpack.c.b16 %v2091, %v2087
    %v3524 = vpack.c.b16 %v2092, %v2088
    %v3525 = vpack.c.b16 %v2097, %v2093
    %v3526 = vpack.c.b16 %v2098, %v2094
    %v3527 = vpack.c.b16 %v2099, %v2095
    %v3528 = vpack.c.b16 %v2100, %v2096
    %v3529 = vpack.c.b16 %v2105, %v2101
    %v3530 = vpack.c.b16 %v2106, %v2102
    %v3531 = vpack.c.b16 %v2107, %v2103
    %v3532 = vpack.c.b16 %v2108, %v2104
    %v3533 = vpack.c.b16 %v2113, %v2109
    %v3534 = vpack.c.b16 %v2114, %v2110
    %v3535 = vpack.c.b16 %v2115, %v2111
    %v3536 = vpack.c.b16 %v2116, %v2112
    %v3537 = vpack.c.b16 %v2121, %v2117
    %v3538 = vpack.c.b16 %v2122, %v2118
    %v3539 = vpack.c.b16 %v2123, %v2119
    %v3540 = vpack.c.b16 %v2124, %v2120
    %v3541 = vpack.c.b16 %v2129, %v2125
    %v3542 = vpack.c.b16 %v2130, %v2126
    %v3543 = vpack.c.b16 %v2131, %v2127
    %v3544 = vpack.c.b16 %v2132, %v2128
    %v3545 = vpack.c.b16 %v2137, %v2133
    %v3546 = vpack.c.b16 %v2138, %v2134
    %v3547 = vpack.c.b16 %v2139, %v2135
    %v3548 = vpack.c.b16 %v2140, %v2136
    %v3549 = vpack.c.b16 %v2145, %v2141
    %v3550 = vpack.c.b16 %v2146, %v2142
    %v3551 = vpack.c.b16 %v2147, %v2143
    %v3552 = vpack.c.b16 %v2148, %v2144
    %v3553 = vpack.c.b16 %v2153, %v2149
    %v3554 = vpack.c.b16 %v2154, %v2150
    %v3555 = vpack.c.b16 %v2155, %v2151
    %v3556 = vpack.c.b16 %v2156, %v2152
    %v3557 = vpack.c.b16 %v2161, %v2157
    %v3558 = vpack.c.b16 %v2162, %v2158
    %v3559 = vpack.c.b16 %v2163, %v2159
    %v3560 = vpack.c.b16 %v2164, %v2160
    %v3561 = vpack.c.b16 %v2169, %v2165
    %v3562 = vpack.c.b16 %v2170, %v2166
    %v3563 = vpack.c.b16 %v2171, %v2167
    %v3564 = vpack.c.b16 %v2172, %v2168
    %v3565 = vpack.c.b16 %v2177, %v2173
    %v3566 = vpack.c.b16 %v2178, %v2174
    %v3567 = vpack.c.b16 %v2179, %v2175
    %v3568 = vpack.c.b16 %v2180, %v2176
    %v3569 = vpack.c.b16 %v2185, %v2181
    %v3570 = vpack.c.b16 %v2186, %v2182
    %v3571 = vpack.c.b16 %v2187, %v2183
    %v3572 = vpack.c.b16 %v2188, %v2184
    %v3573 = vpack.c.b16 %v2193, %v2189
    %v3574 = vpack.c.b16 %v2194, %v2190
    %v3575 = vpack.c.b16 %v2195, %v2191
    %v3576 = vpack.c.b16 %v2196, %v2192
    %v3577 = vpack.c.b16 %v2201, %v2197
    %v3578 = vpack.c.b16 %v2202, %v2198
    %v3579 = vpack.c.b16 %v2203, %v2199
    %v3580 = vpack.c.b16 %v2204, %v2200
    %v3581 = vpack.c.b16 %v2209, %v2205
    %v3582 = vpack.c.b16 %v2210, %v2206
    %v3583 = vpack.c.b16 %v2211, %v2207
    %v3584 = vpack.c.b16 %v2212, %v2208
    %v3585 = vpack.c.b16 %v2217, %v2213
    %v3586 = vpack.c.b16 %v2218, %v2214
    %v3587 = vpack.c.b16 %v2219, %v2215
    %v3588 = vpack.c.b16 %v2220, %v2216
    %v3589 = vpack.c.b16 %v2225, %v2221
    %v3590 = vpack.c.b16 %v2226, %v2222
    %v3591 = vpack.c.b16 %v2227, %v2223
    %v3592 = vpack.c.b16 %v2228, %v2224
    %v3593 = vpack.c.b16 %v2233, %v2229
    %v3594 = vpack.c.b16 %v2234, %v2230
    %v3595 = vpack.c.b16 %v2235, %v2231
    %v3596 = vpack.c.b16 %v2236, %v2232
    %v3597 = vpack.c.b16 %v2241, %v2237
    %v3598 = vpack.c.b16 %v2242, %v2238
    %v3599 = vpack.c.b16 %v2243, %v2239
    %v3600 = vpack.c.b16 %v2244, %v2240
    %v3601 = vpack.c.b16 %v2249, %v2245
    %v3602 = vpack.c.b16 %v2250, %v2246
    %v3603 = vpack.c.b16 %v2251, %v2247
    %v3604 = vpack.c.b16 %v2252, %v2248
    %v3605 = vpack.c.b16 %v2257, %v2253
    %v3606 = vpack.c.b16 %v2258, %v2254
    %v3607 = vpack.c.b16 %v2259, %v2255
    %v3608 = vpack.c.b16 %v2260, %v2256
    %v3609 = vpack.c.b16 %v2265, %v2261
    %v3610 = vpack.c.b16 %v2266, %v2262
    %v3611 = vpack.c.b16 %v2267, %v2263
    %v3612 = vpack.c.b16 %v2268, %v2264
    %v3613 = vpack.c.b16 %v2273, %v2269
    %v3614 = vpack.c.b16 %v2274, %v2270
    %v3615 = vpack.c.b16 %v2275, %v2271
    %v3616 = vpack.c.b16 %v2276, %v2272
    %v3617 = vpack.c.b16 %v2281, %v2277
    %v3618 = vpack.c.b16 %v2282, %v2278
    %v3619 = vpack.c.b16 %v2283, %v2279
    %v3620 = vpack.c.b16 %v2284, %v2280
    %v3621 = vpack.c.b16 %v2289, %v2285
    %v3622 = vpack.c.b16 %v2290, %v2286
    %v3623 = vpack.c.b16 %v2291, %v2287
    %v3624 = vpack.c.b16 %v2292, %v2288
    %v3625 = vpack.c.b16 %v2297, %v2293
    %v3626 = vpack.c.b16 %v2298, %v2294
    %v3627 = vpack.c.b16 %v2299, %v2295
    %v3628 = vpack.c.b16 %v2300, %v2296
    %v3629 = vpack.c.b16 %v2305, %v2301
    %v3630 = vpack.c.b16 %v2306, %v2302
    %v3631 = vpack.c.b16 %v2307, %v2303
    %v3632 = vpack.c.b16 %v2308, %v2304
    %v3633 = vpack.c.b16 %v2313, %v2309
    %v3634 = vpack.c.b16 %v2314, %v2310
    %v3635 = vpack.c.b16 %v2315, %v2311
    %v3636 = vpack.c.b16 %v2316, %v2312
    %v3637 = vpack.c.b16 %v2321, %v2317
    %v3638 = vpack.c.b16 %v2322, %v2318
    %v3639 = vpack.c.b16 %v2323, %v2319
    %v3640 = vpack.c.b16 %v2324, %v2320
    %v3641 = vpack.c.b16 %v2329, %v2325
    %v3642 = vpack.c.b16 %v2330, %v2326
    %v3643 = vpack.c.b16 %v2331, %v2327
    %v3644 = vpack.c.b16 %v2332, %v2328
    %v3645 = vpack.c.b16 %v2337, %v2333
    %v3646 = vpack.c.b16 %v2338, %v2334
    %v3647 = vpack.c.b16 %v2339, %v2335
    %v3648 = vpack.c.b16 %v2340, %v2336
    %v3649 = vpack.c.b16 %v2345, %v2341
    %v3650 = vpack.c.b16 %v2346, %v2342
    %v3651 = vpack.c.b16 %v2347, %v2343
    %v3652 = vpack.c.b16 %v2348, %v2344
    %v3653 = vpack.c.b16 %v2353, %v2349
    %v3654 = vpack.c.b16 %v2354, %v2350
    %v3655 = vpack.c.b16 %v2355, %v2351
    %v3656 = vpack.c.b16 %v2356, %v2352
    %v3657 = vpack.c.b16 %v2361, %v2357
    %v3658 = vpack.c.b16 %v2362, %v2358
    %v3659 = vpack.c.b16 %v2363, %v2359
    %v3660 = vpack.c.b16 %v2364, %v2360
    %v3661 = vpack.c.b16 %v2369, %v2365
    %v3662 = vpack.c.b16 %v2370, %v2366
    %v3663 = vpack.c.b16 %v2371, %v2367
    %v3664 = vpack.c.b16 %v2372, %v2368
    %v3665 = vpack.c.b16 %v2377, %v2373
    %v3666 = vpack.c.b16 %v2378, %v2374
    %v3667 = vpack.c.b16 %v2379, %v2375
    %v3668 = vpack.c.b16 %v2380, %v2376
    %v3669 = vpack.c.b16 %v2385, %v2381
    %v3670 = vpack.c.b16 %v2386, %v2382
    %v3671 = vpack.c.b16 %v2387, %v2383
    %v3672 = vpack.c.b16 %v2388, %v2384
    %v3673 = vpack.c.b16 %v2393, %v2389
    %v3674 = vpack.c.b16 %v2394, %v2390
    %v3675 = vpack.c.b16 %v2395, %v2391
    %v3676 = vpack.c.b16 %v2396, %v2392
    %v3677 = vpack.c.b16 %v2401, %v2397
    %v3678 = vpack.c.b16 %v2402, %v2398
    %v3679 = vpack.c.b16 %v2403, %v2399
    %v3680 = vpack.c.b16 %v2404, %v2400
    %v3681 = vpack.c.b16 %v2409, %v2405
    %v3682 = vpack.c.b16 %v2410, %v2406
    %v3683 = vpack.c.b16 %v2411, %v2407
    %v3684 = vpack.c.b16 %v2412, %v2408
    %v3685 = vpack.c.b16 %v2417, %v2413
    %v3686 = vpack.c.b16 %v2418, %v2414
    %v3687 = vpack.c.b16 %v2419, %v2415
    %v3688 = vpack.c.b16 %v2420, %v2416
    %v3689 = vpack.c.b16 %v2425, %v2421
    %v3690 = vpack.c.b16 %v2426, %v2422
    %v3691 = vpack.c.b16 %v2427, %v2423
    %v3692 = vpack.c.b16 %v2428, %v2424
    %v3693 = vpack.c.b16 %v2433, %v2429
    %v3694 = vpack.c.b16 %v2434, %v2430
    %v3695 = vpack.c.b16 %v2435, %v2431
    %v3696 = vpack.c.b16 %v2436, %v2432
    %v3697 = vpack.c.b16 %v2441, %v2437
    %v3698 = vpack.c.b16 %v2442, %v2438
    %v3699 = vpack.c.b16 %v2443, %v2439
    %v3700 = vpack.c.b16 %v2444, %v2440
    %v3701 = vpack.c.b16 %v2449, %v2445
    %v3702 = vpack.c.b16 %v2450, %v2446
    %v3703 = vpack.c.b16 %v2451, %v2447
    %v3704 = vpack.c.b16 %v2452, %v2448
    %v3705 = vpack.c.b16 %v2457, %v2453
    %v3706 = vpack.c.b16 %v2458, %v2454
    %v3707 = vpack.c.b16 %v2459, %v2455
    %v3708 = vpack.c.b16 %v2460, %v2456
    %v3709 = vpack.c.b16 %v2465, %v2461
    %v3710 = vpack.c.b16 %v2466, %v2462
    %v3711 = vpack.c.b16 %v2467, %v2463
    %v3712 = vpack.c.b16 %v2468, %v2464
    %v3713 = vpack.c.b16 %v2473, %v2469
    %v3714 = vpack.c.b16 %v2474, %v2470
    %v3715 = vpack.c.b16 %v2475, %v2471
    %v3716 = vpack.c.b16 %v2476, %v2472
    %v3717 = vpack.c.b16 %v2481, %v2477
    %v3718 = vpack.c.b16 %v2482, %v2478
    %v3719 = vpack.c.b16 %v2483, %v2479
    %v3720 = vpack.c.b16 %v2484, %v2480
    %v3721 = vpack.c.b16 %v2489, %v2485
    %v3722 = vpack.c.b16 %v2490, %v2486
    %v3723 = vpack.c.b16 %v2491, %v2487
    %v3724 = vpack.c.b16 %v2492, %v2488
    %v3725 = vpack.c.b16 %v2497, %v2493
    %v3726 = vpack.c.b16 %v2498, %v2494
    %v3727 = vpack.c.b16 %v2499, %v2495
    %v3728 = vpack.c.b16 %v2500, %v2496
    %v3729 = vpack.c.b16 %v2505, %v2501
    %v3730 = vpack.c.b16 %v2506, %v2502
    %v3731 = vpack.c.b16 %v2507, %v2503
    %v3732 = vpack.c.b16 %v2508, %v2504
    %v3733 = vpack.c.b16 %v2513, %v2509
    %v3734 = vpack.c.b16 %v2514, %v2510
    %v3735 = vpack.c.b16 %v2515, %v2511
    %v3736 = vpack.c.b16 %v2516, %v2512
    %v3737 = vpack.c.b16 %v2521, %v2517
    %v3738 = vpack.c.b16 %v2522, %v2518
    %v3739 = vpack.c.b16 %v2523, %v2519
    %v3740 = vpack.c.b16 %v2524, %v2520
    %v3741 = vpack.c.b16 %v2529, %v2525
    %v3742 = vpack.c.b16 %v2530, %v2526
    %v3743 = vpack.c.b16 %v2531, %v2527
    %v3744 = vpack.c.b16 %v2532, %v2528
    %v3745 = vpack.c.b16 %v2537, %v2533
    %v3746 = vpack.c.b16 %v2538, %v2534
    %v3747 = vpack.c.b16 %v2539, %v2535
    %v3748 = vpack.c.b16 %v2540, %v2536
    %v3749 = vpack.c.b16 %v2545, %v2541
    %v3750 = vpack.c.b16 %v2546, %v2542
    %v3751 = vpack.c.b16 %v2547, %v2543
    %v3752 = vpack.c.b16 %v2548, %v2544
    %v3753 = vpack.c.b16 %v2553, %v2549
    %v3754 = vpack.c.b16 %v2554, %v2550
    %v3755 = vpack.c.b16 %v2555, %v2551
    %v3756 = vpack.c.b16 %v2556, %v2552
    %v3757 = vpack.c.b16 %v2561, %v2557
    %v3758 = vpack.c.b16 %v2562, %v2558
    %v3759 = vpack.c.b16 %v2563, %v2559
    %v3760 = vpack.c.b16 %v2564, %v2560
    %v3761 = vpack.c.b16 %v2569, %v2565
    %v3762 = vpack.c.b16 %v2570, %v2566
    %v3763 = vpack.c.b16 %v2571, %v2567
    %v3764 = vpack.c.b16 %v2572, %v2568
    %v3765 = vpack.c.b16 %v2577, %v2573
    %v3766 = vpack.c.b16 %v2578, %v2574
    %v3767 = vpack.c.b16 %v2579, %v2575
    %v3768 = vpack.c.b16 %v2580, %v2576
    %v3769 = vpack.c.b16 %v2585, %v2581
    %v3770 = vpack.c.b16 %v2586, %v2582
    %v3771 = vpack.c.b16 %v2587, %v2583
    %v3772 = vpack.c.b16 %v2588, %v2584
    %v3773 = vpack.c.b16 %v2593, %v2589
    %v3774 = vpack.c.b16 %v2594, %v2590
    %v3775 = vpack.c.b16 %v2595, %v2591
    %v3776 = vpack.c.b16 %v2596, %v2592
    %v3777 = vpack.c.b16 %v2601, %v2597
    %v3778 = vpack.c.b16 %v2602, %v2598
    %v3779 = vpack.c.b16 %v2603, %v2599
    %v3780 = vpack.c.b16 %v2604, %v2600
    %v3781 = vpack.c.b16 %v2609, %v2605
    %v3782 = vpack.c.b16 %v2610, %v2606
    %v3783 = vpack.c.b16 %v2611, %v2607
    %v3784 = vpack.c.b16 %v2612, %v2608
    %v3785 = vpack.c.b16 %v2617, %v2613
    %v3786 = vpack.c.b16 %v2618, %v2614
    %v3787 = vpack.c.b16 %v2619, %v2615
    %v3788 = vpack.c.b16 %v2620, %v2616
    %v3789 = vpack.c.b16 %v2625, %v2621
    %v3790 = vpack.c.b16 %v2626, %v2622
    %v3791 = vpack.c.b16 %v2627, %v2623
    %v3792 = vpack.c.b16 %v2628, %v2624
    %v3793 = vpack.c.b16 %v2633, %v2629
    %v3794 = vpack.c.b16 %v2634, %v2630
    %v3795 = vpack.c.b16 %v2635, %v2631
    %v3796 = vpack.c.b16 %v2636, %v2632
    %v3797 = vpack.c.b16 %v2641, %v2637
    %v3798 = vpack.c.b16 %v2642, %v2638
    %v3799 = vpack.c.b16 %v2643, %v2639
    %v3800 = vpack.c.b16 %v2644, %v2640
    %v3801 = vpack.c.b16 %v2649, %v2645
    %v3802 = vpack.c.b16 %v2650, %v2646
    %v3803 = vpack.c.b16 %v2651, %v2647
    %v3804 = vpack.c.b16 %v2652, %v2648
    %v3805 = vpack.c.b16 %v2657, %v2653
    %v3806 = vpack.c.b16 %v2658, %v2654
    %v3807 = vpack.c.b16 %v2659, %v2655
    %v3808 = vpack.c.b16 %v2660, %v2656
    %v3809 = vpack.c.b16 %v2665, %v2661
    %v3810 = vpack.c.b16 %v2666, %v2662
    %v3811 = vpack.c.b16 %v2667, %v2663
    %v3812 = vpack.c.b16 %v2668, %v2664
    %v3813 = vpack.c.b16 %v2673, %v2669
    %v3814 = vpack.c.b16 %v2674, %v2670
    %v3815 = vpack.c.b16 %v2675, %v2671
    %v3816 = vpack.c.b16 %v2676, %v2672
    %v3817 = vpack.c.b16 %v2681, %v2677
    %v3818 = vpack.c.b16 %v2682, %v2678
    %v3819 = vpack.c.b16 %v2683, %v2679
    %v3820 = vpack.c.b16 %v2684, %v2680
    %v3821 = vpack.c.b16 %v2689, %v2685
    %v3822 = vpack.c.b16 %v2690, %v2686
    %v3823 = vpack.c.b16 %v2691, %v2687
    %v3824 = vpack.c.b16 %v2692, %v2688
    %v3825 = vpack.c.b16 %v2697, %v2693
    %v3826 = vpack.c.b16 %v2698, %v2694
    %v3827 = vpack.c.b16 %v2699, %v2695
    %v3828 = vpack.c.b16 %v2700, %v2696
    %v3829 = vpack.c.b16 %v2705, %v2701
    %v3830 = vpack.c.b16 %v2706, %v2702
    %v3831 = vpack.c.b16 %v2707, %v2703
    %v3832 = vpack.c.b16 %v2708, %v2704
    %v3833 = vpack.c.b16 %v2713, %v2709
    %v3834 = vpack.c.b16 %v2714, %v2710
    %v3835 = vpack.c.b16 %v2715, %v2711
    %v3836 = vpack.c.b16 %v2716, %v2712
    %v3837 = vpack.c.b16 %v2721, %v2717
    %v3838 = vpack.c.b16 %v2722, %v2718
    %v3839 = vpack.c.b16 %v2723, %v2719
    %v3840 = vpack.c.b16 %v2724, %v2720
    %v3841 = vpack.c.b16 %v2729, %v2725
    %v3842 = vpack.c.b16 %v2730, %v2726
    %v3843 = vpack.c.b16 %v2731, %v2727
    %v3844 = vpack.c.b16 %v2732, %v2728
    %v3845 = vpack.c.b16 %v2737, %v2733
    %v3846 = vpack.c.b16 %v2738, %v2734
    %v3847 = vpack.c.b16 %v2739, %v2735
    %v3848 = vpack.c.b16 %v2740, %v2736
    %v3849 = vpack.c.b16 %v2745, %v2741
    %v3850 = vpack.c.b16 %v2746, %v2742
    %v3851 = vpack.c.b16 %v2747, %v2743
    %v3852 = vpack.c.b16 %v2748, %v2744
    %v3853 = vpack.c.b16 %v2753, %v2749
    %v3854 = vpack.c.b16 %v2754, %v2750
    %v3855 = vpack.c.b16 %v2755, %v2751
    %v3856 = vpack.c.b16 %v2756, %v2752
    %v3857 = vpack.c.b16 %v2761, %v2757
    %v3858 = vpack.c.b16 %v2762, %v2758
    %v3859 = vpack.c.b16 %v2763, %v2759
    %v3860 = vpack.c.b16 %v2764, %v2760
    %v3861 = vpack.c.b16 %v2769, %v2765
    %v3862 = vpack.c.b16 %v2770, %v2766
    %v3863 = vpack.c.b16 %v2771, %v2767
    %v3864 = vpack.c.b16 %v2772, %v2768
    %v3865 = vpack.c.b16 %v2777, %v2773
    %v3866 = vpack.c.b16 %v2778, %v2774
    %v3867 = vpack.c.b16 %v2779, %v2775
    %v3868 = vpack.c.b16 %v2780, %v2776
    %v3869 = vpack.c.b16 %v2785, %v2781
    %v3870 = vpack.c.b16 %v2786, %v2782
    %v3871 = vpack.c.b16 %v2787, %v2783
    %v3872 = vpack.c.b16 %v2788, %v2784
    %v3873 = vpack.c.b16 %v2793, %v2789
    %v3874 = vpack.c.b16 %v2794, %v2790
    %v3875 = vpack.c.b16 %v2795, %v2791
    %v3876 = vpack.c.b16 %v2796, %v2792
    %v3877 = vpack.c.b16 %v2801, %v2797
    %v3878 = vpack.c.b16 %v2802, %v2798
    %v3879 = vpack.c.b16 %v2803, %v2799
    %v3880 = vpack.c.b16 %v2804, %v2800
    %v3881 = vpack.c.b16 %v2809, %v2805
    %v3882 = vpack.c.b16 %v2810, %v2806
    %v3883 = vpack.c.b16 %v2811, %v2807
    %v3884 = vpack.c.b16 %v2812, %v2808
    %v3885 = vpack.c.b16 %v2817, %v2813
    %v3886 = vpack.c.b16 %v2818, %v2814
    %v3887 = vpack.c.b16 %v2819, %v2815
    %v3888 = vpack.c.b16 %v2820, %v2816
    %v3889 = vpack.c.b16 %v2825, %v2821
    %v3890 = vpack.c.b16 %v2826, %v2822
    %v3891 = vpack.c.b16 %v2827, %v2823
    %v3892 = vpack.c.b16 %v2828, %v2824
    %v3893 = vpack.c.b16 %v2833, %v2829
    %v3894 = vpack.c.b16 %v2834, %v2830
    %v3895 = vpack.c.b16 %v2835, %v2831
    %v3896 = vpack.c.b16 %v2836, %v2832
    %v3897 = vpack.c.b16 %v2841, %v2837
    %v3898 = vpack.c.b16 %v2842, %v2838
    %v3899 = vpack.c.b16 %v2843, %v2839
    %v3900 = vpack.c.b16 %v2844, %v2840
    %v3901 = vpack.c.b16 %v2849, %v2845
    %v3902 = vpack.c.b16 %v2850, %v2846
    %v3903 = vpack.c.b16 %v2851, %v2847
    %v3904 = vpack.c.b16 %v2852, %v2848
    %v3905 = vpack.c.b16 %v2857, %v2853
    %v3906 = vpack.c.b16 %v2858, %v2854
    %v3907 = vpack.c.b16 %v2859, %v2855
    %v3908 = vpack.c.b16 %v2860, %v2856
    %v3909 = vpack.c.b16 %v2865, %v2861
    %v3910 = vpack.c.b16 %v2866, %v2862
    %v3911 = vpack.c.b16 %v2867, %v2863
    %v3912 = vpack.c.b16 %v2868, %v2864
    %v3913 = vpack.c.b16 %v2873, %v2869
    %v3914 = vpack.c.b16 %v2874, %v2870
    %v3915 = vpack.c.b16 %v2875, %v2871
    %v3916 = vpack.c.b16 %v2876, %v2872
    %v3917 = vpack.c.b16 %v2881, %v2877
    %v3918 = vpack.c.b16 %v2882, %v2878
    %v3919 = vpack.c.b16 %v2883, %v2879
    %v3920 = vpack.c.b16 %v2884, %v2880
    %v3921 = vpack.c.b16 %v2889, %v2885
    %v3922 = vpack.c.b16 %v2890, %v2886
    %v3923 = vpack.c.b16 %v2891, %v2887
    %v3924 = vpack.c.b16 %v2892, %v2888
    %v3925 = vpack.c.b16 %v2897, %v2893
    %v3926 = vpack.c.b16 %v2898, %v2894
    %v3927 = vpack.c.b16 %v2899, %v2895
    %v3928 = vpack.c.b16 %v2900, %v2896
    %v3929 = vpack.c.b16 %v2905, %v2901
    %v3930 = vpack.c.b16 %v2906, %v2902
    %v3931 = vpack.c.b16 %v2907, %v2903
    %v3932 = vpack.c.b16 %v2908, %v2904
    %v3933 = vpack.c.b16 %v2913, %v2909
    %v3934 = vpack.c.b16 %v2914, %v2910
    %v3935 = vpack.c.b16 %v2915, %v2911
    %v3936 = vpack.c.b16 %v2916, %v2912
    %v3937 = vpack.c.b16 %v2921, %v2917
    %v3938 = vpack.c.b16 %v2922, %v2918
    %v3939 = vpack.c.b16 %v2923, %v2919
    %v3940 = vpack.c.b16 %v2924, %v2920
    %v3941 = vpack.c.b16 %v2929, %v2925
    %v3942 = vpack.c.b16 %v2930, %v2926
    %v3943 = vpack.c.b16 %v2931, %v2927
    %v3944 = vpack.c.b16 %v2932, %v2928
    %v3945 = vpack.c.b16 %v2937, %v2933
    %v3946 = vpack.c.b16 %v2938, %v2934
    %v3947 = vpack.c.b16 %v2939, %v2935
    %v3948 = vpack.c.b16 %v2940, %v2936
    %v3949 = vpack.c.b16 %v2945, %v2941
    %v3950 = vpack.c.b16 %v2946, %v2942
    %v3951 = vpack.c.b16 %v2947, %v2943
    %v3952 = vpack.c.b16 %v2948, %v2944
    %v3953 = vpack.c.b16 %v2953, %v2949
    %v3954 = vpack.c.b16 %v2954, %v2950
    %v3955 = vpack.c.b16 %v2955, %v2951
    %v3956 = vpack.c.b16 %v2956, %v2952
    %v3957 = vpack.c.b16 %v2961, %v2957
    %v3958 = vpack.c.b16 %v2962, %v2958
    %v3959 = vpack.c.b16 %v2963, %v2959
    %v3960 = vpack.c.b16 %v2964, %v2960
    %v3961 = vpack.c.b16 %v2969, %v2965
    %v3962 = vpack.c.b16 %v2970, %v2966
    %v3963 = vpack.c.b16 %v2971, %v2967
    %v3964 = vpack.c.b16 %v2972, %v2968
    %v3965 = vpack.c.b16 %v2977, %v2973
    %v3966 = vpack.c.b16 %v2978, %v2974
    %v3967 = vpack.c.b16 %v2979, %v2975
    %v3968 = vpack.c.b16 %v2980, %v2976
    %v3969 = vpack.c.b16 %v2985, %v2981
    %v3970 = vpack.c.b16 %v2986, %v2982
    %v3971 = vpack.c.b16 %v2987, %v2983
    %v3972 = vpack.c.b16 %v2988, %v2984
    %v3973 = vpack.c.b16 %v2993, %v2989
    %v3974 = vpack.c.b16 %v2994, %v2990
    %v3975 = vpack.c.b16 %v2995, %v2991
    %v3976 = vpack.c.b16 %v2996, %v2992
    %v3977 = vpack.c.b16 %v3001, %v2997
    %v3978 = vpack.c.b16 %v3002, %v2998
    %v3979 = vpack.c.b16 %v3003, %v2999
    %v3980 = vpack.c.b16 %v3004, %v3000
    %v3981 = vpack.c.b16 %v3009, %v3005
    %v3982 = vpack.c.b16 %v3010, %v3006
    %v3983 = vpack.c.b16 %v3011, %v3007
    %v3984 = vpack.c.b16 %v3012, %v3008
    %v3985 = vpack.c.b16 %v3017, %v3013
    %v3986 = vpack.c.b16 %v3018, %v3014
    %v3987 = vpack.c.b16 %v3019, %v3015
    %v3988 = vpack.c.b16 %v3020, %v3016
    %v3989 = vpack.c.b16 %v3025, %v3021
    %v3990 = vpack.c.b16 %v3026, %v3022
    %v3991 = vpack.c.b16 %v3027, %v3023
    %v3992 = vpack.c.b16 %v3028, %v3024
    %v3993 = vpack.c.b16 %v3033, %v3029
    %v3994 = vpack.c.b16 %v3034, %v3030
    %v3995 = vpack.c.b16 %v3035, %v3031
    %v3996 = vpack.c.b16 %v3036, %v3032
    %v3997 = vpack.c.b16 %v3041, %v3037
    %v3998 = vpack.c.b16 %v3042, %v3038
    %v3999 = vpack.c.b16 %v3043, %v3039
    %v4000 = vpack.c.b16 %v3044, %v3040
    %v4001 = vpack.c.b16 %v3049, %v3045
    %v4002 = vpack.c.b16 %v3050, %v3046
    %v4003 = vpack.c.b16 %v3051, %v3047
    %v4004 = vpack.c.b16 %v3052, %v3048
    %v4005 = vpack.c.b16 %v3057, %v3053
    %v4006 = vpack.c.b16 %v3058, %v3054
    %v4007 = vpack.c.b16 %v3059, %v3055
    %v4008 = vpack.c.b16 %v3060, %v3056
    %v4009 = vpack.c.b16 %v3065, %v3061
    %v4010 = vpack.c.b16 %v3066, %v3062
    %v4011 = vpack.c.b16 %v3067, %v3063
    %v4012 = vpack.c.b16 %v3068, %v3064
    %v4013 = vpack.c.b16 %v3073, %v3069
    %v4014 = vpack.c.b16 %v3074, %v3070
    %v4015 = vpack.c.b16 %v3075, %v3071
    %v4016 = vpack.c.b16 %v3076, %v3072
    %v4017 = vpack.c.b16 %v3081, %v3077
    %v4018 = vpack.c.b16 %v3082, %v3078
    %v4019 = vpack.c.b16 %v3083, %v3079
    %v4020 = vpack.c.b16 %v3084, %v3080
    %v4021 = vpack.c.b16 %v3089, %v3085
    %v4022 = vpack.c.b16 %v3090, %v3086
    %v4023 = vpack.c.b16 %v3091, %v3087
    %v4024 = vpack.c.b16 %v3092, %v3088
    %v4025 = vpack.c.b16 %v3097, %v3093
    %v4026 = vpack.c.b16 %v3098, %v3094
    %v4027 = vpack.c.b16 %v3099, %v3095
    %v4028 = vpack.c.b16 %v3100, %v3096
    %v4029 = vpack.c.b16 %v3105, %v3101
    %v4030 = vpack.c.b16 %v3106, %v3102
    %v4031 = vpack.c.b16 %v3107, %v3103
    %v4032 = vpack.c.b16 %v3108, %v3104
    %v4033 = vpack.c.b16 %v3113, %v3109
    %v4034 = vpack.c.b16 %v3114, %v3110
    %v4035 = vpack.c.b16 %v3115, %v3111
    %v4036 = vpack.c.b16 %v3116, %v3112
    %v4037 = vpack.c.b16 %v3121, %v3117
    %v4038 = vpack.c.b16 %v3122, %v3118
    %v4039 = vpack.c.b16 %v3123, %v3119
    %v4040 = vpack.c.b16 %v3124, %v3120
    %v4041 = vpack.c.b16 %v3129, %v3125
    %v4042 = vpack.c.b16 %v3130, %v3126
    %v4043 = vpack.c.b16 %v3131, %v3127
    %v4044 = vpack.c.b16 %v3132, %v3128
    %v4045 = vpack.c.b16 %v3137, %v3133
    %v4046 = vpack.c.b16 %v3138, %v3134
    %v4047 = vpack.c.b16 %v3139, %v3135
    %v4048 = vpack.c.b16 %v3140, %v3136
    %v4049 = vpack.c.b16 %v3145, %v3141
    %v4050 = vpack.c.b16 %v3146, %v3142
    %v4051 = vpack.c.b16 %v3147, %v3143
    %v4052 = vpack.c.b16 %v3148, %v3144
    %v4053 = vpack.c.b16 %v3153, %v3149
    %v4054 = vpack.c.b16 %v3154, %v3150
    %v4055 = vpack.c.b16 %v3155, %v3151
    %v4056 = vpack.c.b16 %v3156, %v3152
    %v4057 = vpack.c.b16 %v3161, %v3157
    %v4058 = vpack.c.b16 %v3162, %v3158
    %v4059 = vpack.c.b16 %v3163, %v3159
    %v4060 = vpack.c.b16 %v3164, %v3160
    %v4061 = vpack.c.b16 %v3169, %v3165
    %v4062 = vpack.c.b16 %v3170, %v3166
    %v4063 = vpack.c.b16 %v3171, %v3167
    %v4064 = vpack.c.b16 %v3172, %v3168
    %v4065 = vpack.c.b16 %v3177, %v3173
    %v4066 = vpack.c.b16 %v3178, %v3174
    %v4067 = vpack.c.b16 %v3179, %v3175
    %v4068 = vpack.c.b16 %v3180, %v3176
    %v4069 = vpack.c.b16 %v3185, %v3181
    %v4070 = vpack.c.b16 %v3186, %v3182
    %v4071 = vpack.c.b16 %v3187, %v3183
    %v4072 = vpack.c.b16 %v3188, %v3184
    %v4073 = vpack.c.b16 %v3193, %v3189
    %v4074 = vpack.c.b16 %v3194, %v3190
    %v4075 = vpack.c.b16 %v3195, %v3191
    %v4076 = vpack.c.b16 %v3196, %v3192
    %v4077 = vpack.c.b16 %v3201, %v3197
    %v4078 = vpack.c.b16 %v3202, %v3198
    %v4079 = vpack.c.b16 %v3203, %v3199
    %v4080 = vpack.c.b16 %v3204, %v3200
    %v4081 = vpack.c.b16 %v3209, %v3205
    %v4082 = vpack.c.b16 %v3210, %v3206
    %v4083 = vpack.c.b16 %v3211, %v3207
    %v4084 = vpack.c.b16 %v3212, %v3208
    %v4085 = vpack.c.b16 %v3217, %v3213
    %v4086 = vpack.c.b16 %v3218, %v3214
    %v4087 = vpack.c.b16 %v3219, %v3215
    %v4088 = vpack.c.b16 %v3220, %v3216
    %v4089 = vpack.c.b16 %v3225, %v3221
    %v4090 = vpack.c.b16 %v3226, %v3222
    %v4091 = vpack.c.b16 %v3227, %v3223
    %v4092 = vpack.c.b16 %v3228, %v3224
    %v4093 = vpack.c.b16 %v3233, %v3229
    %v4094 = vpack.c.b16 %v3234, %v3230
    %v4095 = vpack.c.b16 %v3235, %v3231
    %v4096 = vpack.c.b16 %v3236, %v3232
    %v4097 = vpack.c.b16 %v3241, %v3237
    %v4098 = vpack.c.b16 %v3242, %v3238
    %v4099 = vpack.c.b16 %v3243, %v3239
    %v4100 = vpack.c.b16 %v3244, %v3240
    %v4101 = vpack.c.b16 %v3249, %v3245
    %v4102 = vpack.c.b16 %v3250, %v3246
    %v4103 = vpack.c.b16 %v3251, %v3247
    %v4104 = vpack.c.b16 %v3252, %v3248
    %v4105 = vpack.c.b16 %v3257, %v3253
    %v4106 = vpack.c.b16 %v3258, %v3254
    %v4107 = vpack.c.b16 %v3259, %v3255
    %v4108 = vpack.c.b16 %v3260, %v3256
    %v4109 = vpack.c.b16 %v3265, %v3261
    %v4110 = vpack.c.b16 %v3266, %v3262
    %v4111 = vpack.c.b16 %v3267, %v3263
    %v4112 = vpack.c.b16 %v3268, %v3264
    %v4113 = vpack.c.b16 %v3273, %v3269
    %v4114 = vpack.c.b16 %v3274, %v3270
    %v4115 = vpack.c.b16 %v3275, %v3271
    %v4116 = vpack.c.b16 %v3276, %v3272
    %v4117 = vpack.c.b16 %v3281, %v3277
    %v4118 = vpack.c.b16 %v3282, %v3278
    %v4119 = vpack.c.b16 %v3283, %v3279
    %v4120 = vpack.c.b16 %v3284, %v3280
    %v4121 = vpack.c.b16 %v3289, %v3285
    %v4122 = vpack.c.b16 %v3290, %v3286
    %v4123 = vpack.c.b16 %v3291, %v3287
    %v4124 = vpack.c.b16 %v3292, %v3288
    %v4125 = vpack.c.b16 %v3297, %v3293
    %v4126 = vpack.c.b16 %v3298, %v3294
    %v4127 = vpack.c.b16 %v3299, %v3295
    %v4128 = vpack.c.b16 %v3300, %v3296
    %v4129 = vpack.c.b16 %v3305, %v3301
    %v4130 = vpack.c.b16 %v3306, %v3302
    %v4131 = vpack.c.b16 %v3307, %v3303
    %v4132 = vpack.c.b16 %v3308, %v3304
    %v4133 = vpack.c.b16 %v3313, %v3309
    %v4134 = vpack.c.b16 %v3314, %v3310
    %v4135 = vpack.c.b16 %v3315, %v3311
    %v4136 = vpack.c.b16 %v3316, %v3312
    %v4137 = vpack.c.b16 %v3321, %v3317
    %v4138 = vpack.c.b16 %v3322, %v3318
    %v4139 = vpack.c.b16 %v3323, %v3319
    %v4140 = vpack.c.b16 %v3324, %v3320
    %v4141 = vpack.c.b16 %v3329, %v3325
    %v4142 = vpack.c.b16 %v3330, %v3326
    %v4143 = vpack.c.b16 %v3331, %v3327
    %v4144 = vpack.c.b16 %v3332, %v3328
    %v4145 = vpack.c.b16 %v3337, %v3333
    %v4146 = vpack.c.b16 %v3338, %v3334
    %v4147 = vpack.c.b16 %v3339, %v3335
    %v4148 = vpack.c.b16 %v3340, %v3336
    %v4149 = vpack.c.b16 %v3345, %v3341
    %v4150 = vpack.c.b16 %v3346, %v3342
    %v4151 = vpack.c.b16 %v3347, %v3343
    %v4152 = vpack.c.b16 %v3348, %v3344
    %v4153 = vpack.c.b16 %v3353, %v3349
    %v4154 = vpack.c.b16 %v3354, %v3350
    %v4155 = vpack.c.b16 %v3355, %v3351
    %v4156 = vpack.c.b16 %v3356, %v3352
    %v4157 = vpack.c.b16 %v3361, %v3357
    %v4158 = vpack.c.b16 %v3362, %v3358
    %v4159 = vpack.c.b16 %v3363, %v3359
    %v4160 = vpack.c.b16 %v3364, %v3360
    %v4161 = vpack.c.b16 %v3369, %v3365
    %v4162 = vpack.c.b16 %v3370, %v3366
    %v4163 = vpack.c.b16 %v3371, %v3367
    %v4164 = vpack.c.b16 %v3372, %v3368
    %v4165 = vpack.c.b16 %v3377, %v3373
    %v4166 = vpack.c.b16 %v3378, %v3374
    %v4167 = vpack.c.b16 %v3379, %v3375
    %v4168 = vpack.c.b16 %v3380, %v3376
    %v4169 = vpack.c.b16 %v3385, %v3381
    %v4170 = vpack.c.b16 %v3386, %v3382
    %v4171 = vpack.c.b16 %v3387, %v3383
    %v4172 = vpack.c.b16 %v3388, %v3384
    %v4173 = vpack.c.b16 %v3393, %v3389
    %v4174 = vpack.c.b16 %v3394, %v3390
    %v4175 = vpack.c.b16 %v3395, %v3391
    %v4176 = vpack.c.b16 %v3396, %v3392
    %v4177 = vpack.c.b16 %v3401, %v3397
    %v4178 = vpack.c.b16 %v3402, %v3398
    %v4179 = vpack.c.b16 %v3403, %v3399
    %v4180 = vpack.c.b16 %v3404, %v3400
    %v4181 = vpack.c.b16 %v3409, %v3405
    %v4182 = vpack.c.b16 %v3410, %v3406
    %v4183 = vpack.c.b16 %v3411, %v3407
    %v4184 = vpack.c.b16 %v3412, %v3408
    %v4185 = vpack.c.b16 %v3417, %v3413
    %v4186 = vpack.c.b16 %v3418, %v3414
    %v4187 = vpack.c.b16 %v3419, %v3415
    %v4188 = vpack.c.b16 %v3420, %v3416
    %4957 = vmatprep.subr.bf16.mxu0 %v3422
    %4958 = vmatpush1.bf16.msra.mxu0 %v3421
    %4959 = vmatprep.subr.bf16.mxu0 %v3426
    %4960 = vmatpush1.bf16.msra.mxu0 %v3425
    %4961 = vmatprep.subr.bf16.mxu0 %v3430
    %4962 = vmatpush1.bf16.msra.mxu0 %v3429
    %4963 = vmatprep.subr.bf16.mxu0 %v3434
    %4964 = vmatpush1.bf16.msra.mxu0 %v3433
    %4965 = vmatprep.subr.bf16.mxu0 %v3438
    %4966 = vmatpush1.bf16.msra.mxu0 %v3437
    %4967 = vmatprep.subr.bf16.mxu0 %v3442
    %4968 = vmatpush1.bf16.msra.mxu0 %v3441
    %4969 = vmatprep.subr.bf16.mxu0 %v3446
    %4970 = vmatpush1.bf16.msra.mxu0 %v3445
    %4971 = vmatprep.subr.bf16.mxu0 %v3450
    %4972 = vmatpush1.bf16.msra.mxu0 %v3449
    %4973 = vmatprep.subr.bf16.mxu0 %v3454
    %4974 = vmatpush1.bf16.msra.mxu0 %v3453
    %4975 = vmatprep.subr.bf16.mxu0 %v3458
    %4976 = vmatpush1.bf16.msra.mxu0 %v3457
    %4977 = vmatprep.subr.bf16.mxu0 %v3462
    %4978 = vmatpush1.bf16.msra.mxu0 %v3461
    %4979 = vmatprep.subr.bf16.mxu0 %v3466
    %4980 = vmatpush1.bf16.msra.mxu0 %v3465
    %4981 = vmatprep.subr.bf16.mxu0 %v3470
    %4982 = vmatpush1.bf16.msra.mxu0 %v3469
    %4983 = vmatprep.subr.bf16.mxu0 %v3474
    %4984 = vmatpush1.bf16.msra.mxu0 %v3473
    %4985 = vmatprep.subr.bf16.mxu0 %v3478
    %4986 = vmatpush1.bf16.msra.mxu0 %v3477
    %4987 = vmatprep.subr.bf16.mxu0 %v3482
    %4988 = vmatpush1.bf16.msra.mxu0 %v3481
    %4989 = vmatprep.mubr.bf16.mxu0 %v1072
    %4990 = vmatmul.mubr.bf16.gmra.mrb[0].mxu0 %v1071
    %v4991 = vpop.f32.mrb[0].mxu0
    %v4992 = vadd.f32 %v1100, %v4991
    %v4993 = vpop.f32.mrb[0].mxu0
    %v4994 = vadd.f32 %v1104, %v4993
    %v4995 = vpop.f32.mrb[0].mxu0
    %v4996 = vpop.f32.mrb[0].mxu0
    %4997 = vdwg.mxu0
    %4998 = vmatprep.subr.bf16.mxu0 %v3486
    %4999 = vmatpush1.bf16.msra.mxu0 %v3485
    %5000 = vmatprep.subr.bf16.mxu0 %v3490
    %5001 = vmatpush1.bf16.msra.mxu0 %v3489
    %5002 = vmatprep.subr.bf16.mxu0 %v3494
    %5003 = vmatpush1.bf16.msra.mxu0 %v3493
    %5004 = vmatprep.subr.bf16.mxu0 %v3498
    %5005 = vmatpush1.bf16.msra.mxu0 %v3497
    %5006 = vmatprep.subr.bf16.mxu0 %v3502
    %5007 = vmatpush1.bf16.msra.mxu0 %v3501
    %5008 = vmatprep.subr.bf16.mxu0 %v3506
    %5009 = vmatpush1.bf16.msra.mxu0 %v3505
    %5010 = vmatprep.subr.bf16.mxu0 %v3510
    %5011 = vmatpush1.bf16.msra.mxu0 %v3509
    %5012 = vmatprep.subr.bf16.mxu0 %v3514
    %5013 = vmatpush1.bf16.msra.mxu0 %v3513
    %5014 = vmatprep.subr.bf16.mxu0 %v3518
    %5015 = vmatpush1.bf16.msra.mxu0 %v3517
    %5016 = vmatprep.subr.bf16.mxu0 %v3522
    %5017 = vmatpush1.bf16.msra.mxu0 %v3521
    %5018 = vmatprep.subr.bf16.mxu0 %v3526
    %5019 = vmatpush1.bf16.msra.mxu0 %v3525
    %5020 = vmatprep.subr.bf16.mxu0 %v3530
    %5021 = vmatpush1.bf16.msra.mxu0 %v3529
    %5022 = vmatprep.subr.bf16.mxu0 %v3534
    %5023 = vmatpush1.bf16.msra.mxu0 %v3533
    %5024 = vmatprep.subr.bf16.mxu0 %v3538
    %5025 = vmatpush1.bf16.msra.mxu0 %v3537
    %5026 = vmatprep.subr.bf16.mxu0 %v3542
    %5027 = vmatpush1.bf16.msra.mxu0 %v3541
    %5028 = vmatprep.subr.bf16.mxu0 %v3546
    %5029 = vmatpush1.bf16.msra.mxu0 %v3545
    %5030 = vmatprep.mubr.bf16.mxu0 %v1074
    %5031 = vmatmul.mubr.bf16.gmra.mrb[0].mxu0 %v1073
    %v5032 = vpop.f32.mrb[0].mxu0
    %v5033 = vadd.f32 %v4992, %v5032
    %v5034 = vpop.f32.mrb[0].mxu0
    %v5035 = vadd.f32 %v4994, %v5034
    %v5036 = vpop.f32.mrb[0].mxu0
    %v5037 = vpop.f32.mrb[0].mxu0
    %5038 = vdwg.mxu0
    %5039 = vmatprep.subr.bf16.mxu0 %v3550
    %5040 = vmatpush1.bf16.msra.mxu0 %v3549
    %5041 = vmatprep.subr.bf16.mxu0 %v3554
    %5042 = vmatpush1.bf16.msra.mxu0 %v3553
    %5043 = vmatprep.subr.bf16.mxu0 %v3558
    %5044 = vmatpush1.bf16.msra.mxu0 %v3557
    %5045 = vmatprep.subr.bf16.mxu0 %v3562
    %5046 = vmatpush1.bf16.msra.mxu0 %v3561
    %5047 = vmatprep.subr.bf16.mxu0 %v3566
    %5048 = vmatpush1.bf16.msra.mxu0 %v3565
    %5049 = vmatprep.subr.bf16.mxu0 %v3570
    %5050 = vmatpush1.bf16.msra.mxu0 %v3569
    %5051 = vmatprep.subr.bf16.mxu0 %v3574
    %5052 = vmatpush1.bf16.msra.mxu0 %v3573
    %5053 = vmatprep.subr.bf16.mxu0 %v3578
    %5054 = vmatpush1.bf16.msra.mxu0 %v3577
    %5055 = vmatprep.subr.bf16.mxu0 %v3582
    %5056 = vmatpush1.bf16.msra.mxu0 %v3581
    %5057 = vmatprep.subr.bf16.mxu0 %v3586
    %5058 = vmatpush1.bf16.msra.mxu0 %v3585
    %5059 = vmatprep.subr.bf16.mxu0 %v3590
    %5060 = vmatpush1.bf16.msra.mxu0 %v3589
    %5061 = vmatprep.subr.bf16.mxu0 %v3594
    %5062 = vmatpush1.bf16.msra.mxu0 %v3593
    %5063 = vmatprep.subr.bf16.mxu0 %v3598
    %5064 = vmatpush1.bf16.msra.mxu0 %v3597
    %5065 = vmatprep.subr.bf16.mxu0 %v3602
    %5066 = vmatpush1.bf16.msra.mxu0 %v3601
    %5067 = vmatprep.subr.bf16.mxu0 %v3606
    %5068 = vmatpush1.bf16.msra.mxu0 %v3605
    %5069 = vmatprep.subr.bf16.mxu0 %v3610
    %5070 = vmatpush1.bf16.msra.mxu0 %v3609
    %5071 = vmatprep.mubr.bf16.mxu0 %v1076
    %5072 = vmatmul.mubr.bf16.gmra.mrb[0].mxu0 %v1075
    %v5073 = vpop.f32.mrb[0].mxu0
    %v5074 = vadd.f32 %v5033, %v5073
    %v5075 = vpop.f32.mrb[0].mxu0
    %v5076 = vadd.f32 %v5035, %v5075
    %v5077 = vpop.f32.mrb[0].mxu0
    %v5078 = vpop.f32.mrb[0].mxu0
    %5079 = vdwg.mxu0
    %5080 = vmatprep.subr.bf16.mxu0 %v3614
    %5081 = vmatpush1.bf16.msra.mxu0 %v3613
    %5082 = vmatprep.subr.bf16.mxu0 %v3618
    %5083 = vmatpush1.bf16.msra.mxu0 %v3617
    %5084 = vmatprep.subr.bf16.mxu0 %v3622
    %5085 = vmatpush1.bf16.msra.mxu0 %v3621
    %5086 = vmatprep.subr.bf16.mxu0 %v3626
    %5087 = vmatpush1.bf16.msra.mxu0 %v3625
    %5088 = vmatprep.subr.bf16.mxu0 %v3630
    %5089 = vmatpush1.bf16.msra.mxu0 %v3629
    %5090 = vmatprep.subr.bf16.mxu0 %v3634
    %5091 = vmatpush1.bf16.msra.mxu0 %v3633
    %5092 = vmatprep.subr.bf16.mxu0 %v3638
    %5093 = vmatpush1.bf16.msra.mxu0 %v3637
    %5094 = vmatprep.subr.bf16.mxu0 %v3642
    %5095 = vmatpush1.bf16.msra.mxu0 %v3641
    %5096 = vmatprep.subr.bf16.mxu0 %v3646
    %5097 = vmatpush1.bf16.msra.mxu0 %v3645
    %5098 = vmatprep.subr.bf16.mxu0 %v3650
    %5099 = vmatpush1.bf16.msra.mxu0 %v3649
    %5100 = vmatprep.subr.bf16.mxu0 %v3654
    %5101 = vmatpush1.bf16.msra.mxu0 %v3653
    %5102 = vmatprep.subr.bf16.mxu0 %v3658
    %5103 = vmatpush1.bf16.msra.mxu0 %v3657
    %5104 = vmatprep.subr.bf16.mxu0 %v3662
    %5105 = vmatpush1.bf16.msra.mxu0 %v3661
    %5106 = vmatprep.subr.bf16.mxu0 %v3666
    %5107 = vmatpush1.bf16.msra.mxu0 %v3665
    %5108 = vmatprep.subr.bf16.mxu0 %v3670
    %5109 = vmatpush1.bf16.msra.mxu0 %v3669
    %5110 = vmatprep.subr.bf16.mxu0 %v3674
    %5111 = vmatpush1.bf16.msra.mxu0 %v3673
    %5112 = vmatprep.mubr.bf16.mxu0 %v1078
    %5113 = vmatmul.mubr.bf16.gmra.mrb[0].mxu0 %v1077
    %v5114 = vpop.f32.mrb[0].mxu0
    %v5115 = vadd.f32 %v5074, %v5114
    %v5116 = vpop.f32.mrb[0].mxu0
    %v5117 = vadd.f32 %v5076, %v5116
    %v5118 = vpop.f32.mrb[0].mxu0
    %v5119 = vpop.f32.mrb[0].mxu0
    %5120 = vdwg.mxu0
    %5121 = vmatprep.subr.bf16.mxu0 %v3678
    %5122 = vmatpush1.bf16.msra.mxu0 %v3677
    %5123 = vmatprep.subr.bf16.mxu0 %v3682
    %5124 = vmatpush1.bf16.msra.mxu0 %v3681
    %5125 = vmatprep.subr.bf16.mxu0 %v3686
    %5126 = vmatpush1.bf16.msra.mxu0 %v3685
    %5127 = vmatprep.subr.bf16.mxu0 %v3690
    %5128 = vmatpush1.bf16.msra.mxu0 %v3689
    %5129 = vmatprep.subr.bf16.mxu0 %v3694
    %5130 = vmatpush1.bf16.msra.mxu0 %v3693
    %5131 = vmatprep.subr.bf16.mxu0 %v3698
    %5132 = vmatpush1.bf16.msra.mxu0 %v3697
    %5133 = vmatprep.subr.bf16.mxu0 %v3702
    %5134 = vmatpush1.bf16.msra.mxu0 %v3701
    %5135 = vmatprep.subr.bf16.mxu0 %v3706
    %5136 = vmatpush1.bf16.msra.mxu0 %v3705
    %5137 = vmatprep.subr.bf16.mxu0 %v3710
    %5138 = vmatpush1.bf16.msra.mxu0 %v3709
    %5139 = vmatprep.subr.bf16.mxu0 %v3714
    %5140 = vmatpush1.bf16.msra.mxu0 %v3713
    %5141 = vmatprep.subr.bf16.mxu0 %v3718
    %5142 = vmatpush1.bf16.msra.mxu0 %v3717
    %5143 = vmatprep.subr.bf16.mxu0 %v3722
    %5144 = vmatpush1.bf16.msra.mxu0 %v3721
    %5145 = vmatprep.subr.bf16.mxu0 %v3726
    %5146 = vmatpush1.bf16.msra.mxu0 %v3725
    %5147 = vmatprep.subr.bf16.mxu0 %v3730
    %5148 = vmatpush1.bf16.msra.mxu0 %v3729
    %5149 = vmatprep.subr.bf16.mxu0 %v3734
    %5150 = vmatpush1.bf16.msra.mxu0 %v3733
    %5151 = vmatprep.subr.bf16.mxu0 %v3738
    %5152 = vmatpush1.bf16.msra.mxu0 %v3737
    %5153 = vmatprep.mubr.bf16.mxu0 %v1080
    %5154 = vmatmul.mubr.bf16.gmra.mrb[0].mxu0 %v1079
    %v5155 = vpop.f32.mrb[0].mxu0
    %v5156 = vadd.f32 %v5115, %v5155
    %v5157 = vpop.f32.mrb[0].mxu0
    %v5158 = vadd.f32 %v5117, %v5157
    %v5159 = vpop.f32.mrb[0].mxu0
    %v5160 = vpop.f32.mrb[0].mxu0
    %5161 = vdwg.mxu0
    %5162 = vmatprep.subr.bf16.mxu0 %v3742
    %5163 = vmatpush1.bf16.msra.mxu0 %v3741
    %5164 = vmatprep.subr.bf16.mxu0 %v3746
    %5165 = vmatpush1.bf16.msra.mxu0 %v3745
    %5166 = vmatprep.subr.bf16.mxu0 %v3750
    %5167 = vmatpush1.bf16.msra.mxu0 %v3749
    %5168 = vmatprep.subr.bf16.mxu0 %v3754
    %5169 = vmatpush1.bf16.msra.mxu0 %v3753
    %5170 = vmatprep.subr.bf16.mxu0 %v3758
    %5171 = vmatpush1.bf16.msra.mxu0 %v3757
    %5172 = vmatprep.subr.bf16.mxu0 %v3762
    %5173 = vmatpush1.bf16.msra.mxu0 %v3761
    %5174 = vmatprep.subr.bf16.mxu0 %v3766
    %5175 = vmatpush1.bf16.msra.mxu0 %v3765
    %5176 = vmatprep.subr.bf16.mxu0 %v3770
    %5177 = vmatpush1.bf16.msra.mxu0 %v3769
    %5178 = vmatprep.subr.bf16.mxu0 %v3774
    %5179 = vmatpush1.bf16.msra.mxu0 %v3773
    %5180 = vmatprep.subr.bf16.mxu0 %v3778
    %5181 = vmatpush1.bf16.msra.mxu0 %v3777
    %5182 = vmatprep.subr.bf16.mxu0 %v3782
    %5183 = vmatpush1.bf16.msra.mxu0 %v3781
    %5184 = vmatprep.subr.bf16.mxu0 %v3786
    %5185 = vmatpush1.bf16.msra.mxu0 %v3785
    %5186 = vmatprep.subr.bf16.mxu0 %v3790
    %5187 = vmatpush1.bf16.msra.mxu0 %v3789
    %5188 = vmatprep.subr.bf16.mxu0 %v3794
    %5189 = vmatpush1.bf16.msra.mxu0 %v3793
    %5190 = vmatprep.subr.bf16.mxu0 %v3798
    %5191 = vmatpush1.bf16.msra.mxu0 %v3797
    %5192 = vmatprep.subr.bf16.mxu0 %v3802
    %5193 = vmatpush1.bf16.msra.mxu0 %v3801
    %5194 = vmatprep.mubr.bf16.mxu0 %v1082
    %5195 = vmatmul.mubr.bf16.gmra.mrb[0].mxu0 %v1081
    %v5196 = vpop.f32.mrb[0].mxu0
    %v5197 = vadd.f32 %v5156, %v5196
    %v5198 = vpop.f32.mrb[0].mxu0
    %v5199 = vadd.f32 %v5158, %v5198
    %v5200 = vpop.f32.mrb[0].mxu0
    %v5201 = vpop.f32.mrb[0].mxu0
    %5202 = vdwg.mxu0
    %5203 = vmatprep.subr.bf16.mxu0 %v3806
    %5204 = vmatpush1.bf16.msra.mxu0 %v3805
    %5205 = vmatprep.subr.bf16.mxu0 %v3810
    %5206 = vmatpush1.bf16.msra.mxu0 %v3809
    %5207 = vmatprep.subr.bf16.mxu0 %v3814
    %5208 = vmatpush1.bf16.msra.mxu0 %v3813
    %5209 = vmatprep.subr.bf16.mxu0 %v3818
    %5210 = vmatpush1.bf16.msra.mxu0 %v3817
    %5211 = vmatprep.subr.bf16.mxu0 %v3822
    %5212 = vmatpush1.bf16.msra.mxu0 %v3821
    %5213 = vmatprep.subr.bf16.mxu0 %v3826
    %5214 = vmatpush1.bf16.msra.mxu0 %v3825
    %5215 = vmatprep.subr.bf16.mxu0 %v3830
    %5216 = vmatpush1.bf16.msra.mxu0 %v3829
    %5217 = vmatprep.subr.bf16.mxu0 %v3834
    %5218 = vmatpush1.bf16.msra.mxu0 %v3833
    %5219 = vmatprep.subr.bf16.mxu0 %v3838
    %5220 = vmatpush1.bf16.msra.mxu0 %v3837
    %5221 = vmatprep.subr.bf16.mxu0 %v3842
    %5222 = vmatpush1.bf16.msra.mxu0 %v3841
    %5223 = vmatprep.subr.bf16.mxu0 %v3846
    %5224 = vmatpush1.bf16.msra.mxu0 %v3845
    %5225 = vmatprep.subr.bf16.mxu0 %v3850
    %5226 = vmatpush1.bf16.msra.mxu0 %v3849
    %5227 = vmatprep.subr.bf16.mxu0 %v3854
    %5228 = vmatpush1.bf16.msra.mxu0 %v3853
    %5229 = vmatprep.subr.bf16.mxu0 %v3858
    %5230 = vmatpush1.bf16.msra.mxu0 %v3857
    %5231 = vmatprep.subr.bf16.mxu0 %v3862
    %5232 = vmatpush1.bf16.msra.mxu0 %v3861
    %5233 = vmatprep.subr.bf16.mxu0 %v3866
    %5234 = vmatpush1.bf16.msra.mxu0 %v3865
    %5235 = vmatprep.mubr.bf16.mxu0 %v1084
    %5236 = vmatmul.mubr.bf16.gmra.mrb[0].mxu0 %v1083
    %v5237 = vpop.f32.mrb[0].mxu0
    %v5238 = vadd.f32 %v5197, %v5237
    %v5239 = vpop.f32.mrb[0].mxu0
    %v5240 = vadd.f32 %v5199, %v5239
    %v5241 = vpop.f32.mrb[0].mxu0
    %v5242 = vpop.f32.mrb[0].mxu0
    %5243 = vdwg.mxu0
    %5244 = vmatprep.subr.bf16.mxu0 %v3870
    %5245 = vmatpush1.bf16.msra.mxu0 %v3869
    %5246 = vmatprep.subr.bf16.mxu0 %v3874
    %5247 = vmatpush1.bf16.msra.mxu0 %v3873
    %5248 = vmatprep.subr.bf16.mxu0 %v3878
    %5249 = vmatpush1.bf16.msra.mxu0 %v3877
    %5250 = vmatprep.subr.bf16.mxu0 %v3882
    %5251 = vmatpush1.bf16.msra.mxu0 %v3881
    %5252 = vmatprep.subr.bf16.mxu0 %v3886
    %5253 = vmatpush1.bf16.msra.mxu0 %v3885
    %5254 = vmatprep.subr.bf16.mxu0 %v3890
    %5255 = vmatpush1.bf16.msra.mxu0 %v3889
    %5256 = vmatprep.subr.bf16.mxu0 %v3894
    %5257 = vmatpush1.bf16.msra.mxu0 %v3893
    %5258 = vmatprep.subr.bf16.mxu0 %v3898
    %5259 = vmatpush1.bf16.msra.mxu0 %v3897
    %5260 = vmatprep.subr.bf16.mxu0 %v3902
    %5261 = vmatpush1.bf16.msra.mxu0 %v3901
    %5262 = vmatprep.subr.bf16.mxu0 %v3906
    %5263 = vmatpush1.bf16.msra.mxu0 %v3905
    %5264 = vmatprep.subr.bf16.mxu0 %v3910
    %5265 = vmatpush1.bf16.msra.mxu0 %v3909
    %5266 = vmatprep.subr.bf16.mxu0 %v3914
    %5267 = vmatpush1.bf16.msra.mxu0 %v3913
    %5268 = vmatprep.subr.bf16.mxu0 %v3918
    %5269 = vmatpush1.bf16.msra.mxu0 %v3917
    %5270 = vmatprep.subr.bf16.mxu0 %v3922
    %5271 = vmatpush1.bf16.msra.mxu0 %v3921
    %5272 = vmatprep.subr.bf16.mxu0 %v3926
    %5273 = vmatpush1.bf16.msra.mxu0 %v3925
    %5274 = vmatprep.subr.bf16.mxu0 %v3930
    %5275 = vmatpush1.bf16.msra.mxu0 %v3929
    %5276 = vmatprep.mubr.bf16.mxu0 %v1086
    %5277 = vmatmul.mubr.bf16.gmra.mrb[0].mxu0 %v1085
    %v5278 = vpop.f32.mrb[0].mxu0
    %v5279 = vadd.f32 %v5238, %v5278
    %v5280 = vpop.f32.mrb[0].mxu0
    %v5281 = vadd.f32 %v5240, %v5280
    %v5282 = vpop.f32.mrb[0].mxu0
    %v5283 = vpop.f32.mrb[0].mxu0
    %5284 = vdwg.mxu0
    %5285 = vmatprep.subr.bf16.mxu0 %v3934
    %5286 = vmatpush1.bf16.msra.mxu0 %v3933
    %5287 = vmatprep.subr.bf16.mxu0 %v3938
    %5288 = vmatpush1.bf16.msra.mxu0 %v3937
    %5289 = vmatprep.subr.bf16.mxu0 %v3942
    %5290 = vmatpush1.bf16.msra.mxu0 %v3941
    %5291 = vmatprep.subr.bf16.mxu0 %v3946
    %5292 = vmatpush1.bf16.msra.mxu0 %v3945
    %5293 = vmatprep.subr.bf16.mxu0 %v3950
    %5294 = vmatpush1.bf16.msra.mxu0 %v3949
    %5295 = vmatprep.subr.bf16.mxu0 %v3954
    %5296 = vmatpush1.bf16.msra.mxu0 %v3953
    %5297 = vmatprep.subr.bf16.mxu0 %v3958
    %5298 = vmatpush1.bf16.msra.mxu0 %v3957
    %5299 = vmatprep.subr.bf16.mxu0 %v3962
    %5300 = vmatpush1.bf16.msra.mxu0 %v3961
    %5301 = vmatprep.subr.bf16.mxu0 %v3966
    %5302 = vmatpush1.bf16.msra.mxu0 %v3965
    %5303 = vmatprep.subr.bf16.mxu0 %v3970
    %5304 = vmatpush1.bf16.msra.mxu0 %v3969
    %5305 = vmatprep.subr.bf16.mxu0 %v3974
    %5306 = vmatpush1.bf16.msra.mxu0 %v3973
    %5307 = vmatprep.subr.bf16.mxu0 %v3978
    %5308 = vmatpush1.bf16.msra.mxu0 %v3977
    %5309 = vmatprep.subr.bf16.mxu0 %v3982
    %5310 = vmatpush1.bf16.msra.mxu0 %v3981
    %5311 = vmatprep.subr.bf16.mxu0 %v3986
    %5312 = vmatpush1.bf16.msra.mxu0 %v3985
    %5313 = vmatprep.subr.bf16.mxu0 %v3990
    %5314 = vmatpush1.bf16.msra.mxu0 %v3989
    %5315 = vmatprep.subr.bf16.mxu0 %v3994
    %5316 = vmatpush1.bf16.msra.mxu0 %v3993
    %5317 = vmatprep.mubr.bf16.mxu0 %v1088
    %5318 = vmatmul.mubr.bf16.gmra.mrb[0].mxu0 %v1087
    %v5319 = vpop.f32.mrb[0].mxu0
    %v5320 = vadd.f32 %v5279, %v5319
    %v5321 = vpop.f32.mrb[0].mxu0
    %v5322 = vadd.f32 %v5281, %v5321
    %v5323 = vpop.f32.mrb[0].mxu0
    %v5324 = vpop.f32.mrb[0].mxu0
    %5325 = vdwg.mxu0
    %5326 = vmatprep.subr.bf16.mxu0 %v3998
    %5327 = vmatpush1.bf16.msra.mxu0 %v3997
    %5328 = vmatprep.subr.bf16.mxu0 %v4002
    %5329 = vmatpush1.bf16.msra.mxu0 %v4001
    %5330 = vmatprep.subr.bf16.mxu0 %v4006
    %5331 = vmatpush1.bf16.msra.mxu0 %v4005
    %5332 = vmatprep.subr.bf16.mxu0 %v4010
    %5333 = vmatpush1.bf16.msra.mxu0 %v4009
    %5334 = vmatprep.subr.bf16.mxu0 %v4014
    %5335 = vmatpush1.bf16.msra.mxu0 %v4013
    %5336 = vmatprep.subr.bf16.mxu0 %v4018
    %5337 = vmatpush1.bf16.msra.mxu0 %v4017
    %5338 = vmatprep.subr.bf16.mxu0 %v4022
    %5339 = vmatpush1.bf16.msra.mxu0 %v4021
    %5340 = vmatprep.subr.bf16.mxu0 %v4026
    %5341 = vmatpush1.bf16.msra.mxu0 %v4025
    %5342 = vmatprep.subr.bf16.mxu0 %v4030
    %5343 = vmatpush1.bf16.msra.mxu0 %v4029
    %5344 = vmatprep.subr.bf16.mxu0 %v4034
    %5345 = vmatpush1.bf16.msra.mxu0 %v4033
    %5346 = vmatprep.subr.bf16.mxu0 %v4038
    %5347 = vmatpush1.bf16.msra.mxu0 %v4037
    %5348 = vmatprep.subr.bf16.mxu0 %v4042
    %5349 = vmatpush1.bf16.msra.mxu0 %v4041
    %5350 = vmatprep.subr.bf16.mxu0 %v4046
    %5351 = vmatpush1.bf16.msra.mxu0 %v4045
    %5352 = vmatprep.subr.bf16.mxu0 %v4050
    %5353 = vmatpush1.bf16.msra.mxu0 %v4049
    %5354 = vmatprep.subr.bf16.mxu0 %v4054
    %5355 = vmatpush1.bf16.msra.mxu0 %v4053
    %5356 = vmatprep.subr.bf16.mxu0 %v4058
    %5357 = vmatpush1.bf16.msra.mxu0 %v4057
    %5358 = vmatprep.mubr.bf16.mxu0 %v1090
    %5359 = vmatmul.mubr.bf16.gmra.mrb[0].mxu0 %v1089
    %v5360 = vpop.f32.mrb[0].mxu0
    %v5361 = vadd.f32 %v5320, %v5360
    %v5362 = vpop.f32.mrb[0].mxu0
    %v5363 = vadd.f32 %v5322, %v5362
    %v5364 = vpop.f32.mrb[0].mxu0
    %v5365 = vpop.f32.mrb[0].mxu0
    %5366 = vdwg.mxu0
    %5367 = vmatprep.subr.bf16.mxu0 %v4062
    %5368 = vmatpush1.bf16.msra.mxu0 %v4061
    %5369 = vmatprep.subr.bf16.mxu0 %v4066
    %5370 = vmatpush1.bf16.msra.mxu0 %v4065
    %5371 = vmatprep.subr.bf16.mxu0 %v4070
    %5372 = vmatpush1.bf16.msra.mxu0 %v4069
    %5373 = vmatprep.subr.bf16.mxu0 %v4074
    %5374 = vmatpush1.bf16.msra.mxu0 %v4073
    %5375 = vmatprep.subr.bf16.mxu0 %v4078
    %5376 = vmatpush1.bf16.msra.mxu0 %v4077
    %5377 = vmatprep.subr.bf16.mxu0 %v4082
    %5378 = vmatpush1.bf16.msra.mxu0 %v4081
    %5379 = vmatprep.subr.bf16.mxu0 %v4086
    %5380 = vmatpush1.bf16.msra.mxu0 %v4085
    %5381 = vmatprep.subr.bf16.mxu0 %v4090
    %5382 = vmatpush1.bf16.msra.mxu0 %v4089
    %5383 = vmatprep.subr.bf16.mxu0 %v4094
    %5384 = vmatpush1.bf16.msra.mxu0 %v4093
    %5385 = vmatprep.subr.bf16.mxu0 %v4098
    %5386 = vmatpush1.bf16.msra.mxu0 %v4097
    %5387 = vmatprep.subr.bf16.mxu0 %v4102
    %5388 = vmatpush1.bf16.msra.mxu0 %v4101
    %5389 = vmatprep.subr.bf16.mxu0 %v4106
    %5390 = vmatpush1.bf16.msra.mxu0 %v4105
    %5391 = vmatprep.subr.bf16.mxu0 %v4110
    %5392 = vmatpush1.bf16.msra.mxu0 %v4109
    %5393 = vmatprep.subr.bf16.mxu0 %v4114
    %5394 = vmatpush1.bf16.msra.mxu0 %v4113
    %5395 = vmatprep.subr.bf16.mxu0 %v4118
    %5396 = vmatpush1.bf16.msra.mxu0 %v4117
    %5397 = vmatprep.subr.bf16.mxu0 %v4122
    %5398 = vmatpush1.bf16.msra.mxu0 %v4121
    %5399 = vmatprep.mubr.bf16.mxu0 %v1092
    %5400 = vmatmul.mubr.bf16.gmra.mrb[0].mxu0 %v1091
    %v5401 = vpop.f32.mrb[0].mxu0
    %v5402 = vadd.f32 %v5361, %v5401
    %v5403 = vpop.f32.mrb[0].mxu0
    %v5404 = vadd.f32 %v5363, %v5403
    %v5405 = vpop.f32.mrb[0].mxu0
    %v5406 = vpop.f32.mrb[0].mxu0
    %5407 = vdwg.mxu0
    %5408 = vmatprep.subr.bf16.mxu0 %v4126
    %5409 = vmatpush1.bf16.msra.mxu0 %v4125
    %5410 = vmatprep.subr.bf16.mxu0 %v4130
    %5411 = vmatpush1.bf16.msra.mxu0 %v4129
    %5412 = vmatprep.subr.bf16.mxu0 %v4134
    %5413 = vmatpush1.bf16.msra.mxu0 %v4133
    %5414 = vmatprep.subr.bf16.mxu0 %v4138
    %5415 = vmatpush1.bf16.msra.mxu0 %v4137
    %5416 = vmatprep.subr.bf16.mxu0 %v4142
    %5417 = vmatpush1.bf16.msra.mxu0 %v4141
    %5418 = vmatprep.subr.bf16.mxu0 %v4146
    %5419 = vmatpush1.bf16.msra.mxu0 %v4145
    %5420 = vmatprep.subr.bf16.mxu0 %v4150
    %5421 = vmatpush1.bf16.msra.mxu0 %v4149
    %5422 = vmatprep.subr.bf16.mxu0 %v4154
    %5423 = vmatpush1.bf16.msra.mxu0 %v4153
    %5424 = vmatprep.subr.bf16.mxu0 %v4158
    %5425 = vmatpush1.bf16.msra.mxu0 %v4157
    %5426 = vmatprep.subr.bf16.mxu0 %v4162
    %5427 = vmatpush1.bf16.msra.mxu0 %v4161
    %5428 = vmatprep.subr.bf16.mxu0 %v4166
    %5429 = vmatpush1.bf16.msra.mxu0 %v4165
    %5430 = vmatprep.subr.bf16.mxu0 %v4170
    %5431 = vmatpush1.bf16.msra.mxu0 %v4169
    %5432 = vmatprep.subr.bf16.mxu0 %v4174
    %5433 = vmatpush1.bf16.msra.mxu0 %v4173
    %5434 = vmatprep.subr.bf16.mxu0 %v4178
    %5435 = vmatpush1.bf16.msra.mxu0 %v4177
    %5436 = vmatprep.subr.bf16.mxu0 %v4182
    %5437 = vmatpush1.bf16.msra.mxu0 %v4181
    %5438 = vmatprep.subr.bf16.mxu0 %v4186
    %5439 = vmatpush1.bf16.msra.mxu0 %v4185
    %5440 = vmatprep.mubr.bf16.mxu0 %v1094
    %5441 = vmatmul.mubr.bf16.gmra.mrb[0].mxu0 %v1093
    %v5442 = vpop.f32.mrb[0].mxu0
    %v5443 = vadd.f32 %v5402, %v5442
    %v5444 = vpop.f32.mrb[0].mxu0
    %v5445 = vadd.f32 %v5404, %v5444
    %v5446 = vpop.f32.mrb[0].mxu0
    %v5447 = vpop.f32.mrb[0].mxu0
    %5448 = vdwg.mxu0
    %5449 = vmatprep.subr.bf16.mxu0 %v3424
    %5450 = vmatpush1.bf16.msra.mxu0 %v3423
    %5451 = vmatprep.subr.bf16.mxu0 %v3428
    %5452 = vmatpush1.bf16.msra.mxu0 %v3427
    %5453 = vmatprep.subr.bf16.mxu0 %v3432
    %5454 = vmatpush1.bf16.msra.mxu0 %v3431
    %5455 = vmatprep.subr.bf16.mxu0 %v3436
    %5456 = vmatpush1.bf16.msra.mxu0 %v3435
    %5457 = vmatprep.subr.bf16.mxu0 %v3440
    %5458 = vmatpush1.bf16.msra.mxu0 %v3439
    %5459 = vmatprep.subr.bf16.mxu0 %v3444
    %5460 = vmatpush1.bf16.msra.mxu0 %v3443
    %5461 = vmatprep.subr.bf16.mxu0 %v3448
    %5462 = vmatpush1.bf16.msra.mxu0 %v3447
    %5463 = vmatprep.subr.bf16.mxu0 %v3452
    %5464 = vmatpush1.bf16.msra.mxu0 %v3451
    %5465 = vmatprep.subr.bf16.mxu0 %v3456
    %5466 = vmatpush1.bf16.msra.mxu0 %v3455
    %5467 = vmatprep.subr.bf16.mxu0 %v3460
    %5468 = vmatpush1.bf16.msra.mxu0 %v3459
    %5469 = vmatprep.subr.bf16.mxu0 %v3464
    %5470 = vmatpush1.bf16.msra.mxu0 %v3463
    %5471 = vmatprep.subr.bf16.mxu0 %v3468
    %5472 = vmatpush1.bf16.msra.mxu0 %v3467
    %5473 = vmatprep.subr.bf16.mxu0 %v3472
    %5474 = vmatpush1.bf16.msra.mxu0 %v3471
    %5475 = vmatprep.subr.bf16.mxu0 %v3476
    %5476 = vmatpush1.bf16.msra.mxu0 %v3475
    %5477 = vmatprep.subr.bf16.mxu0 %v3480
    %5478 = vmatpush1.bf16.msra.mxu0 %v3479
    %5479 = vmatprep.subr.bf16.mxu0 %v3484
    %5480 = vmatpush1.bf16.msra.mxu0 %v3483
    %5481 = vmatprep.mubr.bf16.mxu0 %v1072
    %5482 = vmatmul.mubr.bf16.gmra.mrb[0].mxu0 %v1071
    %v5483 = vpop.f32.mrb[0].mxu0
    %v5484 = vadd.f32 %v1108, %v5483
    %v5485 = vpop.f32.mrb[0].mxu0
    %v5486 = vadd.f32 %v1112, %v5485
    %v5487 = vpop.f32.mrb[0].mxu0
    %v5488 = vpop.f32.mrb[0].mxu0
    %5489 = vdwg.mxu0
    %5490 = vmatprep.subr.bf16.mxu0 %v3488
    %5491 = vmatpush1.bf16.msra.mxu0 %v3487
    %5492 = vmatprep.subr.bf16.mxu0 %v3492
    %5493 = vmatpush1.bf16.msra.mxu0 %v3491
    %5494 = vmatprep.subr.bf16.mxu0 %v3496
    %5495 = vmatpush1.bf16.msra.mxu0 %v3495
    %5496 = vmatprep.subr.bf16.mxu0 %v3500
    %5497 = vmatpush1.bf16.msra.mxu0 %v3499
    %5498 = vmatprep.subr.bf16.mxu0 %v3504
    %5499 = vmatpush1.bf16.msra.mxu0 %v3503
    %5500 = vmatprep.subr.bf16.mxu0 %v3508
    %5501 = vmatpush1.bf16.msra.mxu0 %v3507
    %5502 = vmatprep.subr.bf16.mxu0 %v3512
    %5503 = vmatpush1.bf16.msra.mxu0 %v3511
    %5504 = vmatprep.subr.bf16.mxu0 %v3516
    %5505 = vmatpush1.bf16.msra.mxu0 %v3515
    %5506 = vmatprep.subr.bf16.mxu0 %v3520
    %5507 = vmatpush1.bf16.msra.mxu0 %v3519
    %5508 = vmatprep.subr.bf16.mxu0 %v3524
    %5509 = vmatpush1.bf16.msra.mxu0 %v3523
    %5510 = vmatprep.subr.bf16.mxu0 %v3528
    %5511 = vmatpush1.bf16.msra.mxu0 %v3527
    %5512 = vmatprep.subr.bf16.mxu0 %v3532
    %5513 = vmatpush1.bf16.msra.mxu0 %v3531
    %5514 = vmatprep.subr.bf16.mxu0 %v3536
    %5515 = vmatpush1.bf16.msra.mxu0 %v3535
    %5516 = vmatprep.subr.bf16.mxu0 %v3540
    %5517 = vmatpush1.bf16.msra.mxu0 %v3539
    %5518 = vmatprep.subr.bf16.mxu0 %v3544
    %5519 = vmatpush1.bf16.msra.mxu0 %v3543
    %5520 = vmatprep.subr.bf16.mxu0 %v3548
    %5521 = vmatpush1.bf16.msra.mxu0 %v3547
    %5522 = vmatprep.mubr.bf16.mxu0 %v1074
    %5523 = vmatmul.mubr.bf16.gmra.mrb[0].mxu0 %v1073
    %v5524 = vpop.f32.mrb[0].mxu0
    %v5525 = vadd.f32 %v5484, %v5524
    %v5526 = vpop.f32.mrb[0].mxu0
    %v5527 = vadd.f32 %v5486, %v5526
    %v5528 = vpop.f32.mrb[0].mxu0
    %v5529 = vpop.f32.mrb[0].mxu0
    %5530 = vdwg.mxu0
    %5531 = vmatprep.subr.bf16.mxu0 %v3552
    %5532 = vmatpush1.bf16.msra.mxu0 %v3551
    %5533 = vmatprep.subr.bf16.mxu0 %v3556
    %5534 = vmatpush1.bf16.msra.mxu0 %v3555
    %5535 = vmatprep.subr.bf16.mxu0 %v3560
    %5536 = vmatpush1.bf16.msra.mxu0 %v3559
    %5537 = vmatprep.subr.bf16.mxu0 %v3564
    %5538 = vmatpush1.bf16.msra.mxu0 %v3563
    %5539 = vmatprep.subr.bf16.mxu0 %v3568
    %5540 = vmatpush1.bf16.msra.mxu0 %v3567
    %5541 = vmatprep.subr.bf16.mxu0 %v3572
    %5542 = vmatpush1.bf16.msra.mxu0 %v3571
    %5543 = vmatprep.subr.bf16.mxu0 %v3576
    %5544 = vmatpush1.bf16.msra.mxu0 %v3575
    %5545 = vmatprep.subr.bf16.mxu0 %v3580
    %5546 = vmatpush1.bf16.msra.mxu0 %v3579
    %5547 = vmatprep.subr.bf16.mxu0 %v3584
    %5548 = vmatpush1.bf16.msra.mxu0 %v3583
    %5549 = vmatprep.subr.bf16.mxu0 %v3588
    %5550 = vmatpush1.bf16.msra.mxu0 %v3587
    %5551 = vmatprep.subr.bf16.mxu0 %v3592
    %5552 = vmatpush1.bf16.msra.mxu0 %v3591
    %5553 = vmatprep.subr.bf16.mxu0 %v3596
    %5554 = vmatpush1.bf16.msra.mxu0 %v3595
    %5555 = vmatprep.subr.bf16.mxu0 %v3600
    %5556 = vmatpush1.bf16.msra.mxu0 %v3599
    %5557 = vmatprep.subr.bf16.mxu0 %v3604
    %5558 = vmatpush1.bf16.msra.mxu0 %v3603
    %5559 = vmatprep.subr.bf16.mxu0 %v3608
    %5560 = vmatpush1.bf16.msra.mxu0 %v3607
    %5561 = vmatprep.subr.bf16.mxu0 %v3612
    %5562 = vmatpush1.bf16.msra.mxu0 %v3611
    %5563 = vmatprep.mubr.bf16.mxu0 %v1076
    %5564 = vmatmul.mubr.bf16.gmra.mrb[0].mxu0 %v1075
    %v5565 = vpop.f32.mrb[0].mxu0
    %v5566 = vadd.f32 %v5525, %v5565
    %v5567 = vpop.f32.mrb[0].mxu0
    %v5568 = vadd.f32 %v5527, %v5567
    %v5569 = vpop.f32.mrb[0].mxu0
    %v5570 = vpop.f32.mrb[0].mxu0
    %5571 = vdwg.mxu0
    %5572 = vmatprep.subr.bf16.mxu0 %v3616
    %5573 = vmatpush1.bf16.msra.mxu0 %v3615
    %5574 = vmatprep.subr.bf16.mxu0 %v3620
    %5575 = vmatpush1.bf16.msra.mxu0 %v3619
    %5576 = vmatprep.subr.bf16.mxu0 %v3624
    %5577 = vmatpush1.bf16.msra.mxu0 %v3623
    %5578 = vmatprep.subr.bf16.mxu0 %v3628
    %5579 = vmatpush1.bf16.msra.mxu0 %v3627
    %5580 = vmatprep.subr.bf16.mxu0 %v3632
    %5581 = vmatpush1.bf16.msra.mxu0 %v3631
    %5582 = vmatprep.subr.bf16.mxu0 %v3636
    %5583 = vmatpush1.bf16.msra.mxu0 %v3635
    %5584 = vmatprep.subr.bf16.mxu0 %v3640
    %5585 = vmatpush1.bf16.msra.mxu0 %v3639
    %5586 = vmatprep.subr.bf16.mxu0 %v3644
    %5587 = vmatpush1.bf16.msra.mxu0 %v3643
    %5588 = vmatprep.subr.bf16.mxu0 %v3648
    %5589 = vmatpush1.bf16.msra.mxu0 %v3647
    %5590 = vmatprep.subr.bf16.mxu0 %v3652
    %5591 = vmatpush1.bf16.msra.mxu0 %v3651
    %5592 = vmatprep.subr.bf16.mxu0 %v3656
    %5593 = vmatpush1.bf16.msra.mxu0 %v3655
    %5594 = vmatprep.subr.bf16.mxu0 %v3660
    %5595 = vmatpush1.bf16.msra.mxu0 %v3659
    %5596 = vmatprep.subr.bf16.mxu0 %v3664
    %5597 = vmatpush1.bf16.msra.mxu0 %v3663
    %5598 = vmatprep.subr.bf16.mxu0 %v3668
    %5599 = vmatpush1.bf16.msra.mxu0 %v3667
    %5600 = vmatprep.subr.bf16.mxu0 %v3672
    %5601 = vmatpush1.bf16.msra.mxu0 %v3671
    %5602 = vmatprep.subr.bf16.mxu0 %v3676
    %5603 = vmatpush1.bf16.msra.mxu0 %v3675
    %5604 = vmatprep.mubr.bf16.mxu0 %v1078
    %5605 = vmatmul.mubr.bf16.gmra.mrb[0].mxu0 %v1077
    %v5606 = vpop.f32.mrb[0].mxu0
    %v5607 = vadd.f32 %v5566, %v5606
    %v5608 = vpop.f32.mrb[0].mxu0
    %v5609 = vadd.f32 %v5568, %v5608
    %v5610 = vpop.f32.mrb[0].mxu0
    %v5611 = vpop.f32.mrb[0].mxu0
    %5612 = vdwg.mxu0
    %5613 = vmatprep.subr.bf16.mxu0 %v3680
    %5614 = vmatpush1.bf16.msra.mxu0 %v3679
    %5615 = vmatprep.subr.bf16.mxu0 %v3684
    %5616 = vmatpush1.bf16.msra.mxu0 %v3683
    %5617 = vmatprep.subr.bf16.mxu0 %v3688
    %5618 = vmatpush1.bf16.msra.mxu0 %v3687
    %5619 = vmatprep.subr.bf16.mxu0 %v3692
    %5620 = vmatpush1.bf16.msra.mxu0 %v3691
    %5621 = vmatprep.subr.bf16.mxu0 %v3696
    %5622 = vmatpush1.bf16.msra.mxu0 %v3695
    %5623 = vmatprep.subr.bf16.mxu0 %v3700
    %5624 = vmatpush1.bf16.msra.mxu0 %v3699
    %5625 = vmatprep.subr.bf16.mxu0 %v3704
    %5626 = vmatpush1.bf16.msra.mxu0 %v3703
    %5627 = vmatprep.subr.bf16.mxu0 %v3708
    %5628 = vmatpush1.bf16.msra.mxu0 %v3707
    %5629 = vmatprep.subr.bf16.mxu0 %v3712
    %5630 = vmatpush1.bf16.msra.mxu0 %v3711
    %5631 = vmatprep.subr.bf16.mxu0 %v3716
    %5632 = vmatpush1.bf16.msra.mxu0 %v3715
    %5633 = vmatprep.subr.bf16.mxu0 %v3720
    %5634 = vmatpush1.bf16.msra.mxu0 %v3719
    %5635 = vmatprep.subr.bf16.mxu0 %v3724
    %5636 = vmatpush1.bf16.msra.mxu0 %v3723
    %5637 = vmatprep.subr.bf16.mxu0 %v3728
    %5638 = vmatpush1.bf16.msra.mxu0 %v3727
    %5639 = vmatprep.subr.bf16.mxu0 %v3732
    %5640 = vmatpush1.bf16.msra.mxu0 %v3731
    %5641 = vmatprep.subr.bf16.mxu0 %v3736
    %5642 = vmatpush1.bf16.msra.mxu0 %v3735
    %5643 = vmatprep.subr.bf16.mxu0 %v3740
    %5644 = vmatpush1.bf16.msra.mxu0 %v3739
    %5645 = vmatprep.mubr.bf16.mxu0 %v1080
    %5646 = vmatmul.mubr.bf16.gmra.mrb[0].mxu0 %v1079
    %v5647 = vpop.f32.mrb[0].mxu0
    %v5648 = vadd.f32 %v5607, %v5647
    %v5649 = vpop.f32.mrb[0].mxu0
    %v5650 = vadd.f32 %v5609, %v5649
    %v5651 = vpop.f32.mrb[0].mxu0
    %v5652 = vpop.f32.mrb[0].mxu0
    %5653 = vdwg.mxu0
    %5654 = vmatprep.subr.bf16.mxu0 %v3744
    %5655 = vmatpush1.bf16.msra.mxu0 %v3743
    %5656 = vmatprep.subr.bf16.mxu0 %v3748
    %5657 = vmatpush1.bf16.msra.mxu0 %v3747
    %5658 = vmatprep.subr.bf16.mxu0 %v3752
    %5659 = vmatpush1.bf16.msra.mxu0 %v3751
    %5660 = vmatprep.subr.bf16.mxu0 %v3756
    %5661 = vmatpush1.bf16.msra.mxu0 %v3755
    %5662 = vmatprep.subr.bf16.mxu0 %v3760
    %5663 = vmatpush1.bf16.msra.mxu0 %v3759
    %5664 = vmatprep.subr.bf16.mxu0 %v3764
    %5665 = vmatpush1.bf16.msra.mxu0 %v3763
    %5666 = vmatprep.subr.bf16.mxu0 %v3768
    %5667 = vmatpush1.bf16.msra.mxu0 %v3767
    %5668 = vmatprep.subr.bf16.mxu0 %v3772
    %5669 = vmatpush1.bf16.msra.mxu0 %v3771
    %5670 = vmatprep.subr.bf16.mxu0 %v3776
    %5671 = vmatpush1.bf16.msra.mxu0 %v3775
    %5672 = vmatprep.subr.bf16.mxu0 %v3780
    %5673 = vmatpush1.bf16.msra.mxu0 %v3779
    %5674 = vmatprep.subr.bf16.mxu0 %v3784
    %5675 = vmatpush1.bf16.msra.mxu0 %v3783
    %5676 = vmatprep.subr.bf16.mxu0 %v3788
    %5677 = vmatpush1.bf16.msra.mxu0 %v3787
    %5678 = vmatprep.subr.bf16.mxu0 %v3792
    %5679 = vmatpush1.bf16.msra.mxu0 %v3791
    %5680 = vmatprep.subr.bf16.mxu0 %v3796
    %5681 = vmatpush1.bf16.msra.mxu0 %v3795
    %5682 = vmatprep.subr.bf16.mxu0 %v3800
    %5683 = vmatpush1.bf16.msra.mxu0 %v3799
    %5684 = vmatprep.subr.bf16.mxu0 %v3804
    %5685 = vmatpush1.bf16.msra.mxu0 %v3803
    %5686 = vmatprep.mubr.bf16.mxu0 %v1082
    %5687 = vmatmul.mubr.bf16.gmra.mrb[0].mxu0 %v1081
    %v5688 = vpop.f32.mrb[0].mxu0
    %v5689 = vadd.f32 %v5648, %v5688
    %v5690 = vpop.f32.mrb[0].mxu0
    %v5691 = vadd.f32 %v5650, %v5690
    %v5692 = vpop.f32.mrb[0].mxu0
    %v5693 = vpop.f32.mrb[0].mxu0
    %5694 = vdwg.mxu0
    %5695 = vmatprep.subr.bf16.mxu0 %v3808
    %5696 = vmatpush1.bf16.msra.mxu0 %v3807
    %5697 = vmatprep.subr.bf16.mxu0 %v3812
    %5698 = vmatpush1.bf16.msra.mxu0 %v3811
    %5699 = vmatprep.subr.bf16.mxu0 %v3816
    %5700 = vmatpush1.bf16.msra.mxu0 %v3815
    %5701 = vmatprep.subr.bf16.mxu0 %v3820
    %5702 = vmatpush1.bf16.msra.mxu0 %v3819
    %5703 = vmatprep.subr.bf16.mxu0 %v3824
    %5704 = vmatpush1.bf16.msra.mxu0 %v3823
    %5705 = vmatprep.subr.bf16.mxu0 %v3828
    %5706 = vmatpush1.bf16.msra.mxu0 %v3827
    %5707 = vmatprep.subr.bf16.mxu0 %v3832
    %5708 = vmatpush1.bf16.msra.mxu0 %v3831
    %5709 = vmatprep.subr.bf16.mxu0 %v3836
    %5710 = vmatpush1.bf16.msra.mxu0 %v3835
    %5711 = vmatprep.subr.bf16.mxu0 %v3840
    %5712 = vmatpush1.bf16.msra.mxu0 %v3839
    %5713 = vmatprep.subr.bf16.mxu0 %v3844
    %5714 = vmatpush1.bf16.msra.mxu0 %v3843
    %5715 = vmatprep.subr.bf16.mxu0 %v3848
    %5716 = vmatpush1.bf16.msra.mxu0 %v3847
    %5717 = vmatprep.subr.bf16.mxu0 %v3852
    %5718 = vmatpush1.bf16.msra.mxu0 %v3851
    %5719 = vmatprep.subr.bf16.mxu0 %v3856
    %5720 = vmatpush1.bf16.msra.mxu0 %v3855
    %5721 = vmatprep.subr.bf16.mxu0 %v3860
    %5722 = vmatpush1.bf16.msra.mxu0 %v3859
    %5723 = vmatprep.subr.bf16.mxu0 %v3864
    %5724 = vmatpush1.bf16.msra.mxu0 %v3863
    %5725 = vmatprep.subr.bf16.mxu0 %v3868
    %5726 = vmatpush1.bf16.msra.mxu0 %v3867
    %5727 = vmatprep.mubr.bf16.mxu0 %v1084
    %5728 = vmatmul.mubr.bf16.gmra.mrb[0].mxu0 %v1083
    %v5729 = vpop.f32.mrb[0].mxu0
    %v5730 = vadd.f32 %v5689, %v5729
    %v5731 = vpop.f32.mrb[0].mxu0
    %v5732 = vadd.f32 %v5691, %v5731
    %v5733 = vpop.f32.mrb[0].mxu0
    %v5734 = vpop.f32.mrb[0].mxu0
    %5735 = vdwg.mxu0
    %5736 = vmatprep.subr.bf16.mxu0 %v3872
    %5737 = vmatpush1.bf16.msra.mxu0 %v3871
    %5738 = vmatprep.subr.bf16.mxu0 %v3876
    %5739 = vmatpush1.bf16.msra.mxu0 %v3875
    %5740 = vmatprep.subr.bf16.mxu0 %v3880
    %5741 = vmatpush1.bf16.msra.mxu0 %v3879
    %5742 = vmatprep.subr.bf16.mxu0 %v3884
    %5743 = vmatpush1.bf16.msra.mxu0 %v3883
    %5744 = vmatprep.subr.bf16.mxu0 %v3888
    %5745 = vmatpush1.bf16.msra.mxu0 %v3887
    %5746 = vmatprep.subr.bf16.mxu0 %v3892
    %5747 = vmatpush1.bf16.msra.mxu0 %v3891
    %5748 = vmatprep.subr.bf16.mxu0 %v3896
    %5749 = vmatpush1.bf16.msra.mxu0 %v3895
    %5750 = vmatprep.subr.bf16.mxu0 %v3900
    %5751 = vmatpush1.bf16.msra.mxu0 %v3899
    %5752 = vmatprep.subr.bf16.mxu0 %v3904
    %5753 = vmatpush1.bf16.msra.mxu0 %v3903
    %5754 = vmatprep.subr.bf16.mxu0 %v3908
    %5755 = vmatpush1.bf16.msra.mxu0 %v3907
    %5756 = vmatprep.subr.bf16.mxu0 %v3912
    %5757 = vmatpush1.bf16.msra.mxu0 %v3911
    %5758 = vmatprep.subr.bf16.mxu0 %v3916
    %5759 = vmatpush1.bf16.msra.mxu0 %v3915
    %5760 = vmatprep.subr.bf16.mxu0 %v3920
    %5761 = vmatpush1.bf16.msra.mxu0 %v3919
    %5762 = vmatprep.subr.bf16.mxu0 %v3924
    %5763 = vmatpush1.bf16.msra.mxu0 %v3923
    %5764 = vmatprep.subr.bf16.mxu0 %v3928
    %5765 = vmatpush1.bf16.msra.mxu0 %v3927
    %5766 = vmatprep.subr.bf16.mxu0 %v3932
    %5767 = vmatpush1.bf16.msra.mxu0 %v3931
    %5768 = vmatprep.mubr.bf16.mxu0 %v1086
    %5769 = vmatmul.mubr.bf16.gmra.mrb[0].mxu0 %v1085
    %v5770 = vpop.f32.mrb[0].mxu0
    %v5771 = vadd.f32 %v5730, %v5770
    %v5772 = vpop.f32.mrb[0].mxu0
    %v5773 = vadd.f32 %v5732, %v5772
    %v5774 = vpop.f32.mrb[0].mxu0
    %v5775 = vpop.f32.mrb[0].mxu0
    %5776 = vdwg.mxu0
    %5777 = vmatprep.subr.bf16.mxu0 %v3936
    %5778 = vmatpush1.bf16.msra.mxu0 %v3935
    %5779 = vmatprep.subr.bf16.mxu0 %v3940
    %5780 = vmatpush1.bf16.msra.mxu0 %v3939
    %5781 = vmatprep.subr.bf16.mxu0 %v3944
    %5782 = vmatpush1.bf16.msra.mxu0 %v3943
    %5783 = vmatprep.subr.bf16.mxu0 %v3948
    %5784 = vmatpush1.bf16.msra.mxu0 %v3947
    %5785 = vmatprep.subr.bf16.mxu0 %v3952
    %5786 = vmatpush1.bf16.msra.mxu0 %v3951
    %5787 = vmatprep.subr.bf16.mxu0 %v3956
    %5788 = vmatpush1.bf16.msra.mxu0 %v3955
    %5789 = vmatprep.subr.bf16.mxu0 %v3960
    %5790 = vmatpush1.bf16.msra.mxu0 %v3959
    %5791 = vmatprep.subr.bf16.mxu0 %v3964
    %5792 = vmatpush1.bf16.msra.mxu0 %v3963
    %5793 = vmatprep.subr.bf16.mxu0 %v3968
    %5794 = vmatpush1.bf16.msra.mxu0 %v3967
    %5795 = vmatprep.subr.bf16.mxu0 %v3972
    %5796 = vmatpush1.bf16.msra.mxu0 %v3971
    %5797 = vmatprep.subr.bf16.mxu0 %v3976
    %5798 = vmatpush1.bf16.msra.mxu0 %v3975
    %5799 = vmatprep.subr.bf16.mxu0 %v3980
    %5800 = vmatpush1.bf16.msra.mxu0 %v3979
    %5801 = vmatprep.subr.bf16.mxu0 %v3984
    %5802 = vmatpush1.bf16.msra.mxu0 %v3983
    %5803 = vmatprep.subr.bf16.mxu0 %v3988
    %5804 = vmatpush1.bf16.msra.mxu0 %v3987
    %5805 = vmatprep.subr.bf16.mxu0 %v3992
    %5806 = vmatpush1.bf16.msra.mxu0 %v3991
    %5807 = vmatprep.subr.bf16.mxu0 %v3996
    %5808 = vmatpush1.bf16.msra.mxu0 %v3995
    %5809 = vmatprep.mubr.bf16.mxu0 %v1088
    %5810 = vmatmul.mubr.bf16.gmra.mrb[0].mxu0 %v1087
    %v5811 = vpop.f32.mrb[0].mxu0
    %v5812 = vadd.f32 %v5771, %v5811
    %v5813 = vpop.f32.mrb[0].mxu0
    %v5814 = vadd.f32 %v5773, %v5813
    %v5815 = vpop.f32.mrb[0].mxu0
    %v5816 = vpop.f32.mrb[0].mxu0
    %5817 = vdwg.mxu0
    %5818 = vmatprep.subr.bf16.mxu0 %v4000
    %5819 = vmatpush1.bf16.msra.mxu0 %v3999
    %5820 = vmatprep.subr.bf16.mxu0 %v4004
    %5821 = vmatpush1.bf16.msra.mxu0 %v4003
    %5822 = vmatprep.subr.bf16.mxu0 %v4008
    %5823 = vmatpush1.bf16.msra.mxu0 %v4007
    %5824 = vmatprep.subr.bf16.mxu0 %v4012
    %5825 = vmatpush1.bf16.msra.mxu0 %v4011
    %5826 = vmatprep.subr.bf16.mxu0 %v4016
    %5827 = vmatpush1.bf16.msra.mxu0 %v4015
    %5828 = vmatprep.subr.bf16.mxu0 %v4020
    %5829 = vmatpush1.bf16.msra.mxu0 %v4019
    %5830 = vmatprep.subr.bf16.mxu0 %v4024
    %5831 = vmatpush1.bf16.msra.mxu0 %v4023
    %5832 = vmatprep.subr.bf16.mxu0 %v4028
    %5833 = vmatpush1.bf16.msra.mxu0 %v4027
    %5834 = vmatprep.subr.bf16.mxu0 %v4032
    %5835 = vmatpush1.bf16.msra.mxu0 %v4031
    %5836 = vmatprep.subr.bf16.mxu0 %v4036
    %5837 = vmatpush1.bf16.msra.mxu0 %v4035
    %5838 = vmatprep.subr.bf16.mxu0 %v4040
    %5839 = vmatpush1.bf16.msra.mxu0 %v4039
    %5840 = vmatprep.subr.bf16.mxu0 %v4044
    %5841 = vmatpush1.bf16.msra.mxu0 %v4043
    %5842 = vmatprep.subr.bf16.mxu0 %v4048
    %5843 = vmatpush1.bf16.msra.mxu0 %v4047
    %5844 = vmatprep.subr.bf16.mxu0 %v4052
    %5845 = vmatpush1.bf16.msra.mxu0 %v4051
    %5846 = vmatprep.subr.bf16.mxu0 %v4056
    %5847 = vmatpush1.bf16.msra.mxu0 %v4055
    %5848 = vmatprep.subr.bf16.mxu0 %v4060
    %5849 = vmatpush1.bf16.msra.mxu0 %v4059
    %5850 = vmatprep.mubr.bf16.mxu0 %v1090
    %5851 = vmatmul.mubr.bf16.gmra.mrb[0].mxu0 %v1089
    %v5852 = vpop.f32.mrb[0].mxu0
    %v5853 = vadd.f32 %v5812, %v5852
    %v5854 = vpop.f32.mrb[0].mxu0
    %v5855 = vadd.f32 %v5814, %v5854
    %v5856 = vpop.f32.mrb[0].mxu0
    %v5857 = vpop.f32.mrb[0].mxu0
    %5858 = vdwg.mxu0
    %5859 = vmatprep.subr.bf16.mxu0 %v4064
    %5860 = vmatpush1.bf16.msra.mxu0 %v4063
    %5861 = vmatprep.subr.bf16.mxu0 %v4068
    %5862 = vmatpush1.bf16.msra.mxu0 %v4067
    %5863 = vmatprep.subr.bf16.mxu0 %v4072
    %5864 = vmatpush1.bf16.msra.mxu0 %v4071
    %5865 = vmatprep.subr.bf16.mxu0 %v4076
    %5866 = vmatpush1.bf16.msra.mxu0 %v4075
    %5867 = vmatprep.subr.bf16.mxu0 %v4080
    %5868 = vmatpush1.bf16.msra.mxu0 %v4079
    %5869 = vmatprep.subr.bf16.mxu0 %v4084
    %5870 = vmatpush1.bf16.msra.mxu0 %v4083
    %5871 = vmatprep.subr.bf16.mxu0 %v4088
    %5872 = vmatpush1.bf16.msra.mxu0 %v4087
    %5873 = vmatprep.subr.bf16.mxu0 %v4092
    %5874 = vmatpush1.bf16.msra.mxu0 %v4091
    %5875 = vmatprep.subr.bf16.mxu0 %v4096
    %5876 = vmatpush1.bf16.msra.mxu0 %v4095
    %5877 = vmatprep.subr.bf16.mxu0 %v4100
    %5878 = vmatpush1.bf16.msra.mxu0 %v4099
    %5879 = vmatprep.subr.bf16.mxu0 %v4104
    %5880 = vmatpush1.bf16.msra.mxu0 %v4103
    %5881 = vmatprep.subr.bf16.mxu0 %v4108
    %5882 = vmatpush1.bf16.msra.mxu0 %v4107
    %5883 = vmatprep.subr.bf16.mxu0 %v4112
    %5884 = vmatpush1.bf16.msra.mxu0 %v4111
    %5885 = vmatprep.subr.bf16.mxu0 %v4116
    %5886 = vmatpush1.bf16.msra.mxu0 %v4115
    %5887 = vmatprep.subr.bf16.mxu0 %v4120
    %5888 = vmatpush1.bf16.msra.mxu0 %v4119
    %5889 = vmatprep.subr.bf16.mxu0 %v4124
    %5890 = vmatpush1.bf16.msra.mxu0 %v4123
    %5891 = vmatprep.mubr.bf16.mxu0 %v1092
    %5892 = vmatmul.mubr.bf16.gmra.mrb[0].mxu0 %v1091
    %v5893 = vpop.f32.mrb[0].mxu0
    %v5894 = vadd.f32 %v5853, %v5893
    %v5895 = vpop.f32.mrb[0].mxu0
    %v5896 = vadd.f32 %v5855, %v5895
    %v5897 = vpop.f32.mrb[0].mxu0
    %v5898 = vpop.f32.mrb[0].mxu0
    %5899 = vdwg.mxu0
    %5900 = vmatprep.subr.bf16.mxu0 %v4128
    %5901 = vmatpush1.bf16.msra.mxu0 %v4127
    %5902 = vmatprep.subr.bf16.mxu0 %v4132
    %5903 = vmatpush1.bf16.msra.mxu0 %v4131
    %5904 = vmatprep.subr.bf16.mxu0 %v4136
    %5905 = vmatpush1.bf16.msra.mxu0 %v4135
    %5906 = vmatprep.subr.bf16.mxu0 %v4140
    %5907 = vmatpush1.bf16.msra.mxu0 %v4139
    %5908 = vmatprep.subr.bf16.mxu0 %v4144
    %5909 = vmatpush1.bf16.msra.mxu0 %v4143
    %5910 = vmatprep.subr.bf16.mxu0 %v4148
    %5911 = vmatpush1.bf16.msra.mxu0 %v4147
    %5912 = vmatprep.subr.bf16.mxu0 %v4152
    %5913 = vmatpush1.bf16.msra.mxu0 %v4151
    %5914 = vmatprep.subr.bf16.mxu0 %v4156
    %5915 = vmatpush1.bf16.msra.mxu0 %v4155
    %5916 = vmatprep.subr.bf16.mxu0 %v4160
    %5917 = vmatpush1.bf16.msra.mxu0 %v4159
    %5918 = vmatprep.subr.bf16.mxu0 %v4164
    %5919 = vmatpush1.bf16.msra.mxu0 %v4163
    %5920 = vmatprep.subr.bf16.mxu0 %v4168
    %5921 = vmatpush1.bf16.msra.mxu0 %v4167
    %5922 = vmatprep.subr.bf16.mxu0 %v4172
    %5923 = vmatpush1.bf16.msra.mxu0 %v4171
    %5924 = vmatprep.subr.bf16.mxu0 %v4176
    %5925 = vmatpush1.bf16.msra.mxu0 %v4175
    %5926 = vmatprep.subr.bf16.mxu0 %v4180
    %5927 = vmatpush1.bf16.msra.mxu0 %v4179
    %5928 = vmatprep.subr.bf16.mxu0 %v4184
    %5929 = vmatpush1.bf16.msra.mxu0 %v4183
    %5930 = vmatprep.subr.bf16.mxu0 %v4188
    %5931 = vmatpush1.bf16.msra.mxu0 %v4187
    %5932 = vmatprep.mubr.bf16.mxu0 %v1094
    %5933 = vmatmul.mubr.bf16.gmra.mrb[0].mxu0 %v1093
    %v5934 = vpop.f32.mrb[0].mxu0
    %v5935 = vadd.f32 %v5894, %v5934
    %v5936 = vpop.f32.mrb[0].mxu0
    %v5937 = vadd.f32 %v5896, %v5936
    %v5938 = vpop.f32.mrb[0].mxu0
    %v5939 = vpop.f32.mrb[0].mxu0
    %5940 = vdwg.mxu0
    %v5941 = vrot.slane %v5443, 4
    %v5942 = vadd.f32 %v5443, %v5941
    %v5943 = vrot.slane %v5942, 2
    %v5944 = vadd.f32 %v5942, %v5943
    %v5945 = vrot.slane %v5944, 1
    %v5946 = vadd.f32 %v5944, %v5945
    %v5947 = vrot.slane %v5445, 4
    %v5948 = vadd.f32 %v5445, %v5947
    %v5949 = vrot.slane %v5948, 2
    %v5950 = vadd.f32 %v5948, %v5949
    %v5951 = vrot.slane %v5950, 1
    %v5952 = vadd.f32 %v5950, %v5951
    %v5953 = vrot.slane %v5935, 4
    %v5954 = vadd.f32 %v5935, %v5953
    %v5955 = vrot.slane %v5954, 2
    %v5956 = vadd.f32 %v5954, %v5955
    %v5957 = vrot.slane %v5956, 1
    %v5958 = vadd.f32 %v5956, %v5957
    %v5959 = vrot.slane %v5937, 4
    %v5960 = vadd.f32 %v5937, %v5959
    %v5961 = vrot.slane %v5960, 2
    %v5962 = vadd.f32 %v5960, %v5961
    %v5963 = vrot.slane %v5962, 1
    %v5964 = vadd.f32 %v5962, %v5963
    %v5965 = vrcp.pop 8.0
    %v5966 = vmul.f32 %v5946, %v5965
    %v5967 = vmul.f32 %v5952, %v5965
    %v5968 = vmul.f32 %v5958, %v5965
    %v5969 = vmul.f32 %v5964, %v5965
    %v5970 = vsub.f32 %v5443, %v5966
    %v5971 = vsub.f32 %v5445, %v5967
    %v5972 = vsub.f32 %v5935, %v5968
    %v5973 = vsub.f32 %v5937, %v5969
    %v5974 = vmul.f32 %v5970, %v5970
    %v5975 = vmul.f32 %v5971, %v5971
    %v5976 = vmul.f32 %v5972, %v5972
    %v5977 = vmul.f32 %v5973, %v5973
    %v5978 = vrot.slane %v5974, 4
    %v5979 = vadd.f32 %v5974, %v5978
    %v5980 = vrot.slane %v5979, 2
    %v5981 = vadd.f32 %v5979, %v5980
    %v5982 = vrot.slane %v5981, 1
    %v5983 = vadd.f32 %v5981, %v5982
    %v5984 = vrot.slane %v5975, 4
    %v5985 = vadd.f32 %v5975, %v5984
    %v5986 = vrot.slane %v5985, 2
    %v5987 = vadd.f32 %v5985, %v5986
    %v5988 = vrot.slane %v5987, 1
    %v5989 = vadd.f32 %v5987, %v5988
    %v5990 = vrot.slane %v5976, 4
    %v5991 = vadd.f32 %v5976, %v5990
    %v5992 = vrot.slane %v5991, 2
    %v5993 = vadd.f32 %v5991, %v5992
    %v5994 = vrot.slane %v5993, 1
    %v5995 = vadd.f32 %v5993, %v5994
    %v5996 = vrot.slane %v5977, 4
    %v5997 = vadd.f32 %v5977, %v5996
    %v5998 = vrot.slane %v5997, 2
    %v5999 = vadd.f32 %v5997, %v5998
    %v6000 = vrot.slane %v5999, 1
    %v6001 = vadd.f32 %v5999, %v6000
    %v6002 = vmul.f32 %v5983, %v5965
    %v6003 = vmul.f32 %v5989, %v5965
    %v6004 = vmul.f32 %v5995, %v5965
    %v6005 = vmul.f32 %v6001, %v5965
    %v6006 = vld [vmem:[#allocation11] sm:$0xf]
    %v6007 = vadd.f32 %v6002, 1e-05
    %v6008 = vadd.f32 %v6003, 1e-05
    %v6009 = vadd.f32 %v6004, 1e-05
    %v6010 = vadd.f32 %v6005, 1e-05
    %v6011 = vrsqrt.pop %v6007
    %v6012 = vrsqrt.pop %v6008
    %v6013 = vrsqrt.pop %v6009
    %v6014 = vrsqrt.pop %v6010
    %v6019 = vcombine.low %v6011, %v6012
    %v6020 = vcombine.low %v6013, %v6014
    %v6022 = vunpack.c.l.s4 1966171168
    %v6023 = vunpack.c.0.s8 %v6022
    %v6024 = vlaneseq
    %v6025 = vshrl.u32 %v6024, 7
    %v6026 = vsub.s32 %v6023, %v6025
    %v6027 = vrot.slane %v6019, %v6026
    %v6029 = vunpack.c.l.s4 1966171168
    %v6030 = vunpack.c.0.s8 %v6029
    %v6031 = vlaneseq
    %v6032 = vshrl.u32 %v6031, 7
    %v6033 = vsub.s32 %v6030, %v6032
    %v6034 = vrot.slane %v6020, %v6033
    %v6035 = vcombine.low %v6027, %v6034
    %v6037 = vunpack.c.l.s4 1966171168
    %v6038 = vunpack.c.0.s8 %v6037
    %v6039 = vlaneseq
    %v6040 = vshrl.u32 %v6039, 7
    %v6041 = vsub.s32 %v6038, %v6040
    %v6042 = vrot.slane %v6035, %v6041
    %v6044 = vmul.f32 %v6006, %v6042
    %v6045 = vld [vmem:[#allocation12] sm:$0xf]
    %v6047 = vlaneseq
    %v6048 = vshrl.u32 %v6047, 7
    %v6049 = vsub.s32 0, %v6048
    %v6050 = vrot.slane %v6044, %v6049
    %v6051 = vlaneseq
    %v6052 = vshrl.u32 %v6051, 7
    %v6053 = vsub.s32 1, %v6052
    %v6054 = vrot.slane %v6044, %v6053
    %v6055 = vlaneseq
    %v6056 = vshrl.u32 %v6055, 7
    %v6057 = vsub.s32 2, %v6056
    %v6058 = vrot.slane %v6044, %v6057
    %v6059 = vlaneseq
    %v6060 = vshrl.u32 %v6059, 7
    %v6061 = vsub.s32 3, %v6060
    %v6062 = vrot.slane %v6044, %v6061
    %v6067 = vmul.f32 %v5966, %v6050
    %v6068 = vmul.f32 %v5967, %v6054
    %v6069 = vmul.f32 %v5968, %v6058
    %v6070 = vmul.f32 %v5969, %v6062
    %v6075 = vcombine.low %v6067, %v6068
    %v6076 = vcombine.low %v6069, %v6070
    %v6078 = vunpack.c.l.s4 1966171168
    %v6079 = vunpack.c.0.s8 %v6078
    %v6080 = vlaneseq
    %v6081 = vshrl.u32 %v6080, 7
    %v6082 = vsub.s32 %v6079, %v6081
    %v6083 = vrot.slane %v6075, %v6082
    %v6085 = vunpack.c.l.s4 1966171168
    %v6086 = vunpack.c.0.s8 %v6085
    %v6087 = vlaneseq
    %v6088 = vshrl.u32 %v6087, 7
    %v6089 = vsub.s32 %v6086, %v6088
    %v6090 = vrot.slane %v6076, %v6089
    %v6091 = vcombine.low %v6083, %v6090
    %v6093 = vunpack.c.l.s4 1966171168
    %v6094 = vunpack.c.0.s8 %v6093
    %v6095 = vlaneseq
    %v6096 = vshrl.u32 %v6095, 7
    %v6097 = vsub.s32 %v6094, %v6096
    %v6098 = vrot.slane %v6091, %v6097
    %v6100 = vsub.f32 %v6045, %v6098
    %v6101 = vmul.f32 %v5443, %v6050
    %v6102 = vmul.f32 %v5445, %v6054
    %v6103 = vmul.f32 %v5935, %v6058
    %v6104 = vmul.f32 %v5937, %v6062
    %v6106 = vlaneseq
    %v6107 = vshrl.u32 %v6106, 7
    %v6108 = vsub.s32 0, %v6107
    %v6109 = vrot.slane %v6100, %v6108
    %v6110 = vlaneseq
    %v6111 = vshrl.u32 %v6110, 7
    %v6112 = vsub.s32 1, %v6111
    %v6113 = vrot.slane %v6100, %v6112
    %v6114 = vlaneseq
    %v6115 = vshrl.u32 %v6114, 7
    %v6116 = vsub.s32 2, %v6115
    %v6117 = vrot.slane %v6100, %v6116
    %v6118 = vlaneseq
    %v6119 = vshrl.u32 %v6118, 7
    %v6120 = vsub.s32 3, %v6119
    %v6121 = vrot.slane %v6100, %v6120
    %v6126 = vadd.f32 %v6101, %v6109
    %v6127 = vadd.f32 %v6102, %v6113
    %v6128 = vadd.f32 %v6103, %v6117
    %v6129 = vadd.f32 %v6104, %v6121
    %v6130 = vmax.f32 %v6126, 0.0
    %v6131 = vmax.f32 %v6127, 0.0
    %v6132 = vmax.f32 %v6128, 0.0
    %v6133 = vmax.f32 %v6129, 0.0
    %s6134 = smul.u32 4, 64
    %s6135 = smul.u32 %s6134, 2
    %s6136 = sshll.u32 %s6135, 4
    %6137 = dma.done [#allocation5], %s6136
    %v6138 = vld [vmem:[#allocation2] sm:$0xff]
    %v6139 = vld [vmem:[#allocation2 + $0x8] sm:$0xff]
    %v6140 = vld [vmem:[#allocation2 + $0x10] sm:$0xff]
    %v6141 = vld [vmem:[#allocation2 + $0x18] sm:$0xff]
    %v6142 = vld [vmem:[#allocation2 + $0x20] sm:$0xff]
    %v6143 = vld [vmem:[#allocation2 + $0x28] sm:$0xff]
    %v6144 = vld [vmem:[#allocation2 + $0x30] sm:$0xff]
    %v6145 = vld [vmem:[#allocation2 + $0x38] sm:$0xff]
    %v6146 = vld [vmem:[#allocation2 + $0x40] sm:$0xff]
    %v6147 = vld [vmem:[#allocation2 + $0x48] sm:$0xff]
    %v6148 = vld [vmem:[#allocation2 + $0x50] sm:$0xff]
    %v6149 = vld [vmem:[#allocation2 + $0x58] sm:$0xff]
    %v6150 = vld [vmem:[#allocation2 + $0x60] sm:$0xff]
    %v6151 = vld [vmem:[#allocation2 + $0x68] sm:$0xff]
    %v6152 = vld [vmem:[#allocation2 + $0x70] sm:$0xff]
    %v6153 = vld [vmem:[#allocation2 + $0x78] sm:$0xff]
    %v6154 = vld [vmem:[#allocation2 + $0x80] sm:$0xff]
    %v6155 = vld [vmem:[#allocation2 + $0x88] sm:$0xff]
    %v6156 = vld [vmem:[#allocation2 + $0x90] sm:$0xff]
    %v6157 = vld [vmem:[#allocation2 + $0x98] sm:$0xff]
    %v6158 = vld [vmem:[#allocation2 + $0xa0] sm:$0xff]
    %v6159 = vld [vmem:[#allocation2 + $0xa8] sm:$0xff]
    %v6160 = vld [vmem:[#allocation2 + $0xb0] sm:$0xff]
    %v6161 = vld [vmem:[#allocation2 + $0xb8] sm:$0xff]
    %v6162 = vld [vmem:[#allocation2 + $0xc0] sm:$0xff]
    %v6163 = vld [vmem:[#allocation2 + $0xc8] sm:$0xff]
    %v6164 = vld [vmem:[#allocation2 + $0xd0] sm:$0xff]
    %v6165 = vld [vmem:[#allocation2 + $0xd8] sm:$0xff]
    %v6166 = vld [vmem:[#allocation2 + $0xe0] sm:$0xff]
    %v6167 = vld [vmem:[#allocation2 + $0xe8] sm:$0xff]
    %v6168 = vld [vmem:[#allocation2 + $0xf0] sm:$0xff]
    %v6169 = vld [vmem:[#allocation2 + $0xf8] sm:$0xff]
    %v6170 = vld [vmem:[#allocation2 + $0x100] sm:$0xff]
    %v6171 = vld [vmem:[#allocation2 + $0x108] sm:$0xff]
    %v6172 = vld [vmem:[#allocation2 + $0x110] sm:$0xff]
    %v6173 = vld [vmem:[#allocation2 + $0x118] sm:$0xff]
    %v6174 = vld [vmem:[#allocation2 + $0x120] sm:$0xff]
    %v6175 = vld [vmem:[#allocation2 + $0x128] sm:$0xff]
    %v6176 = vld [vmem:[#allocation2 + $0x130] sm:$0xff]
    %v6177 = vld [vmem:[#allocation2 + $0x138] sm:$0xff]
    %v6178 = vld [vmem:[#allocation2 + $0x140] sm:$0xff]
    %v6179 = vld [vmem:[#allocation2 + $0x148] sm:$0xff]
    %v6180 = vld [vmem:[#allocation2 + $0x150] sm:$0xff]
    %v6181 = vld [vmem:[#allocation2 + $0x158] sm:$0xff]
    %v6182 = vld [vmem:[#allocation2 + $0x160] sm:$0xff]
    %v6183 = vld [vmem:[#allocation2 + $0x168] sm:$0xff]
    %v6184 = vld [vmem:[#allocation2 + $0x170] sm:$0xff]
    %v6185 = vld [vmem:[#allocation2 + $0x178] sm:$0xff]
    %v6186 = vld [vmem:[#allocation2 + $0x180] sm:$0xff]
    %v6187 = vld [vmem:[#allocation2 + $0x188] sm:$0xff]
    %v6188 = vld [vmem:[#allocation2 + $0x190] sm:$0xff]
    %v6189 = vld [vmem:[#allocation2 + $0x198] sm:$0xff]
    %v6190 = vld [vmem:[#allocation2 + $0x1a0] sm:$0xff]
    %v6191 = vld [vmem:[#allocation2 + $0x1a8] sm:$0xff]
    %v6192 = vld [vmem:[#allocation2 + $0x1b0] sm:$0xff]
    %v6193 = vld [vmem:[#allocation2 + $0x1b8] sm:$0xff]
    %v6194 = vld [vmem:[#allocation2 + $0x1c0] sm:$0xff]
    %v6195 = vld [vmem:[#allocation2 + $0x1c8] sm:$0xff]
    %v6196 = vld [vmem:[#allocation2 + $0x1d0] sm:$0xff]
    %v6197 = vld [vmem:[#allocation2 + $0x1d8] sm:$0xff]
    %v6198 = vld [vmem:[#allocation2 + $0x1e0] sm:$0xff]
    %v6199 = vld [vmem:[#allocation2 + $0x1e8] sm:$0xff]
    %v6200 = vld [vmem:[#allocation2 + $0x1f0] sm:$0xff]
    %v6201 = vld [vmem:[#allocation2 + $0x1f8] sm:$0xff]
    %v6202 = vpack.c.bf16 %v6130, %v6130
    %v6203 = vpack.c.bf16 %v6131, %v6131
    %v6204 = vpack.c.bf16 %v6132, %v6132
    %v6205 = vpack.c.bf16 %v6133, %v6133
    %v6206 = vld [vmem:[#allocation14] sm:$0x3]
    %v6208 = vlaneseq
    %v6209 = vshrl.u32 %v6208, 7
    %v6210 = vsub.s32 0, %v6209
    %v6211 = vrot.slane %v6206, %v6210
    %v6212 = vlaneseq
    %v6213 = vshrl.u32 %v6212, 7
    %v6214 = vsub.s32 1, %v6213
    %v6215 = vrot.slane %v6206, %v6214
    %6218 = vmatprep.subr.bf16.mxu0 %v6139
    %6219 = vmatpush1.bf16.msra.mxu0 %v6138
    %6220 = vmatprep.subr.bf16.mxu0 %v6141
    %6221 = vmatpush1.bf16.msra.mxu0 %v6140
    %6222 = vmatprep.subr.bf16.mxu0 %v6143
    %6223 = vmatpush1.bf16.msra.mxu0 %v6142
    %6224 = vmatprep.subr.bf16.mxu0 %v6145
    %6225 = vmatpush1.bf16.msra.mxu0 %v6144
    %6226 = vmatprep.subr.bf16.mxu0 %v6147
    %6227 = vmatpush1.bf16.msra.mxu0 %v6146
    %6228 = vmatprep.subr.bf16.mxu0 %v6149
    %6229 = vmatpush1.bf16.msra.mxu0 %v6148
    %6230 = vmatprep.subr.bf16.mxu0 %v6151
    %6231 = vmatpush1.bf16.msra.mxu0 %v6150
    %6232 = vmatprep.subr.bf16.mxu0 %v6153
    %6233 = vmatpush1.bf16.msra.mxu0 %v6152
    %6234 = vmatprep.subr.bf16.mxu0 %v6155
    %6235 = vmatpush1.bf16.msra.mxu0 %v6154
    %6236 = vmatprep.subr.bf16.mxu0 %v6157
    %6237 = vmatpush1.bf16.msra.mxu0 %v6156
    %6238 = vmatprep.subr.bf16.mxu0 %v6159
    %6239 = vmatpush1.bf16.msra.mxu0 %v6158
    %6240 = vmatprep.subr.bf16.mxu0 %v6161
    %6241 = vmatpush1.bf16.msra.mxu0 %v6160
    %6242 = vmatprep.subr.bf16.mxu0 %v6163
    %6243 = vmatpush1.bf16.msra.mxu0 %v6162
    %6244 = vmatprep.subr.bf16.mxu0 %v6165
    %6245 = vmatpush1.bf16.msra.mxu0 %v6164
    %6246 = vmatprep.subr.bf16.mxu0 %v6167
    %6247 = vmatpush1.bf16.msra.mxu0 %v6166
    %6248 = vmatprep.subr.bf16.mxu0 %v6169
    %6249 = vmatpush1.bf16.msra.mxu0 %v6168
    %6250 = vmatprep.mubr.bf16.mxu0 %v6203
    %6251 = vmatmul.mubr.bf16.gmra.mrb[0].mxu0 %v6202
    %v6252 = vpop.f32.mrb[0].mxu0
    %v6253 = vadd.f32 %v6211, %v6252
    %v6254 = vpop.f32.mrb[0].mxu0
    %v6255 = vadd.f32 %v6215, %v6254
    %v6256 = vpop.f32.mrb[0].mxu0
    %v6257 = vpop.f32.mrb[0].mxu0
    %6258 = vdwg.mxu0
    %6259 = vmatprep.subr.bf16.mxu0 %v6171
    %6260 = vmatpush1.bf16.msra.mxu0 %v6170
    %6261 = vmatprep.subr.bf16.mxu0 %v6173
    %6262 = vmatpush1.bf16.msra.mxu0 %v6172
    %6263 = vmatprep.subr.bf16.mxu0 %v6175
    %6264 = vmatpush1.bf16.msra.mxu0 %v6174
    %6265 = vmatprep.subr.bf16.mxu0 %v6177
    %6266 = vmatpush1.bf16.msra.mxu0 %v6176
    %6267 = vmatprep.subr.bf16.mxu0 %v6179
    %6268 = vmatpush1.bf16.msra.mxu0 %v6178
    %6269 = vmatprep.subr.bf16.mxu0 %v6181
    %6270 = vmatpush1.bf16.msra.mxu0 %v6180
    %6271 = vmatprep.subr.bf16.mxu0 %v6183
    %6272 = vmatpush1.bf16.msra.mxu0 %v6182
    %6273 = vmatprep.subr.bf16.mxu0 %v6185
    %6274 = vmatpush1.bf16.msra.mxu0 %v6184
    %6275 = vmatprep.subr.bf16.mxu0 %v6187
    %6276 = vmatpush1.bf16.msra.mxu0 %v6186
    %6277 = vmatprep.subr.bf16.mxu0 %v6189
    %6278 = vmatpush1.bf16.msra.mxu0 %v6188
    %6279 = vmatprep.subr.bf16.mxu0 %v6191
    %6280 = vmatpush1.bf16.msra.mxu0 %v6190
    %6281 = vmatprep.subr.bf16.mxu0 %v6193
    %6282 = vmatpush1.bf16.msra.mxu0 %v6192
    %6283 = vmatprep.subr.bf16.mxu0 %v6195
    %6284 = vmatpush1.bf16.msra.mxu0 %v6194
    %6285 = vmatprep.subr.bf16.mxu0 %v6197
    %6286 = vmatpush1.bf16.msra.mxu0 %v6196
    %6287 = vmatprep.subr.bf16.mxu0 %v6199
    %6288 = vmatpush1.bf16.msra.mxu0 %v6198
    %6289 = vmatprep.subr.bf16.mxu0 %v6201
    %6290 = vmatpush1.bf16.msra.mxu0 %v6200
    %6291 = vmatprep.mubr.bf16.mxu0 %v6205
    %6292 = vmatmul.mubr.bf16.gmra.mrb[0].mxu0 %v6204
    %v6293 = vpop.f32.mrb[0].mxu0
    %v6294 = vadd.f32 %v6253, %v6293
    %v6295 = vpop.f32.mrb[0].mxu0
    %v6296 = vadd.f32 %v6255, %v6295
    %v6297 = vpop.f32.mrb[0].mxu0
    %v6298 = vpop.f32.mrb[0].mxu0
    %6299 = vdwg.mxu0
    %v6300 = vrot.slane %v6294, 4
    %v6301 = vadd.f32 %v6294, %v6300
    %v6302 = vrot.slane %v6301, 2
    %v6303 = vadd.f32 %v6301, %v6302
    %v6304 = vrot.slane %v6303, 1
    %v6305 = vadd.f32 %v6303, %v6304
    %v6306 = vrot.slane %v6296, 4
    %v6307 = vadd.f32 %v6296, %v6306
    %v6308 = vrot.slane %v6307, 2
    %v6309 = vadd.f32 %v6307, %v6308
    %v6310 = vrot.slane %v6309, 1
    %v6311 = vadd.f32 %v6309, %v6310
    %v6312 = vmul.f32 %v6305, %v5965
    %v6313 = vmul.f32 %v6311, %v5965
    %v6314 = vsub.f32 %v6294, %v6312
    %v6315 = vsub.f32 %v6296, %v6313
    %v6316 = vmul.f32 %v6314, %v6314
    %v6317 = vmul.f32 %v6315, %v6315
    %v6318 = vrot.slane %v6316, 4
    %v6319 = vadd.f32 %v6316, %v6318
    %v6320 = vrot.slane %v6319, 2
    %v6321 = vadd.f32 %v6319, %v6320
    %v6322 = vrot.slane %v6321, 1
    %v6323 = vadd.f32 %v6321, %v6322
    %v6324 = vrot.slane %v6317, 4
    %v6325 = vadd.f32 %v6317, %v6324
    %v6326 = vrot.slane %v6325, 2
    %v6327 = vadd.f32 %v6325, %v6326
    %v6328 = vrot.slane %v6327, 1
    %v6329 = vadd.f32 %v6327, %v6328
    %v6330 = vmul.f32 %v6323, %v5965
    %v6331 = vmul.f32 %v6329, %v5965
    %v6332 = vld [vmem:[#allocation15] sm:$0x3]
    %v6333 = vadd.f32 %v6330, 1e-05
    %v6334 = vadd.f32 %v6331, 1e-05
    %v6335 = vrsqrt.pop %v6333
    %v6336 = vrsqrt.pop %v6334
    %v6339 = vcombine.low %v6335, %v6336
    %v6341 = vunpack.c.l.s4 1966171168
    %v6342 = vunpack.c.0.s8 %v6341
    %v6343 = vlaneseq
    %v6344 = vshrl.u32 %v6343, 7
    %v6345 = vsub.s32 %v6342, %v6344
    %v6346 = vrot.slane %v6339, %v6345
    %v6348 = vunpack.c.l.s4 1966171168
    %v6349 = vunpack.c.0.s8 %v6348
    %v6350 = vlaneseq
    %v6351 = vshrl.u32 %v6350, 7
    %v6352 = vsub.s32 %v6349, %v6351
    %v6353 = vrot.slane %v6346, %v6352
    %v6355 = vmul.f32 %v6332, %v6353
    %v6356 = vld [vmem:[#allocation17] sm:$0x3]
    %v6358 = vlaneseq
    %v6359 = vshrl.u32 %v6358, 7
    %v6360 = vsub.s32 0, %v6359
    %v6361 = vrot.slane %v6355, %v6360
    %v6362 = vlaneseq
    %v6363 = vshrl.u32 %v6362, 7
    %v6364 = vsub.s32 1, %v6363
    %v6365 = vrot.slane %v6355, %v6364
    %v6368 = vmul.f32 %v6312, %v6361
    %v6369 = vmul.f32 %v6313, %v6365
    %v6372 = vcombine.low %v6368, %v6369
    %v6374 = vunpack.c.l.s4 1966171168
    %v6375 = vunpack.c.0.s8 %v6374
    %v6376 = vlaneseq
    %v6377 = vshrl.u32 %v6376, 7
    %v6378 = vsub.s32 %v6375, %v6377
    %v6379 = vrot.slane %v6372, %v6378
    %v6381 = vunpack.c.l.s4 1966171168
    %v6382 = vunpack.c.0.s8 %v6381
    %v6383 = vlaneseq
    %v6384 = vshrl.u32 %v6383, 7
    %v6385 = vsub.s32 %v6382, %v6384
    %v6386 = vrot.slane %v6379, %v6385
    %v6388 = vsub.f32 %v6356, %v6386
    %v6389 = vmul.f32 %v6294, %v6361
    %v6390 = vmul.f32 %v6296, %v6365
    %v6392 = vlaneseq
    %v6393 = vshrl.u32 %v6392, 7
    %v6394 = vsub.s32 0, %v6393
    %v6395 = vrot.slane %v6388, %v6394
    %v6396 = vlaneseq
    %v6397 = vshrl.u32 %v6396, 7
    %v6398 = vsub.s32 1, %v6397
    %v6399 = vrot.slane %v6388, %v6398
    %v6402 = vadd.f32 %v6389, %v6395
    %v6403 = vadd.f32 %v6390, %v6399
    %v6404 = vmax.f32 %v6402, 0.0
    %v6405 = vmax.f32 %v6403, 0.0
    %s6406 = smul.u32 4, 32
    %s6407 = smul.u32 %s6406, 4
    %s6408 = sshll.u32 %s6407, 4
    %6409 = dma.done %s209, %s6408
    %v6410 = vld [vmem:[#allocation3] sm:$0xff]
    %v6411 = vld [vmem:[#allocation3 + $0x8] sm:$0xff]
    %v6412 = vld [vmem:[#allocation3 + $0x10] sm:$0xff]
    %v6413 = vld [vmem:[#allocation3 + $0x18] sm:$0xff]
    %v6414 = vld [vmem:[#allocation3 + $0x20] sm:$0xff]
    %v6415 = vld [vmem:[#allocation3 + $0x28] sm:$0xff]
    %v6416 = vld [vmem:[#allocation3 + $0x30] sm:$0xff]
    %v6417 = vld [vmem:[#allocation3 + $0x38] sm:$0xff]
    %v6418 = vld [vmem:[#allocation3 + $0x40] sm:$0xff]
    %v6419 = vld [vmem:[#allocation3 + $0x48] sm:$0xff]
    %v6420 = vld [vmem:[#allocation3 + $0x50] sm:$0xff]
    %v6421 = vld [vmem:[#allocation3 + $0x58] sm:$0xff]
    %v6422 = vld [vmem:[#allocation3 + $0x60] sm:$0xff]
    %v6423 = vld [vmem:[#allocation3 + $0x68] sm:$0xff]
    %v6424 = vld [vmem:[#allocation3 + $0x70] sm:$0xff]
    %v6425 = vld [vmem:[#allocation3 + $0x78] sm:$0xff]
    %v6426 = vld [vmem:[#allocation3 + $0x80] sm:$0xff]
    %v6427 = vld [vmem:[#allocation3 + $0x88] sm:$0xff]
    %v6428 = vld [vmem:[#allocation3 + $0x90] sm:$0xff]
    %v6429 = vld [vmem:[#allocation3 + $0x98] sm:$0xff]
    %v6430 = vld [vmem:[#allocation3 + $0xa0] sm:$0xff]
    %v6431 = vld [vmem:[#allocation3 + $0xa8] sm:$0xff]
    %v6432 = vld [vmem:[#allocation3 + $0xb0] sm:$0xff]
    %v6433 = vld [vmem:[#allocation3 + $0xb8] sm:$0xff]
    %v6434 = vld [vmem:[#allocation3 + $0xc0] sm:$0xff]
    %v6435 = vld [vmem:[#allocation3 + $0xc8] sm:$0xff]
    %v6436 = vld [vmem:[#allocation3 + $0xd0] sm:$0xff]
    %v6437 = vld [vmem:[#allocation3 + $0xd8] sm:$0xff]
    %v6438 = vld [vmem:[#allocation3 + $0xe0] sm:$0xff]
    %v6439 = vld [vmem:[#allocation3 + $0xe8] sm:$0xff]
    %v6440 = vld [vmem:[#allocation3 + $0xf0] sm:$0xff]
    %v6441 = vld [vmem:[#allocation3 + $0xf8] sm:$0xff]
    %v6442 = vld [vmem:[#allocation3 + $0x100] sm:$0xff]
    %v6443 = vld [vmem:[#allocation3 + $0x108] sm:$0xff]
    %v6444 = vld [vmem:[#allocation3 + $0x110] sm:$0xff]
    %v6445 = vld [vmem:[#allocation3 + $0x118] sm:$0xff]
    %v6446 = vld [vmem:[#allocation3 + $0x120] sm:$0xff]
    %v6447 = vld [vmem:[#allocation3 + $0x128] sm:$0xff]
    %v6448 = vld [vmem:[#allocation3 + $0x130] sm:$0xff]
    %v6449 = vld [vmem:[#allocation3 + $0x138] sm:$0xff]
    %v6450 = vld [vmem:[#allocation3 + $0x140] sm:$0xff]
    %v6451 = vld [vmem:[#allocation3 + $0x148] sm:$0xff]
    %v6452 = vld [vmem:[#allocation3 + $0x150] sm:$0xff]
    %v6453 = vld [vmem:[#allocation3 + $0x158] sm:$0xff]
    %v6454 = vld [vmem:[#allocation3 + $0x160] sm:$0xff]
    %v6455 = vld [vmem:[#allocation3 + $0x168] sm:$0xff]
    %v6456 = vld [vmem:[#allocation3 + $0x170] sm:$0xff]
    %v6457 = vld [vmem:[#allocation3 + $0x178] sm:$0xff]
    %v6458 = vld [vmem:[#allocation3 + $0x180] sm:$0xff]
    %v6459 = vld [vmem:[#allocation3 + $0x188] sm:$0xff]
    %v6460 = vld [vmem:[#allocation3 + $0x190] sm:$0xff]
    %v6461 = vld [vmem:[#allocation3 + $0x198] sm:$0xff]
    %v6462 = vld [vmem:[#allocation3 + $0x1a0] sm:$0xff]
    %v6463 = vld [vmem:[#allocation3 + $0x1a8] sm:$0xff]
    %v6464 = vld [vmem:[#allocation3 + $0x1b0] sm:$0xff]
    %v6465 = vld [vmem:[#allocation3 + $0x1b8] sm:$0xff]
    %v6466 = vld [vmem:[#allocation3 + $0x1c0] sm:$0xff]
    %v6467 = vld [vmem:[#allocation3 + $0x1c8] sm:$0xff]
    %v6468 = vld [vmem:[#allocation3 + $0x1d0] sm:$0xff]
    %v6469 = vld [vmem:[#allocation3 + $0x1d8] sm:$0xff]
    %v6470 = vld [vmem:[#allocation3 + $0x1e0] sm:$0xff]
    %v6471 = vld [vmem:[#allocation3 + $0x1e8] sm:$0xff]
    %v6472 = vld [vmem:[#allocation3 + $0x1f0] sm:$0xff]
    %v6473 = vld [vmem:[#allocation3 + $0x1f8] sm:$0xff]
    %v6474 = vpack.c.bf16 %v6404, %v6404
    %v6475 = vpack.c.bf16 %v6405, %v6405
    %v6476 = vld [vmem:[#allocation18] sm:$0xf]
    %v6478 = vlaneseq
    %v6479 = vshrl.u32 %v6478, 7
    %v6480 = vsub.s32 0, %v6479
    %v6481 = vrot.slane %v6476, %v6480
    %v6482 = vlaneseq
    %v6483 = vshrl.u32 %v6482, 7
    %v6484 = vsub.s32 1, %v6483
    %v6485 = vrot.slane %v6476, %v6484
    %v6486 = vlaneseq
    %v6487 = vshrl.u32 %v6486, 7
    %v6488 = vsub.s32 2, %v6487
    %v6489 = vrot.slane %v6476, %v6488
    %v6490 = vlaneseq
    %v6491 = vshrl.u32 %v6490, 7
    %v6492 = vsub.s32 3, %v6491
    %v6493 = vrot.slane %v6476, %v6492
    %6498 = vmatprep.subr.bf16.mxu0 %v6411
    %6499 = vmatpush1.bf16.msra.mxu0 %v6410
    %6500 = vmatprep.subr.bf16.mxu0 %v6415
    %6501 = vmatpush1.bf16.msra.mxu0 %v6414
    %6502 = vmatprep.subr.bf16.mxu0 %v6419
    %6503 = vmatpush1.bf16.msra.mxu0 %v6418
    %6504 = vmatprep.subr.bf16.mxu0 %v6423
    %6505 = vmatpush1.bf16.msra.mxu0 %v6422
    %6506 = vmatprep.subr.bf16.mxu0 %v6427
    %6507 = vmatpush1.bf16.msra.mxu0 %v6426
    %6508 = vmatprep.subr.bf16.mxu0 %v6431
    %6509 = vmatpush1.bf16.msra.mxu0 %v6430
    %6510 = vmatprep.subr.bf16.mxu0 %v6435
    %6511 = vmatpush1.bf16.msra.mxu0 %v6434
    %6512 = vmatprep.subr.bf16.mxu0 %v6439
    %6513 = vmatpush1.bf16.msra.mxu0 %v6438
    %6514 = vmatprep.subr.bf16.mxu0 %v6443
    %6515 = vmatpush1.bf16.msra.mxu0 %v6442
    %6516 = vmatprep.subr.bf16.mxu0 %v6447
    %6517 = vmatpush1.bf16.msra.mxu0 %v6446
    %6518 = vmatprep.subr.bf16.mxu0 %v6451
    %6519 = vmatpush1.bf16.msra.mxu0 %v6450
    %6520 = vmatprep.subr.bf16.mxu0 %v6455
    %6521 = vmatpush1.bf16.msra.mxu0 %v6454
    %6522 = vmatprep.subr.bf16.mxu0 %v6459
    %6523 = vmatpush1.bf16.msra.mxu0 %v6458
    %6524 = vmatprep.subr.bf16.mxu0 %v6463
    %6525 = vmatpush1.bf16.msra.mxu0 %v6462
    %6526 = vmatprep.subr.bf16.mxu0 %v6467
    %6527 = vmatpush1.bf16.msra.mxu0 %v6466
    %6528 = vmatprep.subr.bf16.mxu0 %v6471
    %6529 = vmatpush1.bf16.msra.mxu0 %v6470
    %6530 = vmatprep.mubr.bf16.mxu0 %v6475
    %6531 = vmatmul.mubr.bf16.gmra.mrb[0].mxu0 %v6474
    %v6532 = vpop.f32.mrb[0].mxu0
    %v6533 = vadd.f32 %v6481, %v6532
    %v6534 = vpop.f32.mrb[0].mxu0
    %v6535 = vadd.f32 %v6485, %v6534
    %v6536 = vpop.f32.mrb[0].mxu0
    %v6537 = vpop.f32.mrb[0].mxu0
    %6538 = vdwg.mxu0
    %6539 = vmatprep.subr.bf16.mxu0 %v6413
    %6540 = vmatpush1.bf16.msra.mxu0 %v6412
    %6541 = vmatprep.subr.bf16.mxu0 %v6417
    %6542 = vmatpush1.bf16.msra.mxu0 %v6416
    %6543 = vmatprep.subr.bf16.mxu0 %v6421
    %6544 = vmatpush1.bf16.msra.mxu0 %v6420
    %6545 = vmatprep.subr.bf16.mxu0 %v6425
    %6546 = vmatpush1.bf16.msra.mxu0 %v6424
    %6547 = vmatprep.subr.bf16.mxu0 %v6429
    %6548 = vmatpush1.bf16.msra.mxu0 %v6428
    %6549 = vmatprep.subr.bf16.mxu0 %v6433
    %6550 = vmatpush1.bf16.msra.mxu0 %v6432
    %6551 = vmatprep.subr.bf16.mxu0 %v6437
    %6552 = vmatpush1.bf16.msra.mxu0 %v6436
    %6553 = vmatprep.subr.bf16.mxu0 %v6441
    %6554 = vmatpush1.bf16.msra.mxu0 %v6440
    %6555 = vmatprep.subr.bf16.mxu0 %v6445
    %6556 = vmatpush1.bf16.msra.mxu0 %v6444
    %6557 = vmatprep.subr.bf16.mxu0 %v6449
    %6558 = vmatpush1.bf16.msra.mxu0 %v6448
    %6559 = vmatprep.subr.bf16.mxu0 %v6453
    %6560 = vmatpush1.bf16.msra.mxu0 %v6452
    %6561 = vmatprep.subr.bf16.mxu0 %v6457
    %6562 = vmatpush1.bf16.msra.mxu0 %v6456
    %6563 = vmatprep.subr.bf16.mxu0 %v6461
    %6564 = vmatpush1.bf16.msra.mxu0 %v6460
    %6565 = vmatprep.subr.bf16.mxu0 %v6465
    %6566 = vmatpush1.bf16.msra.mxu0 %v6464
    %6567 = vmatprep.subr.bf16.mxu0 %v6469
    %6568 = vmatpush1.bf16.msra.mxu0 %v6468
    %6569 = vmatprep.subr.bf16.mxu0 %v6473
    %6570 = vmatpush1.bf16.msra.mxu0 %v6472
    %6571 = vmatprep.mubr.bf16.mxu0 %v6475
    %6572 = vmatmul.mubr.bf16.gmra.mrb[0].mxu0 %v6474
    %v6573 = vpop.f32.mrb[0].mxu0
    %v6574 = vadd.f32 %v6489, %v6573
    %v6575 = vpop.f32.mrb[0].mxu0
    %v6576 = vadd.f32 %v6493, %v6575
    %v6577 = vpop.f32.mrb[0].mxu0
    %v6578 = vpop.f32.mrb[0].mxu0
    %6579 = vdwg.mxu0
    %v6580 = vrot.slane %v6533, 4
    %v6581 = vadd.f32 %v6533, %v6580
    %v6582 = vrot.slane %v6581, 2
    %v6583 = vadd.f32 %v6581, %v6582
    %v6584 = vrot.slane %v6583, 1
    %v6585 = vadd.f32 %v6583, %v6584
    %v6586 = vrot.slane %v6535, 4
    %v6587 = vadd.f32 %v6535, %v6586
    %v6588 = vrot.slane %v6587, 2
    %v6589 = vadd.f32 %v6587, %v6588
    %v6590 = vrot.slane %v6589, 1
    %v6591 = vadd.f32 %v6589, %v6590
    %v6592 = vrot.slane %v6574, 4
    %v6593 = vadd.f32 %v6574, %v6592
    %v6594 = vrot.slane %v6593, 2
    %v6595 = vadd.f32 %v6593, %v6594
    %v6596 = vrot.slane %v6595, 1
    %v6597 = vadd.f32 %v6595, %v6596
    %v6598 = vrot.slane %v6576, 4
    %v6599 = vadd.f32 %v6576, %v6598
    %v6600 = vrot.slane %v6599, 2
    %v6601 = vadd.f32 %v6599, %v6600
    %v6602 = vrot.slane %v6601, 1
    %v6603 = vadd.f32 %v6601, %v6602
    %v6604 = vmul.f32 %v6585, %v5965
    %v6605 = vmul.f32 %v6591, %v5965
    %v6606 = vmul.f32 %v6597, %v5965
    %v6607 = vmul.f32 %v6603, %v5965
    %v6608 = vsub.f32 %v6533, %v6604
    %v6609 = vsub.f32 %v6535, %v6605
    %v6610 = vsub.f32 %v6574, %v6606
    %v6611 = vsub.f32 %v6576, %v6607
    %v6612 = vmul.f32 %v6608, %v6608
    %v6613 = vmul.f32 %v6609, %v6609
    %v6614 = vmul.f32 %v6610, %v6610
    %v6615 = vmul.f32 %v6611, %v6611
    %v6616 = vrot.slane %v6612, 4
    %v6617 = vadd.f32 %v6612, %v6616
    %v6618 = vrot.slane %v6617, 2
    %v6619 = vadd.f32 %v6617, %v6618
    %v6620 = vrot.slane %v6619, 1
    %v6621 = vadd.f32 %v6619, %v6620
    %v6622 = vrot.slane %v6613, 4
    %v6623 = vadd.f32 %v6613, %v6622
    %v6624 = vrot.slane %v6623, 2
    %v6625 = vadd.f32 %v6623, %v6624
    %v6626 = vrot.slane %v6625, 1
    %v6627 = vadd.f32 %v6625, %v6626
    %v6628 = vrot.slane %v6614, 4
    %v6629 = vadd.f32 %v6614, %v6628
    %v6630 = vrot.slane %v6629, 2
    %v6631 = vadd.f32 %v6629, %v6630
    %v6632 = vrot.slane %v6631, 1
    %v6633 = vadd.f32 %v6631, %v6632
    %v6634 = vrot.slane %v6615, 4
    %v6635 = vadd.f32 %v6615, %v6634
    %v6636 = vrot.slane %v6635, 2
    %v6637 = vadd.f32 %v6635, %v6636
    %v6638 = vrot.slane %v6637, 1
    %v6639 = vadd.f32 %v6637, %v6638
    %v6640 = vmul.f32 %v6621, %v5965
    %v6641 = vmul.f32 %v6627, %v5965
    %v6642 = vmul.f32 %v6633, %v5965
    %v6643 = vmul.f32 %v6639, %v5965
    %v6644 = vld [vmem:[#allocation20] sm:$0xf]
    %v6645 = vadd.f32 %v6640, 1e-05
    %v6646 = vadd.f32 %v6641, 1e-05
    %v6647 = vadd.f32 %v6642, 1e-05
    %v6648 = vadd.f32 %v6643, 1e-05
    %v6649 = vrsqrt.pop %v6645
    %v6650 = vrsqrt.pop %v6646
    %v6651 = vrsqrt.pop %v6647
    %v6652 = vrsqrt.pop %v6648
    %v6657 = vcombine.low %v6649, %v6650
    %v6658 = vcombine.low %v6651, %v6652
    %v6660 = vunpack.c.l.s4 1966171168
    %v6661 = vunpack.c.0.s8 %v6660
    %v6662 = vlaneseq
    %v6663 = vshrl.u32 %v6662, 7
    %v6664 = vsub.s32 %v6661, %v6663
    %v6665 = vrot.slane %v6657, %v6664
    %v6667 = vunpack.c.l.s4 1966171168
    %v6668 = vunpack.c.0.s8 %v6667
    %v6669 = vlaneseq
    %v6670 = vshrl.u32 %v6669, 7
    %v6671 = vsub.s32 %v6668, %v6670
    %v6672 = vrot.slane %v6658, %v6671
    %v6673 = vcombine.low %v6665, %v6672
    %v6675 = vunpack.c.l.s4 1966171168
    %v6676 = vunpack.c.0.s8 %v6675
    %v6677 = vlaneseq
    %v6678 = vshrl.u32 %v6677, 7
    %v6679 = vsub.s32 %v6676, %v6678
    %v6680 = vrot.slane %v6673, %v6679
    %v6682 = vmul.f32 %v6644, %v6680
    %v6683 = vld [vmem:[#allocation21] sm:$0xf]
    %v6685 = vlaneseq
    %v6686 = vshrl.u32 %v6685, 7
    %v6687 = vsub.s32 0, %v6686
    %v6688 = vrot.slane %v6682, %v6687
    %v6689 = vlaneseq
    %v6690 = vshrl.u32 %v6689, 7
    %v6691 = vsub.s32 1, %v6690
    %v6692 = vrot.slane %v6682, %v6691
    %v6693 = vlaneseq
    %v6694 = vshrl.u32 %v6693, 7
    %v6695 = vsub.s32 2, %v6694
    %v6696 = vrot.slane %v6682, %v6695
    %v6697 = vlaneseq
    %v6698 = vshrl.u32 %v6697, 7
    %v6699 = vsub.s32 3, %v6698
    %v6700 = vrot.slane %v6682, %v6699
    %v6705 = vmul.f32 %v6604, %v6688
    %v6706 = vmul.f32 %v6605, %v6692
    %v6707 = vmul.f32 %v6606, %v6696
    %v6708 = vmul.f32 %v6607, %v6700
    %v6713 = vcombine.low %v6705, %v6706
    %v6714 = vcombine.low %v6707, %v6708
    %v6716 = vunpack.c.l.s4 1966171168
    %v6717 = vunpack.c.0.s8 %v6716
    %v6718 = vlaneseq
    %v6719 = vshrl.u32 %v6718, 7
    %v6720 = vsub.s32 %v6717, %v6719
    %v6721 = vrot.slane %v6713, %v6720
    %v6723 = vunpack.c.l.s4 1966171168
    %v6724 = vunpack.c.0.s8 %v6723
    %v6725 = vlaneseq
    %v6726 = vshrl.u32 %v6725, 7
    %v6727 = vsub.s32 %v6724, %v6726
    %v6728 = vrot.slane %v6714, %v6727
    %v6729 = vcombine.low %v6721, %v6728
    %v6731 = vunpack.c.l.s4 1966171168
    %v6732 = vunpack.c.0.s8 %v6731
    %v6733 = vlaneseq
    %v6734 = vshrl.u32 %v6733, 7
    %v6735 = vsub.s32 %v6732, %v6734
    %v6736 = vrot.slane %v6729, %v6735
    %v6738 = vsub.f32 %v6683, %v6736
    %v6739 = vmul.f32 %v6533, %v6688
    %v6740 = vmul.f32 %v6535, %v6692
    %v6741 = vmul.f32 %v6574, %v6696
    %v6742 = vmul.f32 %v6576, %v6700
    %v6744 = vlaneseq
    %v6745 = vshrl.u32 %v6744, 7
    %v6746 = vsub.s32 0, %v6745
    %v6747 = vrot.slane %v6738, %v6746
    %v6748 = vlaneseq
    %v6749 = vshrl.u32 %v6748, 7
    %v6750 = vsub.s32 1, %v6749
    %v6751 = vrot.slane %v6738, %v6750
    %v6752 = vlaneseq
    %v6753 = vshrl.u32 %v6752, 7
    %v6754 = vsub.s32 2, %v6753
    %v6755 = vrot.slane %v6738, %v6754
    %v6756 = vlaneseq
    %v6757 = vshrl.u32 %v6756, 7
    %v6758 = vsub.s32 3, %v6757
    %v6759 = vrot.slane %v6738, %v6758
    %v6764 = vadd.f32 %v6739, %v6747
    %v6765 = vadd.f32 %v6740, %v6751
    %v6766 = vadd.f32 %v6741, %v6755
    %v6767 = vadd.f32 %v6742, %v6759
    %v6768 = vmax.f32 %v6764, 0.0
    %v6769 = vmax.f32 %v6765, 0.0
    %v6770 = vmax.f32 %v6766, 0.0
    %v6771 = vmax.f32 %v6767, 0.0
    %s6772 = smul.u32 %s6134, 24
    %s6773 = sshll.u32 %s6772, 4
    %6774 = dma.done %s244, %s6773
    %v6775 = vld [vmem:[#allocation4] sm:$0xff]
    %v6776 = vld [vmem:[#allocation4 + $0x8] sm:$0xff]
    %v6777 = vld [vmem:[#allocation4 + $0x10] sm:$0xff]
    %v6778 = vld [vmem:[#allocation4 + $0x18] sm:$0xff]
    %v6779 = vld [vmem:[#allocation4 + $0x20] sm:$0xff]
    %v6780 = vld [vmem:[#allocation4 + $0x28] sm:$0xff]
    %v6781 = vld [vmem:[#allocation4 + $0x30] sm:$0xff]
    %v6782 = vld [vmem:[#allocation4 + $0x38] sm:$0xff]
    %v6783 = vld [vmem:[#allocation4 + $0x40] sm:$0xff]
    %v6784 = vld [vmem:[#allocation4 + $0x48] sm:$0xff]
    %v6785 = vld [vmem:[#allocation4 + $0x50] sm:$0xff]
    %v6786 = vld [vmem:[#allocation4 + $0x58] sm:$0xff]
    %v6787 = vld [vmem:[#allocation4 + $0x60] sm:$0xff]
    %v6788 = vld [vmem:[#allocation4 + $0x68] sm:$0xff]
    %v6789 = vld [vmem:[#allocation4 + $0x70] sm:$0xff]
    %v6790 = vld [vmem:[#allocation4 + $0x78] sm:$0xff]
    %v6791 = vld [vmem:[#allocation4 + $0x80] sm:$0xff]
    %v6792 = vld [vmem:[#allocation4 + $0x88] sm:$0xff]
    %v6793 = vld [vmem:[#allocation4 + $0x90] sm:$0xff]
    %v6794 = vld [vmem:[#allocation4 + $0x98] sm:$0xff]
    %v6795 = vld [vmem:[#allocation4 + $0xa0] sm:$0xff]
    %v6796 = vld [vmem:[#allocation4 + $0xa8] sm:$0xff]
    %v6797 = vld [vmem:[#allocation4 + $0xb0] sm:$0xff]
    %v6798 = vld [vmem:[#allocation4 + $0xb8] sm:$0xff]
    %v6799 = vld [vmem:[#allocation4 + $0xc0] sm:$0xff]
    %v6800 = vld [vmem:[#allocation4 + $0xc8] sm:$0xff]
    %v6801 = vld [vmem:[#allocation4 + $0xd0] sm:$0xff]
    %v6802 = vld [vmem:[#allocation4 + $0xd8] sm:$0xff]
    %v6803 = vld [vmem:[#allocation4 + $0xe0] sm:$0xff]
    %v6804 = vld [vmem:[#allocation4 + $0xe8] sm:$0xff]
    %v6805 = vld [vmem:[#allocation4 + $0xf0] sm:$0xff]
    %v6806 = vld [vmem:[#allocation4 + $0xf8] sm:$0xff]
    %v6807 = vld [vmem:[#allocation4 + $0x100] sm:$0xff]
    %v6808 = vld [vmem:[#allocation4 + $0x108] sm:$0xff]
    %v6809 = vld [vmem:[#allocation4 + $0x110] sm:$0xff]
    %v6810 = vld [vmem:[#allocation4 + $0x118] sm:$0xff]
    %v6811 = vld [vmem:[#allocation4 + $0x120] sm:$0xff]
    %v6812 = vld [vmem:[#allocation4 + $0x128] sm:$0xff]
    %v6813 = vld [vmem:[#allocation4 + $0x130] sm:$0xff]
    %v6814 = vld [vmem:[#allocation4 + $0x138] sm:$0xff]
    %v6815 = vld [vmem:[#allocation4 + $0x140] sm:$0xff]
    %v6816 = vld [vmem:[#allocation4 + $0x148] sm:$0xff]
    %v6817 = vld [vmem:[#allocation4 + $0x150] sm:$0xff]
    %v6818 = vld [vmem:[#allocation4 + $0x158] sm:$0xff]
    %v6819 = vld [vmem:[#allocation4 + $0x160] sm:$0xff]
    %v6820 = vld [vmem:[#allocation4 + $0x168] sm:$0xff]
    %v6821 = vld [vmem:[#allocation4 + $0x170] sm:$0xff]
    %v6822 = vld [vmem:[#allocation4 + $0x178] sm:$0xff]
    %v6823 = vld [vmem:[#allocation4 + $0x180] sm:$0xff]
    %v6824 = vld [vmem:[#allocation4 + $0x188] sm:$0xff]
    %v6825 = vld [vmem:[#allocation4 + $0x190] sm:$0xff]
    %v6826 = vld [vmem:[#allocation4 + $0x198] sm:$0xff]
    %v6827 = vld [vmem:[#allocation4 + $0x1a0] sm:$0xff]
    %v6828 = vld [vmem:[#allocation4 + $0x1a8] sm:$0xff]
    %v6829 = vld [vmem:[#allocation4 + $0x1b0] sm:$0xff]
    %v6830 = vld [vmem:[#allocation4 + $0x1b8] sm:$0xff]
    %v6831 = vld [vmem:[#allocation4 + $0x1c0] sm:$0xff]
    %v6832 = vld [vmem:[#allocation4 + $0x1c8] sm:$0xff]
    %v6833 = vld [vmem:[#allocation4 + $0x1d0] sm:$0xff]
    %v6834 = vld [vmem:[#allocation4 + $0x1d8] sm:$0xff]
    %v6835 = vld [vmem:[#allocation4 + $0x1e0] sm:$0xff]
    %v6836 = vld [vmem:[#allocation4 + $0x1e8] sm:$0xff]
    %v6837 = vld [vmem:[#allocation4 + $0x1f0] sm:$0xff]
    %v6838 = vld [vmem:[#allocation4 + $0x1f8] sm:$0xff]
    %v6839 = vld [vmem:[#allocation4 + $0x200] sm:$0xff]
    %v6840 = vld [vmem:[#allocation4 + $0x208] sm:$0xff]
    %v6841 = vld [vmem:[#allocation4 + $0x210] sm:$0xff]
    %v6842 = vld [vmem:[#allocation4 + $0x218] sm:$0xff]
    %v6843 = vld [vmem:[#allocation4 + $0x220] sm:$0xff]
    %v6844 = vld [vmem:[#allocation4 + $0x228] sm:$0xff]
    %v6845 = vld [vmem:[#allocation4 + $0x230] sm:$0xff]
    %v6846 = vld [vmem:[#allocation4 + $0x238] sm:$0xff]
    %v6847 = vld [vmem:[#allocation4 + $0x240] sm:$0xff]
    %v6848 = vld [vmem:[#allocation4 + $0x248] sm:$0xff]
    %v6849 = vld [vmem:[#allocation4 + $0x250] sm:$0xff]
    %v6850 = vld [vmem:[#allocation4 + $0x258] sm:$0xff]
    %v6851 = vld [vmem:[#allocation4 + $0x260] sm:$0xff]
    %v6852 = vld [vmem:[#allocation4 + $0x268] sm:$0xff]
    %v6853 = vld [vmem:[#allocation4 + $0x270] sm:$0xff]
    %v6854 = vld [vmem:[#allocation4 + $0x278] sm:$0xff]
    %v6855 = vld [vmem:[#allocation4 + $0x280] sm:$0xff]
    %v6856 = vld [vmem:[#allocation4 + $0x288] sm:$0xff]
    %v6857 = vld [vmem:[#allocation4 + $0x290] sm:$0xff]
    %v6858 = vld [vmem:[#allocation4 + $0x298] sm:$0xff]
    %v6859 = vld [vmem:[#allocation4 + $0x2a0] sm:$0xff]
    %v6860 = vld [vmem:[#allocation4 + $0x2a8] sm:$0xff]
    %v6861 = vld [vmem:[#allocation4 + $0x2b0] sm:$0xff]
    %v6862 = vld [vmem:[#allocation4 + $0x2b8] sm:$0xff]
    %v6863 = vld [vmem:[#allocation4 + $0x2c0] sm:$0xff]
    %v6864 = vld [vmem:[#allocation4 + $0x2c8] sm:$0xff]
    %v6865 = vld [vmem:[#allocation4 + $0x2d0] sm:$0xff]
    %v6866 = vld [vmem:[#allocation4 + $0x2d8] sm:$0xff]
    %v6867 = vld [vmem:[#allocation4 + $0x2e0] sm:$0xff]
    %v6868 = vld [vmem:[#allocation4 + $0x2e8] sm:$0xff]
    %v6869 = vld [vmem:[#allocation4 + $0x2f0] sm:$0xff]
    %v6870 = vld [vmem:[#allocation4 + $0x2f8] sm:$0xff]
    %v6871 = vld [vmem:[#allocation4 + $0x300] sm:$0xff]
    %v6872 = vld [vmem:[#allocation4 + $0x308] sm:$0xff]
    %v6873 = vld [vmem:[#allocation4 + $0x310] sm:$0xff]
    %v6874 = vld [vmem:[#allocation4 + $0x318] sm:$0xff]
    %v6875 = vld [vmem:[#allocation4 + $0x320] sm:$0xff]
    %v6876 = vld [vmem:[#allocation4 + $0x328] sm:$0xff]
    %v6877 = vld [vmem:[#allocation4 + $0x330] sm:$0xff]
    %v6878 = vld [vmem:[#allocation4 + $0x338] sm:$0xff]
    %v6879 = vld [vmem:[#allocation4 + $0x340] sm:$0xff]
    %v6880 = vld [vmem:[#allocation4 + $0x348] sm:$0xff]
    %v6881 = vld [vmem:[#allocation4 + $0x350] sm:$0xff]
    %v6882 = vld [vmem:[#allocation4 + $0x358] sm:$0xff]
    %v6883 = vld [vmem:[#allocation4 + $0x360] sm:$0xff]
    %v6884 = vld [vmem:[#allocation4 + $0x368] sm:$0xff]
    %v6885 = vld [vmem:[#allocation4 + $0x370] sm:$0xff]
    %v6886 = vld [vmem:[#allocation4 + $0x378] sm:$0xff]
    %v6887 = vld [vmem:[#allocation4 + $0x380] sm:$0xff]
    %v6888 = vld [vmem:[#allocation4 + $0x388] sm:$0xff]
    %v6889 = vld [vmem:[#allocation4 + $0x390] sm:$0xff]
    %v6890 = vld [vmem:[#allocation4 + $0x398] sm:$0xff]
    %v6891 = vld [vmem:[#allocation4 + $0x3a0] sm:$0xff]
    %v6892 = vld [vmem:[#allocation4 + $0x3a8] sm:$0xff]
    %v6893 = vld [vmem:[#allocation4 + $0x3b0] sm:$0xff]
    %v6894 = vld [vmem:[#allocation4 + $0x3b8] sm:$0xff]
    %v6895 = vld [vmem:[#allocation4 + $0x3c0] sm:$0xff]
    %v6896 = vld [vmem:[#allocation4 + $0x3c8] sm:$0xff]
    %v6897 = vld [vmem:[#allocation4 + $0x3d0] sm:$0xff]
    %v6898 = vld [vmem:[#allocation4 + $0x3d8] sm:$0xff]
    %v6899 = vld [vmem:[#allocation4 + $0x3e0] sm:$0xff]
    %v6900 = vld [vmem:[#allocation4 + $0x3e8] sm:$0xff]
    %v6901 = vld [vmem:[#allocation4 + $0x3f0] sm:$0xff]
    %v6902 = vld [vmem:[#allocation4 + $0x3f8] sm:$0xff]
    %v6903 = vld [vmem:[#allocation4 + $0x400] sm:$0xff]
    %v6904 = vld [vmem:[#allocation4 + $0x408] sm:$0xff]
    %v6905 = vld [vmem:[#allocation4 + $0x410] sm:$0xff]
    %v6906 = vld [vmem:[#allocation4 + $0x418] sm:$0xff]
    %v6907 = vld [vmem:[#allocation4 + $0x420] sm:$0xff]
    %v6908 = vld [vmem:[#allocation4 + $0x428] sm:$0xff]
    %v6909 = vld [vmem:[#allocation4 + $0x430] sm:$0xff]
    %v6910 = vld [vmem:[#allocation4 + $0x438] sm:$0xff]
    %v6911 = vld [vmem:[#allocation4 + $0x440] sm:$0xff]
    %v6912 = vld [vmem:[#allocation4 + $0x448] sm:$0xff]
    %v6913 = vld [vmem:[#allocation4 + $0x450] sm:$0xff]
    %v6914 = vld [vmem:[#allocation4 + $0x458] sm:$0xff]
    %v6915 = vld [vmem:[#allocation4 + $0x460] sm:$0xff]
    %v6916 = vld [vmem:[#allocation4 + $0x468] sm:$0xff]
    %v6917 = vld [vmem:[#allocation4 + $0x470] sm:$0xff]
    %v6918 = vld [vmem:[#allocation4 + $0x478] sm:$0xff]
    %v6919 = vld [vmem:[#allocation4 + $0x480] sm:$0xff]
    %v6920 = vld [vmem:[#allocation4 + $0x488] sm:$0xff]
    %v6921 = vld [vmem:[#allocation4 + $0x490] sm:$0xff]
    %v6922 = vld [vmem:[#allocation4 + $0x498] sm:$0xff]
    %v6923 = vld [vmem:[#allocation4 + $0x4a0] sm:$0xff]
    %v6924 = vld [vmem:[#allocation4 + $0x4a8] sm:$0xff]
    %v6925 = vld [vmem:[#allocation4 + $0x4b0] sm:$0xff]
    %v6926 = vld [vmem:[#allocation4 + $0x4b8] sm:$0xff]
    %v6927 = vld [vmem:[#allocation4 + $0x4c0] sm:$0xff]
    %v6928 = vld [vmem:[#allocation4 + $0x4c8] sm:$0xff]
    %v6929 = vld [vmem:[#allocation4 + $0x4d0] sm:$0xff]
    %v6930 = vld [vmem:[#allocation4 + $0x4d8] sm:$0xff]
    %v6931 = vld [vmem:[#allocation4 + $0x4e0] sm:$0xff]
    %v6932 = vld [vmem:[#allocation4 + $0x4e8] sm:$0xff]
    %v6933 = vld [vmem:[#allocation4 + $0x4f0] sm:$0xff]
    %v6934 = vld [vmem:[#allocation4 + $0x4f8] sm:$0xff]
    %v6935 = vld [vmem:[#allocation4 + $0x500] sm:$0xff]
    %v6936 = vld [vmem:[#allocation4 + $0x508] sm:$0xff]
    %v6937 = vld [vmem:[#allocation4 + $0x510] sm:$0xff]
    %v6938 = vld [vmem:[#allocation4 + $0x518] sm:$0xff]
    %v6939 = vld [vmem:[#allocation4 + $0x520] sm:$0xff]
    %v6940 = vld [vmem:[#allocation4 + $0x528] sm:$0xff]
    %v6941 = vld [vmem:[#allocation4 + $0x530] sm:$0xff]
    %v6942 = vld [vmem:[#allocation4 + $0x538] sm:$0xff]
    %v6943 = vld [vmem:[#allocation4 + $0x540] sm:$0xff]
    %v6944 = vld [vmem:[#allocation4 + $0x548] sm:$0xff]
    %v6945 = vld [vmem:[#allocation4 + $0x550] sm:$0xff]
    %v6946 = vld [vmem:[#allocation4 + $0x558] sm:$0xff]
    %v6947 = vld [vmem:[#allocation4 + $0x560] sm:$0xff]
    %v6948 = vld [vmem:[#allocation4 + $0x568] sm:$0xff]
    %v6949 = vld [vmem:[#allocation4 + $0x570] sm:$0xff]
    %v6950 = vld [vmem:[#allocation4 + $0x578] sm:$0xff]
    %v6951 = vld [vmem:[#allocation4 + $0x580] sm:$0xff]
    %v6952 = vld [vmem:[#allocation4 + $0x588] sm:$0xff]
    %v6953 = vld [vmem:[#allocation4 + $0x590] sm:$0xff]
    %v6954 = vld [vmem:[#allocation4 + $0x598] sm:$0xff]
    %v6955 = vld [vmem:[#allocation4 + $0x5a0] sm:$0xff]
    %v6956 = vld [vmem:[#allocation4 + $0x5a8] sm:$0xff]
    %v6957 = vld [vmem:[#allocation4 + $0x5b0] sm:$0xff]
    %v6958 = vld [vmem:[#allocation4 + $0x5b8] sm:$0xff]
    %v6959 = vld [vmem:[#allocation4 + $0x5c0] sm:$0xff]
    %v6960 = vld [vmem:[#allocation4 + $0x5c8] sm:$0xff]
    %v6961 = vld [vmem:[#allocation4 + $0x5d0] sm:$0xff]
    %v6962 = vld [vmem:[#allocation4 + $0x5d8] sm:$0xff]
    %v6963 = vld [vmem:[#allocation4 + $0x5e0] sm:$0xff]
    %v6964 = vld [vmem:[#allocation4 + $0x5e8] sm:$0xff]
    %v6965 = vld [vmem:[#allocation4 + $0x5f0] sm:$0xff]
    %v6966 = vld [vmem:[#allocation4 + $0x5f8] sm:$0xff]
    %v6967 = vld [vmem:[#allocation4 + $0x600] sm:$0xff]
    %v6968 = vld [vmem:[#allocation4 + $0x608] sm:$0xff]
    %v6969 = vld [vmem:[#allocation4 + $0x610] sm:$0xff]
    %v6970 = vld [vmem:[#allocation4 + $0x618] sm:$0xff]
    %v6971 = vld [vmem:[#allocation4 + $0x620] sm:$0xff]
    %v6972 = vld [vmem:[#allocation4 + $0x628] sm:$0xff]
    %v6973 = vld [vmem:[#allocation4 + $0x630] sm:$0xff]
    %v6974 = vld [vmem:[#allocation4 + $0x638] sm:$0xff]
    %v6975 = vld [vmem:[#allocation4 + $0x640] sm:$0xff]
    %v6976 = vld [vmem:[#allocation4 + $0x648] sm:$0xff]
    %v6977 = vld [vmem:[#allocation4 + $0x650] sm:$0xff]
    %v6978 = vld [vmem:[#allocation4 + $0x658] sm:$0xff]
    %v6979 = vld [vmem:[#allocation4 + $0x660] sm:$0xff]
    %v6980 = vld [vmem:[#allocation4 + $0x668] sm:$0xff]
    %v6981 = vld [vmem:[#allocation4 + $0x670] sm:$0xff]
    %v6982 = vld [vmem:[#allocation4 + $0x678] sm:$0xff]
    %v6983 = vld [vmem:[#allocation4 + $0x680] sm:$0xff]
    %v6984 = vld [vmem:[#allocation4 + $0x688] sm:$0xff]
    %v6985 = vld [vmem:[#allocation4 + $0x690] sm:$0xff]
    %v6986 = vld [vmem:[#allocation4 + $0x698] sm:$0xff]
    %v6987 = vld [vmem:[#allocation4 + $0x6a0] sm:$0xff]
    %v6988 = vld [vmem:[#allocation4 + $0x6a8] sm:$0xff]
    %v6989 = vld [vmem:[#allocation4 + $0x6b0] sm:$0xff]
    %v6990 = vld [vmem:[#allocation4 + $0x6b8] sm:$0xff]
    %v6991 = vld [vmem:[#allocation4 + $0x6c0] sm:$0xff]
    %v6992 = vld [vmem:[#allocation4 + $0x6c8] sm:$0xff]
    %v6993 = vld [vmem:[#allocation4 + $0x6d0] sm:$0xff]
    %v6994 = vld [vmem:[#allocation4 + $0x6d8] sm:$0xff]
    %v6995 = vld [vmem:[#allocation4 + $0x6e0] sm:$0xff]
    %v6996 = vld [vmem:[#allocation4 + $0x6e8] sm:$0xff]
    %v6997 = vld [vmem:[#allocation4 + $0x6f0] sm:$0xff]
    %v6998 = vld [vmem:[#allocation4 + $0x6f8] sm:$0xff]
    %v6999 = vld [vmem:[#allocation4 + $0x700] sm:$0xff]
    %v7000 = vld [vmem:[#allocation4 + $0x708] sm:$0xff]
    %v7001 = vld [vmem:[#allocation4 + $0x710] sm:$0xff]
    %v7002 = vld [vmem:[#allocation4 + $0x718] sm:$0xff]
    %v7003 = vld [vmem:[#allocation4 + $0x720] sm:$0xff]
    %v7004 = vld [vmem:[#allocation4 + $0x728] sm:$0xff]
    %v7005 = vld [vmem:[#allocation4 + $0x730] sm:$0xff]
    %v7006 = vld [vmem:[#allocation4 + $0x738] sm:$0xff]
    %v7007 = vld [vmem:[#allocation4 + $0x740] sm:$0xff]
    %v7008 = vld [vmem:[#allocation4 + $0x748] sm:$0xff]
    %v7009 = vld [vmem:[#allocation4 + $0x750] sm:$0xff]
    %v7010 = vld [vmem:[#allocation4 + $0x758] sm:$0xff]
    %v7011 = vld [vmem:[#allocation4 + $0x760] sm:$0xff]
    %v7012 = vld [vmem:[#allocation4 + $0x768] sm:$0xff]
    %v7013 = vld [vmem:[#allocation4 + $0x770] sm:$0xff]
    %v7014 = vld [vmem:[#allocation4 + $0x778] sm:$0xff]
    %v7015 = vld [vmem:[#allocation4 + $0x780] sm:$0xff]
    %v7016 = vld [vmem:[#allocation4 + $0x788] sm:$0xff]
    %v7017 = vld [vmem:[#allocation4 + $0x790] sm:$0xff]
    %v7018 = vld [vmem:[#allocation4 + $0x798] sm:$0xff]
    %v7019 = vld [vmem:[#allocation4 + $0x7a0] sm:$0xff]
    %v7020 = vld [vmem:[#allocation4 + $0x7a8] sm:$0xff]
    %v7021 = vld [vmem:[#allocation4 + $0x7b0] sm:$0xff]
    %v7022 = vld [vmem:[#allocation4 + $0x7b8] sm:$0xff]
    %v7023 = vld [vmem:[#allocation4 + $0x7c0] sm:$0xff]
    %v7024 = vld [vmem:[#allocation4 + $0x7c8] sm:$0xff]
    %v7025 = vld [vmem:[#allocation4 + $0x7d0] sm:$0xff]
    %v7026 = vld [vmem:[#allocation4 + $0x7d8] sm:$0xff]
    %v7027 = vld [vmem:[#allocation4 + $0x7e0] sm:$0xff]
    %v7028 = vld [vmem:[#allocation4 + $0x7e8] sm:$0xff]
    %v7029 = vld [vmem:[#allocation4 + $0x7f0] sm:$0xff]
    %v7030 = vld [vmem:[#allocation4 + $0x7f8] sm:$0xff]
    %v7031 = vld [vmem:[#allocation4 + $0x800] sm:$0xff]
    %v7032 = vld [vmem:[#allocation4 + $0x808] sm:$0xff]
    %v7033 = vld [vmem:[#allocation4 + $0x810] sm:$0xff]
    %v7034 = vld [vmem:[#allocation4 + $0x818] sm:$0xff]
    %v7035 = vld [vmem:[#allocation4 + $0x820] sm:$0xff]
    %v7036 = vld [vmem:[#allocation4 + $0x828] sm:$0xff]
    %v7037 = vld [vmem:[#allocation4 + $0x830] sm:$0xff]
    %v7038 = vld [vmem:[#allocation4 + $0x838] sm:$0xff]
    %v7039 = vld [vmem:[#allocation4 + $0x840] sm:$0xff]
    %v7040 = vld [vmem:[#allocation4 + $0x848] sm:$0xff]
    %v7041 = vld [vmem:[#allocation4 + $0x850] sm:$0xff]
    %v7042 = vld [vmem:[#allocation4 + $0x858] sm:$0xff]
    %v7043 = vld [vmem:[#allocation4 + $0x860] sm:$0xff]
    %v7044 = vld [vmem:[#allocation4 + $0x868] sm:$0xff]
    %v7045 = vld [vmem:[#allocation4 + $0x870] sm:$0xff]
    %v7046 = vld [vmem:[#allocation4 + $0x878] sm:$0xff]
    %v7047 = vld [vmem:[#allocation4 + $0x880] sm:$0xff]
    %v7048 = vld [vmem:[#allocation4 + $0x888] sm:$0xff]
    %v7049 = vld [vmem:[#allocation4 + $0x890] sm:$0xff]
    %v7050 = vld [vmem:[#allocation4 + $0x898] sm:$0xff]
    %v7051 = vld [vmem:[#allocation4 + $0x8a0] sm:$0xff]
    %v7052 = vld [vmem:[#allocation4 + $0x8a8] sm:$0xff]
    %v7053 = vld [vmem:[#allocation4 + $0x8b0] sm:$0xff]
    %v7054 = vld [vmem:[#allocation4 + $0x8b8] sm:$0xff]
    %v7055 = vld [vmem:[#allocation4 + $0x8c0] sm:$0xff]
    %v7056 = vld [vmem:[#allocation4 + $0x8c8] sm:$0xff]
    %v7057 = vld [vmem:[#allocation4 + $0x8d0] sm:$0xff]
    %v7058 = vld [vmem:[#allocation4 + $0x8d8] sm:$0xff]
    %v7059 = vld [vmem:[#allocation4 + $0x8e0] sm:$0xff]
    %v7060 = vld [vmem:[#allocation4 + $0x8e8] sm:$0xff]
    %v7061 = vld [vmem:[#allocation4 + $0x8f0] sm:$0xff]
    %v7062 = vld [vmem:[#allocation4 + $0x8f8] sm:$0xff]
    %v7063 = vld [vmem:[#allocation4 + $0x900] sm:$0xff]
    %v7064 = vld [vmem:[#allocation4 + $0x908] sm:$0xff]
    %v7065 = vld [vmem:[#allocation4 + $0x910] sm:$0xff]
    %v7066 = vld [vmem:[#allocation4 + $0x918] sm:$0xff]
    %v7067 = vld [vmem:[#allocation4 + $0x920] sm:$0xff]
    %v7068 = vld [vmem:[#allocation4 + $0x928] sm:$0xff]
    %v7069 = vld [vmem:[#allocation4 + $0x930] sm:$0xff]
    %v7070 = vld [vmem:[#allocation4 + $0x938] sm:$0xff]
    %v7071 = vld [vmem:[#allocation4 + $0x940] sm:$0xff]
    %v7072 = vld [vmem:[#allocation4 + $0x948] sm:$0xff]
    %v7073 = vld [vmem:[#allocation4 + $0x950] sm:$0xff]
    %v7074 = vld [vmem:[#allocation4 + $0x958] sm:$0xff]
    %v7075 = vld [vmem:[#allocation4 + $0x960] sm:$0xff]
    %v7076 = vld [vmem:[#allocation4 + $0x968] sm:$0xff]
    %v7077 = vld [vmem:[#allocation4 + $0x970] sm:$0xff]
    %v7078 = vld [vmem:[#allocation4 + $0x978] sm:$0xff]
    %v7079 = vld [vmem:[#allocation4 + $0x980] sm:$0xff]
    %v7080 = vld [vmem:[#allocation4 + $0x988] sm:$0xff]
    %v7081 = vld [vmem:[#allocation4 + $0x990] sm:$0xff]
    %v7082 = vld [vmem:[#allocation4 + $0x998] sm:$0xff]
    %v7083 = vld [vmem:[#allocation4 + $0x9a0] sm:$0xff]
    %v7084 = vld [vmem:[#allocation4 + $0x9a8] sm:$0xff]
    %v7085 = vld [vmem:[#allocation4 + $0x9b0] sm:$0xff]
    %v7086 = vld [vmem:[#allocation4 + $0x9b8] sm:$0xff]
    %v7087 = vld [vmem:[#allocation4 + $0x9c0] sm:$0xff]
    %v7088 = vld [vmem:[#allocation4 + $0x9c8] sm:$0xff]
    %v7089 = vld [vmem:[#allocation4 + $0x9d0] sm:$0xff]
    %v7090 = vld [vmem:[#allocation4 + $0x9d8] sm:$0xff]
    %v7091 = vld [vmem:[#allocation4 + $0x9e0] sm:$0xff]
    %v7092 = vld [vmem:[#allocation4 + $0x9e8] sm:$0xff]
    %v7093 = vld [vmem:[#allocation4 + $0x9f0] sm:$0xff]
    %v7094 = vld [vmem:[#allocation4 + $0x9f8] sm:$0xff]
    %v7095 = vld [vmem:[#allocation4 + $0xa00] sm:$0xff]
    %v7096 = vld [vmem:[#allocation4 + $0xa08] sm:$0xff]
    %v7097 = vld [vmem:[#allocation4 + $0xa10] sm:$0xff]
    %v7098 = vld [vmem:[#allocation4 + $0xa18] sm:$0xff]
    %v7099 = vld [vmem:[#allocation4 + $0xa20] sm:$0xff]
    %v7100 = vld [vmem:[#allocation4 + $0xa28] sm:$0xff]
    %v7101 = vld [vmem:[#allocation4 + $0xa30] sm:$0xff]
    %v7102 = vld [vmem:[#allocation4 + $0xa38] sm:$0xff]
    %v7103 = vld [vmem:[#allocation4 + $0xa40] sm:$0xff]
    %v7104 = vld [vmem:[#allocation4 + $0xa48] sm:$0xff]
    %v7105 = vld [vmem:[#allocation4 + $0xa50] sm:$0xff]
    %v7106 = vld [vmem:[#allocation4 + $0xa58] sm:$0xff]
    %v7107 = vld [vmem:[#allocation4 + $0xa60] sm:$0xff]
    %v7108 = vld [vmem:[#allocation4 + $0xa68] sm:$0xff]
    %v7109 = vld [vmem:[#allocation4 + $0xa70] sm:$0xff]
    %v7110 = vld [vmem:[#allocation4 + $0xa78] sm:$0xff]
    %v7111 = vld [vmem:[#allocation4 + $0xa80] sm:$0xff]
    %v7112 = vld [vmem:[#allocation4 + $0xa88] sm:$0xff]
    %v7113 = vld [vmem:[#allocation4 + $0xa90] sm:$0xff]
    %v7114 = vld [vmem:[#allocation4 + $0xa98] sm:$0xff]
    %v7115 = vld [vmem:[#allocation4 + $0xaa0] sm:$0xff]
    %v7116 = vld [vmem:[#allocation4 + $0xaa8] sm:$0xff]
    %v7117 = vld [vmem:[#allocation4 + $0xab0] sm:$0xff]
    %v7118 = vld [vmem:[#allocation4 + $0xab8] sm:$0xff]
    %v7119 = vld [vmem:[#allocation4 + $0xac0] sm:$0xff]
    %v7120 = vld [vmem:[#allocation4 + $0xac8] sm:$0xff]
    %v7121 = vld [vmem:[#allocation4 + $0xad0] sm:$0xff]
    %v7122 = vld [vmem:[#allocation4 + $0xad8] sm:$0xff]
    %v7123 = vld [vmem:[#allocation4 + $0xae0] sm:$0xff]
    %v7124 = vld [vmem:[#allocation4 + $0xae8] sm:$0xff]
    %v7125 = vld [vmem:[#allocation4 + $0xaf0] sm:$0xff]
    %v7126 = vld [vmem:[#allocation4 + $0xaf8] sm:$0xff]
    %v7127 = vld [vmem:[#allocation4 + $0xb00] sm:$0xff]
    %v7128 = vld [vmem:[#allocation4 + $0xb08] sm:$0xff]
    %v7129 = vld [vmem:[#allocation4 + $0xb10] sm:$0xff]
    %v7130 = vld [vmem:[#allocation4 + $0xb18] sm:$0xff]
    %v7131 = vld [vmem:[#allocation4 + $0xb20] sm:$0xff]
    %v7132 = vld [vmem:[#allocation4 + $0xb28] sm:$0xff]
    %v7133 = vld [vmem:[#allocation4 + $0xb30] sm:$0xff]
    %v7134 = vld [vmem:[#allocation4 + $0xb38] sm:$0xff]
    %v7135 = vld [vmem:[#allocation4 + $0xb40] sm:$0xff]
    %v7136 = vld [vmem:[#allocation4 + $0xb48] sm:$0xff]
    %v7137 = vld [vmem:[#allocation4 + $0xb50] sm:$0xff]
    %v7138 = vld [vmem:[#allocation4 + $0xb58] sm:$0xff]
    %v7139 = vld [vmem:[#allocation4 + $0xb60] sm:$0xff]
    %v7140 = vld [vmem:[#allocation4 + $0xb68] sm:$0xff]
    %v7141 = vld [vmem:[#allocation4 + $0xb70] sm:$0xff]
    %v7142 = vld [vmem:[#allocation4 + $0xb78] sm:$0xff]
    %v7143 = vld [vmem:[#allocation4 + $0xb80] sm:$0xff]
    %v7144 = vld [vmem:[#allocation4 + $0xb88] sm:$0xff]
    %v7145 = vld [vmem:[#allocation4 + $0xb90] sm:$0xff]
    %v7146 = vld [vmem:[#allocation4 + $0xb98] sm:$0xff]
    %v7147 = vld [vmem:[#allocation4 + $0xba0] sm:$0xff]
    %v7148 = vld [vmem:[#allocation4 + $0xba8] sm:$0xff]
    %v7149 = vld [vmem:[#allocation4 + $0xbb0] sm:$0xff]
    %v7150 = vld [vmem:[#allocation4 + $0xbb8] sm:$0xff]
    %v7151 = vld [vmem:[#allocation4 + $0xbc0] sm:$0xff]
    %v7152 = vld [vmem:[#allocation4 + $0xbc8] sm:$0xff]
    %v7153 = vld [vmem:[#allocation4 + $0xbd0] sm:$0xff]
    %v7154 = vld [vmem:[#allocation4 + $0xbd8] sm:$0xff]
    %v7155 = vld [vmem:[#allocation4 + $0xbe0] sm:$0xff]
    %v7156 = vld [vmem:[#allocation4 + $0xbe8] sm:$0xff]
    %v7157 = vld [vmem:[#allocation4 + $0xbf0] sm:$0xff]
    %v7158 = vld [vmem:[#allocation4 + $0xbf8] sm:$0xff]
    %v7159 = vld [vmem:[#allocation4 + $0xc00] sm:$0xff]
    %v7160 = vld [vmem:[#allocation4 + $0xc08] sm:$0xff]
    %v7161 = vld [vmem:[#allocation4 + $0xc10] sm:$0xff]
    %v7162 = vld [vmem:[#allocation4 + $0xc18] sm:$0xff]
    %v7163 = vld [vmem:[#allocation4 + $0xc20] sm:$0xff]
    %v7164 = vld [vmem:[#allocation4 + $0xc28] sm:$0xff]
    %v7165 = vld [vmem:[#allocation4 + $0xc30] sm:$0xff]
    %v7166 = vld [vmem:[#allocation4 + $0xc38] sm:$0xff]
    %v7167 = vld [vmem:[#allocation4 + $0xc40] sm:$0xff]
    %v7168 = vld [vmem:[#allocation4 + $0xc48] sm:$0xff]
    %v7169 = vld [vmem:[#allocation4 + $0xc50] sm:$0xff]
    %v7170 = vld [vmem:[#allocation4 + $0xc58] sm:$0xff]
    %v7171 = vld [vmem:[#allocation4 + $0xc60] sm:$0xff]
    %v7172 = vld [vmem:[#allocation4 + $0xc68] sm:$0xff]
    %v7173 = vld [vmem:[#allocation4 + $0xc70] sm:$0xff]
    %v7174 = vld [vmem:[#allocation4 + $0xc78] sm:$0xff]
    %v7175 = vld [vmem:[#allocation4 + $0xc80] sm:$0xff]
    %v7176 = vld [vmem:[#allocation4 + $0xc88] sm:$0xff]
    %v7177 = vld [vmem:[#allocation4 + $0xc90] sm:$0xff]
    %v7178 = vld [vmem:[#allocation4 + $0xc98] sm:$0xff]
    %v7179 = vld [vmem:[#allocation4 + $0xca0] sm:$0xff]
    %v7180 = vld [vmem:[#allocation4 + $0xca8] sm:$0xff]
    %v7181 = vld [vmem:[#allocation4 + $0xcb0] sm:$0xff]
    %v7182 = vld [vmem:[#allocation4 + $0xcb8] sm:$0xff]
    %v7183 = vld [vmem:[#allocation4 + $0xcc0] sm:$0xff]
    %v7184 = vld [vmem:[#allocation4 + $0xcc8] sm:$0xff]
    %v7185 = vld [vmem:[#allocation4 + $0xcd0] sm:$0xff]
    %v7186 = vld [vmem:[#allocation4 + $0xcd8] sm:$0xff]
    %v7187 = vld [vmem:[#allocation4 + $0xce0] sm:$0xff]
    %v7188 = vld [vmem:[#allocation4 + $0xce8] sm:$0xff]
    %v7189 = vld [vmem:[#allocation4 + $0xcf0] sm:$0xff]
    %v7190 = vld [vmem:[#allocation4 + $0xcf8] sm:$0xff]
    %v7191 = vld [vmem:[#allocation4 + $0xd00] sm:$0xff]
    %v7192 = vld [vmem:[#allocation4 + $0xd08] sm:$0xff]
    %v7193 = vld [vmem:[#allocation4 + $0xd10] sm:$0xff]
    %v7194 = vld [vmem:[#allocation4 + $0xd18] sm:$0xff]
    %v7195 = vld [vmem:[#allocation4 + $0xd20] sm:$0xff]
    %v7196 = vld [vmem:[#allocation4 + $0xd28] sm:$0xff]
    %v7197 = vld [vmem:[#allocation4 + $0xd30] sm:$0xff]
    %v7198 = vld [vmem:[#allocation4 + $0xd38] sm:$0xff]
    %v7199 = vld [vmem:[#allocation4 + $0xd40] sm:$0xff]
    %v7200 = vld [vmem:[#allocation4 + $0xd48] sm:$0xff]
    %v7201 = vld [vmem:[#allocation4 + $0xd50] sm:$0xff]
    %v7202 = vld [vmem:[#allocation4 + $0xd58] sm:$0xff]
    %v7203 = vld [vmem:[#allocation4 + $0xd60] sm:$0xff]
    %v7204 = vld [vmem:[#allocation4 + $0xd68] sm:$0xff]
    %v7205 = vld [vmem:[#allocation4 + $0xd70] sm:$0xff]
    %v7206 = vld [vmem:[#allocation4 + $0xd78] sm:$0xff]
    %v7207 = vld [vmem:[#allocation4 + $0xd80] sm:$0xff]
    %v7208 = vld [vmem:[#allocation4 + $0xd88] sm:$0xff]
    %v7209 = vld [vmem:[#allocation4 + $0xd90] sm:$0xff]
    %v7210 = vld [vmem:[#allocation4 + $0xd98] sm:$0xff]
    %v7211 = vld [vmem:[#allocation4 + $0xda0] sm:$0xff]
    %v7212 = vld [vmem:[#allocation4 + $0xda8] sm:$0xff]
    %v7213 = vld [vmem:[#allocation4 + $0xdb0] sm:$0xff]
    %v7214 = vld [vmem:[#allocation4 + $0xdb8] sm:$0xff]
    %v7215 = vld [vmem:[#allocation4 + $0xdc0] sm:$0xff]
    %v7216 = vld [vmem:[#allocation4 + $0xdc8] sm:$0xff]
    %v7217 = vld [vmem:[#allocation4 + $0xdd0] sm:$0xff]
    %v7218 = vld [vmem:[#allocation4 + $0xdd8] sm:$0xff]
    %v7219 = vld [vmem:[#allocation4 + $0xde0] sm:$0xff]
    %v7220 = vld [vmem:[#allocation4 + $0xde8] sm:$0xff]
    %v7221 = vld [vmem:[#allocation4 + $0xdf0] sm:$0xff]
    %v7222 = vld [vmem:[#allocation4 + $0xdf8] sm:$0xff]
    %v7223 = vld [vmem:[#allocation4 + $0xe00] sm:$0xff]
    %v7224 = vld [vmem:[#allocation4 + $0xe08] sm:$0xff]
    %v7225 = vld [vmem:[#allocation4 + $0xe10] sm:$0xff]
    %v7226 = vld [vmem:[#allocation4 + $0xe18] sm:$0xff]
    %v7227 = vld [vmem:[#allocation4 + $0xe20] sm:$0xff]
    %v7228 = vld [vmem:[#allocation4 + $0xe28] sm:$0xff]
    %v7229 = vld [vmem:[#allocation4 + $0xe30] sm:$0xff]
    %v7230 = vld [vmem:[#allocation4 + $0xe38] sm:$0xff]
    %v7231 = vld [vmem:[#allocation4 + $0xe40] sm:$0xff]
    %v7232 = vld [vmem:[#allocation4 + $0xe48] sm:$0xff]
    %v7233 = vld [vmem:[#allocation4 + $0xe50] sm:$0xff]
    %v7234 = vld [vmem:[#allocation4 + $0xe58] sm:$0xff]
    %v7235 = vld [vmem:[#allocation4 + $0xe60] sm:$0xff]
    %v7236 = vld [vmem:[#allocation4 + $0xe68] sm:$0xff]
    %v7237 = vld [vmem:[#allocation4 + $0xe70] sm:$0xff]
    %v7238 = vld [vmem:[#allocation4 + $0xe78] sm:$0xff]
    %v7239 = vld [vmem:[#allocation4 + $0xe80] sm:$0xff]
    %v7240 = vld [vmem:[#allocation4 + $0xe88] sm:$0xff]
    %v7241 = vld [vmem:[#allocation4 + $0xe90] sm:$0xff]
    %v7242 = vld [vmem:[#allocation4 + $0xe98] sm:$0xff]
    %v7243 = vld [vmem:[#allocation4 + $0xea0] sm:$0xff]
    %v7244 = vld [vmem:[#allocation4 + $0xea8] sm:$0xff]
    %v7245 = vld [vmem:[#allocation4 + $0xeb0] sm:$0xff]
    %v7246 = vld [vmem:[#allocation4 + $0xeb8] sm:$0xff]
    %v7247 = vld [vmem:[#allocation4 + $0xec0] sm:$0xff]
    %v7248 = vld [vmem:[#allocation4 + $0xec8] sm:$0xff]
    %v7249 = vld [vmem:[#allocation4 + $0xed0] sm:$0xff]
    %v7250 = vld [vmem:[#allocation4 + $0xed8] sm:$0xff]
    %v7251 = vld [vmem:[#allocation4 + $0xee0] sm:$0xff]
    %v7252 = vld [vmem:[#allocation4 + $0xee8] sm:$0xff]
    %v7253 = vld [vmem:[#allocation4 + $0xef0] sm:$0xff]
    %v7254 = vld [vmem:[#allocation4 + $0xef8] sm:$0xff]
    %v7255 = vld [vmem:[#allocation4 + $0xf00] sm:$0xff]
    %v7256 = vld [vmem:[#allocation4 + $0xf08] sm:$0xff]
    %v7257 = vld [vmem:[#allocation4 + $0xf10] sm:$0xff]
    %v7258 = vld [vmem:[#allocation4 + $0xf18] sm:$0xff]
    %v7259 = vld [vmem:[#allocation4 + $0xf20] sm:$0xff]
    %v7260 = vld [vmem:[#allocation4 + $0xf28] sm:$0xff]
    %v7261 = vld [vmem:[#allocation4 + $0xf30] sm:$0xff]
    %v7262 = vld [vmem:[#allocation4 + $0xf38] sm:$0xff]
    %v7263 = vld [vmem:[#allocation4 + $0xf40] sm:$0xff]
    %v7264 = vld [vmem:[#allocation4 + $0xf48] sm:$0xff]
    %v7265 = vld [vmem:[#allocation4 + $0xf50] sm:$0xff]
    %v7266 = vld [vmem:[#allocation4 + $0xf58] sm:$0xff]
    %v7267 = vld [vmem:[#allocation4 + $0xf60] sm:$0xff]
    %v7268 = vld [vmem:[#allocation4 + $0xf68] sm:$0xff]
    %v7269 = vld [vmem:[#allocation4 + $0xf70] sm:$0xff]
    %v7270 = vld [vmem:[#allocation4 + $0xf78] sm:$0xff]
    %v7271 = vld [vmem:[#allocation4 + $0xf80] sm:$0xff]
    %v7272 = vld [vmem:[#allocation4 + $0xf88] sm:$0xff]
    %v7273 = vld [vmem:[#allocation4 + $0xf90] sm:$0xff]
    %v7274 = vld [vmem:[#allocation4 + $0xf98] sm:$0xff]
    %v7275 = vld [vmem:[#allocation4 + $0xfa0] sm:$0xff]
    %v7276 = vld [vmem:[#allocation4 + $0xfa8] sm:$0xff]
    %v7277 = vld [vmem:[#allocation4 + $0xfb0] sm:$0xff]
    %v7278 = vld [vmem:[#allocation4 + $0xfb8] sm:$0xff]
    %v7279 = vld [vmem:[#allocation4 + $0xfc0] sm:$0xff]
    %v7280 = vld [vmem:[#allocation4 + $0xfc8] sm:$0xff]
    %v7281 = vld [vmem:[#allocation4 + $0xfd0] sm:$0xff]
    %v7282 = vld [vmem:[#allocation4 + $0xfd8] sm:$0xff]
    %v7283 = vld [vmem:[#allocation4 + $0xfe0] sm:$0xff]
    %v7284 = vld [vmem:[#allocation4 + $0xfe8] sm:$0xff]
    %v7285 = vld [vmem:[#allocation4 + $0xff0] sm:$0xff]
    %v7286 = vld [vmem:[#allocation4 + $0xff8] sm:$0xff]
    %v7287 = vld [vmem:[#allocation4 + $0x1000] sm:$0xff]
    %v7288 = vld [vmem:[#allocation4 + $0x1008] sm:$0xff]
    %v7289 = vld [vmem:[#allocation4 + $0x1010] sm:$0xff]
    %v7290 = vld [vmem:[#allocation4 + $0x1018] sm:$0xff]
    %v7291 = vld [vmem:[#allocation4 + $0x1020] sm:$0xff]
    %v7292 = vld [vmem:[#allocation4 + $0x1028] sm:$0xff]
    %v7293 = vld [vmem:[#allocation4 + $0x1030] sm:$0xff]
    %v7294 = vld [vmem:[#allocation4 + $0x1038] sm:$0xff]
    %v7295 = vld [vmem:[#allocation4 + $0x1040] sm:$0xff]
    %v7296 = vld [vmem:[#allocation4 + $0x1048] sm:$0xff]
    %v7297 = vld [vmem:[#allocation4 + $0x1050] sm:$0xff]
    %v7298 = vld [vmem:[#allocation4 + $0x1058] sm:$0xff]
    %v7299 = vld [vmem:[#allocation4 + $0x1060] sm:$0xff]
    %v7300 = vld [vmem:[#allocation4 + $0x1068] sm:$0xff]
    %v7301 = vld [vmem:[#allocation4 + $0x1070] sm:$0xff]
    %v7302 = vld [vmem:[#allocation4 + $0x1078] sm:$0xff]
    %v7303 = vld [vmem:[#allocation4 + $0x1080] sm:$0xff]
    %v7304 = vld [vmem:[#allocation4 + $0x1088] sm:$0xff]
    %v7305 = vld [vmem:[#allocation4 + $0x1090] sm:$0xff]
    %v7306 = vld [vmem:[#allocation4 + $0x1098] sm:$0xff]
    %v7307 = vld [vmem:[#allocation4 + $0x10a0] sm:$0xff]
    %v7308 = vld [vmem:[#allocation4 + $0x10a8] sm:$0xff]
    %v7309 = vld [vmem:[#allocation4 + $0x10b0] sm:$0xff]
    %v7310 = vld [vmem:[#allocation4 + $0x10b8] sm:$0xff]
    %v7311 = vld [vmem:[#allocation4 + $0x10c0] sm:$0xff]
    %v7312 = vld [vmem:[#allocation4 + $0x10c8] sm:$0xff]
    %v7313 = vld [vmem:[#allocation4 + $0x10d0] sm:$0xff]
    %v7314 = vld [vmem:[#allocation4 + $0x10d8] sm:$0xff]
    %v7315 = vld [vmem:[#allocation4 + $0x10e0] sm:$0xff]
    %v7316 = vld [vmem:[#allocation4 + $0x10e8] sm:$0xff]
    %v7317 = vld [vmem:[#allocation4 + $0x10f0] sm:$0xff]
    %v7318 = vld [vmem:[#allocation4 + $0x10f8] sm:$0xff]
    %v7319 = vld [vmem:[#allocation4 + $0x1100] sm:$0xff]
    %v7320 = vld [vmem:[#allocation4 + $0x1108] sm:$0xff]
    %v7321 = vld [vmem:[#allocation4 + $0x1110] sm:$0xff]
    %v7322 = vld [vmem:[#allocation4 + $0x1118] sm:$0xff]
    %v7323 = vld [vmem:[#allocation4 + $0x1120] sm:$0xff]
    %v7324 = vld [vmem:[#allocation4 + $0x1128] sm:$0xff]
    %v7325 = vld [vmem:[#allocation4 + $0x1130] sm:$0xff]
    %v7326 = vld [vmem:[#allocation4 + $0x1138] sm:$0xff]
    %v7327 = vld [vmem:[#allocation4 + $0x1140] sm:$0xff]
    %v7328 = vld [vmem:[#allocation4 + $0x1148] sm:$0xff]
    %v7329 = vld [vmem:[#allocation4 + $0x1150] sm:$0xff]
    %v7330 = vld [vmem:[#allocation4 + $0x1158] sm:$0xff]
    %v7331 = vld [vmem:[#allocation4 + $0x1160] sm:$0xff]
    %v7332 = vld [vmem:[#allocation4 + $0x1168] sm:$0xff]
    %v7333 = vld [vmem:[#allocation4 + $0x1170] sm:$0xff]
    %v7334 = vld [vmem:[#allocation4 + $0x1178] sm:$0xff]
    %v7335 = vld [vmem:[#allocation4 + $0x1180] sm:$0xff]
    %v7336 = vld [vmem:[#allocation4 + $0x1188] sm:$0xff]
    %v7337 = vld [vmem:[#allocation4 + $0x1190] sm:$0xff]
    %v7338 = vld [vmem:[#allocation4 + $0x1198] sm:$0xff]
    %v7339 = vld [vmem:[#allocation4 + $0x11a0] sm:$0xff]
    %v7340 = vld [vmem:[#allocation4 + $0x11a8] sm:$0xff]
    %v7341 = vld [vmem:[#allocation4 + $0x11b0] sm:$0xff]
    %v7342 = vld [vmem:[#allocation4 + $0x11b8] sm:$0xff]
    %v7343 = vld [vmem:[#allocation4 + $0x11c0] sm:$0xff]
    %v7344 = vld [vmem:[#allocation4 + $0x11c8] sm:$0xff]
    %v7345 = vld [vmem:[#allocation4 + $0x11d0] sm:$0xff]
    %v7346 = vld [vmem:[#allocation4 + $0x11d8] sm:$0xff]
    %v7347 = vld [vmem:[#allocation4 + $0x11e0] sm:$0xff]
    %v7348 = vld [vmem:[#allocation4 + $0x11e8] sm:$0xff]
    %v7349 = vld [vmem:[#allocation4 + $0x11f0] sm:$0xff]
    %v7350 = vld [vmem:[#allocation4 + $0x11f8] sm:$0xff]
    %v7351 = vld [vmem:[#allocation4 + $0x1200] sm:$0xff]
    %v7352 = vld [vmem:[#allocation4 + $0x1208] sm:$0xff]
    %v7353 = vld [vmem:[#allocation4 + $0x1210] sm:$0xff]
    %v7354 = vld [vmem:[#allocation4 + $0x1218] sm:$0xff]
    %v7355 = vld [vmem:[#allocation4 + $0x1220] sm:$0xff]
    %v7356 = vld [vmem:[#allocation4 + $0x1228] sm:$0xff]
    %v7357 = vld [vmem:[#allocation4 + $0x1230] sm:$0xff]
    %v7358 = vld [vmem:[#allocation4 + $0x1238] sm:$0xff]
    %v7359 = vld [vmem:[#allocation4 + $0x1240] sm:$0xff]
    %v7360 = vld [vmem:[#allocation4 + $0x1248] sm:$0xff]
    %v7361 = vld [vmem:[#allocation4 + $0x1250] sm:$0xff]
    %v7362 = vld [vmem:[#allocation4 + $0x1258] sm:$0xff]
    %v7363 = vld [vmem:[#allocation4 + $0x1260] sm:$0xff]
    %v7364 = vld [vmem:[#allocation4 + $0x1268] sm:$0xff]
    %v7365 = vld [vmem:[#allocation4 + $0x1270] sm:$0xff]
    %v7366 = vld [vmem:[#allocation4 + $0x1278] sm:$0xff]
    %v7367 = vld [vmem:[#allocation4 + $0x1280] sm:$0xff]
    %v7368 = vld [vmem:[#allocation4 + $0x1288] sm:$0xff]
    %v7369 = vld [vmem:[#allocation4 + $0x1290] sm:$0xff]
    %v7370 = vld [vmem:[#allocation4 + $0x1298] sm:$0xff]
    %v7371 = vld [vmem:[#allocation4 + $0x12a0] sm:$0xff]
    %v7372 = vld [vmem:[#allocation4 + $0x12a8] sm:$0xff]
    %v7373 = vld [vmem:[#allocation4 + $0x12b0] sm:$0xff]
    %v7374 = vld [vmem:[#allocation4 + $0x12b8] sm:$0xff]
    %v7375 = vld [vmem:[#allocation4 + $0x12c0] sm:$0xff]
    %v7376 = vld [vmem:[#allocation4 + $0x12c8] sm:$0xff]
    %v7377 = vld [vmem:[#allocation4 + $0x12d0] sm:$0xff]
    %v7378 = vld [vmem:[#allocation4 + $0x12d8] sm:$0xff]
    %v7379 = vld [vmem:[#allocation4 + $0x12e0] sm:$0xff]
    %v7380 = vld [vmem:[#allocation4 + $0x12e8] sm:$0xff]
    %v7381 = vld [vmem:[#allocation4 + $0x12f0] sm:$0xff]
    %v7382 = vld [vmem:[#allocation4 + $0x12f8] sm:$0xff]
    %v7383 = vld [vmem:[#allocation4 + $0x1300] sm:$0xff]
    %v7384 = vld [vmem:[#allocation4 + $0x1308] sm:$0xff]
    %v7385 = vld [vmem:[#allocation4 + $0x1310] sm:$0xff]
    %v7386 = vld [vmem:[#allocation4 + $0x1318] sm:$0xff]
    %v7387 = vld [vmem:[#allocation4 + $0x1320] sm:$0xff]
    %v7388 = vld [vmem:[#allocation4 + $0x1328] sm:$0xff]
    %v7389 = vld [vmem:[#allocation4 + $0x1330] sm:$0xff]
    %v7390 = vld [vmem:[#allocation4 + $0x1338] sm:$0xff]
    %v7391 = vld [vmem:[#allocation4 + $0x1340] sm:$0xff]
    %v7392 = vld [vmem:[#allocation4 + $0x1348] sm:$0xff]
    %v7393 = vld [vmem:[#allocation4 + $0x1350] sm:$0xff]
    %v7394 = vld [vmem:[#allocation4 + $0x1358] sm:$0xff]
    %v7395 = vld [vmem:[#allocation4 + $0x1360] sm:$0xff]
    %v7396 = vld [vmem:[#allocation4 + $0x1368] sm:$0xff]
    %v7397 = vld [vmem:[#allocation4 + $0x1370] sm:$0xff]
    %v7398 = vld [vmem:[#allocation4 + $0x1378] sm:$0xff]
    %v7399 = vld [vmem:[#allocation4 + $0x1380] sm:$0xff]
    %v7400 = vld [vmem:[#allocation4 + $0x1388] sm:$0xff]
    %v7401 = vld [vmem:[#allocation4 + $0x1390] sm:$0xff]
    %v7402 = vld [vmem:[#allocation4 + $0x1398] sm:$0xff]
    %v7403 = vld [vmem:[#allocation4 + $0x13a0] sm:$0xff]
    %v7404 = vld [vmem:[#allocation4 + $0x13a8] sm:$0xff]
    %v7405 = vld [vmem:[#allocation4 + $0x13b0] sm:$0xff]
    %v7406 = vld [vmem:[#allocation4 + $0x13b8] sm:$0xff]
    %v7407 = vld [vmem:[#allocation4 + $0x13c0] sm:$0xff]
    %v7408 = vld [vmem:[#allocation4 + $0x13c8] sm:$0xff]
    %v7409 = vld [vmem:[#allocation4 + $0x13d0] sm:$0xff]
    %v7410 = vld [vmem:[#allocation4 + $0x13d8] sm:$0xff]
    %v7411 = vld [vmem:[#allocation4 + $0x13e0] sm:$0xff]
    %v7412 = vld [vmem:[#allocation4 + $0x13e8] sm:$0xff]
    %v7413 = vld [vmem:[#allocation4 + $0x13f0] sm:$0xff]
    %v7414 = vld [vmem:[#allocation4 + $0x13f8] sm:$0xff]
    %v7415 = vld [vmem:[#allocation4 + $0x1400] sm:$0xff]
    %v7416 = vld [vmem:[#allocation4 + $0x1408] sm:$0xff]
    %v7417 = vld [vmem:[#allocation4 + $0x1410] sm:$0xff]
    %v7418 = vld [vmem:[#allocation4 + $0x1418] sm:$0xff]
    %v7419 = vld [vmem:[#allocation4 + $0x1420] sm:$0xff]
    %v7420 = vld [vmem:[#allocation4 + $0x1428] sm:$0xff]
    %v7421 = vld [vmem:[#allocation4 + $0x1430] sm:$0xff]
    %v7422 = vld [vmem:[#allocation4 + $0x1438] sm:$0xff]
    %v7423 = vld [vmem:[#allocation4 + $0x1440] sm:$0xff]
    %v7424 = vld [vmem:[#allocation4 + $0x1448] sm:$0xff]
    %v7425 = vld [vmem:[#allocation4 + $0x1450] sm:$0xff]
    %v7426 = vld [vmem:[#allocation4 + $0x1458] sm:$0xff]
    %v7427 = vld [vmem:[#allocation4 + $0x1460] sm:$0xff]
    %v7428 = vld [vmem:[#allocation4 + $0x1468] sm:$0xff]
    %v7429 = vld [vmem:[#allocation4 + $0x1470] sm:$0xff]
    %v7430 = vld [vmem:[#allocation4 + $0x1478] sm:$0xff]
    %v7431 = vld [vmem:[#allocation4 + $0x1480] sm:$0xff]
    %v7432 = vld [vmem:[#allocation4 + $0x1488] sm:$0xff]
    %v7433 = vld [vmem:[#allocation4 + $0x1490] sm:$0xff]
    %v7434 = vld [vmem:[#allocation4 + $0x1498] sm:$0xff]
    %v7435 = vld [vmem:[#allocation4 + $0x14a0] sm:$0xff]
    %v7436 = vld [vmem:[#allocation4 + $0x14a8] sm:$0xff]
    %v7437 = vld [vmem:[#allocation4 + $0x14b0] sm:$0xff]
    %v7438 = vld [vmem:[#allocation4 + $0x14b8] sm:$0xff]
    %v7439 = vld [vmem:[#allocation4 + $0x14c0] sm:$0xff]
    %v7440 = vld [vmem:[#allocation4 + $0x14c8] sm:$0xff]
    %v7441 = vld [vmem:[#allocation4 + $0x14d0] sm:$0xff]
    %v7442 = vld [vmem:[#allocation4 + $0x14d8] sm:$0xff]
    %v7443 = vld [vmem:[#allocation4 + $0x14e0] sm:$0xff]
    %v7444 = vld [vmem:[#allocation4 + $0x14e8] sm:$0xff]
    %v7445 = vld [vmem:[#allocation4 + $0x14f0] sm:$0xff]
    %v7446 = vld [vmem:[#allocation4 + $0x14f8] sm:$0xff]
    %v7447 = vld [vmem:[#allocation4 + $0x1500] sm:$0xff]
    %v7448 = vld [vmem:[#allocation4 + $0x1508] sm:$0xff]
    %v7449 = vld [vmem:[#allocation4 + $0x1510] sm:$0xff]
    %v7450 = vld [vmem:[#allocation4 + $0x1518] sm:$0xff]
    %v7451 = vld [vmem:[#allocation4 + $0x1520] sm:$0xff]
    %v7452 = vld [vmem:[#allocation4 + $0x1528] sm:$0xff]
    %v7453 = vld [vmem:[#allocation4 + $0x1530] sm:$0xff]
    %v7454 = vld [vmem:[#allocation4 + $0x1538] sm:$0xff]
    %v7455 = vld [vmem:[#allocation4 + $0x1540] sm:$0xff]
    %v7456 = vld [vmem:[#allocation4 + $0x1548] sm:$0xff]
    %v7457 = vld [vmem:[#allocation4 + $0x1550] sm:$0xff]
    %v7458 = vld [vmem:[#allocation4 + $0x1558] sm:$0xff]
    %v7459 = vld [vmem:[#allocation4 + $0x1560] sm:$0xff]
    %v7460 = vld [vmem:[#allocation4 + $0x1568] sm:$0xff]
    %v7461 = vld [vmem:[#allocation4 + $0x1570] sm:$0xff]
    %v7462 = vld [vmem:[#allocation4 + $0x1578] sm:$0xff]
    %v7463 = vld [vmem:[#allocation4 + $0x1580] sm:$0xff]
    %v7464 = vld [vmem:[#allocation4 + $0x1588] sm:$0xff]
    %v7465 = vld [vmem:[#allocation4 + $0x1590] sm:$0xff]
    %v7466 = vld [vmem:[#allocation4 + $0x1598] sm:$0xff]
    %v7467 = vld [vmem:[#allocation4 + $0x15a0] sm:$0xff]
    %v7468 = vld [vmem:[#allocation4 + $0x15a8] sm:$0xff]
    %v7469 = vld [vmem:[#allocation4 + $0x15b0] sm:$0xff]
    %v7470 = vld [vmem:[#allocation4 + $0x15b8] sm:$0xff]
    %v7471 = vld [vmem:[#allocation4 + $0x15c0] sm:$0xff]
    %v7472 = vld [vmem:[#allocation4 + $0x15c8] sm:$0xff]
    %v7473 = vld [vmem:[#allocation4 + $0x15d0] sm:$0xff]
    %v7474 = vld [vmem:[#allocation4 + $0x15d8] sm:$0xff]
    %v7475 = vld [vmem:[#allocation4 + $0x15e0] sm:$0xff]
    %v7476 = vld [vmem:[#allocation4 + $0x15e8] sm:$0xff]
    %v7477 = vld [vmem:[#allocation4 + $0x15f0] sm:$0xff]
    %v7478 = vld [vmem:[#allocation4 + $0x15f8] sm:$0xff]
    %v7479 = vld [vmem:[#allocation4 + $0x1600] sm:$0xff]
    %v7480 = vld [vmem:[#allocation4 + $0x1608] sm:$0xff]
    %v7481 = vld [vmem:[#allocation4 + $0x1610] sm:$0xff]
    %v7482 = vld [vmem:[#allocation4 + $0x1618] sm:$0xff]
    %v7483 = vld [vmem:[#allocation4 + $0x1620] sm:$0xff]
    %v7484 = vld [vmem:[#allocation4 + $0x1628] sm:$0xff]
    %v7485 = vld [vmem:[#allocation4 + $0x1630] sm:$0xff]
    %v7486 = vld [vmem:[#allocation4 + $0x1638] sm:$0xff]
    %v7487 = vld [vmem:[#allocation4 + $0x1640] sm:$0xff]
    %v7488 = vld [vmem:[#allocation4 + $0x1648] sm:$0xff]
    %v7489 = vld [vmem:[#allocation4 + $0x1650] sm:$0xff]
    %v7490 = vld [vmem:[#allocation4 + $0x1658] sm:$0xff]
    %v7491 = vld [vmem:[#allocation4 + $0x1660] sm:$0xff]
    %v7492 = vld [vmem:[#allocation4 + $0x1668] sm:$0xff]
    %v7493 = vld [vmem:[#allocation4 + $0x1670] sm:$0xff]
    %v7494 = vld [vmem:[#allocation4 + $0x1678] sm:$0xff]
    %v7495 = vld [vmem:[#allocation4 + $0x1680] sm:$0xff]
    %v7496 = vld [vmem:[#allocation4 + $0x1688] sm:$0xff]
    %v7497 = vld [vmem:[#allocation4 + $0x1690] sm:$0xff]
    %v7498 = vld [vmem:[#allocation4 + $0x1698] sm:$0xff]
    %v7499 = vld [vmem:[#allocation4 + $0x16a0] sm:$0xff]
    %v7500 = vld [vmem:[#allocation4 + $0x16a8] sm:$0xff]
    %v7501 = vld [vmem:[#allocation4 + $0x16b0] sm:$0xff]
    %v7502 = vld [vmem:[#allocation4 + $0x16b8] sm:$0xff]
    %v7503 = vld [vmem:[#allocation4 + $0x16c0] sm:$0xff]
    %v7504 = vld [vmem:[#allocation4 + $0x16c8] sm:$0xff]
    %v7505 = vld [vmem:[#allocation4 + $0x16d0] sm:$0xff]
    %v7506 = vld [vmem:[#allocation4 + $0x16d8] sm:$0xff]
    %v7507 = vld [vmem:[#allocation4 + $0x16e0] sm:$0xff]
    %v7508 = vld [vmem:[#allocation4 + $0x16e8] sm:$0xff]
    %v7509 = vld [vmem:[#allocation4 + $0x16f0] sm:$0xff]
    %v7510 = vld [vmem:[#allocation4 + $0x16f8] sm:$0xff]
    %v7511 = vld [vmem:[#allocation4 + $0x1700] sm:$0xff]
    %v7512 = vld [vmem:[#allocation4 + $0x1708] sm:$0xff]
    %v7513 = vld [vmem:[#allocation4 + $0x1710] sm:$0xff]
    %v7514 = vld [vmem:[#allocation4 + $0x1718] sm:$0xff]
    %v7515 = vld [vmem:[#allocation4 + $0x1720] sm:$0xff]
    %v7516 = vld [vmem:[#allocation4 + $0x1728] sm:$0xff]
    %v7517 = vld [vmem:[#allocation4 + $0x1730] sm:$0xff]
    %v7518 = vld [vmem:[#allocation4 + $0x1738] sm:$0xff]
    %v7519 = vld [vmem:[#allocation4 + $0x1740] sm:$0xff]
    %v7520 = vld [vmem:[#allocation4 + $0x1748] sm:$0xff]
    %v7521 = vld [vmem:[#allocation4 + $0x1750] sm:$0xff]
    %v7522 = vld [vmem:[#allocation4 + $0x1758] sm:$0xff]
    %v7523 = vld [vmem:[#allocation4 + $0x1760] sm:$0xff]
    %v7524 = vld [vmem:[#allocation4 + $0x1768] sm:$0xff]
    %v7525 = vld [vmem:[#allocation4 + $0x1770] sm:$0xff]
    %v7526 = vld [vmem:[#allocation4 + $0x1778] sm:$0xff]
    %v7527 = vld [vmem:[#allocation4 + $0x1780] sm:$0xff]
    %v7528 = vld [vmem:[#allocation4 + $0x1788] sm:$0xff]
    %v7529 = vld [vmem:[#allocation4 + $0x1790] sm:$0xff]
    %v7530 = vld [vmem:[#allocation4 + $0x1798] sm:$0xff]
    %v7531 = vld [vmem:[#allocation4 + $0x17a0] sm:$0xff]
    %v7532 = vld [vmem:[#allocation4 + $0x17a8] sm:$0xff]
    %v7533 = vld [vmem:[#allocation4 + $0x17b0] sm:$0xff]
    %v7534 = vld [vmem:[#allocation4 + $0x17b8] sm:$0xff]
    %v7535 = vld [vmem:[#allocation4 + $0x17c0] sm:$0xff]
    %v7536 = vld [vmem:[#allocation4 + $0x17c8] sm:$0xff]
    %v7537 = vld [vmem:[#allocation4 + $0x17d0] sm:$0xff]
    %v7538 = vld [vmem:[#allocation4 + $0x17d8] sm:$0xff]
    %v7539 = vld [vmem:[#allocation4 + $0x17e0] sm:$0xff]
    %v7540 = vld [vmem:[#allocation4 + $0x17e8] sm:$0xff]
    %v7541 = vld [vmem:[#allocation4 + $0x17f0] sm:$0xff]
    %v7542 = vld [vmem:[#allocation4 + $0x17f8] sm:$0xff]
    %v7543 = vpack.c.bf16 %v6768, %v6768
    %v7544 = vpack.c.bf16 %v6769, %v6769
    %v7545 = vpack.c.bf16 %v6770, %v6770
    %v7546 = vpack.c.bf16 %v6771, %v6771
    %v7547 = vld [vmem:[#allocation23] sm:$0xff]
    %v7548 = vld [vmem:[#allocation23 + $0x8] sm:$0xff]
    %v7549 = vld [vmem:[#allocation23 + $0x10] sm:$0xff]
    %v7553 = vlaneseq
    %v7554 = vshrl.u32 %v7553, 7
    %v7555 = vsub.s32 0, %v7554
    %v7556 = vrot.slane %v7547, %v7555
    %v7557 = vlaneseq
    %v7558 = vshrl.u32 %v7557, 7
    %v7559 = vsub.s32 1, %v7558
    %v7560 = vrot.slane %v7547, %v7559
    %v7561 = vlaneseq
    %v7562 = vshrl.u32 %v7561, 7
    %v7563 = vsub.s32 2, %v7562
    %v7564 = vrot.slane %v7547, %v7563
    %v7565 = vlaneseq
    %v7566 = vshrl.u32 %v7565, 7
    %v7567 = vsub.s32 3, %v7566
    %v7568 = vrot.slane %v7547, %v7567
    %v7569 = vlaneseq
    %v7570 = vshrl.u32 %v7569, 7
    %v7571 = vsub.s32 4, %v7570
    %v7572 = vrot.slane %v7547, %v7571
    %v7573 = vlaneseq
    %v7574 = vshrl.u32 %v7573, 7
    %v7575 = vsub.s32 5, %v7574
    %v7576 = vrot.slane %v7547, %v7575
    %v7577 = vlaneseq
    %v7578 = vshrl.u32 %v7577, 7
    %v7579 = vsub.s32 6, %v7578
    %v7580 = vrot.slane %v7547, %v7579
    %v7581 = vlaneseq
    %v7582 = vshrl.u32 %v7581, 7
    %v7583 = vsub.s32 7, %v7582
    %v7584 = vrot.slane %v7547, %v7583
    %v7585 = vlaneseq
    %v7586 = vshrl.u32 %v7585, 7
    %v7587 = vsub.s32 0, %v7586
    %v7588 = vrot.slane %v7548, %v7587
    %v7589 = vlaneseq
    %v7590 = vshrl.u32 %v7589, 7
    %v7591 = vsub.s32 1, %v7590
    %v7592 = vrot.slane %v7548, %v7591
    %v7593 = vlaneseq
    %v7594 = vshrl.u32 %v7593, 7
    %v7595 = vsub.s32 2, %v7594
    %v7596 = vrot.slane %v7548, %v7595
    %v7597 = vlaneseq
    %v7598 = vshrl.u32 %v7597, 7
    %v7599 = vsub.s32 3, %v7598
    %v7600 = vrot.slane %v7548, %v7599
    %v7601 = vlaneseq
    %v7602 = vshrl.u32 %v7601, 7
    %v7603 = vsub.s32 4, %v7602
    %v7604 = vrot.slane %v7548, %v7603
    %v7605 = vlaneseq
    %v7606 = vshrl.u32 %v7605, 7
    %v7607 = vsub.s32 5, %v7606
    %v7608 = vrot.slane %v7548, %v7607
    %v7609 = vlaneseq
    %v7610 = vshrl.u32 %v7609, 7
    %v7611 = vsub.s32 6, %v7610
    %v7612 = vrot.slane %v7548, %v7611
    %v7613 = vlaneseq
    %v7614 = vshrl.u32 %v7613, 7
    %v7615 = vsub.s32 7, %v7614
    %v7616 = vrot.slane %v7548, %v7615
    %v7617 = vlaneseq
    %v7618 = vshrl.u32 %v7617, 7
    %v7619 = vsub.s32 0, %v7618
    %v7620 = vrot.slane %v7549, %v7619
    %v7621 = vlaneseq
    %v7622 = vshrl.u32 %v7621, 7
    %v7623 = vsub.s32 1, %v7622
    %v7624 = vrot.slane %v7549, %v7623
    %v7625 = vlaneseq
    %v7626 = vshrl.u32 %v7625, 7
    %v7627 = vsub.s32 2, %v7626
    %v7628 = vrot.slane %v7549, %v7627
    %v7629 = vlaneseq
    %v7630 = vshrl.u32 %v7629, 7
    %v7631 = vsub.s32 3, %v7630
    %v7632 = vrot.slane %v7549, %v7631
    %v7633 = vlaneseq
    %v7634 = vshrl.u32 %v7633, 7
    %v7635 = vsub.s32 4, %v7634
    %v7636 = vrot.slane %v7549, %v7635
    %v7637 = vlaneseq
    %v7638 = vshrl.u32 %v7637, 7
    %v7639 = vsub.s32 5, %v7638
    %v7640 = vrot.slane %v7549, %v7639
    %v7641 = vlaneseq
    %v7642 = vshrl.u32 %v7641, 7
    %v7643 = vsub.s32 6, %v7642
    %v7644 = vrot.slane %v7549, %v7643
    %v7645 = vlaneseq
    %v7646 = vshrl.u32 %v7645, 7
    %v7647 = vsub.s32 7, %v7646
    %v7648 = vrot.slane %v7549, %v7647
    %7673 = vmatprep.subr.bf16.mxu0 %v6776
    %7674 = vmatpush1.bf16.msra.mxu0 %v6775
    %7675 = vmatprep.subr.bf16.mxu0 %v6800
    %7676 = vmatpush1.bf16.msra.mxu0 %v6799
    %7677 = vmatprep.subr.bf16.mxu0 %v6824
    %7678 = vmatpush1.bf16.msra.mxu0 %v6823
    %7679 = vmatprep.subr.bf16.mxu0 %v6848
    %7680 = vmatpush1.bf16.msra.mxu0 %v6847
    %7681 = vmatprep.subr.bf16.mxu0 %v6872
    %7682 = vmatpush1.bf16.msra.mxu0 %v6871
    %7683 = vmatprep.subr.bf16.mxu0 %v6896
    %7684 = vmatpush1.bf16.msra.mxu0 %v6895
    %7685 = vmatprep.subr.bf16.mxu0 %v6920
    %7686 = vmatpush1.bf16.msra.mxu0 %v6919
    %7687 = vmatprep.subr.bf16.mxu0 %v6944
    %7688 = vmatpush1.bf16.msra.mxu0 %v6943
    %7689 = vmatprep.subr.bf16.mxu0 %v6968
    %7690 = vmatpush1.bf16.msra.mxu0 %v6967
    %7691 = vmatprep.subr.bf16.mxu0 %v6992
    %7692 = vmatpush1.bf16.msra.mxu0 %v6991
    %7693 = vmatprep.subr.bf16.mxu0 %v7016
    %7694 = vmatpush1.bf16.msra.mxu0 %v7015
    %7695 = vmatprep.subr.bf16.mxu0 %v7040
    %7696 = vmatpush1.bf16.msra.mxu0 %v7039
    %7697 = vmatprep.subr.bf16.mxu0 %v7064
    %7698 = vmatpush1.bf16.msra.mxu0 %v7063
    %7699 = vmatprep.subr.bf16.mxu0 %v7088
    %7700 = vmatpush1.bf16.msra.mxu0 %v7087
    %7701 = vmatprep.subr.bf16.mxu0 %v7112
    %7702 = vmatpush1.bf16.msra.mxu0 %v7111
    %7703 = vmatprep.subr.bf16.mxu0 %v7136
    %7704 = vmatpush1.bf16.msra.mxu0 %v7135
    %7705 = vmatprep.mubr.bf16.mxu0 %v7544
    %7706 = vmatmul.mubr.bf16.gmra.mrb[0].mxu0 %v7543
    %v7707 = vpop.f32.mrb[0].mxu0
    %v7708 = vadd.f32 %v7556, %v7707
    %v7709 = vpop.f32.mrb[0].mxu0
    %v7710 = vadd.f32 %v7560, %v7709
    %v7711 = vpop.f32.mrb[0].mxu0
    %v7712 = vpop.f32.mrb[0].mxu0
    %7713 = vdwg.mxu0
    %7714 = vmatprep.subr.bf16.mxu0 %v7160
    %7715 = vmatpush1.bf16.msra.mxu0 %v7159
    %7716 = vmatprep.subr.bf16.mxu0 %v7184
    %7717 = vmatpush1.bf16.msra.mxu0 %v7183
    %7718 = vmatprep.subr.bf16.mxu0 %v7208
    %7719 = vmatpush1.bf16.msra.mxu0 %v7207
    %7720 = vmatprep.subr.bf16.mxu0 %v7232
    %7721 = vmatpush1.bf16.msra.mxu0 %v7231
    %7722 = vmatprep.subr.bf16.mxu0 %v7256
    %7723 = vmatpush1.bf16.msra.mxu0 %v7255
    %7724 = vmatprep.subr.bf16.mxu0 %v7280
    %7725 = vmatpush1.bf16.msra.mxu0 %v7279
    %7726 = vmatprep.subr.bf16.mxu0 %v7304
    %7727 = vmatpush1.bf16.msra.mxu0 %v7303
    %7728 = vmatprep.subr.bf16.mxu0 %v7328
    %7729 = vmatpush1.bf16.msra.mxu0 %v7327
    %7730 = vmatprep.subr.bf16.mxu0 %v7352
    %7731 = vmatpush1.bf16.msra.mxu0 %v7351
    %7732 = vmatprep.subr.bf16.mxu0 %v7376
    %7733 = vmatpush1.bf16.msra.mxu0 %v7375
    %7734 = vmatprep.subr.bf16.mxu0 %v7400
    %7735 = vmatpush1.bf16.msra.mxu0 %v7399
    %7736 = vmatprep.subr.bf16.mxu0 %v7424
    %7737 = vmatpush1.bf16.msra.mxu0 %v7423
    %7738 = vmatprep.subr.bf16.mxu0 %v7448
    %7739 = vmatpush1.bf16.msra.mxu0 %v7447
    %7740 = vmatprep.subr.bf16.mxu0 %v7472
    %7741 = vmatpush1.bf16.msra.mxu0 %v7471
    %7742 = vmatprep.subr.bf16.mxu0 %v7496
    %7743 = vmatpush1.bf16.msra.mxu0 %v7495
    %7744 = vmatprep.subr.bf16.mxu0 %v7520
    %7745 = vmatpush1.bf16.msra.mxu0 %v7519
    %7746 = vmatprep.mubr.bf16.mxu0 %v7546
    %7747 = vmatmul.mubr.bf16.gmra.mrb[0].mxu0 %v7545
    %v7748 = vpop.f32.mrb[0].mxu0
    %v7749 = vadd.f32 %v7708, %v7748
    %v7750 = vpop.f32.mrb[0].mxu0
    %v7751 = vadd.f32 %v7710, %v7750
    %v7752 = vpop.f32.mrb[0].mxu0
    %v7753 = vpop.f32.mrb[0].mxu0
    %7754 = vdwg.mxu0
    %7755 = vmatprep.subr.bf16.mxu0 %v6778
    %7756 = vmatpush1.bf16.msra.mxu0 %v6777
    %7757 = vmatprep.subr.bf16.mxu0 %v6802
    %7758 = vmatpush1.bf16.msra.mxu0 %v6801
    %7759 = vmatprep.subr.bf16.mxu0 %v6826
    %7760 = vmatpush1.bf16.msra.mxu0 %v6825
    %7761 = vmatprep.subr.bf16.mxu0 %v6850
    %7762 = vmatpush1.bf16.msra.mxu0 %v6849
    %7763 = vmatprep.subr.bf16.mxu0 %v6874
    %7764 = vmatpush1.bf16.msra.mxu0 %v6873
    %7765 = vmatprep.subr.bf16.mxu0 %v6898
    %7766 = vmatpush1.bf16.msra.mxu0 %v6897
    %7767 = vmatprep.subr.bf16.mxu0 %v6922
    %7768 = vmatpush1.bf16.msra.mxu0 %v6921
    %7769 = vmatprep.subr.bf16.mxu0 %v6946
    %7770 = vmatpush1.bf16.msra.mxu0 %v6945
    %7771 = vmatprep.subr.bf16.mxu0 %v6970
    %7772 = vmatpush1.bf16.msra.mxu0 %v6969
    %7773 = vmatprep.subr.bf16.mxu0 %v6994
    %7774 = vmatpush1.bf16.msra.mxu0 %v6993
    %7775 = vmatprep.subr.bf16.mxu0 %v7018
    %7776 = vmatpush1.bf16.msra.mxu0 %v7017
    %7777 = vmatprep.subr.bf16.mxu0 %v7042
    %7778 = vmatpush1.bf16.msra.mxu0 %v7041
    %7779 = vmatprep.subr.bf16.mxu0 %v7066
    %7780 = vmatpush1.bf16.msra.mxu0 %v7065
    %7781 = vmatprep.subr.bf16.mxu0 %v7090
    %7782 = vmatpush1.bf16.msra.mxu0 %v7089
    %7783 = vmatprep.subr.bf16.mxu0 %v7114
    %7784 = vmatpush1.bf16.msra.mxu0 %v7113
    %7785 = vmatprep.subr.bf16.mxu0 %v7138
    %7786 = vmatpush1.bf16.msra.mxu0 %v7137
    %7787 = vmatprep.mubr.bf16.mxu0 %v7544
    %7788 = vmatmul.mubr.bf16.gmra.mrb[0].mxu0 %v7543
    %v7789 = vpop.f32.mrb[0].mxu0
    %v7790 = vadd.f32 %v7564, %v7789
    %v7791 = vpop.f32.mrb[0].mxu0
    %v7792 = vadd.f32 %v7568, %v7791
    %v7793 = vpop.f32.mrb[0].mxu0
    %v7794 = vpop.f32.mrb[0].mxu0
    %7795 = vdwg.mxu0
    %7796 = vmatprep.subr.bf16.mxu0 %v7162
    %7797 = vmatpush1.bf16.msra.mxu0 %v7161
    %7798 = vmatprep.subr.bf16.mxu0 %v7186
    %7799 = vmatpush1.bf16.msra.mxu0 %v7185
    %7800 = vmatprep.subr.bf16.mxu0 %v7210
    %7801 = vmatpush1.bf16.msra.mxu0 %v7209
    %7802 = vmatprep.subr.bf16.mxu0 %v7234
    %7803 = vmatpush1.bf16.msra.mxu0 %v7233
    %7804 = vmatprep.subr.bf16.mxu0 %v7258
    %7805 = vmatpush1.bf16.msra.mxu0 %v7257
    %7806 = vmatprep.subr.bf16.mxu0 %v7282
    %7807 = vmatpush1.bf16.msra.mxu0 %v7281
    %7808 = vmatprep.subr.bf16.mxu0 %v7306
    %7809 = vmatpush1.bf16.msra.mxu0 %v7305
    %7810 = vmatprep.subr.bf16.mxu0 %v7330
    %7811 = vmatpush1.bf16.msra.mxu0 %v7329
    %7812 = vmatprep.subr.bf16.mxu0 %v7354
    %7813 = vmatpush1.bf16.msra.mxu0 %v7353
    %7814 = vmatprep.subr.bf16.mxu0 %v7378
    %7815 = vmatpush1.bf16.msra.mxu0 %v7377
    %7816 = vmatprep.subr.bf16.mxu0 %v7402
    %7817 = vmatpush1.bf16.msra.mxu0 %v7401
    %7818 = vmatprep.subr.bf16.mxu0 %v7426
    %7819 = vmatpush1.bf16.msra.mxu0 %v7425
    %7820 = vmatprep.subr.bf16.mxu0 %v7450
    %7821 = vmatpush1.bf16.msra.mxu0 %v7449
    %7822 = vmatprep.subr.bf16.mxu0 %v7474
    %7823 = vmatpush1.bf16.msra.mxu0 %v7473
    %7824 = vmatprep.subr.bf16.mxu0 %v7498
    %7825 = vmatpush1.bf16.msra.mxu0 %v7497
    %7826 = vmatprep.subr.bf16.mxu0 %v7522
    %7827 = vmatpush1.bf16.msra.mxu0 %v7521
    %7828 = vmatprep.mubr.bf16.mxu0 %v7546
    %7829 = vmatmul.mubr.bf16.gmra.mrb[0].mxu0 %v7545
    %v7830 = vpop.f32.mrb[0].mxu0
    %v7831 = vadd.f32 %v7790, %v7830
    %v7832 = vpop.f32.mrb[0].mxu0
    %v7833 = vadd.f32 %v7792, %v7832
    %v7834 = vpop.f32.mrb[0].mxu0
    %v7835 = vpop.f32.mrb[0].mxu0
    %7836 = vdwg.mxu0
    %7837 = vmatprep.subr.bf16.mxu0 %v6780
    %7838 = vmatpush1.bf16.msra.mxu0 %v6779
    %7839 = vmatprep.subr.bf16.mxu0 %v6804
    %7840 = vmatpush1.bf16.msra.mxu0 %v6803
    %7841 = vmatprep.subr.bf16.mxu0 %v6828
    %7842 = vmatpush1.bf16.msra.mxu0 %v6827
    %7843 = vmatprep.subr.bf16.mxu0 %v6852
    %7844 = vmatpush1.bf16.msra.mxu0 %v6851
    %7845 = vmatprep.subr.bf16.mxu0 %v6876
    %7846 = vmatpush1.bf16.msra.mxu0 %v6875
    %7847 = vmatprep.subr.bf16.mxu0 %v6900
    %7848 = vmatpush1.bf16.msra.mxu0 %v6899
    %7849 = vmatprep.subr.bf16.mxu0 %v6924
    %7850 = vmatpush1.bf16.msra.mxu0 %v6923
    %7851 = vmatprep.subr.bf16.mxu0 %v6948
    %7852 = vmatpush1.bf16.msra.mxu0 %v6947
    %7853 = vmatprep.subr.bf16.mxu0 %v6972
    %7854 = vmatpush1.bf16.msra.mxu0 %v6971
    %7855 = vmatprep.subr.bf16.mxu0 %v6996
    %7856 = vmatpush1.bf16.msra.mxu0 %v6995
    %7857 = vmatprep.subr.bf16.mxu0 %v7020
    %7858 = vmatpush1.bf16.msra.mxu0 %v7019
    %7859 = vmatprep.subr.bf16.mxu0 %v7044
    %7860 = vmatpush1.bf16.msra.mxu0 %v7043
    %7861 = vmatprep.subr.bf16.mxu0 %v7068
    %7862 = vmatpush1.bf16.msra.mxu0 %v7067
    %7863 = vmatprep.subr.bf16.mxu0 %v7092
    %7864 = vmatpush1.bf16.msra.mxu0 %v7091
    %7865 = vmatprep.subr.bf16.mxu0 %v7116
    %7866 = vmatpush1.bf16.msra.mxu0 %v7115
    %7867 = vmatprep.subr.bf16.mxu0 %v7140
    %7868 = vmatpush1.bf16.msra.mxu0 %v7139
    %7869 = vmatprep.mubr.bf16.mxu0 %v7544
    %7870 = vmatmul.mubr.bf16.gmra.mrb[0].mxu0 %v7543
    %v7871 = vpop.f32.mrb[0].mxu0
    %v7872 = vadd.f32 %v7572, %v7871
    %v7873 = vpop.f32.mrb[0].mxu0
    %v7874 = vadd.f32 %v7576, %v7873
    %v7875 = vpop.f32.mrb[0].mxu0
    %v7876 = vpop.f32.mrb[0].mxu0
    %7877 = vdwg.mxu0
    %7878 = vmatprep.subr.bf16.mxu0 %v7164
    %7879 = vmatpush1.bf16.msra.mxu0 %v7163
    %7880 = vmatprep.subr.bf16.mxu0 %v7188
    %7881 = vmatpush1.bf16.msra.mxu0 %v7187
    %7882 = vmatprep.subr.bf16.mxu0 %v7212
    %7883 = vmatpush1.bf16.msra.mxu0 %v7211
    %7884 = vmatprep.subr.bf16.mxu0 %v7236
    %7885 = vmatpush1.bf16.msra.mxu0 %v7235
    %7886 = vmatprep.subr.bf16.mxu0 %v7260
    %7887 = vmatpush1.bf16.msra.mxu0 %v7259
    %7888 = vmatprep.subr.bf16.mxu0 %v7284
    %7889 = vmatpush1.bf16.msra.mxu0 %v7283
    %7890 = vmatprep.subr.bf16.mxu0 %v7308
    %7891 = vmatpush1.bf16.msra.mxu0 %v7307
    %7892 = vmatprep.subr.bf16.mxu0 %v7332
    %7893 = vmatpush1.bf16.msra.mxu0 %v7331
    %7894 = vmatprep.subr.bf16.mxu0 %v7356
    %7895 = vmatpush1.bf16.msra.mxu0 %v7355
    %7896 = vmatprep.subr.bf16.mxu0 %v7380
    %7897 = vmatpush1.bf16.msra.mxu0 %v7379
    %7898 = vmatprep.subr.bf16.mxu0 %v7404
    %7899 = vmatpush1.bf16.msra.mxu0 %v7403
    %7900 = vmatprep.subr.bf16.mxu0 %v7428
    %7901 = vmatpush1.bf16.msra.mxu0 %v7427
    %7902 = vmatprep.subr.bf16.mxu0 %v7452
    %7903 = vmatpush1.bf16.msra.mxu0 %v7451
    %7904 = vmatprep.subr.bf16.mxu0 %v7476
    %7905 = vmatpush1.bf16.msra.mxu0 %v7475
    %7906 = vmatprep.subr.bf16.mxu0 %v7500
    %7907 = vmatpush1.bf16.msra.mxu0 %v7499
    %7908 = vmatprep.subr.bf16.mxu0 %v7524
    %7909 = vmatpush1.bf16.msra.mxu0 %v7523
    %7910 = vmatprep.mubr.bf16.mxu0 %v7546
    %7911 = vmatmul.mubr.bf16.gmra.mrb[0].mxu0 %v7545
    %v7912 = vpop.f32.mrb[0].mxu0
    %v7913 = vadd.f32 %v7872, %v7912
    %v7914 = vpop.f32.mrb[0].mxu0
    %v7915 = vadd.f32 %v7874, %v7914
    %v7916 = vpop.f32.mrb[0].mxu0
    %v7917 = vpop.f32.mrb[0].mxu0
    %7918 = vdwg.mxu0
    %7919 = vmatprep.subr.bf16.mxu0 %v6782
    %7920 = vmatpush1.bf16.msra.mxu0 %v6781
    %7921 = vmatprep.subr.bf16.mxu0 %v6806
    %7922 = vmatpush1.bf16.msra.mxu0 %v6805
    %7923 = vmatprep.subr.bf16.mxu0 %v6830
    %7924 = vmatpush1.bf16.msra.mxu0 %v6829
    %7925 = vmatprep.subr.bf16.mxu0 %v6854
    %7926 = vmatpush1.bf16.msra.mxu0 %v6853
    %7927 = vmatprep.subr.bf16.mxu0 %v6878
    %7928 = vmatpush1.bf16.msra.mxu0 %v6877
    %7929 = vmatprep.subr.bf16.mxu0 %v6902
    %7930 = vmatpush1.bf16.msra.mxu0 %v6901
    %7931 = vmatprep.subr.bf16.mxu0 %v6926
    %7932 = vmatpush1.bf16.msra.mxu0 %v6925
    %7933 = vmatprep.subr.bf16.mxu0 %v6950
    %7934 = vmatpush1.bf16.msra.mxu0 %v6949
    %7935 = vmatprep.subr.bf16.mxu0 %v6974
    %7936 = vmatpush1.bf16.msra.mxu0 %v6973
    %7937 = vmatprep.subr.bf16.mxu0 %v6998
    %7938 = vmatpush1.bf16.msra.mxu0 %v6997
    %7939 = vmatprep.subr.bf16.mxu0 %v7022
    %7940 = vmatpush1.bf16.msra.mxu0 %v7021
    %7941 = vmatprep.subr.bf16.mxu0 %v7046
    %7942 = vmatpush1.bf16.msra.mxu0 %v7045
    %7943 = vmatprep.subr.bf16.mxu0 %v7070
    %7944 = vmatpush1.bf16.msra.mxu0 %v7069
    %7945 = vmatprep.subr.bf16.mxu0 %v7094
    %7946 = vmatpush1.bf16.msra.mxu0 %v7093
    %7947 = vmatprep.subr.bf16.mxu0 %v7118
    %7948 = vmatpush1.bf16.msra.mxu0 %v7117
    %7949 = vmatprep.subr.bf16.mxu0 %v7142
    %7950 = vmatpush1.bf16.msra.mxu0 %v7141
    %7951 = vmatprep.mubr.bf16.mxu0 %v7544
    %7952 = vmatmul.mubr.bf16.gmra.mrb[0].mxu0 %v7543
    %v7953 = vpop.f32.mrb[0].mxu0
    %v7954 = vadd.f32 %v7580, %v7953
    %v7955 = vpop.f32.mrb[0].mxu0
    %v7956 = vadd.f32 %v7584, %v7955
    %v7957 = vpop.f32.mrb[0].mxu0
    %v7958 = vpop.f32.mrb[0].mxu0
    %7959 = vdwg.mxu0
    %7960 = vmatprep.subr.bf16.mxu0 %v7166
    %7961 = vmatpush1.bf16.msra.mxu0 %v7165
    %7962 = vmatprep.subr.bf16.mxu0 %v7190
    %7963 = vmatpush1.bf16.msra.mxu0 %v7189
    %7964 = vmatprep.subr.bf16.mxu0 %v7214
    %7965 = vmatpush1.bf16.msra.mxu0 %v7213
    %7966 = vmatprep.subr.bf16.mxu0 %v7238
    %7967 = vmatpush1.bf16.msra.mxu0 %v7237
    %7968 = vmatprep.subr.bf16.mxu0 %v7262
    %7969 = vmatpush1.bf16.msra.mxu0 %v7261
    %7970 = vmatprep.subr.bf16.mxu0 %v7286
    %7971 = vmatpush1.bf16.msra.mxu0 %v7285
    %7972 = vmatprep.subr.bf16.mxu0 %v7310
    %7973 = vmatpush1.bf16.msra.mxu0 %v7309
    %7974 = vmatprep.subr.bf16.mxu0 %v7334
    %7975 = vmatpush1.bf16.msra.mxu0 %v7333
    %7976 = vmatprep.subr.bf16.mxu0 %v7358
    %7977 = vmatpush1.bf16.msra.mxu0 %v7357
    %7978 = vmatprep.subr.bf16.mxu0 %v7382
    %7979 = vmatpush1.bf16.msra.mxu0 %v7381
    %7980 = vmatprep.subr.bf16.mxu0 %v7406
    %7981 = vmatpush1.bf16.msra.mxu0 %v7405
    %7982 = vmatprep.subr.bf16.mxu0 %v7430
    %7983 = vmatpush1.bf16.msra.mxu0 %v7429
    %7984 = vmatprep.subr.bf16.mxu0 %v7454
    %7985 = vmatpush1.bf16.msra.mxu0 %v7453
    %7986 = vmatprep.subr.bf16.mxu0 %v7478
    %7987 = vmatpush1.bf16.msra.mxu0 %v7477
    %7988 = vmatprep.subr.bf16.mxu0 %v7502
    %7989 = vmatpush1.bf16.msra.mxu0 %v7501
    %7990 = vmatprep.subr.bf16.mxu0 %v7526
    %7991 = vmatpush1.bf16.msra.mxu0 %v7525
    %7992 = vmatprep.mubr.bf16.mxu0 %v7546
    %7993 = vmatmul.mubr.bf16.gmra.mrb[0].mxu0 %v7545
    %v7994 = vpop.f32.mrb[0].mxu0
    %v7995 = vadd.f32 %v7954, %v7994
    %v7996 = vpop.f32.mrb[0].mxu0
    %v7997 = vadd.f32 %v7956, %v7996
    %v7998 = vpop.f32.mrb[0].mxu0
    %v7999 = vpop.f32.mrb[0].mxu0
    %8000 = vdwg.mxu0
    %8001 = vmatprep.subr.bf16.mxu0 %v6784
    %8002 = vmatpush1.bf16.msra.mxu0 %v6783
    %8003 = vmatprep.subr.bf16.mxu0 %v6808
    %8004 = vmatpush1.bf16.msra.mxu0 %v6807
    %8005 = vmatprep.subr.bf16.mxu0 %v6832
    %8006 = vmatpush1.bf16.msra.mxu0 %v6831
    %8007 = vmatprep.subr.bf16.mxu0 %v6856
    %8008 = vmatpush1.bf16.msra.mxu0 %v6855
    %8009 = vmatprep.subr.bf16.mxu0 %v6880
    %8010 = vmatpush1.bf16.msra.mxu0 %v6879
    %8011 = vmatprep.subr.bf16.mxu0 %v6904
    %8012 = vmatpush1.bf16.msra.mxu0 %v6903
    %8013 = vmatprep.subr.bf16.mxu0 %v6928
    %8014 = vmatpush1.bf16.msra.mxu0 %v6927
    %8015 = vmatprep.subr.bf16.mxu0 %v6952
    %8016 = vmatpush1.bf16.msra.mxu0 %v6951
    %8017 = vmatprep.subr.bf16.mxu0 %v6976
    %8018 = vmatpush1.bf16.msra.mxu0 %v6975
    %8019 = vmatprep.subr.bf16.mxu0 %v7000
    %8020 = vmatpush1.bf16.msra.mxu0 %v6999
    %8021 = vmatprep.subr.bf16.mxu0 %v7024
    %8022 = vmatpush1.bf16.msra.mxu0 %v7023
    %8023 = vmatprep.subr.bf16.mxu0 %v7048
    %8024 = vmatpush1.bf16.msra.mxu0 %v7047
    %8025 = vmatprep.subr.bf16.mxu0 %v7072
    %8026 = vmatpush1.bf16.msra.mxu0 %v7071
    %8027 = vmatprep.subr.bf16.mxu0 %v7096
    %8028 = vmatpush1.bf16.msra.mxu0 %v7095
    %8029 = vmatprep.subr.bf16.mxu0 %v7120
    %8030 = vmatpush1.bf16.msra.mxu0 %v7119
    %8031 = vmatprep.subr.bf16.mxu0 %v7144
    %8032 = vmatpush1.bf16.msra.mxu0 %v7143
    %8033 = vmatprep.mubr.bf16.mxu0 %v7544
    %8034 = vmatmul.mubr.bf16.gmra.mrb[0].mxu0 %v7543
    %v8035 = vpop.f32.mrb[0].mxu0
    %v8036 = vadd.f32 %v7588, %v8035
    %v8037 = vpop.f32.mrb[0].mxu0
    %v8038 = vadd.f32 %v7592, %v8037
    %v8039 = vpop.f32.mrb[0].mxu0
    %v8040 = vpop.f32.mrb[0].mxu0
    %8041 = vdwg.mxu0
    %8042 = vmatprep.subr.bf16.mxu0 %v7168
    %8043 = vmatpush1.bf16.msra.mxu0 %v7167
    %8044 = vmatprep.subr.bf16.mxu0 %v7192
    %8045 = vmatpush1.bf16.msra.mxu0 %v7191
    %8046 = vmatprep.subr.bf16.mxu0 %v7216
    %8047 = vmatpush1.bf16.msra.mxu0 %v7215
    %8048 = vmatprep.subr.bf16.mxu0 %v7240
    %8049 = vmatpush1.bf16.msra.mxu0 %v7239
    %8050 = vmatprep.subr.bf16.mxu0 %v7264
    %8051 = vmatpush1.bf16.msra.mxu0 %v7263
    %8052 = vmatprep.subr.bf16.mxu0 %v7288
    %8053 = vmatpush1.bf16.msra.mxu0 %v7287
    %8054 = vmatprep.subr.bf16.mxu0 %v7312
    %8055 = vmatpush1.bf16.msra.mxu0 %v7311
    %8056 = vmatprep.subr.bf16.mxu0 %v7336
    %8057 = vmatpush1.bf16.msra.mxu0 %v7335
    %8058 = vmatprep.subr.bf16.mxu0 %v7360
    %8059 = vmatpush1.bf16.msra.mxu0 %v7359
    %8060 = vmatprep.subr.bf16.mxu0 %v7384
    %8061 = vmatpush1.bf16.msra.mxu0 %v7383
    %8062 = vmatprep.subr.bf16.mxu0 %v7408
    %8063 = vmatpush1.bf16.msra.mxu0 %v7407
    %8064 = vmatprep.subr.bf16.mxu0 %v7432
    %8065 = vmatpush1.bf16.msra.mxu0 %v7431
    %8066 = vmatprep.subr.bf16.mxu0 %v7456
    %8067 = vmatpush1.bf16.msra.mxu0 %v7455
    %8068 = vmatprep.subr.bf16.mxu0 %v7480
    %8069 = vmatpush1.bf16.msra.mxu0 %v7479
    %8070 = vmatprep.subr.bf16.mxu0 %v7504
    %8071 = vmatpush1.bf16.msra.mxu0 %v7503
    %8072 = vmatprep.subr.bf16.mxu0 %v7528
    %8073 = vmatpush1.bf16.msra.mxu0 %v7527
    %8074 = vmatprep.mubr.bf16.mxu0 %v7546
    %8075 = vmatmul.mubr.bf16.gmra.mrb[0].mxu0 %v7545
    %v8076 = vpop.f32.mrb[0].mxu0
    %v8077 = vadd.f32 %v8036, %v8076
    %v8078 = vpop.f32.mrb[0].mxu0
    %v8079 = vadd.f32 %v8038, %v8078
    %v8080 = vpop.f32.mrb[0].mxu0
    %v8081 = vpop.f32.mrb[0].mxu0
    %8082 = vdwg.mxu0
    %8083 = vmatprep.subr.bf16.mxu0 %v6786
    %8084 = vmatpush1.bf16.msra.mxu0 %v6785
    %8085 = vmatprep.subr.bf16.mxu0 %v6810
    %8086 = vmatpush1.bf16.msra.mxu0 %v6809
    %8087 = vmatprep.subr.bf16.mxu0 %v6834
    %8088 = vmatpush1.bf16.msra.mxu0 %v6833
    %8089 = vmatprep.subr.bf16.mxu0 %v6858
    %8090 = vmatpush1.bf16.msra.mxu0 %v6857
    %8091 = vmatprep.subr.bf16.mxu0 %v6882
    %8092 = vmatpush1.bf16.msra.mxu0 %v6881
    %8093 = vmatprep.subr.bf16.mxu0 %v6906
    %8094 = vmatpush1.bf16.msra.mxu0 %v6905
    %8095 = vmatprep.subr.bf16.mxu0 %v6930
    %8096 = vmatpush1.bf16.msra.mxu0 %v6929
    %8097 = vmatprep.subr.bf16.mxu0 %v6954
    %8098 = vmatpush1.bf16.msra.mxu0 %v6953
    %8099 = vmatprep.subr.bf16.mxu0 %v6978
    %8100 = vmatpush1.bf16.msra.mxu0 %v6977
    %8101 = vmatprep.subr.bf16.mxu0 %v7002
    %8102 = vmatpush1.bf16.msra.mxu0 %v7001
    %8103 = vmatprep.subr.bf16.mxu0 %v7026
    %8104 = vmatpush1.bf16.msra.mxu0 %v7025
    %8105 = vmatprep.subr.bf16.mxu0 %v7050
    %8106 = vmatpush1.bf16.msra.mxu0 %v7049
    %8107 = vmatprep.subr.bf16.mxu0 %v7074
    %8108 = vmatpush1.bf16.msra.mxu0 %v7073
    %8109 = vmatprep.subr.bf16.mxu0 %v7098
    %8110 = vmatpush1.bf16.msra.mxu0 %v7097
    %8111 = vmatprep.subr.bf16.mxu0 %v7122
    %8112 = vmatpush1.bf16.msra.mxu0 %v7121
    %8113 = vmatprep.subr.bf16.mxu0 %v7146
    %8114 = vmatpush1.bf16.msra.mxu0 %v7145
    %8115 = vmatprep.mubr.bf16.mxu0 %v7544
    %8116 = vmatmul.mubr.bf16.gmra.mrb[0].mxu0 %v7543
    %v8117 = vpop.f32.mrb[0].mxu0
    %v8118 = vadd.f32 %v7596, %v8117
    %v8119 = vpop.f32.mrb[0].mxu0
    %v8120 = vadd.f32 %v7600, %v8119
    %v8121 = vpop.f32.mrb[0].mxu0
    %v8122 = vpop.f32.mrb[0].mxu0
    %8123 = vdwg.mxu0
    %8124 = vmatprep.subr.bf16.mxu0 %v7170
    %8125 = vmatpush1.bf16.msra.mxu0 %v7169
    %8126 = vmatprep.subr.bf16.mxu0 %v7194
    %8127 = vmatpush1.bf16.msra.mxu0 %v7193
    %8128 = vmatprep.subr.bf16.mxu0 %v7218
    %8129 = vmatpush1.bf16.msra.mxu0 %v7217
    %8130 = vmatprep.subr.bf16.mxu0 %v7242
    %8131 = vmatpush1.bf16.msra.mxu0 %v7241
    %8132 = vmatprep.subr.bf16.mxu0 %v7266
    %8133 = vmatpush1.bf16.msra.mxu0 %v7265
    %8134 = vmatprep.subr.bf16.mxu0 %v7290
    %8135 = vmatpush1.bf16.msra.mxu0 %v7289
    %8136 = vmatprep.subr.bf16.mxu0 %v7314
    %8137 = vmatpush1.bf16.msra.mxu0 %v7313
    %8138 = vmatprep.subr.bf16.mxu0 %v7338
    %8139 = vmatpush1.bf16.msra.mxu0 %v7337
    %8140 = vmatprep.subr.bf16.mxu0 %v7362
    %8141 = vmatpush1.bf16.msra.mxu0 %v7361
    %8142 = vmatprep.subr.bf16.mxu0 %v7386
    %8143 = vmatpush1.bf16.msra.mxu0 %v7385
    %8144 = vmatprep.subr.bf16.mxu0 %v7410
    %8145 = vmatpush1.bf16.msra.mxu0 %v7409
    %8146 = vmatprep.subr.bf16.mxu0 %v7434
    %8147 = vmatpush1.bf16.msra.mxu0 %v7433
    %8148 = vmatprep.subr.bf16.mxu0 %v7458
    %8149 = vmatpush1.bf16.msra.mxu0 %v7457
    %8150 = vmatprep.subr.bf16.mxu0 %v7482
    %8151 = vmatpush1.bf16.msra.mxu0 %v7481
    %8152 = vmatprep.subr.bf16.mxu0 %v7506
    %8153 = vmatpush1.bf16.msra.mxu0 %v7505
    %8154 = vmatprep.subr.bf16.mxu0 %v7530
    %8155 = vmatpush1.bf16.msra.mxu0 %v7529
    %8156 = vmatprep.mubr.bf16.mxu0 %v7546
    %8157 = vmatmul.mubr.bf16.gmra.mrb[0].mxu0 %v7545
    %v8158 = vpop.f32.mrb[0].mxu0
    %v8159 = vadd.f32 %v8118, %v8158
    %v8160 = vpop.f32.mrb[0].mxu0
    %v8161 = vadd.f32 %v8120, %v8160
    %v8162 = vpop.f32.mrb[0].mxu0
    %v8163 = vpop.f32.mrb[0].mxu0
    %8164 = vdwg.mxu0
    %8165 = vmatprep.subr.bf16.mxu0 %v6788
    %8166 = vmatpush1.bf16.msra.mxu0 %v6787
    %8167 = vmatprep.subr.bf16.mxu0 %v6812
    %8168 = vmatpush1.bf16.msra.mxu0 %v6811
    %8169 = vmatprep.subr.bf16.mxu0 %v6836
    %8170 = vmatpush1.bf16.msra.mxu0 %v6835
    %8171 = vmatprep.subr.bf16.mxu0 %v6860
    %8172 = vmatpush1.bf16.msra.mxu0 %v6859
    %8173 = vmatprep.subr.bf16.mxu0 %v6884
    %8174 = vmatpush1.bf16.msra.mxu0 %v6883
    %8175 = vmatprep.subr.bf16.mxu0 %v6908
    %8176 = vmatpush1.bf16.msra.mxu0 %v6907
    %8177 = vmatprep.subr.bf16.mxu0 %v6932
    %8178 = vmatpush1.bf16.msra.mxu0 %v6931
    %8179 = vmatprep.subr.bf16.mxu0 %v6956
    %8180 = vmatpush1.bf16.msra.mxu0 %v6955
    %8181 = vmatprep.subr.bf16.mxu0 %v6980
    %8182 = vmatpush1.bf16.msra.mxu0 %v6979
    %8183 = vmatprep.subr.bf16.mxu0 %v7004
    %8184 = vmatpush1.bf16.msra.mxu0 %v7003
    %8185 = vmatprep.subr.bf16.mxu0 %v7028
    %8186 = vmatpush1.bf16.msra.mxu0 %v7027
    %8187 = vmatprep.subr.bf16.mxu0 %v7052
    %8188 = vmatpush1.bf16.msra.mxu0 %v7051
    %8189 = vmatprep.subr.bf16.mxu0 %v7076
    %8190 = vmatpush1.bf16.msra.mxu0 %v7075
    %8191 = vmatprep.subr.bf16.mxu0 %v7100
    %8192 = vmatpush1.bf16.msra.mxu0 %v7099
    %8193 = vmatprep.subr.bf16.mxu0 %v7124
    %8194 = vmatpush1.bf16.msra.mxu0 %v7123
    %8195 = vmatprep.subr.bf16.mxu0 %v7148
    %8196 = vmatpush1.bf16.msra.mxu0 %v7147
    %8197 = vmatprep.mubr.bf16.mxu0 %v7544
    %8198 = vmatmul.mubr.bf16.gmra.mrb[0].mxu0 %v7543
    %v8199 = vpop.f32.mrb[0].mxu0
    %v8200 = vadd.f32 %v7604, %v8199
    %v8201 = vpop.f32.mrb[0].mxu0
    %v8202 = vadd.f32 %v7608, %v8201
    %v8203 = vpop.f32.mrb[0].mxu0
    %v8204 = vpop.f32.mrb[0].mxu0
    %8205 = vdwg.mxu0
    %8206 = vmatprep.subr.bf16.mxu0 %v7172
    %8207 = vmatpush1.bf16.msra.mxu0 %v7171
    %8208 = vmatprep.subr.bf16.mxu0 %v7196
    %8209 = vmatpush1.bf16.msra.mxu0 %v7195
    %8210 = vmatprep.subr.bf16.mxu0 %v7220
    %8211 = vmatpush1.bf16.msra.mxu0 %v7219
    %8212 = vmatprep.subr.bf16.mxu0 %v7244
    %8213 = vmatpush1.bf16.msra.mxu0 %v7243
    %8214 = vmatprep.subr.bf16.mxu0 %v7268
    %8215 = vmatpush1.bf16.msra.mxu0 %v7267
    %8216 = vmatprep.subr.bf16.mxu0 %v7292
    %8217 = vmatpush1.bf16.msra.mxu0 %v7291
    %8218 = vmatprep.subr.bf16.mxu0 %v7316
    %8219 = vmatpush1.bf16.msra.mxu0 %v7315
    %8220 = vmatprep.subr.bf16.mxu0 %v7340
    %8221 = vmatpush1.bf16.msra.mxu0 %v7339
    %8222 = vmatprep.subr.bf16.mxu0 %v7364
    %8223 = vmatpush1.bf16.msra.mxu0 %v7363
    %8224 = vmatprep.subr.bf16.mxu0 %v7388
    %8225 = vmatpush1.bf16.msra.mxu0 %v7387
    %8226 = vmatprep.subr.bf16.mxu0 %v7412
    %8227 = vmatpush1.bf16.msra.mxu0 %v7411
    %8228 = vmatprep.subr.bf16.mxu0 %v7436
    %8229 = vmatpush1.bf16.msra.mxu0 %v7435
    %8230 = vmatprep.subr.bf16.mxu0 %v7460
    %8231 = vmatpush1.bf16.msra.mxu0 %v7459
    %8232 = vmatprep.subr.bf16.mxu0 %v7484
    %8233 = vmatpush1.bf16.msra.mxu0 %v7483
    %8234 = vmatprep.subr.bf16.mxu0 %v7508
    %8235 = vmatpush1.bf16.msra.mxu0 %v7507
    %8236 = vmatprep.subr.bf16.mxu0 %v7532
    %8237 = vmatpush1.bf16.msra.mxu0 %v7531
    %8238 = vmatprep.mubr.bf16.mxu0 %v7546
    %8239 = vmatmul.mubr.bf16.gmra.mrb[0].mxu0 %v7545
    %v8240 = vpop.f32.mrb[0].mxu0
    %v8241 = vadd.f32 %v8200, %v8240
    %v8242 = vpop.f32.mrb[0].mxu0
    %v8243 = vadd.f32 %v8202, %v8242
    %v8244 = vpop.f32.mrb[0].mxu0
    %v8245 = vpop.f32.mrb[0].mxu0
    %8246 = vdwg.mxu0
    %8247 = vmatprep.subr.bf16.mxu0 %v6790
    %8248 = vmatpush1.bf16.msra.mxu0 %v6789
    %8249 = vmatprep.subr.bf16.mxu0 %v6814
    %8250 = vmatpush1.bf16.msra.mxu0 %v6813
    %8251 = vmatprep.subr.bf16.mxu0 %v6838
    %8252 = vmatpush1.bf16.msra.mxu0 %v6837
    %8253 = vmatprep.subr.bf16.mxu0 %v6862
    %8254 = vmatpush1.bf16.msra.mxu0 %v6861
    %8255 = vmatprep.subr.bf16.mxu0 %v6886
    %8256 = vmatpush1.bf16.msra.mxu0 %v6885
    %8257 = vmatprep.subr.bf16.mxu0 %v6910
    %8258 = vmatpush1.bf16.msra.mxu0 %v6909
    %8259 = vmatprep.subr.bf16.mxu0 %v6934
    %8260 = vmatpush1.bf16.msra.mxu0 %v6933
    %8261 = vmatprep.subr.bf16.mxu0 %v6958
    %8262 = vmatpush1.bf16.msra.mxu0 %v6957
    %8263 = vmatprep.subr.bf16.mxu0 %v6982
    %8264 = vmatpush1.bf16.msra.mxu0 %v6981
    %8265 = vmatprep.subr.bf16.mxu0 %v7006
    %8266 = vmatpush1.bf16.msra.mxu0 %v7005
    %8267 = vmatprep.subr.bf16.mxu0 %v7030
    %8268 = vmatpush1.bf16.msra.mxu0 %v7029
    %8269 = vmatprep.subr.bf16.mxu0 %v7054
    %8270 = vmatpush1.bf16.msra.mxu0 %v7053
    %8271 = vmatprep.subr.bf16.mxu0 %v7078
    %8272 = vmatpush1.bf16.msra.mxu0 %v7077
    %8273 = vmatprep.subr.bf16.mxu0 %v7102
    %8274 = vmatpush1.bf16.msra.mxu0 %v7101
    %8275 = vmatprep.subr.bf16.mxu0 %v7126
    %8276 = vmatpush1.bf16.msra.mxu0 %v7125
    %8277 = vmatprep.subr.bf16.mxu0 %v7150
    %8278 = vmatpush1.bf16.msra.mxu0 %v7149
    %8279 = vmatprep.mubr.bf16.mxu0 %v7544
    %8280 = vmatmul.mubr.bf16.gmra.mrb[0].mxu0 %v7543
    %v8281 = vpop.f32.mrb[0].mxu0
    %v8282 = vadd.f32 %v7612, %v8281
    %v8283 = vpop.f32.mrb[0].mxu0
    %v8284 = vadd.f32 %v7616, %v8283
    %v8285 = vpop.f32.mrb[0].mxu0
    %v8286 = vpop.f32.mrb[0].mxu0
    %8287 = vdwg.mxu0
    %8288 = vmatprep.subr.bf16.mxu0 %v7174
    %8289 = vmatpush1.bf16.msra.mxu0 %v7173
    %8290 = vmatprep.subr.bf16.mxu0 %v7198
    %8291 = vmatpush1.bf16.msra.mxu0 %v7197
    %8292 = vmatprep.subr.bf16.mxu0 %v7222
    %8293 = vmatpush1.bf16.msra.mxu0 %v7221
    %8294 = vmatprep.subr.bf16.mxu0 %v7246
    %8295 = vmatpush1.bf16.msra.mxu0 %v7245
    %8296 = vmatprep.subr.bf16.mxu0 %v7270
    %8297 = vmatpush1.bf16.msra.mxu0 %v7269
    %8298 = vmatprep.subr.bf16.mxu0 %v7294
    %8299 = vmatpush1.bf16.msra.mxu0 %v7293
    %8300 = vmatprep.subr.bf16.mxu0 %v7318
    %8301 = vmatpush1.bf16.msra.mxu0 %v7317
    %8302 = vmatprep.subr.bf16.mxu0 %v7342
    %8303 = vmatpush1.bf16.msra.mxu0 %v7341
    %8304 = vmatprep.subr.bf16.mxu0 %v7366
    %8305 = vmatpush1.bf16.msra.mxu0 %v7365
    %8306 = vmatprep.subr.bf16.mxu0 %v7390
    %8307 = vmatpush1.bf16.msra.mxu0 %v7389
    %8308 = vmatprep.subr.bf16.mxu0 %v7414
    %8309 = vmatpush1.bf16.msra.mxu0 %v7413
    %8310 = vmatprep.subr.bf16.mxu0 %v7438
    %8311 = vmatpush1.bf16.msra.mxu0 %v7437
    %8312 = vmatprep.subr.bf16.mxu0 %v7462
    %8313 = vmatpush1.bf16.msra.mxu0 %v7461
    %8314 = vmatprep.subr.bf16.mxu0 %v7486
    %8315 = vmatpush1.bf16.msra.mxu0 %v7485
    %8316 = vmatprep.subr.bf16.mxu0 %v7510
    %8317 = vmatpush1.bf16.msra.mxu0 %v7509
    %8318 = vmatprep.subr.bf16.mxu0 %v7534
    %8319 = vmatpush1.bf16.msra.mxu0 %v7533
    %8320 = vmatprep.mubr.bf16.mxu0 %v7546
    %8321 = vmatmul.mubr.bf16.gmra.mrb[0].mxu0 %v7545
    %v8322 = vpop.f32.mrb[0].mxu0
    %v8323 = vadd.f32 %v8282, %v8322
    %v8324 = vpop.f32.mrb[0].mxu0
    %v8325 = vadd.f32 %v8284, %v8324
    %v8326 = vpop.f32.mrb[0].mxu0
    %v8327 = vpop.f32.mrb[0].mxu0
    %8328 = vdwg.mxu0
    %8329 = vmatprep.subr.bf16.mxu0 %v6792
    %8330 = vmatpush1.bf16.msra.mxu0 %v6791
    %8331 = vmatprep.subr.bf16.mxu0 %v6816
    %8332 = vmatpush1.bf16.msra.mxu0 %v6815
    %8333 = vmatprep.subr.bf16.mxu0 %v6840
    %8334 = vmatpush1.bf16.msra.mxu0 %v6839
    %8335 = vmatprep.subr.bf16.mxu0 %v6864
    %8336 = vmatpush1.bf16.msra.mxu0 %v6863
    %8337 = vmatprep.subr.bf16.mxu0 %v6888
    %8338 = vmatpush1.bf16.msra.mxu0 %v6887
    %8339 = vmatprep.subr.bf16.mxu0 %v6912
    %8340 = vmatpush1.bf16.msra.mxu0 %v6911
    %8341 = vmatprep.subr.bf16.mxu0 %v6936
    %8342 = vmatpush1.bf16.msra.mxu0 %v6935
    %8343 = vmatprep.subr.bf16.mxu0 %v6960
    %8344 = vmatpush1.bf16.msra.mxu0 %v6959
    %8345 = vmatprep.subr.bf16.mxu0 %v6984
    %8346 = vmatpush1.bf16.msra.mxu0 %v6983
    %8347 = vmatprep.subr.bf16.mxu0 %v7008
    %8348 = vmatpush1.bf16.msra.mxu0 %v7007
    %8349 = vmatprep.subr.bf16.mxu0 %v7032
    %8350 = vmatpush1.bf16.msra.mxu0 %v7031
    %8351 = vmatprep.subr.bf16.mxu0 %v7056
    %8352 = vmatpush1.bf16.msra.mxu0 %v7055
    %8353 = vmatprep.subr.bf16.mxu0 %v7080
    %8354 = vmatpush1.bf16.msra.mxu0 %v7079
    %8355 = vmatprep.subr.bf16.mxu0 %v7104
    %8356 = vmatpush1.bf16.msra.mxu0 %v7103
    %8357 = vmatprep.subr.bf16.mxu0 %v7128
    %8358 = vmatpush1.bf16.msra.mxu0 %v7127
    %8359 = vmatprep.subr.bf16.mxu0 %v7152
    %8360 = vmatpush1.bf16.msra.mxu0 %v7151
    %8361 = vmatprep.mubr.bf16.mxu0 %v7544
    %8362 = vmatmul.mubr.bf16.gmra.mrb[0].mxu0 %v7543
    %v8363 = vpop.f32.mrb[0].mxu0
    %v8364 = vadd.f32 %v7620, %v8363
    %v8365 = vpop.f32.mrb[0].mxu0
    %v8366 = vadd.f32 %v7624, %v8365
    %v8367 = vpop.f32.mrb[0].mxu0
    %v8368 = vpop.f32.mrb[0].mxu0
    %8369 = vdwg.mxu0
    %8370 = vmatprep.subr.bf16.mxu0 %v7176
    %8371 = vmatpush1.bf16.msra.mxu0 %v7175
    %8372 = vmatprep.subr.bf16.mxu0 %v7200
    %8373 = vmatpush1.bf16.msra.mxu0 %v7199
    %8374 = vmatprep.subr.bf16.mxu0 %v7224
    %8375 = vmatpush1.bf16.msra.mxu0 %v7223
    %8376 = vmatprep.subr.bf16.mxu0 %v7248
    %8377 = vmatpush1.bf16.msra.mxu0 %v7247
    %8378 = vmatprep.subr.bf16.mxu0 %v7272
    %8379 = vmatpush1.bf16.msra.mxu0 %v7271
    %8380 = vmatprep.subr.bf16.mxu0 %v7296
    %8381 = vmatpush1.bf16.msra.mxu0 %v7295
    %8382 = vmatprep.subr.bf16.mxu0 %v7320
    %8383 = vmatpush1.bf16.msra.mxu0 %v7319
    %8384 = vmatprep.subr.bf16.mxu0 %v7344
    %8385 = vmatpush1.bf16.msra.mxu0 %v7343
    %8386 = vmatprep.subr.bf16.mxu0 %v7368
    %8387 = vmatpush1.bf16.msra.mxu0 %v7367
    %8388 = vmatprep.subr.bf16.mxu0 %v7392
    %8389 = vmatpush1.bf16.msra.mxu0 %v7391
    %8390 = vmatprep.subr.bf16.mxu0 %v7416
    %8391 = vmatpush1.bf16.msra.mxu0 %v7415
    %8392 = vmatprep.subr.bf16.mxu0 %v7440
    %8393 = vmatpush1.bf16.msra.mxu0 %v7439
    %8394 = vmatprep.subr.bf16.mxu0 %v7464
    %8395 = vmatpush1.bf16.msra.mxu0 %v7463
    %8396 = vmatprep.subr.bf16.mxu0 %v7488
    %8397 = vmatpush1.bf16.msra.mxu0 %v7487
    %8398 = vmatprep.subr.bf16.mxu0 %v7512
    %8399 = vmatpush1.bf16.msra.mxu0 %v7511
    %8400 = vmatprep.subr.bf16.mxu0 %v7536
    %8401 = vmatpush1.bf16.msra.mxu0 %v7535
    %8402 = vmatprep.mubr.bf16.mxu0 %v7546
    %8403 = vmatmul.mubr.bf16.gmra.mrb[0].mxu0 %v7545
    %v8404 = vpop.f32.mrb[0].mxu0
    %v8405 = vadd.f32 %v8364, %v8404
    %v8406 = vpop.f32.mrb[0].mxu0
    %v8407 = vadd.f32 %v8366, %v8406
    %v8408 = vpop.f32.mrb[0].mxu0
    %v8409 = vpop.f32.mrb[0].mxu0
    %8410 = vdwg.mxu0
    %8411 = vmatprep.subr.bf16.mxu0 %v6794
    %8412 = vmatpush1.bf16.msra.mxu0 %v6793
    %8413 = vmatprep.subr.bf16.mxu0 %v6818
    %8414 = vmatpush1.bf16.msra.mxu0 %v6817
    %8415 = vmatprep.subr.bf16.mxu0 %v6842
    %8416 = vmatpush1.bf16.msra.mxu0 %v6841
    %8417 = vmatprep.subr.bf16.mxu0 %v6866
    %8418 = vmatpush1.bf16.msra.mxu0 %v6865
    %8419 = vmatprep.subr.bf16.mxu0 %v6890
    %8420 = vmatpush1.bf16.msra.mxu0 %v6889
    %8421 = vmatprep.subr.bf16.mxu0 %v6914
    %8422 = vmatpush1.bf16.msra.mxu0 %v6913
    %8423 = vmatprep.subr.bf16.mxu0 %v6938
    %8424 = vmatpush1.bf16.msra.mxu0 %v6937
    %8425 = vmatprep.subr.bf16.mxu0 %v6962
    %8426 = vmatpush1.bf16.msra.mxu0 %v6961
    %8427 = vmatprep.subr.bf16.mxu0 %v6986
    %8428 = vmatpush1.bf16.msra.mxu0 %v6985
    %8429 = vmatprep.subr.bf16.mxu0 %v7010
    %8430 = vmatpush1.bf16.msra.mxu0 %v7009
    %8431 = vmatprep.subr.bf16.mxu0 %v7034
    %8432 = vmatpush1.bf16.msra.mxu0 %v7033
    %8433 = vmatprep.subr.bf16.mxu0 %v7058
    %8434 = vmatpush1.bf16.msra.mxu0 %v7057
    %8435 = vmatprep.subr.bf16.mxu0 %v7082
    %8436 = vmatpush1.bf16.msra.mxu0 %v7081
    %8437 = vmatprep.subr.bf16.mxu0 %v7106
    %8438 = vmatpush1.bf16.msra.mxu0 %v7105
    %8439 = vmatprep.subr.bf16.mxu0 %v7130
    %8440 = vmatpush1.bf16.msra.mxu0 %v7129
    %8441 = vmatprep.subr.bf16.mxu0 %v7154
    %8442 = vmatpush1.bf16.msra.mxu0 %v7153
    %8443 = vmatprep.mubr.bf16.mxu0 %v7544
    %8444 = vmatmul.mubr.bf16.gmra.mrb[0].mxu0 %v7543
    %v8445 = vpop.f32.mrb[0].mxu0
    %v8446 = vadd.f32 %v7628, %v8445
    %v8447 = vpop.f32.mrb[0].mxu0
    %v8448 = vadd.f32 %v7632, %v8447
    %v8449 = vpop.f32.mrb[0].mxu0
    %v8450 = vpop.f32.mrb[0].mxu0
    %8451 = vdwg.mxu0
    %8452 = vmatprep.subr.bf16.mxu0 %v7178
    %8453 = vmatpush1.bf16.msra.mxu0 %v7177
    %8454 = vmatprep.subr.bf16.mxu0 %v7202
    %8455 = vmatpush1.bf16.msra.mxu0 %v7201
    %8456 = vmatprep.subr.bf16.mxu0 %v7226
    %8457 = vmatpush1.bf16.msra.mxu0 %v7225
    %8458 = vmatprep.subr.bf16.mxu0 %v7250
    %8459 = vmatpush1.bf16.msra.mxu0 %v7249
    %8460 = vmatprep.subr.bf16.mxu0 %v7274
    %8461 = vmatpush1.bf16.msra.mxu0 %v7273
    %8462 = vmatprep.subr.bf16.mxu0 %v7298
    %8463 = vmatpush1.bf16.msra.mxu0 %v7297
    %8464 = vmatprep.subr.bf16.mxu0 %v7322
    %8465 = vmatpush1.bf16.msra.mxu0 %v7321
    %8466 = vmatprep.subr.bf16.mxu0 %v7346
    %8467 = vmatpush1.bf16.msra.mxu0 %v7345
    %8468 = vmatprep.subr.bf16.mxu0 %v7370
    %8469 = vmatpush1.bf16.msra.mxu0 %v7369
    %8470 = vmatprep.subr.bf16.mxu0 %v7394
    %8471 = vmatpush1.bf16.msra.mxu0 %v7393
    %8472 = vmatprep.subr.bf16.mxu0 %v7418
    %8473 = vmatpush1.bf16.msra.mxu0 %v7417
    %8474 = vmatprep.subr.bf16.mxu0 %v7442
    %8475 = vmatpush1.bf16.msra.mxu0 %v7441
    %8476 = vmatprep.subr.bf16.mxu0 %v7466
    %8477 = vmatpush1.bf16.msra.mxu0 %v7465
    %8478 = vmatprep.subr.bf16.mxu0 %v7490
    %8479 = vmatpush1.bf16.msra.mxu0 %v7489
    %8480 = vmatprep.subr.bf16.mxu0 %v7514
    %8481 = vmatpush1.bf16.msra.mxu0 %v7513
    %8482 = vmatprep.subr.bf16.mxu0 %v7538
    %8483 = vmatpush1.bf16.msra.mxu0 %v7537
    %8484 = vmatprep.mubr.bf16.mxu0 %v7546
    %8485 = vmatmul.mubr.bf16.gmra.mrb[0].mxu0 %v7545
    %v8486 = vpop.f32.mrb[0].mxu0
    %v8487 = vadd.f32 %v8446, %v8486
    %v8488 = vpop.f32.mrb[0].mxu0
    %v8489 = vadd.f32 %v8448, %v8488
    %v8490 = vpop.f32.mrb[0].mxu0
    %v8491 = vpop.f32.mrb[0].mxu0
    %8492 = vdwg.mxu0
    %8493 = vmatprep.subr.bf16.mxu0 %v6796
    %8494 = vmatpush1.bf16.msra.mxu0 %v6795
    %8495 = vmatprep.subr.bf16.mxu0 %v6820
    %8496 = vmatpush1.bf16.msra.mxu0 %v6819
    %8497 = vmatprep.subr.bf16.mxu0 %v6844
    %8498 = vmatpush1.bf16.msra.mxu0 %v6843
    %8499 = vmatprep.subr.bf16.mxu0 %v6868
    %8500 = vmatpush1.bf16.msra.mxu0 %v6867
    %8501 = vmatprep.subr.bf16.mxu0 %v6892
    %8502 = vmatpush1.bf16.msra.mxu0 %v6891
    %8503 = vmatprep.subr.bf16.mxu0 %v6916
    %8504 = vmatpush1.bf16.msra.mxu0 %v6915
    %8505 = vmatprep.subr.bf16.mxu0 %v6940
    %8506 = vmatpush1.bf16.msra.mxu0 %v6939
    %8507 = vmatprep.subr.bf16.mxu0 %v6964
    %8508 = vmatpush1.bf16.msra.mxu0 %v6963
    %8509 = vmatprep.subr.bf16.mxu0 %v6988
    %8510 = vmatpush1.bf16.msra.mxu0 %v6987
    %8511 = vmatprep.subr.bf16.mxu0 %v7012
    %8512 = vmatpush1.bf16.msra.mxu0 %v7011
    %8513 = vmatprep.subr.bf16.mxu0 %v7036
    %8514 = vmatpush1.bf16.msra.mxu0 %v7035
    %8515 = vmatprep.subr.bf16.mxu0 %v7060
    %8516 = vmatpush1.bf16.msra.mxu0 %v7059
    %8517 = vmatprep.subr.bf16.mxu0 %v7084
    %8518 = vmatpush1.bf16.msra.mxu0 %v7083
    %8519 = vmatprep.subr.bf16.mxu0 %v7108
    %8520 = vmatpush1.bf16.msra.mxu0 %v7107
    %8521 = vmatprep.subr.bf16.mxu0 %v7132
    %8522 = vmatpush1.bf16.msra.mxu0 %v7131
    %8523 = vmatprep.subr.bf16.mxu0 %v7156
    %8524 = vmatpush1.bf16.msra.mxu0 %v7155
    %8525 = vmatprep.mubr.bf16.mxu0 %v7544
    %8526 = vmatmul.mubr.bf16.gmra.mrb[0].mxu0 %v7543
    %v8527 = vpop.f32.mrb[0].mxu0
    %v8528 = vadd.f32 %v7636, %v8527
    %v8529 = vpop.f32.mrb[0].mxu0
    %v8530 = vadd.f32 %v7640, %v8529
    %v8531 = vpop.f32.mrb[0].mxu0
    %v8532 = vpop.f32.mrb[0].mxu0
    %8533 = vdwg.mxu0
    %8534 = vmatprep.subr.bf16.mxu0 %v7180
    %8535 = vmatpush1.bf16.msra.mxu0 %v7179
    %8536 = vmatprep.subr.bf16.mxu0 %v7204
    %8537 = vmatpush1.bf16.msra.mxu0 %v7203
    %8538 = vmatprep.subr.bf16.mxu0 %v7228
    %8539 = vmatpush1.bf16.msra.mxu0 %v7227
    %8540 = vmatprep.subr.bf16.mxu0 %v7252
    %8541 = vmatpush1.bf16.msra.mxu0 %v7251
    %8542 = vmatprep.subr.bf16.mxu0 %v7276
    %8543 = vmatpush1.bf16.msra.mxu0 %v7275
    %8544 = vmatprep.subr.bf16.mxu0 %v7300
    %8545 = vmatpush1.bf16.msra.mxu0 %v7299
    %8546 = vmatprep.subr.bf16.mxu0 %v7324
    %8547 = vmatpush1.bf16.msra.mxu0 %v7323
    %8548 = vmatprep.subr.bf16.mxu0 %v7348
    %8549 = vmatpush1.bf16.msra.mxu0 %v7347
    %8550 = vmatprep.subr.bf16.mxu0 %v7372
    %8551 = vmatpush1.bf16.msra.mxu0 %v7371
    %8552 = vmatprep.subr.bf16.mxu0 %v7396
    %8553 = vmatpush1.bf16.msra.mxu0 %v7395
    %8554 = vmatprep.subr.bf16.mxu0 %v7420
    %8555 = vmatpush1.bf16.msra.mxu0 %v7419
    %8556 = vmatprep.subr.bf16.mxu0 %v7444
    %8557 = vmatpush1.bf16.msra.mxu0 %v7443
    %8558 = vmatprep.subr.bf16.mxu0 %v7468
    %8559 = vmatpush1.bf16.msra.mxu0 %v7467
    %8560 = vmatprep.subr.bf16.mxu0 %v7492
    %8561 = vmatpush1.bf16.msra.mxu0 %v7491
    %8562 = vmatprep.subr.bf16.mxu0 %v7516
    %8563 = vmatpush1.bf16.msra.mxu0 %v7515
    %8564 = vmatprep.subr.bf16.mxu0 %v7540
    %8565 = vmatpush1.bf16.msra.mxu0 %v7539
    %8566 = vmatprep.mubr.bf16.mxu0 %v7546
    %8567 = vmatmul.mubr.bf16.gmra.mrb[0].mxu0 %v7545
    %v8568 = vpop.f32.mrb[0].mxu0
    %v8569 = vadd.f32 %v8528, %v8568
    %v8570 = vpop.f32.mrb[0].mxu0
    %v8571 = vadd.f32 %v8530, %v8570
    %v8572 = vpop.f32.mrb[0].mxu0
    %v8573 = vpop.f32.mrb[0].mxu0
    %8574 = vdwg.mxu0
    %8575 = vmatprep.subr.bf16.mxu0 %v6798
    %8576 = vmatpush1.bf16.msra.mxu0 %v6797
    %8577 = vmatprep.subr.bf16.mxu0 %v6822
    %8578 = vmatpush1.bf16.msra.mxu0 %v6821
    %8579 = vmatprep.subr.bf16.mxu0 %v6846
    %8580 = vmatpush1.bf16.msra.mxu0 %v6845
    %8581 = vmatprep.subr.bf16.mxu0 %v6870
    %8582 = vmatpush1.bf16.msra.mxu0 %v6869
    %8583 = vmatprep.subr.bf16.mxu0 %v6894
    %8584 = vmatpush1.bf16.msra.mxu0 %v6893
    %8585 = vmatprep.subr.bf16.mxu0 %v6918
    %8586 = vmatpush1.bf16.msra.mxu0 %v6917
    %8587 = vmatprep.subr.bf16.mxu0 %v6942
    %8588 = vmatpush1.bf16.msra.mxu0 %v6941
    %8589 = vmatprep.subr.bf16.mxu0 %v6966
    %8590 = vmatpush1.bf16.msra.mxu0 %v6965
    %8591 = vmatprep.subr.bf16.mxu0 %v6990
    %8592 = vmatpush1.bf16.msra.mxu0 %v6989
    %8593 = vmatprep.subr.bf16.mxu0 %v7014
    %8594 = vmatpush1.bf16.msra.mxu0 %v7013
    %8595 = vmatprep.subr.bf16.mxu0 %v7038
    %8596 = vmatpush1.bf16.msra.mxu0 %v7037
    %8597 = vmatprep.subr.bf16.mxu0 %v7062
    %8598 = vmatpush1.bf16.msra.mxu0 %v7061
    %8599 = vmatprep.subr.bf16.mxu0 %v7086
    %8600 = vmatpush1.bf16.msra.mxu0 %v7085
    %8601 = vmatprep.subr.bf16.mxu0 %v7110
    %8602 = vmatpush1.bf16.msra.mxu0 %v7109
    %8603 = vmatprep.subr.bf16.mxu0 %v7134
    %8604 = vmatpush1.bf16.msra.mxu0 %v7133
    %8605 = vmatprep.subr.bf16.mxu0 %v7158
    %8606 = vmatpush1.bf16.msra.mxu0 %v7157
    %8607 = vmatprep.mubr.bf16.mxu0 %v7544
    %8608 = vmatmul.mubr.bf16.gmra.mrb[0].mxu0 %v7543
    %v8609 = vpop.f32.mrb[0].mxu0
    %v8610 = vadd.f32 %v7644, %v8609
    %v8611 = vpop.f32.mrb[0].mxu0
    %v8612 = vadd.f32 %v7648, %v8611
    %v8613 = vpop.f32.mrb[0].mxu0
    %v8614 = vpop.f32.mrb[0].mxu0
    %8615 = vdwg.mxu0
    %8616 = vmatprep.subr.bf16.mxu0 %v7182
    %8617 = vmatpush1.bf16.msra.mxu0 %v7181
    %8618 = vmatprep.subr.bf16.mxu0 %v7206
    %8619 = vmatpush1.bf16.msra.mxu0 %v7205
    %8620 = vmatprep.subr.bf16.mxu0 %v7230
    %8621 = vmatpush1.bf16.msra.mxu0 %v7229
    %8622 = vmatprep.subr.bf16.mxu0 %v7254
    %8623 = vmatpush1.bf16.msra.mxu0 %v7253
    %8624 = vmatprep.subr.bf16.mxu0 %v7278
    %8625 = vmatpush1.bf16.msra.mxu0 %v7277
    %8626 = vmatprep.subr.bf16.mxu0 %v7302
    %8627 = vmatpush1.bf16.msra.mxu0 %v7301
    %8628 = vmatprep.subr.bf16.mxu0 %v7326
    %8629 = vmatpush1.bf16.msra.mxu0 %v7325
    %8630 = vmatprep.subr.bf16.mxu0 %v7350
    %8631 = vmatpush1.bf16.msra.mxu0 %v7349
    %8632 = vmatprep.subr.bf16.mxu0 %v7374
    %8633 = vmatpush1.bf16.msra.mxu0 %v7373
    %8634 = vmatprep.subr.bf16.mxu0 %v7398
    %8635 = vmatpush1.bf16.msra.mxu0 %v7397
    %8636 = vmatprep.subr.bf16.mxu0 %v7422
    %8637 = vmatpush1.bf16.msra.mxu0 %v7421
    %8638 = vmatprep.subr.bf16.mxu0 %v7446
    %8639 = vmatpush1.bf16.msra.mxu0 %v7445
    %8640 = vmatprep.subr.bf16.mxu0 %v7470
    %8641 = vmatpush1.bf16.msra.mxu0 %v7469
    %8642 = vmatprep.subr.bf16.mxu0 %v7494
    %8643 = vmatpush1.bf16.msra.mxu0 %v7493
    %8644 = vmatprep.subr.bf16.mxu0 %v7518
    %8645 = vmatpush1.bf16.msra.mxu0 %v7517
    %8646 = vmatprep.subr.bf16.mxu0 %v7542
    %8647 = vmatpush1.bf16.msra.mxu0 %v7541
    %8648 = vmatprep.mubr.bf16.mxu0 %v7546
    %8649 = vmatmul.mubr.bf16.gmra.mrb[0].mxu0 %v7545
    %v8650 = vpop.f32.mrb[0].mxu0
    %v8651 = vadd.f32 %v8610, %v8650
    %v8652 = vpop.f32.mrb[0].mxu0
    %v8653 = vadd.f32 %v8612, %v8652
    %v8654 = vpop.f32.mrb[0].mxu0
    %v8655 = vpop.f32.mrb[0].mxu0
    %8656 = vdwg.mxu0
    %v8657 = vmax.f32 %v7749, 0.0
    %v8658 = vmax.f32 %v7751, 0.0
    %v8659 = vmax.f32 %v7831, 0.0
    %v8660 = vmax.f32 %v7833, 0.0
    %v8661 = vmax.f32 %v7913, 0.0
    %v8662 = vmax.f32 %v7915, 0.0
    %v8663 = vmax.f32 %v7995, 0.0
    %v8664 = vmax.f32 %v7997, 0.0
    %v8665 = vmax.f32 %v8077, 0.0
    %v8666 = vmax.f32 %v8079, 0.0
    %v8667 = vmax.f32 %v8159, 0.0
    %v8668 = vmax.f32 %v8161, 0.0
    %v8669 = vmax.f32 %v8241, 0.0
    %v8670 = vmax.f32 %v8243, 0.0
    %v8671 = vmax.f32 %v8323, 0.0
    %v8672 = vmax.f32 %v8325, 0.0
    %v8673 = vmax.f32 %v8405, 0.0
    %v8674 = vmax.f32 %v8407, 0.0
    %v8675 = vmax.f32 %v8487, 0.0
    %v8676 = vmax.f32 %v8489, 0.0
    %v8677 = vmax.f32 %v8569, 0.0
    %v8678 = vmax.f32 %v8571, 0.0
    %v8679 = vmax.f32 %v8651, 0.0
    %v8680 = vmax.f32 %v8653, 0.0
    %8681 = vst [vmem:[#allocation24] sm:$0xff] %v8657
    %8682 = vst [vmem:[#allocation24 + $0x8] sm:$0xff] %v8658
    %8683 = vst [vmem:[#allocation24 + $0x10] sm:$0xff] %v8659
    %8684 = vst [vmem:[#allocation24 + $0x18] sm:$0xff] %v8660
    %8685 = vst [vmem:[#allocation24 + $0x20] sm:$0xff] %v8661
    %8686 = vst [vmem:[#allocation24 + $0x28] sm:$0xff] %v8662
    %8687 = vst [vmem:[#allocation24 + $0x30] sm:$0xff] %v8663
    %8688 = vst [vmem:[#allocation24 + $0x38] sm:$0xff] %v8664
    %8689 = vst [vmem:[#allocation24 + $0x40] sm:$0xff] %v8665
    %8690 = vst [vmem:[#allocation24 + $0x48] sm:$0xff] %v8666
    %8691 = vst [vmem:[#allocation24 + $0x50] sm:$0xff] %v8667
    %8692 = vst [vmem:[#allocation24 + $0x58] sm:$0xff] %v8668
    %8693 = vst [vmem:[#allocation24 + $0x60] sm:$0xff] %v8669
    %8694 = vst [vmem:[#allocation24 + $0x68] sm:$0xff] %v8670
    %8695 = vst [vmem:[#allocation24 + $0x70] sm:$0xff] %v8671
    %8696 = vst [vmem:[#allocation24 + $0x78] sm:$0xff] %v8672
    %8697 = vst [vmem:[#allocation24 + $0x80] sm:$0xff] %v8673
    %8698 = vst [vmem:[#allocation24 + $0x88] sm:$0xff] %v8674
    %8699 = vst [vmem:[#allocation24 + $0x90] sm:$0xff] %v8675
    %8700 = vst [vmem:[#allocation24 + $0x98] sm:$0xff] %v8676
    %8701 = vst [vmem:[#allocation24 + $0xa0] sm:$0xff] %v8677
    %8702 = vst [vmem:[#allocation24 + $0xa8] sm:$0xff] %v8678
    %8703 = vst [vmem:[#allocation24 + $0xb0] sm:$0xff] %v8679
    %8704 = vst [vmem:[#allocation24 + $0xb8] sm:$0xff] %v8680
    // Predicated region
    $region94: #{net_forward.1} parent=1 // pred_check
      _
    $region95: #{net_forward.1} parent=1 // pred_check_branch
      %8706 = sbr.rel (0) target = $region97
    $region96: #{net_forward.1} parent=1 // pred_region
      %s8708 = ssub.s32 3072, 3072
      %8709 = vsyncadd [#allocation8], %s8708
      %s8711 = sshll.u32 [#allocation24], 4
      %s8712 = int_to_ptr.vmem [resolvable:$true] %s8711
      %8714 = dma.vmem_to_hbm [thread:$0]  %s8712, 3072, %s15, [#allocation8]
    $region97: #{net_forward.1} parent=1 // pred_fallthru
      _
    // Predicated region
    $region98: #{net_forward.1} parent=1 // pred_check
      _
    $region99: #{net_forward.1} parent=1 // pred_check_branch
      %8716 = sbr.rel (0) target = $region101
    $region100: #{net_forward.1} parent=1 // pred_region
      %8717 = dma.done [#allocation8], 3072
    $region101: #{net_forward.1} parent=1 // pred_fallthru
      _
    %8718 = vsyncpa [#allocation7], 1
    %8719 = vsyncpa [#allocation10], 1
    %8720 = vsyncpa [#allocation13], 1
    %8721 = vsyncpa [#allocation16], 1
    %8722 = vsyncpa [#allocation19], 1
    %8723 = vsyncpa [#allocation22], 1
    %8724 = vsyncpa [#allocation8], 1
  %8725 = vsyncmov [#allocation5]
  %s8726 = vpop.sfrf %8725
  %p8727 = scmp.eq.s32.totalorder %s8726, 0
  %p8728 = pneg %p8727
  %8730 = shalt.err (%p8728)
  %s8731 = scalar_lea.sflag [#allocation5], 1
  %8732 = vsyncmov %s8731
  %s8733 = vpop.sfrf %8732
  %p8734 = scmp.eq.s32.totalorder %s8733, 0
  %p8735 = pneg %p8734
  %8737 = shalt.err (%p8735)
  %s8738 = scalar_lea.sflag [#allocation5], 2
  %8739 = vsyncmov %s8738
  %s8740 = vpop.sfrf %8739
  %p8741 = scmp.eq.s32.totalorder %s8740, 0
  %p8742 = pneg %p8741
  %8744 = shalt.err (%p8742)

</llo_original>
